<compile_context>
chip_gen: v5e
topology: v5e:2x2
jax: 0.10.0
libtpu: 0.0.40
codegen_flags: <defaults>
</compile_context>

<pallas_src>
import math

import jax
import jax.numpy as jnp
from jax.experimental import pallas as pl
from jax.experimental.pallas import tpu as pltpu

# ---- scaled-down DAC config (real 44khz: d_model=64, strides=(2,4,8,8), latent=1024,
#      n_codebooks=9, codebook_size=1024, codebook_dim=8) ----
D_MODEL = 8
STRIDES = (2, 4)
DILATIONS = (1, 3, 9)
LATENT_DIM = D_MODEL * (2 ** len(STRIDES))   # 32
N_CODEBOOKS = 3
CODEBOOK_SIZE = 64
CODEBOOK_DIM = 8
HOP_LENGTH = int(math.prod(STRIDES))         # 8

_MXU_DTYPE = jnp.bfloat16   # conv matmul inputs (f32 accumulate); snake / VQ math stays f32
_PARALLEL = pltpu.CompilerParams(dimension_semantics=("parallel",))


# ----------------------- fused encoder + RVQ kernel -------------------------

def _build_encode_kernel(strides, dilations, n_cb, cb_dim, cb_size):
    """Build the single fused kernel.  Ref order (must match the wrapper):
       x, stem (w, b),
       per block: per res-unit (a1, ia1, w1, b1, a2, ia2, w2, b2), then (a, ia, wd, bd),
       final (a, ia, w, b), rvq (wi, bi, cbn, cbt, wo, bo),
       outputs (z, codes, latents), scratch pad_ref.
       Conv weights arrive pre-reshaped as (Cout, K*Cin) matmul matrices."""

    def kernel(*refs):
        pad_ref = refs[-1]                        # (Cmax, Lmax) f32 scratch: padded tiles
        z_ref, codes_ref, lat_ref = refs[-4:-1]
        it = iter(refs[:-4])

        def snake(x, a_ref, ia_ref):
            # snake(x) = x + (alpha + 1e-9)^-1 * sin(alpha * x)^2   (per channel)
            return x + ia_ref[...] * jnp.square(jnp.sin(a_ref[...] * x))

        def conv(x_act, w_ref, b_ref, k, dil, pad, l_out):
            """Conv1d: padded tile staged in VMEM scratch, in-kernel im2col, one deep
            MXU matmul.  x_act is (Cin, L) f32 with the activation already applied
            (snake(0)=0, so the zero halo in the scratch commutes with the activation)."""
            cin, l_in = x_act.shape
            if k == 1:                            # 1x1 conv: no padding / im2col needed
                return (jnp.dot(w_ref[...], x_act.astype(_MXU_DTYPE),
                                preferred_element_type=jnp.float32) + b_ref[...])
            # stage padded tile (zero halo) once; snake / cast are NOT recomputed per tap
            pad_ref[0:cin, :] = jnp.zeros((cin, pad_ref.shape[1]), jnp.float32)
            pad_ref[0:cin, pad:pad + l_in] = x_act
            if cin == 1:                          # stem conv: exact f32 rank-1 VPU taps
                acc = jnp.zeros((w_ref.shape[0], l_out), jnp.float32)
                for kk in range(k):
                    acc = acc + (w_ref[:, kk:kk + 1]
                                 * pad_ref[0:1, kk * dil:kk * dil + l_out])
                return acc + b_ref[...]
            # im2col: all K taps folded into one (Cout, K*Cin) x (K*Cin, L_out) matmul
            cols = jnp.concatenate(
                [pad_ref[0:cin, kk * dil:kk * dil + l_out] for kk in range(k)], axis=0)
            return (jnp.dot(w_ref[...], cols.astype(_MXU_DTYPE),
                            preferred_element_type=jnp.float32) + b_ref[...])

        # ------------------------------ encoder ------------------------------
        x_ref = next(it)
        h = x_ref[0]                              # (1, L) f32
        length = h.shape[1]

        w = next(it)
        b = next(it)
        h = conv(h, w, b, 7, 1, 3, length)        # stem WNConv1d(1, d, k=7, pad=3)

        for s in strides:                         # EncoderBlocks
            for dil in dilations:                 # ResidualUnits
                a1, ia1 = next(it), next(it)
                w1, b1 = next(it), next(it)
                a2, ia2 = next(it), next(it)
                w2, b2 = next(it), next(it)
                y = conv(snake(h, a1, ia1), w1, b1, 7, dil, 3 * dil, length)
                h = conv(snake(y, a2, ia2), w2, b2, 1, 1, 0, length) + h   # fused residual
            a, ia = next(it), next(it)
            wd, bd = next(it), next(it)
            k = 2 * s
            pad = -(-s // 2)                      # ceil(s/2)
            l_out = (length + 2 * pad - k) // s + 1
            l_full = length + 2 * pad - k + 1
            # strided conv = stride-1 conv + exact 0/1 column-selection matmul (MXU);
            # keeps everything on static slices, no HBM phase-split copies.
            y_full = conv(snake(h, a, ia), wd, bd, k, 1, pad, l_full)
            jj = jax.lax.broadcasted_iota(jnp.int32, (l_full, l_out), 0)
            tt = jax.lax.broadcasted_iota(jnp.int32, (l_full, l_out), 1)
            sel = (jj == tt * s).astype(jnp.float32)
            h = jnp.dot(y_full, sel, preferred_element_type=jnp.float32)
            length = l_out

        a, ia = next(it), next(it)
        w, b = next(it), next(it)
        z_e = conv(snake(h, a, ia), w, b, 3, 1, 1, length)           # (D, T)

        # ------------------- residual vector quantization --------------------
        wi = next(it)
        bi = next(it)
        cbn = next(it)
        cbt = next(it)
        wo = next(it)
        bo = next(it)

        res = z_e                                 # residual stays in vregs
        z_acc = jnp.zeros_like(res)
        for i in range(n_cb):
            ze_i = jnp.dot(wi[i], res, preferred_element_type=jnp.float32) + bi[i]
            lat_ref[0, i * cb_dim:(i + 1) * cb_dim, :] = ze_i        # direct store
            nrm = jnp.sqrt(jnp.sum(ze_i * ze_i, axis=0, keepdims=True))
            zen = ze_i / jnp.maximum(nrm, 1e-12)
            sim = jnp.dot(cbn[i], zen, preferred_element_type=jnp.float32)   # (N, T)
            rows = jax.lax.broadcasted_iota(jnp.int32, sim.shape, 0)
            best = jnp.max(sim, axis=0, keepdims=True)
            idx = jnp.min(jnp.where(sim >= best, rows, cb_size),
                          axis=0, keepdims=True)                     # first-index ties
            codes_ref[0, i:i + 1, :] = idx                           # direct store
            one_hot = (rows == idx).astype(jnp.float32)
            zq_c = jnp.dot(cbt[i], one_hot, preferred_element_type=jnp.float32)
            zq = jnp.dot(wo[i], zq_c, preferred_element_type=jnp.float32) + bo[i]
            z_acc = z_acc + zq
            res = res - zq
        z_ref[0] = z_acc
        # TODO(synk): at real codebook sizes (N=1024) chunk the NN search over N with a
        #             running (max, argmax) per lane instead of the full (N, T) sim.

    return kernel


_ENCODE_KERNEL = _build_encode_kernel(STRIDES, DILATIONS, N_CODEBOOKS,
                                      CODEBOOK_DIM, CODEBOOK_SIZE)


def _max_scratch_dims(lp):
    """Sublane / lane extent needed by the in-kernel padded-tile scratch."""
    max_c, max_l = 1, lp + 6                      # stem conv k=7 pad=3
    length, d = lp, D_MODEL
    for s in STRIDES:
        max_c = max(max_c, d)
        max_l = max(max_l, length + 2 * 3 * max(DILATIONS))   # dilated res convs
        pad = -(-s // 2)
        max_l = max(max_l, length + 2 * pad)
        length = (length + 2 * pad - 2 * s) // s + 1
        d *= 2
    max_c = max(max_c, d)                         # final conv input channels
    max_l = max(max_l, length + 2)
    return (-(-max_c // 8) * 8, -(-max_l // 128) * 128)


# ----------------------------- parameters ----------------------------------

def _make_params(key):
    def nrm(k, shape, fan_in):
        return jax.random.normal(k, shape, dtype=jnp.float32) / math.sqrt(fan_in)

    def snake_alpha(c):
        a = jnp.ones((c,), jnp.float32)
        return a, 1.0 / (a + 1e-9)                # inv_alpha precomputed once

    keys = iter(jax.random.split(key, 128))
    p = {}
    d = D_MODEL
    p["conv_in_w"] = nrm(next(keys), (d, 1, 7), 7)
    p["conv_in_b"] = jnp.zeros((d,), jnp.float32)
    blocks = []
    for s in STRIDES:
        in_d = d
        d = d * 2
        res_units = []
        for dil in DILATIONS:
            a1, ia1 = snake_alpha(in_d)
            a2, ia2 = snake_alpha(in_d)
            res_units.append(dict(
                dilation=dil,
                alpha1=a1, inv_alpha1=ia1,
                w1=nrm(next(keys), (in_d, in_d, 7), in_d * 7),
                b1=jnp.zeros((in_d,), jnp.float32),
                alpha2=a2, inv_alpha2=ia2,
                w2=nrm(next(keys), (in_d, in_d, 1), in_d),
                b2=jnp.zeros((in_d,), jnp.float32),
            ))
        ab, iab = snake_alpha(in_d)
        blocks.append(dict(
            res=res_units,
            alpha=ab, inv_alpha=iab,
            down_w=nrm(next(keys), (d, in_d, 2 * s), in_d * 2 * s),
            down_b=jnp.zeros((d,), jnp.float32),
            stride=s,
        ))
    p["blocks"] = blocks
    af, iaf = snake_alpha(d)
    p["final_alpha"], p["final_inv_alpha"] = af, iaf
    p["final_w"] = nrm(next(keys), (LATENT_DIM, d, 3), d * 3)
    p["final_b"] = jnp.zeros((LATENT_DIM,), jnp.float32)
    qs = []
    for _ in range(N_CODEBOOKS):
        qs.append(dict(
            wi=nrm(next(keys), (CODEBOOK_DIM, LATENT_DIM), LATENT_DIM),
            bi=jnp.zeros((CODEBOOK_DIM,), jnp.float32),
            cb=jax.random.normal(next(keys), (CODEBOOK_SIZE, CODEBOOK_DIM),
                                 dtype=jnp.float32),
            wo=nrm(next(keys), (LATENT_DIM, CODEBOOK_DIM), CODEBOOK_DIM),
            bo=jnp.zeros((LATENT_DIM,), jnp.float32),
        ))
    p["quantizers"] = qs
    return p


# ----------------------------- model ----------------------------------------

class DacWrapperPallas:
    def __init__(self, return_type="z", key=None):
        if return_type not in ("z", "codes", "latents"):
            raise ValueError(f"Unknown return type: {return_type}")
        self.return_type = return_type
        self.hop_length = HOP_LENGTH
        self.params = _make_params(key if key is not None else jax.random.PRNGKey(0))
        self._encode_jit = jax.jit(self._encode_impl)

    def preprocess(self, x):
        L = x.shape[-1]
        right_pad = (-L) % self.hop_length
        return jnp.pad(x, ((0, 0), (0, 0), (0, right_pad)))

    def _encode_impl(self, x):
        p = self.params
        B, _, lp = x.shape
        t_out = lp // HOP_LENGTH

        args = [x]
        in_specs = [pl.BlockSpec((1, 1, lp), lambda i: (i, 0, 0))]

        def add(arr):
            args.append(arr)
            nd = arr.ndim
            in_specs.append(pl.BlockSpec(arr.shape, lambda i, _n=nd: (0,) * _n))

        def wmat(w, cast=True):
            co, ci, k = w.shape
            m = jnp.transpose(w, (0, 2, 1)).reshape(co, k * ci)   # col index = k*Cin + c
            return m.astype(_MXU_DTYPE) if cast else m

        def col(v):
            return v.reshape(-1, 1)

        add(wmat(p["conv_in_w"], cast=False))     # stem stays f32 (rank-1 VPU taps)
        add(col(p["conv_in_b"]))
        for blk in p["blocks"]:
            for ru in blk["res"]:
                add(col(ru["alpha1"])); add(col(ru["inv_alpha1"]))
                add(wmat(ru["w1"])); add(col(ru["b1"]))
                add(col(ru["alpha2"])); add(col(ru["inv_alpha2"]))
                add(wmat(ru["w2"])); add(col(ru["b2"]))
            add(col(blk["alpha"])); add(col(blk["inv_alpha"]))
            add(wmat(blk["down_w"])); add(col(blk["down_b"]))
        add(col(p["final_alpha"])); add(col(p["final_inv_alpha"]))
        add(wmat(p["final_w"])); add(col(p["final_b"]))

        qs = p["quantizers"]
        cb = jnp.stack([q["cb"] for q in qs])                        # (Ncb, N, Dc)
        add(jnp.stack([q["wi"] for q in qs]))                        # (Ncb, Dc, D)
        add(jnp.stack([col(q["bi"]) for q in qs]))                   # (Ncb, Dc, 1)
        add(cb / jnp.maximum(jnp.sqrt(jnp.sum(cb * cb, axis=-1, keepdims=True)), 1e-12))
        add(jnp.transpose(cb, (0, 2, 1)))                            # (Ncb, Dc, N)
        add(jnp.stack([q["wo"] for q in qs]))                        # (Ncb, D, Dc)
        add(jnp.stack([col(q["bo"]) for q in qs]))                   # (Ncb, D, 1)

        max_c, max_l = _max_scratch_dims(lp)

        return pl.pallas_call(
            _ENCODE_KERNEL,
            out_shape=(jax.ShapeDtypeStruct((B, LATENT_DIM, t_out), jnp.float32),
                       jax.ShapeDtypeStruct((B, N_CODEBOOKS, t_out), jnp.int32),
                       jax.ShapeDtypeStruct((B, N_CODEBOOKS * CODEBOOK_DIM, t_out),
                                            jnp.float32)),
            grid=(B,),
            in_specs=in_specs,
            out_specs=(pl.BlockSpec((1, LATENT_DIM, t_out), lambda i: (i, 0, 0)),
                       pl.BlockSpec((1, N_CODEBOOKS, t_out), lambda i: (i, 0, 0)),
                       pl.BlockSpec((1, N_CODEBOOKS * CODEBOOK_DIM, t_out),
                                    lambda i: (i, 0, 0))),
            scratch_shapes=[pltpu.VMEM((max_c, max_l), jnp.float32)],
            compiler_params=_PARALLEL,
        )(*args)

    def encode(self, x):
        return self._encode_jit(x)

    def __call__(self, x):
        assert x.shape[1] == 1
        x = self.preprocess(x)
        z, codes, latents = self.encode(x)
        if self.return_type == "z":
            return z
        if self.return_type == "codes":
            return codes
        return latents


# ----------------------------- driver ---------------------------------------

if __name__ == "__main__":
    key = jax.random.PRNGKey(0)
    k_param, k_x = jax.random.split(key)

    model = DacWrapperPallas(return_type="z", key=k_param)
    x = jax.random.uniform(k_x, (2, 1, 60), dtype=jnp.float32,
                           minval=-1.0, maxval=1.0)

    z = model(x)
    jax.block_until_ready(z)

    xp_ = model.preprocess(x)
    z2, codes, latents = model.encode(xp_)
    jax.block_until_ready((z2, codes, latents))

    T = xp_.shape[-1] // HOP_LENGTH
    assert z.shape == (2, LATENT_DIM, T)
    assert codes.shape == (2, N_CODEBOOKS, T) and codes.dtype == jnp.int32
    assert latents.shape == (2, N_CODEBOOKS * CODEBOOK_DIM, T)
    assert bool(jnp.all(jnp.isfinite(z)))
    assert bool(jnp.all((codes >= 0) & (codes < CODEBOOK_SIZE)))

    print("KERNEL_OK")
</pallas_src>

<mosaic_0001>
module attributes {stable_mosaic.version = 11 : i64} {
  func.func @kernel(%arg0: i32, %arg1: memref<1x1x64xf32, #tpu.memory_space<vmem>>, %arg2: memref<8x7xf32, #tpu.memory_space<vmem>>, %arg3: memref<8x1xf32, #tpu.memory_space<vmem>>, %arg4: memref<8x1xf32, #tpu.memory_space<vmem>>, %arg5: memref<8x1xf32, #tpu.memory_space<vmem>>, %arg6: memref<8x56xbf16, #tpu.memory_space<vmem>>, %arg7: memref<8x1xf32, #tpu.memory_space<vmem>>, %arg8: memref<8x1xf32, #tpu.memory_space<vmem>>, %arg9: memref<8x1xf32, #tpu.memory_space<vmem>>, %arg10: memref<8x8xbf16, #tpu.memory_space<vmem>>, %arg11: memref<8x1xf32, #tpu.memory_space<vmem>>, %arg12: memref<8x1xf32, #tpu.memory_space<vmem>>, %arg13: memref<8x1xf32, #tpu.memory_space<vmem>>, %arg14: memref<8x56xbf16, #tpu.memory_space<vmem>>, %arg15: memref<8x1xf32, #tpu.memory_space<vmem>>, %arg16: memref<8x1xf32, #tpu.memory_space<vmem>>, %arg17: memref<8x1xf32, #tpu.memory_space<vmem>>, %arg18: memref<8x8xbf16, #tpu.memory_space<vmem>>, %arg19: memref<8x1xf32, #tpu.memory_space<vmem>>, %arg20: memref<8x1xf32, #tpu.memory_space<vmem>>, %arg21: memref<8x1xf32, #tpu.memory_space<vmem>>, %arg22: memref<8x56xbf16, #tpu.memory_space<vmem>>, %arg23: memref<8x1xf32, #tpu.memory_space<vmem>>, %arg24: memref<8x1xf32, #tpu.memory_space<vmem>>, %arg25: memref<8x1xf32, #tpu.memory_space<vmem>>, %arg26: memref<8x8xbf16, #tpu.memory_space<vmem>>, %arg27: memref<8x1xf32, #tpu.memory_space<vmem>>, %arg28: memref<8x1xf32, #tpu.memory_space<vmem>>, %arg29: memref<8x1xf32, #tpu.memory_space<vmem>>, %arg30: memref<16x32xbf16, #tpu.memory_space<vmem>>, %arg31: memref<16x1xf32, #tpu.memory_space<vmem>>, %arg32: memref<16x1xf32, #tpu.memory_space<vmem>>, %arg33: memref<16x1xf32, #tpu.memory_space<vmem>>, %arg34: memref<16x112xbf16, #tpu.memory_space<vmem>>, %arg35: memref<16x1xf32, #tpu.memory_space<vmem>>, %arg36: memref<16x1xf32, #tpu.memory_space<vmem>>, %arg37: memref<16x1xf32, #tpu.memory_space<vmem>>, %arg38: memref<16x16xbf16, #tpu.memory_space<vmem>>, %arg39: memref<16x1xf32, #tpu.memory_space<vmem>>, %arg40: memref<16x1xf32, #tpu.memory_space<vmem>>, %arg41: memref<16x1xf32, #tpu.memory_space<vmem>>, %arg42: memref<16x112xbf16, #tpu.memory_space<vmem>>, %arg43: memref<16x1xf32, #tpu.memory_space<vmem>>, %arg44: memref<16x1xf32, #tpu.memory_space<vmem>>, %arg45: memref<16x1xf32, #tpu.memory_space<vmem>>, %arg46: memref<16x16xbf16, #tpu.memory_space<vmem>>, %arg47: memref<16x1xf32, #tpu.memory_space<vmem>>, %arg48: memref<16x1xf32, #tpu.memory_space<vmem>>, %arg49: memref<16x1xf32, #tpu.memory_space<vmem>>, %arg50: memref<16x112xbf16, #tpu.memory_space<vmem>>, %arg51: memref<16x1xf32, #tpu.memory_space<vmem>>, %arg52: memref<16x1xf32, #tpu.memory_space<vmem>>, %arg53: memref<16x1xf32, #tpu.memory_space<vmem>>, %arg54: memref<16x16xbf16, #tpu.memory_space<vmem>>, %arg55: memref<16x1xf32, #tpu.memory_space<vmem>>, %arg56: memref<16x1xf32, #tpu.memory_space<vmem>>, %arg57: memref<16x1xf32, #tpu.memory_space<vmem>>, %arg58: memref<32x128xbf16, #tpu.memory_space<vmem>>, %arg59: memref<32x1xf32, #tpu.memory_space<vmem>>, %arg60: memref<32x1xf32, #tpu.memory_space<vmem>>, %arg61: memref<32x1xf32, #tpu.memory_space<vmem>>, %arg62: memref<32x96xbf16, #tpu.memory_space<vmem>>, %arg63: memref<32x1xf32, #tpu.memory_space<vmem>>, %arg64: memref<3x8x32xf32, #tpu.memory_space<vmem>>, %arg65: memref<3x8x1xf32, #tpu.memory_space<vmem>>, %arg66: memref<3x64x8xf32, #tpu.memory_space<vmem>>, %arg67: memref<3x8x64xf32, #tpu.memory_space<vmem>>, %arg68: memref<3x32x8xf32, #tpu.memory_space<vmem>>, %arg69: memref<3x32x1xf32, #tpu.memory_space<vmem>>, %arg70: memref<1x32x8xf32, #tpu.memory_space<vmem>>, %arg71: memref<1x3x8xi32, #tpu.memory_space<vmem>>, %arg72: memref<1x24x8xf32, #tpu.memory_space<vmem>>, %arg73: memref<32x128xf32, #tpu.memory_space<vmem>>) attributes {dimension_semantics = [#tpu.dimension_semantics<parallel>], iteration_bounds = array<i64: 2>, scalar_prefetch = 0 : i64, scratch_operands = 1 : i64, tpu.core_type = #tpu.core_type<tc>, window_params = [{transform_indices = @transform_0, window_bounds = array<i64: 1, 1, 64>}, {pipeline_mode = #tpu.pipeline_mode<synchronous>, transform_indices = @transform_1, window_bounds = array<i64: 8, 7>}, {pipeline_mode = #tpu.pipeline_mode<synchronous>, transform_indices = @transform_2, window_bounds = array<i64: 8, 1>}, {pipeline_mode = #tpu.pipeline_mode<synchronous>, transform_indices = @transform_3, window_bounds = array<i64: 8, 1>}, {pipeline_mode = #tpu.pipeline_mode<synchronous>, transform_indices = @transform_4, window_bounds = array<i64: 8, 1>}, {pipeline_mode = #tpu.pipeline_mode<synchronous>, transform_indices = @transform_5, window_bounds = array<i64: 8, 56>}, {pipeline_mode = #tpu.pipeline_mode<synchronous>, transform_indices = @transform_6, window_bounds = array<i64: 8, 1>}, {pipeline_mode = #tpu.pipeline_mode<synchronous>, transform_indices = @transform_7, window_bounds = array<i64: 8, 1>}, {pipeline_mode = #tpu.pipeline_mode<synchronous>, transform_indices = @transform_8, window_bounds = array<i64: 8, 1>}, {pipeline_mode = #tpu.pipeline_mode<synchronous>, transform_indices = @transform_9, window_bounds = array<i64: 8, 8>}, {pipeline_mode = #tpu.pipeline_mode<synchronous>, transform_indices = @transform_10, window_bounds = array<i64: 8, 1>}, {pipeline_mode = #tpu.pipeline_mode<synchronous>, transform_indices = @transform_11, window_bounds = array<i64: 8, 1>}, {pipeline_mode = #tpu.pipeline_mode<synchronous>, transform_indices = @transform_12, window_bounds = array<i64: 8, 1>}, {pipeline_mode = #tpu.pipeline_mode<synchronous>, transform_indices = @transform_13, window_bounds = array<i64: 8, 56>}, {pipeline_mode = #tpu.pipeline_mode<synchronous>, transform_indices = @transform_14, window_bounds = array<i64: 8, 1>}, {pipeline_mode = #tpu.pipeline_mode<synchronous>, transform_indices = @transform_15, window_bounds = array<i64: 8, 1>}, {pipeline_mode = #tpu.pipeline_mode<synchronous>, transform_indices = @transform_16, window_bounds = array<i64: 8, 1>}, {pipeline_mode = #tpu.pipeline_mode<synchronous>, transform_indices = @transform_17, window_bounds = array<i64: 8, 8>}, {pipeline_mode = #tpu.pipeline_mode<synchronous>, transform_indices = @transform_18, window_bounds = array<i64: 8, 1>}, {pipeline_mode = #tpu.pipeline_mode<synchronous>, transform_indices = @transform_19, window_bounds = array<i64: 8, 1>}, {pipeline_mode = #tpu.pipeline_mode<synchronous>, transform_indices = @transform_20, window_bounds = array<i64: 8, 1>}, {pipeline_mode = #tpu.pipeline_mode<synchronous>, transform_indices = @transform_21, window_bounds = array<i64: 8, 56>}, {pipeline_mode = #tpu.pipeline_mode<synchronous>, transform_indices = @transform_22, window_bounds = array<i64: 8, 1>}, {pipeline_mode = #tpu.pipeline_mode<synchronous>, transform_indices = @transform_23, window_bounds = array<i64: 8, 1>}, {pipeline_mode = #tpu.pipeline_mode<synchronous>, transform_indices = @transform_24, window_bounds = array<i64: 8, 1>}, {pipeline_mode = #tpu.pipeline_mode<synchronous>, transform_indices = @transform_25, window_bounds = array<i64: 8, 8>}, {pipeline_mode = #tpu.pipeline_mode<synchronous>, transform_indices = @transform_26, window_bounds = array<i64: 8, 1>}, {pipeline_mode = #tpu.pipeline_mode<synchronous>, transform_indices = @transform_27, window_bounds = array<i64: 8, 1>}, {pipeline_mode = #tpu.pipeline_mode<synchronous>, transform_indices = @transform_28, window_bounds = array<i64: 8, 1>}, {pipeline_mode = #tpu.pipeline_mode<synchronous>, transform_indices = @transform_29, window_bounds = array<i64: 16, 32>}, {pipeline_mode = #tpu.pipeline_mode<synchronous>, transform_indices = @transform_30, window_bounds = array<i64: 16, 1>}, {pipeline_mode = #tpu.pipeline_mode<synchronous>, transform_indices = @transform_31, window_bounds = array<i64: 16, 1>}, {pipeline_mode = #tpu.pipeline_mode<synchronous>, transform_indices = @transform_32, window_bounds = array<i64: 16, 1>}, {pipeline_mode = #tpu.pipeline_mode<synchronous>, transform_indices = @transform_33, window_bounds = array<i64: 16, 112>}, {pipeline_mode = #tpu.pipeline_mode<synchronous>, transform_indices = @transform_34, window_bounds = array<i64: 16, 1>}, {pipeline_mode = #tpu.pipeline_mode<synchronous>, transform_indices = @transform_35, window_bounds = array<i64: 16, 1>}, {pipeline_mode = #tpu.pipeline_mode<synchronous>, transform_indices = @transform_36, window_bounds = array<i64: 16, 1>}, {pipeline_mode = #tpu.pipeline_mode<synchronous>, transform_indices = @transform_37, window_bounds = array<i64: 16, 16>}, {pipeline_mode = #tpu.pipeline_mode<synchronous>, transform_indices = @transform_38, window_bounds = array<i64: 16, 1>}, {pipeline_mode = #tpu.pipeline_mode<synchronous>, transform_indices = @transform_39, window_bounds = array<i64: 16, 1>}, {pipeline_mode = #tpu.pipeline_mode<synchronous>, transform_indices = @transform_40, window_bounds = array<i64: 16, 1>}, {pipeline_mode = #tpu.pipeline_mode<synchronous>, transform_indices = @transform_41, window_bounds = array<i64: 16, 112>}, {pipeline_mode = #tpu.pipeline_mode<synchronous>, transform_indices = @transform_42, window_bounds = array<i64: 16, 1>}, {pipeline_mode = #tpu.pipeline_mode<synchronous>, transform_indices = @transform_43, window_bounds = array<i64: 16, 1>}, {pipeline_mode = #tpu.pipeline_mode<synchronous>, transform_indices = @transform_44, window_bounds = array<i64: 16, 1>}, {pipeline_mode = #tpu.pipeline_mode<synchronous>, transform_indices = @transform_45, window_bounds = array<i64: 16, 16>}, {pipeline_mode = #tpu.pipeline_mode<synchronous>, transform_indices = @transform_46, window_bounds = array<i64: 16, 1>}, {pipeline_mode = #tpu.pipeline_mode<synchronous>, transform_indices = @transform_47, window_bounds = array<i64: 16, 1>}, {pipeline_mode = #tpu.pipeline_mode<synchronous>, transform_indices = @transform_48, window_bounds = array<i64: 16, 1>}, {pipeline_mode = #tpu.pipeline_mode<synchronous>, transform_indices = @transform_49, window_bounds = array<i64: 16, 112>}, {pipeline_mode = #tpu.pipeline_mode<synchronous>, transform_indices = @transform_50, window_bounds = array<i64: 16, 1>}, {pipeline_mode = #tpu.pipeline_mode<synchronous>, transform_indices = @transform_51, window_bounds = array<i64: 16, 1>}, {pipeline_mode = #tpu.pipeline_mode<synchronous>, transform_indices = @transform_52, window_bounds = array<i64: 16, 1>}, {pipeline_mode = #tpu.pipeline_mode<synchronous>, transform_indices = @transform_53, window_bounds = array<i64: 16, 16>}, {pipeline_mode = #tpu.pipeline_mode<synchronous>, transform_indices = @transform_54, window_bounds = array<i64: 16, 1>}, {pipeline_mode = #tpu.pipeline_mode<synchronous>, transform_indices = @transform_55, window_bounds = array<i64: 16, 1>}, {pipeline_mode = #tpu.pipeline_mode<synchronous>, transform_indices = @transform_56, window_bounds = array<i64: 16, 1>}, {pipeline_mode = #tpu.pipeline_mode<synchronous>, transform_indices = @transform_57, window_bounds = array<i64: 32, 128>}, {pipeline_mode = #tpu.pipeline_mode<synchronous>, transform_indices = @transform_58, window_bounds = array<i64: 32, 1>}, {pipeline_mode = #tpu.pipeline_mode<synchronous>, transform_indices = @transform_59, window_bounds = array<i64: 32, 1>}, {pipeline_mode = #tpu.pipeline_mode<synchronous>, transform_indices = @transform_60, window_bounds = array<i64: 32, 1>}, {pipeline_mode = #tpu.pipeline_mode<synchronous>, transform_indices = @transform_61, window_bounds = array<i64: 32, 96>}, {pipeline_mode = #tpu.pipeline_mode<synchronous>, transform_indices = @transform_62, window_bounds = array<i64: 32, 1>}, {pipeline_mode = #tpu.pipeline_mode<synchronous>, transform_indices = @transform_63, window_bounds = array<i64: 3, 8, 32>}, {pipeline_mode = #tpu.pipeline_mode<synchronous>, transform_indices = @transform_64, window_bounds = array<i64: 3, 8, 1>}, {pipeline_mode = #tpu.pipeline_mode<synchronous>, transform_indices = @transform_65, window_bounds = array<i64: 3, 64, 8>}, {pipeline_mode = #tpu.pipeline_mode<synchronous>, transform_indices = @transform_66, window_bounds = array<i64: 3, 8, 64>}, {pipeline_mode = #tpu.pipeline_mode<synchronous>, transform_indices = @transform_67, window_bounds = array<i64: 3, 32, 8>}, {pipeline_mode = #tpu.pipeline_mode<synchronous>, transform_indices = @transform_68, window_bounds = array<i64: 3, 32, 1>}, {transform_indices = @transform_69, window_bounds = array<i64: 1, 32, 8>}, {transform_indices = @transform_70, window_bounds = array<i64: 1, 3, 8>}, {transform_indices = @transform_71, window_bounds = array<i64: 1, 24, 8>}]} {
    %c0 = arith.constant 0 : index
    %c0_0 = arith.constant 0 : index
    %c0_1 = arith.constant 0 : index
    %0 = vector.load %arg1[%c0, %c0_0, %c0_1] : memref<1x1x64xf32, #tpu.memory_space<vmem>>, vector<1x1x64xf32>
    %1 = vector.shape_cast %0 : vector<1x1x64xf32> to vector<1x64xf32>
    %cst = arith.constant 0.000000e+00 : f32
    %2 = vector.broadcast %cst : f32 to vector<1x128xf32>
    %c0_2 = arith.constant 0 : index
    %c0_3 = arith.constant 0 : index
    %3 = vector.load %arg73[%c0_2, %c0_3] : memref<32x128xf32, #tpu.memory_space<vmem>>, vector<1x128xf32>
    tpu.vector_store %arg73[%c0_2, %c0_3], %2 {strides = array<i32>} : memref<32x128xf32, #tpu.memory_space<vmem>>, vector<1x128xf32>,
    %c0_4 = arith.constant 0 : index
    %c3 = arith.constant 3 : index
    %4 = vector.load %arg73[%c0_4, %c3] : memref<32x128xf32, #tpu.memory_space<vmem>>, vector<1x64xf32>
    tpu.vector_store %arg73[%c0_4, %c3], %1 {strides = array<i32>} : memref<32x128xf32, #tpu.memory_space<vmem>>, vector<1x64xf32>,
    %cst_5 = arith.constant 0.000000e+00 : f32
    %5 = vector.broadcast %cst_5 : f32 to vector<8x64xf32>
    %c0_6 = arith.constant 0 : index
    %c0_7 = arith.constant 0 : index
    %6 = vector.load %arg2[%c0_6, %c0_7] : memref<8x7xf32, #tpu.memory_space<vmem>>, vector<8x1xf32>
    %c0_8 = arith.constant 0 : index
    %c0_9 = arith.constant 0 : index
    %7 = vector.load %arg73[%c0_8, %c0_9] : memref<32x128xf32, #tpu.memory_space<vmem>>, vector<1x64xf32>
    %8 = vector.broadcast %6 : vector<8x1xf32> to vector<8x64xf32>
    %9 = vector.broadcast %7 : vector<1x64xf32> to vector<8x64xf32>
    %10 = arith.mulf %8, %9 : vector<8x64xf32>
    %11 = arith.addf %5, %10 : vector<8x64xf32>
    %c0_10 = arith.constant 0 : index
    %c1 = arith.constant 1 : index
    %12 = vector.load %arg2[%c0_10, %c1] : memref<8x7xf32, #tpu.memory_space<vmem>>, vector<8x1xf32>
    %c0_11 = arith.constant 0 : index
    %c1_12 = arith.constant 1 : index
    %13 = vector.load %arg73[%c0_11, %c1_12] : memref<32x128xf32, #tpu.memory_space<vmem>>, vector<1x64xf32>
    %14 = vector.broadcast %12 : vector<8x1xf32> to vector<8x64xf32>
    %15 = vector.broadcast %13 : vector<1x64xf32> to vector<8x64xf32>
    %16 = arith.mulf %14, %15 : vector<8x64xf32>
    %17 = arith.addf %11, %16 : vector<8x64xf32>
    %c0_13 = arith.constant 0 : index
    %c2 = arith.constant 2 : index
    %18 = vector.load %arg2[%c0_13, %c2] : memref<8x7xf32, #tpu.memory_space<vmem>>, vector<8x1xf32>
    %c0_14 = arith.constant 0 : index
    %c2_15 = arith.constant 2 : index
    %19 = vector.load %arg73[%c0_14, %c2_15] : memref<32x128xf32, #tpu.memory_space<vmem>>, vector<1x64xf32>
    %20 = vector.broadcast %18 : vector<8x1xf32> to vector<8x64xf32>
    %21 = vector.broadcast %19 : vector<1x64xf32> to vector<8x64xf32>
    %22 = arith.mulf %20, %21 : vector<8x64xf32>
    %23 = arith.addf %17, %22 : vector<8x64xf32>
    %c0_16 = arith.constant 0 : index
    %c3_17 = arith.constant 3 : index
    %24 = vector.load %arg2[%c0_16, %c3_17] : memref<8x7xf32, #tpu.memory_space<vmem>>, vector<8x1xf32>
    %c0_18 = arith.constant 0 : index
    %c3_19 = arith.constant 3 : index
    %25 = vector.load %arg73[%c0_18, %c3_19] : memref<32x128xf32, #tpu.memory_space<vmem>>, vector<1x64xf32>
    %26 = vector.broadcast %24 : vector<8x1xf32> to vector<8x64xf32>
    %27 = vector.broadcast %25 : vector<1x64xf32> to vector<8x64xf32>
    %28 = arith.mulf %26, %27 : vector<8x64xf32>
    %29 = arith.addf %23, %28 : vector<8x64xf32>
    %c0_20 = arith.constant 0 : index
    %c4 = arith.constant 4 : index
    %30 = vector.load %arg2[%c0_20, %c4] : memref<8x7xf32, #tpu.memory_space<vmem>>, vector<8x1xf32>
    %c0_21 = arith.constant 0 : index
    %c4_22 = arith.constant 4 : index
    %31 = vector.load %arg73[%c0_21, %c4_22] : memref<32x128xf32, #tpu.memory_space<vmem>>, vector<1x64xf32>
    %32 = vector.broadcast %30 : vector<8x1xf32> to vector<8x64xf32>
    %33 = vector.broadcast %31 : vector<1x64xf32> to vector<8x64xf32>
    %34 = arith.mulf %32, %33 : vector<8x64xf32>
    %35 = arith.addf %29, %34 : vector<8x64xf32>
    %c0_23 = arith.constant 0 : index
    %c5 = arith.constant 5 : index
    %36 = vector.load %arg2[%c0_23, %c5] : memref<8x7xf32, #tpu.memory_space<vmem>>, vector<8x1xf32>
    %c0_24 = arith.constant 0 : index
    %c5_25 = arith.constant 5 : index
    %37 = vector.load %arg73[%c0_24, %c5_25] : memref<32x128xf32, #tpu.memory_space<vmem>>, vector<1x64xf32>
    %38 = vector.broadcast %36 : vector<8x1xf32> to vector<8x64xf32>
    %39 = vector.broadcast %37 : vector<1x64xf32> to vector<8x64xf32>
    %40 = arith.mulf %38, %39 : vector<8x64xf32>
    %41 = arith.addf %35, %40 : vector<8x64xf32>
    %c0_26 = arith.constant 0 : index
    %c6 = arith.constant 6 : index
    %42 = vector.load %arg2[%c0_26, %c6] : memref<8x7xf32, #tpu.memory_space<vmem>>, vector<8x1xf32>
    %c0_27 = arith.constant 0 : index
    %c6_28 = arith.constant 6 : index
    %43 = vector.load %arg73[%c0_27, %c6_28] : memref<32x128xf32, #tpu.memory_space<vmem>>, vector<1x64xf32>
    %44 = vector.broadcast %42 : vector<8x1xf32> to vector<8x64xf32>
    %45 = vector.broadcast %43 : vector<1x64xf32> to vector<8x64xf32>
    %46 = arith.mulf %44, %45 : vector<8x64xf32>
    %47 = arith.addf %41, %46 : vector<8x64xf32>
    %c0_29 = arith.constant 0 : index
    %c0_30 = arith.constant 0 : index
    %48 = vector.load %arg3[%c0_29, %c0_30] : memref<8x1xf32, #tpu.memory_space<vmem>>, vector<8x1xf32>
    %49 = vector.broadcast %48 : vector<8x1xf32> to vector<8x64xf32>
    %50 = arith.addf %47, %49 : vector<8x64xf32>
    %c0_31 = arith.constant 0 : index
    %c0_32 = arith.constant 0 : index
    %51 = vector.load %arg5[%c0_31, %c0_32] : memref<8x1xf32, #tpu.memory_space<vmem>>, vector<8x1xf32>
    %c0_33 = arith.constant 0 : index
    %c0_34 = arith.constant 0 : index
    %52 = vector.load %arg4[%c0_33, %c0_34] : memref<8x1xf32, #tpu.memory_space<vmem>>, vector<8x1xf32>
    %53 = vector.broadcast %52 : vector<8x1xf32> to vector<8x64xf32>
    %54 = arith.mulf %53, %50 : vector<8x64xf32>
    %55 = math.sin %54 : vector<8x64xf32>
    %56 = arith.mulf %55, %55 : vector<8x64xf32>
    %57 = vector.broadcast %51 : vector<8x1xf32> to vector<8x64xf32>
    %58 = arith.mulf %57, %56 : vector<8x64xf32>
    %59 = arith.addf %50, %58 : vector<8x64xf32>
    %cst_35 = arith.constant 0.000000e+00 : f32
    %60 = vector.broadcast %cst_35 : f32 to vector<8x128xf32>
    %c0_36 = arith.constant 0 : index
    %c0_37 = arith.constant 0 : index
    %61 = vector.load %arg73[%c0_36, %c0_37] : memref<32x128xf32, #tpu.memory_space<vmem>>, vector<8x128xf32>
    tpu.vector_store %arg73[%c0_36, %c0_37], %60 {strides = array<i32>} : memref<32x128xf32, #tpu.memory_space<vmem>>, vector<8x128xf32>,
    %c0_38 = arith.constant 0 : index
    %c3_39 = arith.constant 3 : index
    %62 = vector.load %arg73[%c0_38, %c3_39] : memref<32x128xf32, #tpu.memory_space<vmem>>, vector<8x64xf32>
    tpu.vector_store %arg73[%c0_38, %c3_39], %59 {strides = array<i32>} : memref<32x128xf32, #tpu.memory_space<vmem>>, vector<8x64xf32>,
    %c0_40 = arith.constant 0 : index
    %c0_41 = arith.constant 0 : index
    %63 = vector.load %arg73[%c0_40, %c0_41] : memref<32x128xf32, #tpu.memory_space<vmem>>, vector<8x64xf32>
    %c0_42 = arith.constant 0 : index
    %c1_43 = arith.constant 1 : index
    %64 = vector.load %arg73[%c0_42, %c1_43] : memref<32x128xf32, #tpu.memory_space<vmem>>, vector<8x64xf32>
    %c0_44 = arith.constant 0 : index
    %c2_45 = arith.constant 2 : index
    %65 = vector.load %arg73[%c0_44, %c2_45] : memref<32x128xf32, #tpu.memory_space<vmem>>, vector<8x64xf32>
    %c0_46 = arith.constant 0 : index
    %c3_47 = arith.constant 3 : index
    %66 = vector.load %arg73[%c0_46, %c3_47] : memref<32x128xf32, #tpu.memory_space<vmem>>, vector<8x64xf32>
    %c0_48 = arith.constant 0 : index
    %c4_49 = arith.constant 4 : index
    %67 = vector.load %arg73[%c0_48, %c4_49] : memref<32x128xf32, #tpu.memory_space<vmem>>, vector<8x64xf32>
    %c0_50 = arith.constant 0 : index
    %c5_51 = arith.constant 5 : index
    %68 = vector.load %arg73[%c0_50, %c5_51] : memref<32x128xf32, #tpu.memory_space<vmem>>, vector<8x64xf32>
    %c0_52 = arith.constant 0 : index
    %c6_53 = arith.constant 6 : index
    %69 = vector.load %arg73[%c0_52, %c6_53] : memref<32x128xf32, #tpu.memory_space<vmem>>, vector<8x64xf32>
    %70 = tpu.concatenate %63, %64, %65, %66, %67, %68, %69 in 0 : vector<8x64xf32>, vector<8x64xf32>, vector<8x64xf32>, vector<8x64xf32>, vector<8x64xf32>, vector<8x64xf32>, vector<8x64xf32> -> vector<56x64xf32>
    %c0_54 = arith.constant 0 : index
    %c0_55 = arith.constant 0 : index
    %71 = vector.load %arg6[%c0_54, %c0_55] : memref<8x56xbf16, #tpu.memory_space<vmem>>, vector<8x56xbf16>
    %72 = arith.truncf %70 : vector<56x64xf32> to vector<56x64xbf16>
    %cst_56 = arith.constant dense<0.000000e+00> : vector<8x64xf32>
    %73 = tpu.matmul %71, %72, %cst_56 {dimension_numbers = #tpu.dot_dimension_numbers<[1], [0], [0], [1], [0, 0, 1, 1], [], []>} : vector<8x56xbf16>, vector<56x64xbf16>, vector<8x64xf32> -> vector<8x64xf32>
    %c0_57 = arith.constant 0 : index
    %c0_58 = arith.constant 0 : index
    %74 = vector.load %arg7[%c0_57, %c0_58] : memref<8x1xf32, #tpu.memory_space<vmem>>, vector<8x1xf32>
    %75 = vector.broadcast %74 : vector<8x1xf32> to vector<8x64xf32>
    %76 = arith.addf %73, %75 : vector<8x64xf32>
    %c0_59 = arith.constant 0 : index
    %c0_60 = arith.constant 0 : index
    %77 = vector.load %arg9[%c0_59, %c0_60] : memref<8x1xf32, #tpu.memory_space<vmem>>, vector<8x1xf32>
    %c0_61 = arith.constant 0 : index
    %c0_62 = arith.constant 0 : index
    %78 = vector.load %arg8[%c0_61, %c0_62] : memref<8x1xf32, #tpu.memory_space<vmem>>, vector<8x1xf32>
    %79 = vector.broadcast %78 : vector<8x1xf32> to vector<8x64xf32>
    %80 = arith.mulf %79, %76 : vector<8x64xf32>
    %81 = math.sin %80 : vector<8x64xf32>
    %82 = arith.mulf %81, %81 : vector<8x64xf32>
    %83 = vector.broadcast %77 : vector<8x1xf32> to vector<8x64xf32>
    %84 = arith.mulf %83, %82 : vector<8x64xf32>
    %85 = arith.addf %76, %84 : vector<8x64xf32>
    %c0_63 = arith.constant 0 : index
    %c0_64 = arith.constant 0 : index
    %86 = vector.load %arg10[%c0_63, %c0_64] : memref<8x8xbf16, #tpu.memory_space<vmem>>, vector<8x8xbf16>
    %87 = arith.truncf %85 : vector<8x64xf32> to vector<8x64xbf16>
    %cst_65 = arith.constant dense<0.000000e+00> : vector<8x64xf32>
    %88 = tpu.matmul %86, %87, %cst_65 {dimension_numbers = #tpu.dot_dimension_numbers<[1], [0], [0], [1], [0, 0, 1, 1], [], []>} : vector<8x8xbf16>, vector<8x64xbf16>, vector<8x64xf32> -> vector<8x64xf32>
    %c0_66 = arith.constant 0 : index
    %c0_67 = arith.constant 0 : index
    %89 = vector.load %arg11[%c0_66, %c0_67] : memref<8x1xf32, #tpu.memory_space<vmem>>, vector<8x1xf32>
    %90 = vector.broadcast %89 : vector<8x1xf32> to vector<8x64xf32>
    %91 = arith.addf %88, %90 : vector<8x64xf32>
    %92 = arith.addf %91, %50 : vector<8x64xf32>
    %c0_68 = arith.constant 0 : index
    %c0_69 = arith.constant 0 : index
    %93 = vector.load %arg13[%c0_68, %c0_69] : memref<8x1xf32, #tpu.memory_space<vmem>>, vector<8x1xf32>
    %c0_70 = arith.constant 0 : index
    %c0_71 = arith.constant 0 : index
    %94 = vector.load %arg12[%c0_70, %c0_71] : memref<8x1xf32, #tpu.memory_space<vmem>>, vector<8x1xf32>
    %95 = vector.broadcast %94 : vector<8x1xf32> to vector<8x64xf32>
    %96 = arith.mulf %95, %92 : vector<8x64xf32>
    %97 = math.sin %96 : vector<8x64xf32>
    %98 = arith.mulf %97, %97 : vector<8x64xf32>
    %99 = vector.broadcast %93 : vector<8x1xf32> to vector<8x64xf32>
    %100 = arith.mulf %99, %98 : vector<8x64xf32>
    %101 = arith.addf %92, %100 : vector<8x64xf32>
    %cst_72 = arith.constant 0.000000e+00 : f32
    %102 = vector.broadcast %cst_72 : f32 to vector<8x128xf32>
    %c0_73 = arith.constant 0 : index
    %c0_74 = arith.constant 0 : index
    %103 = vector.load %arg73[%c0_73, %c0_74] : memref<32x128xf32, #tpu.memory_space<vmem>>, vector<8x128xf32>
    tpu.vector_store %arg73[%c0_73, %c0_74], %102 {strides = array<i32>} : memref<32x128xf32, #tpu.memory_space<vmem>>, vector<8x128xf32>,
    %c0_75 = arith.constant 0 : index
    %c9 = arith.constant 9 : index
    %104 = vector.load %arg73[%c0_75, %c9] : memref<32x128xf32, #tpu.memory_space<vmem>>, vector<8x64xf32>
    tpu.vector_store %arg73[%c0_75, %c9], %101 {strides = array<i32>} : memref<32x128xf32, #tpu.memory_space<vmem>>, vector<8x64xf32>,
    %c0_76 = arith.constant 0 : index
    %c0_77 = arith.constant 0 : index
    %105 = vector.load %arg73[%c0_76, %c0_77] : memref<32x128xf32, #tpu.memory_space<vmem>>, vector<8x64xf32>
    %c0_78 = arith.constant 0 : index
    %c3_79 = arith.constant 3 : index
    %106 = vector.load %arg73[%c0_78, %c3_79] : memref<32x128xf32, #tpu.memory_space<vmem>>, vector<8x64xf32>
    %c0_80 = arith.constant 0 : index
    %c6_81 = arith.constant 6 : index
    %107 = vector.load %arg73[%c0_80, %c6_81] : memref<32x128xf32, #tpu.memory_space<vmem>>, vector<8x64xf32>
    %c0_82 = arith.constant 0 : index
    %c9_83 = arith.constant 9 : index
    %108 = vector.load %arg73[%c0_82, %c9_83] : memref<32x128xf32, #tpu.memory_space<vmem>>, vector<8x64xf32>
    %c0_84 = arith.constant 0 : index
    %c12 = arith.constant 12 : index
    %109 = vector.load %arg73[%c0_84, %c12] : memref<32x128xf32, #tpu.memory_space<vmem>>, vector<8x64xf32>
    %c0_85 = arith.constant 0 : index
    %c15 = arith.constant 15 : index
    %110 = vector.load %arg73[%c0_85, %c15] : memref<32x128xf32, #tpu.memory_space<vmem>>, vector<8x64xf32>
    %c0_86 = arith.constant 0 : index
    %c18 = arith.constant 18 : index
    %111 = vector.load %arg73[%c0_86, %c18] : memref<32x128xf32, #tpu.memory_space<vmem>>, vector<8x64xf32>
    %112 = tpu.concatenate %105, %106, %107, %108, %109, %110, %111 in 0 : vector<8x64xf32>, vector<8x64xf32>, vector<8x64xf32>, vector<8x64xf32>, vector<8x64xf32>, vector<8x64xf32>, vector<8x64xf32> -> vector<56x64xf32>
    %c0_87 = arith.constant 0 : index
    %c0_88 = arith.constant 0 : index
    %113 = vector.load %arg14[%c0_87, %c0_88] : memref<8x56xbf16, #tpu.memory_space<vmem>>, vector<8x56xbf16>
    %114 = arith.truncf %112 : vector<56x64xf32> to vector<56x64xbf16>
    %cst_89 = arith.constant dense<0.000000e+00> : vector<8x64xf32>
    %115 = tpu.matmul %113, %114, %cst_89 {dimension_numbers = #tpu.dot_dimension_numbers<[1], [0], [0], [1], [0, 0, 1, 1], [], []>} : vector<8x56xbf16>, vector<56x64xbf16>, vector<8x64xf32> -> vector<8x64xf32>
    %c0_90 = arith.constant 0 : index
    %c0_91 = arith.constant 0 : index
    %116 = vector.load %arg15[%c0_90, %c0_91] : memref<8x1xf32, #tpu.memory_space<vmem>>, vector<8x1xf32>
    %117 = vector.broadcast %116 : vector<8x1xf32> to vector<8x64xf32>
    %118 = arith.addf %115, %117 : vector<8x64xf32>
    %c0_92 = arith.constant 0 : index
    %c0_93 = arith.constant 0 : index
    %119 = vector.load %arg17[%c0_92, %c0_93] : memref<8x1xf32, #tpu.memory_space<vmem>>, vector<8x1xf32>
    %c0_94 = arith.constant 0 : index
    %c0_95 = arith.constant 0 : index
    %120 = vector.load %arg16[%c0_94, %c0_95] : memref<8x1xf32, #tpu.memory_space<vmem>>, vector<8x1xf32>
    %121 = vector.broadcast %120 : vector<8x1xf32> to vector<8x64xf32>
    %122 = arith.mulf %121, %118 : vector<8x64xf32>
    %123 = math.sin %122 : vector<8x64xf32>
    %124 = arith.mulf %123, %123 : vector<8x64xf32>
    %125 = vector.broadcast %119 : vector<8x1xf32> to vector<8x64xf32>
    %126 = arith.mulf %125, %124 : vector<8x64xf32>
    %127 = arith.addf %118, %126 : vector<8x64xf32>
    %c0_96 = arith.constant 0 : index
    %c0_97 = arith.constant 0 : index
    %128 = vector.load %arg18[%c0_96, %c0_97] : memref<8x8xbf16, #tpu.memory_space<vmem>>, vector<8x8xbf16>
    %129 = arith.truncf %127 : vector<8x64xf32> to vector<8x64xbf16>
    %cst_98 = arith.constant dense<0.000000e+00> : vector<8x64xf32>
    %130 = tpu.matmul %128, %129, %cst_98 {dimension_numbers = #tpu.dot_dimension_numbers<[1], [0], [0], [1], [0, 0, 1, 1], [], []>} : vector<8x8xbf16>, vector<8x64xbf16>, vector<8x64xf32> -> vector<8x64xf32>
    %c0_99 = arith.constant 0 : index
    %c0_100 = arith.constant 0 : index
    %131 = vector.load %arg19[%c0_99, %c0_100] : memref<8x1xf32, #tpu.memory_space<vmem>>, vector<8x1xf32>
    %132 = vector.broadcast %131 : vector<8x1xf32> to vector<8x64xf32>
    %133 = arith.addf %130, %132 : vector<8x64xf32>
    %134 = arith.addf %133, %92 : vector<8x64xf32>
    %c0_101 = arith.constant 0 : index
    %c0_102 = arith.constant 0 : index
    %135 = vector.load %arg21[%c0_101, %c0_102] : memref<8x1xf32, #tpu.memory_space<vmem>>, vector<8x1xf32>
    %c0_103 = arith.constant 0 : index
    %c0_104 = arith.constant 0 : index
    %136 = vector.load %arg20[%c0_103, %c0_104] : memref<8x1xf32, #tpu.memory_space<vmem>>, vector<8x1xf32>
    %137 = vector.broadcast %136 : vector<8x1xf32> to vector<8x64xf32>
    %138 = arith.mulf %137, %134 : vector<8x64xf32>
    %139 = math.sin %138 : vector<8x64xf32>
    %140 = arith.mulf %139, %139 : vector<8x64xf32>
    %141 = vector.broadcast %135 : vector<8x1xf32> to vector<8x64xf32>
    %142 = arith.mulf %141, %140 : vector<8x64xf32>
    %143 = arith.addf %134, %142 : vector<8x64xf32>
    %cst_105 = arith.constant 0.000000e+00 : f32
    %144 = vector.broadcast %cst_105 : f32 to vector<8x128xf32>
    %c0_106 = arith.constant 0 : index
    %c0_107 = arith.constant 0 : index
    %145 = vector.load %arg73[%c0_106, %c0_107] : memref<32x128xf32, #tpu.memory_space<vmem>>, vector<8x128xf32>
    tpu.vector_store %arg73[%c0_106, %c0_107], %144 {strides = array<i32>} : memref<32x128xf32, #tpu.memory_space<vmem>>, vector<8x128xf32>,
    %c0_108 = arith.constant 0 : index
    %c27 = arith.constant 27 : index
    %146 = vector.load %arg73[%c0_108, %c27] : memref<32x128xf32, #tpu.memory_space<vmem>>, vector<8x64xf32>
    tpu.vector_store %arg73[%c0_108, %c27], %143 {strides = array<i32>} : memref<32x128xf32, #tpu.memory_space<vmem>>, vector<8x64xf32>,
    %c0_109 = arith.constant 0 : index
    %c0_110 = arith.constant 0 : index
    %147 = vector.load %arg73[%c0_109, %c0_110] : memref<32x128xf32, #tpu.memory_space<vmem>>, vector<8x64xf32>
    %c0_111 = arith.constant 0 : index
    %c9_112 = arith.constant 9 : index
    %148 = vector.load %arg73[%c0_111, %c9_112] : memref<32x128xf32, #tpu.memory_space<vmem>>, vector<8x64xf32>
    %c0_113 = arith.constant 0 : index
    %c18_114 = arith.constant 18 : index
    %149 = vector.load %arg73[%c0_113, %c18_114] : memref<32x128xf32, #tpu.memory_space<vmem>>, vector<8x64xf32>
    %c0_115 = arith.constant 0 : index
    %c27_116 = arith.constant 27 : index
    %150 = vector.load %arg73[%c0_115, %c27_116] : memref<32x128xf32, #tpu.memory_space<vmem>>, vector<8x64xf32>
    %c0_117 = arith.constant 0 : index
    %c36 = arith.constant 36 : index
    %151 = vector.load %arg73[%c0_117, %c36] : memref<32x128xf32, #tpu.memory_space<vmem>>, vector<8x64xf32>
    %c0_118 = arith.constant 0 : index
    %c45 = arith.constant 45 : index
    %152 = vector.load %arg73[%c0_118, %c45] : memref<32x128xf32, #tpu.memory_space<vmem>>, vector<8x64xf32>
    %c0_119 = arith.constant 0 : index
    %c54 = arith.constant 54 : index
    %153 = vector.load %arg73[%c0_119, %c54] : memref<32x128xf32, #tpu.memory_space<vmem>>, vector<8x64xf32>
    %154 = tpu.concatenate %147, %148, %149, %150, %151, %152, %153 in 0 : vector<8x64xf32>, vector<8x64xf32>, vector<8x64xf32>, vector<8x64xf32>, vector<8x64xf32>, vector<8x64xf32>, vector<8x64xf32> -> vector<56x64xf32>
    %c0_120 = arith.constant 0 : index
    %c0_121 = arith.constant 0 : index
    %155 = vector.load %arg22[%c0_120, %c0_121] : memref<8x56xbf16, #tpu.memory_space<vmem>>, vector<8x56xbf16>
    %156 = arith.truncf %154 : vector<56x64xf32> to vector<56x64xbf16>
    %cst_122 = arith.constant dense<0.000000e+00> : vector<8x64xf32>
    %157 = tpu.matmul %155, %156, %cst_122 {dimension_numbers = #tpu.dot_dimension_numbers<[1], [0], [0], [1], [0, 0, 1, 1], [], []>} : vector<8x56xbf16>, vector<56x64xbf16>, vector<8x64xf32> -> vector<8x64xf32>
    %c0_123 = arith.constant 0 : index
    %c0_124 = arith.constant 0 : index
    %158 = vector.load %arg23[%c0_123, %c0_124] : memref<8x1xf32, #tpu.memory_space<vmem>>, vector<8x1xf32>
    %159 = vector.broadcast %158 : vector<8x1xf32> to vector<8x64xf32>
    %160 = arith.addf %157, %159 : vector<8x64xf32>
    %c0_125 = arith.constant 0 : index
    %c0_126 = arith.constant 0 : index
    %161 = vector.load %arg25[%c0_125, %c0_126] : memref<8x1xf32, #tpu.memory_space<vmem>>, vector<8x1xf32>
    %c0_127 = arith.constant 0 : index
    %c0_128 = arith.constant 0 : index
    %162 = vector.load %arg24[%c0_127, %c0_128] : memref<8x1xf32, #tpu.memory_space<vmem>>, vector<8x1xf32>
    %163 = vector.broadcast %162 : vector<8x1xf32> to vector<8x64xf32>
    %164 = arith.mulf %163, %160 : vector<8x64xf32>
    %165 = math.sin %164 : vector<8x64xf32>
    %166 = arith.mulf %165, %165 : vector<8x64xf32>
    %167 = vector.broadcast %161 : vector<8x1xf32> to vector<8x64xf32>
    %168 = arith.mulf %167, %166 : vector<8x64xf32>
    %169 = arith.addf %160, %168 : vector<8x64xf32>
    %c0_129 = arith.constant 0 : index
    %c0_130 = arith.constant 0 : index
    %170 = vector.load %arg26[%c0_129, %c0_130] : memref<8x8xbf16, #tpu.memory_space<vmem>>, vector<8x8xbf16>
    %171 = arith.truncf %169 : vector<8x64xf32> to vector<8x64xbf16>
    %cst_131 = arith.constant dense<0.000000e+00> : vector<8x64xf32>
    %172 = tpu.matmul %170, %171, %cst_131 {dimension_numbers = #tpu.dot_dimension_numbers<[1], [0], [0], [1], [0, 0, 1, 1], [], []>} : vector<8x8xbf16>, vector<8x64xbf16>, vector<8x64xf32> -> vector<8x64xf32>
    %c0_132 = arith.constant 0 : index
    %c0_133 = arith.constant 0 : index
    %173 = vector.load %arg27[%c0_132, %c0_133] : memref<8x1xf32, #tpu.memory_space<vmem>>, vector<8x1xf32>
    %174 = vector.broadcast %173 : vector<8x1xf32> to vector<8x64xf32>
    %175 = arith.addf %172, %174 : vector<8x64xf32>
    %176 = arith.addf %175, %134 : vector<8x64xf32>
    %c0_134 = arith.constant 0 : index
    %c0_135 = arith.constant 0 : index
    %177 = vector.load %arg29[%c0_134, %c0_135] : memref<8x1xf32, #tpu.memory_space<vmem>>, vector<8x1xf32>
    %c0_136 = arith.constant 0 : index
    %c0_137 = arith.constant 0 : index
    %178 = vector.load %arg28[%c0_136, %c0_137] : memref<8x1xf32, #tpu.memory_space<vmem>>, vector<8x1xf32>
    %179 = vector.broadcast %178 : vector<8x1xf32> to vector<8x64xf32>
    %180 = arith.mulf %179, %176 : vector<8x64xf32>
    %181 = math.sin %180 : vector<8x64xf32>
    %182 = arith.mulf %181, %181 : vector<8x64xf32>
    %183 = vector.broadcast %177 : vector<8x1xf32> to vector<8x64xf32>
    %184 = arith.mulf %183, %182 : vector<8x64xf32>
    %185 = arith.addf %176, %184 : vector<8x64xf32>
    %cst_138 = arith.constant 0.000000e+00 : f32
    %186 = vector.broadcast %cst_138 : f32 to vector<8x128xf32>
    %c0_139 = arith.constant 0 : index
    %c0_140 = arith.constant 0 : index
    %187 = vector.load %arg73[%c0_139, %c0_140] : memref<32x128xf32, #tpu.memory_space<vmem>>, vector<8x128xf32>
    tpu.vector_store %arg73[%c0_139, %c0_140], %186 {strides = array<i32>} : memref<32x128xf32, #tpu.memory_space<vmem>>, vector<8x128xf32>,
    %c0_141 = arith.constant 0 : index
    %c1_142 = arith.constant 1 : index
    %188 = vector.load %arg73[%c0_141, %c1_142] : memref<32x128xf32, #tpu.memory_space<vmem>>, vector<8x64xf32>
    tpu.vector_store %arg73[%c0_141, %c1_142], %185 {strides = array<i32>} : memref<32x128xf32, #tpu.memory_space<vmem>>, vector<8x64xf32>,
    %c0_143 = arith.constant 0 : index
    %c0_144 = arith.constant 0 : index
    %189 = vector.load %arg73[%c0_143, %c0_144] : memref<32x128xf32, #tpu.memory_space<vmem>>, vector<8x63xf32>
    %c0_145 = arith.constant 0 : index
    %c1_146 = arith.constant 1 : index
    %190 = vector.load %arg73[%c0_145, %c1_146] : memref<32x128xf32, #tpu.memory_space<vmem>>, vector<8x63xf32>
    %c0_147 = arith.constant 0 : index
    %c2_148 = arith.constant 2 : index
    %191 = vector.load %arg73[%c0_147, %c2_148] : memref<32x128xf32, #tpu.memory_space<vmem>>, vector<8x63xf32>
    %c0_149 = arith.constant 0 : index
    %c3_150 = arith.constant 3 : index
    %192 = vector.load %arg73[%c0_149, %c3_150] : memref<32x128xf32, #tpu.memory_space<vmem>>, vector<8x63xf32>
    %193 = tpu.concatenate %189, %190, %191, %192 in 0 : vector<8x63xf32>, vector<8x63xf32>, vector<8x63xf32>, vector<8x63xf32> -> vector<32x63xf32>
    %c0_151 = arith.constant 0 : index
    %c0_152 = arith.constant 0 : index
    %194 = vector.load %arg30[%c0_151, %c0_152] : memref<16x32xbf16, #tpu.memory_space<vmem>>, vector<16x32xbf16>
    %195 = arith.truncf %193 : vector<32x63xf32> to vector<32x63xbf16>
    %cst_153 = arith.constant dense<0.000000e+00> : vector<16x63xf32>
    %196 = tpu.matmul %194, %195, %cst_153 {dimension_numbers = #tpu.dot_dimension_numbers<[1], [0], [0], [1], [0, 0, 1, 1], [], []>} : vector<16x32xbf16>, vector<32x63xbf16>, vector<16x63xf32> -> vector<16x63xf32>
    %c0_154 = arith.constant 0 : index
    %c0_155 = arith.constant 0 : index
    %197 = vector.load %arg31[%c0_154, %c0_155] : memref<16x1xf32, #tpu.memory_space<vmem>>, vector<16x1xf32>
    %198 = vector.broadcast %197 : vector<16x1xf32> to vector<16x63xf32>
    %199 = arith.addf %196, %198 : vector<16x63xf32>
    %200 = tpu.iota {dimensions = array<i32: 0>} : vector<63x32xi32>
    %201 = tpu.iota {dimensions = array<i32: 1>} : vector<63x32xi32>
    %c2_i32 = arith.constant 2 : i32
    %202 = vector.broadcast %c2_i32 : i32 to vector<63x32xi32>
    %203 = arith.muli %201, %202 : vector<63x32xi32>
    %204 = arith.cmpi eq, %200, %203 : vector<63x32xi32>
    %205 = arith.extui %204 : vector<63x32xi1> to vector<63x32xi32>
    %206 = arith.sitofp %205 : vector<63x32xi32> to vector<63x32xf32>
    %cst_156 = arith.constant dense<0.000000e+00> : vector<16x32xf32>
    %207 = tpu.matmul %199, %206, %cst_156 {dimension_numbers = #tpu.dot_dimension_numbers<[1], [0], [0], [1], [0, 0, 1, 1], [], []>} : vector<16x63xf32>, vector<63x32xf32>, vector<16x32xf32> -> vector<16x32xf32>
    %c0_157 = arith.constant 0 : index
    %c0_158 = arith.constant 0 : index
    %208 = vector.load %arg33[%c0_157, %c0_158] : memref<16x1xf32, #tpu.memory_space<vmem>>, vector<16x1xf32>
    %c0_159 = arith.constant 0 : index
    %c0_160 = arith.constant 0 : index
    %209 = vector.load %arg32[%c0_159, %c0_160] : memref<16x1xf32, #tpu.memory_space<vmem>>, vector<16x1xf32>
    %210 = vector.broadcast %209 : vector<16x1xf32> to vector<16x32xf32>
    %211 = arith.mulf %210, %207 : vector<16x32xf32>
    %212 = math.sin %211 : vector<16x32xf32>
    %213 = arith.mulf %212, %212 : vector<16x32xf32>
    %214 = vector.broadcast %208 : vector<16x1xf32> to vector<16x32xf32>
    %215 = arith.mulf %214, %213 : vector<16x32xf32>
    %216 = arith.addf %207, %215 : vector<16x32xf32>
    %cst_161 = arith.constant 0.000000e+00 : f32
    %217 = vector.broadcast %cst_161 : f32 to vector<16x128xf32>
    %c0_162 = arith.constant 0 : index
    %c0_163 = arith.constant 0 : index
    %218 = vector.load %arg73[%c0_162, %c0_163] : memref<32x128xf32, #tpu.memory_space<vmem>>, vector<16x128xf32>
    tpu.vector_store %arg73[%c0_162, %c0_163], %217 {strides = array<i32>} : memref<32x128xf32, #tpu.memory_space<vmem>>, vector<16x128xf32>,
    %c0_164 = arith.constant 0 : index
    %c3_165 = arith.constant 3 : index
    %219 = vector.load %arg73[%c0_164, %c3_165] : memref<32x128xf32, #tpu.memory_space<vmem>>, vector<16x32xf32>
    tpu.vector_store %arg73[%c0_164, %c3_165], %216 {strides = array<i32>} : memref<32x128xf32, #tpu.memory_space<vmem>>, vector<16x32xf32>,
    %c0_166 = arith.constant 0 : index
    %c0_167 = arith.constant 0 : index
    %220 = vector.load %arg73[%c0_166, %c0_167] : memref<32x128xf32, #tpu.memory_space<vmem>>, vector<16x32xf32>
    %c0_168 = arith.constant 0 : index
    %c1_169 = arith.constant 1 : index
    %221 = vector.load %arg73[%c0_168, %c1_169] : memref<32x128xf32, #tpu.memory_space<vmem>>, vector<16x32xf32>
    %c0_170 = arith.constant 0 : index
    %c2_171 = arith.constant 2 : index
    %222 = vector.load %arg73[%c0_170, %c2_171] : memref<32x128xf32, #tpu.memory_space<vmem>>, vector<16x32xf32>
    %c0_172 = arith.constant 0 : index
    %c3_173 = arith.constant 3 : index
    %223 = vector.load %arg73[%c0_172, %c3_173] : memref<32x128xf32, #tpu.memory_space<vmem>>, vector<16x32xf32>
    %c0_174 = arith.constant 0 : index
    %c4_175 = arith.constant 4 : index
    %224 = vector.load %arg73[%c0_174, %c4_175] : memref<32x128xf32, #tpu.memory_space<vmem>>, vector<16x32xf32>
    %c0_176 = arith.constant 0 : index
    %c5_177 = arith.constant 5 : index
    %225 = vector.load %arg73[%c0_176, %c5_177] : memref<32x128xf32, #tpu.memory_space<vmem>>, vector<16x32xf32>
    %c0_178 = arith.constant 0 : index
    %c6_179 = arith.constant 6 : index
    %226 = vector.load %arg73[%c0_178, %c6_179] : memref<32x128xf32, #tpu.memory_space<vmem>>, vector<16x32xf32>
    %227 = tpu.concatenate %220, %221, %222, %223, %224, %225, %226 in 0 : vector<16x32xf32>, vector<16x32xf32>, vector<16x32xf32>, vector<16x32xf32>, vector<16x32xf32>, vector<16x32xf32>, vector<16x32xf32> -> vector<112x32xf32>
    %c0_180 = arith.constant 0 : index
    %c0_181 = arith.constant 0 : index
    %228 = vector.load %arg34[%c0_180, %c0_181] : memref<16x112xbf16, #tpu.memory_space<vmem>>, vector<16x112xbf16>
    %229 = arith.truncf %227 : vector<112x32xf32> to vector<112x32xbf16>
    %cst_182 = arith.constant dense<0.000000e+00> : vector<16x32xf32>
    %230 = tpu.matmul %228, %229, %cst_182 {dimension_numbers = #tpu.dot_dimension_numbers<[1], [0], [0], [1], [0, 0, 1, 1], [], []>} : vector<16x112xbf16>, vector<112x32xbf16>, vector<16x32xf32> -> vector<16x32xf32>
    %c0_183 = arith.constant 0 : index
    %c0_184 = arith.constant 0 : index
    %231 = vector.load %arg35[%c0_183, %c0_184] : memref<16x1xf32, #tpu.memory_space<vmem>>, vector<16x1xf32>
    %232 = vector.broadcast %231 : vector<16x1xf32> to vector<16x32xf32>
    %233 = arith.addf %230, %232 : vector<16x32xf32>
    %c0_185 = arith.constant 0 : index
    %c0_186 = arith.constant 0 : index
    %234 = vector.load %arg37[%c0_185, %c0_186] : memref<16x1xf32, #tpu.memory_space<vmem>>, vector<16x1xf32>
    %c0_187 = arith.constant 0 : index
    %c0_188 = arith.constant 0 : index
    %235 = vector.load %arg36[%c0_187, %c0_188] : memref<16x1xf32, #tpu.memory_space<vmem>>, vector<16x1xf32>
    %236 = vector.broadcast %235 : vector<16x1xf32> to vector<16x32xf32>
    %237 = arith.mulf %236, %233 : vector<16x32xf32>
    %238 = math.sin %237 : vector<16x32xf32>
    %239 = arith.mulf %238, %238 : vector<16x32xf32>
    %240 = vector.broadcast %234 : vector<16x1xf32> to vector<16x32xf32>
    %241 = arith.mulf %240, %239 : vector<16x32xf32>
    %242 = arith.addf %233, %241 : vector<16x32xf32>
    %c0_189 = arith.constant 0 : index
    %c0_190 = arith.constant 0 : index
    %243 = vector.load %arg38[%c0_189, %c0_190] : memref<16x16xbf16, #tpu.memory_space<vmem>>, vector<16x16xbf16>
    %244 = arith.truncf %242 : vector<16x32xf32> to vector<16x32xbf16>
    %cst_191 = arith.constant dense<0.000000e+00> : vector<16x32xf32>
    %245 = tpu.matmul %243, %244, %cst_191 {dimension_numbers = #tpu.dot_dimension_numbers<[1], [0], [0], [1], [0, 0, 1, 1], [], []>} : vector<16x16xbf16>, vector<16x32xbf16>, vector<16x32xf32> -> vector<16x32xf32>
    %c0_192 = arith.constant 0 : index
    %c0_193 = arith.constant 0 : index
    %246 = vector.load %arg39[%c0_192, %c0_193] : memref<16x1xf32, #tpu.memory_space<vmem>>, vector<16x1xf32>
    %247 = vector.broadcast %246 : vector<16x1xf32> to vector<16x32xf32>
    %248 = arith.addf %245, %247 : vector<16x32xf32>
    %249 = arith.addf %248, %207 : vector<16x32xf32>
    %c0_194 = arith.constant 0 : index
    %c0_195 = arith.constant 0 : index
    %250 = vector.load %arg41[%c0_194, %c0_195] : memref<16x1xf32, #tpu.memory_space<vmem>>, vector<16x1xf32>
    %c0_196 = arith.constant 0 : index
    %c0_197 = arith.constant 0 : index
    %251 = vector.load %arg40[%c0_196, %c0_197] : memref<16x1xf32, #tpu.memory_space<vmem>>, vector<16x1xf32>
    %252 = vector.broadcast %251 : vector<16x1xf32> to vector<16x32xf32>
    %253 = arith.mulf %252, %249 : vector<16x32xf32>
    %254 = math.sin %253 : vector<16x32xf32>
    %255 = arith.mulf %254, %254 : vector<16x32xf32>
    %256 = vector.broadcast %250 : vector<16x1xf32> to vector<16x32xf32>
    %257 = arith.mulf %256, %255 : vector<16x32xf32>
    %258 = arith.addf %249, %257 : vector<16x32xf32>
    %cst_198 = arith.constant 0.000000e+00 : f32
    %259 = vector.broadcast %cst_198 : f32 to vector<16x128xf32>
    %c0_199 = arith.constant 0 : index
    %c0_200 = arith.constant 0 : index
    %260 = vector.load %arg73[%c0_199, %c0_200] : memref<32x128xf32, #tpu.memory_space<vmem>>, vector<16x128xf32>
    tpu.vector_store %arg73[%c0_199, %c0_200], %259 {strides = array<i32>} : memref<32x128xf32, #tpu.memory_space<vmem>>, vector<16x128xf32>,
    %c0_201 = arith.constant 0 : index
    %c9_202 = arith.constant 9 : index
    %261 = vector.load %arg73[%c0_201, %c9_202] : memref<32x128xf32, #tpu.memory_space<vmem>>, vector<16x32xf32>
    tpu.vector_store %arg73[%c0_201, %c9_202], %258 {strides = array<i32>} : memref<32x128xf32, #tpu.memory_space<vmem>>, vector<16x32xf32>,
    %c0_203 = arith.constant 0 : index
    %c0_204 = arith.constant 0 : index
    %262 = vector.load %arg73[%c0_203, %c0_204] : memref<32x128xf32, #tpu.memory_space<vmem>>, vector<16x32xf32>
    %c0_205 = arith.constant 0 : index
    %c3_206 = arith.constant 3 : index
    %263 = vector.load %arg73[%c0_205, %c3_206] : memref<32x128xf32, #tpu.memory_space<vmem>>, vector<16x32xf32>
    %c0_207 = arith.constant 0 : index
    %c6_208 = arith.constant 6 : index
    %264 = vector.load %arg73[%c0_207, %c6_208] : memref<32x128xf32, #tpu.memory_space<vmem>>, vector<16x32xf32>
    %c0_209 = arith.constant 0 : index
    %c9_210 = arith.constant 9 : index
    %265 = vector.load %arg73[%c0_209, %c9_210] : memref<32x128xf32, #tpu.memory_space<vmem>>, vector<16x32xf32>
    %c0_211 = arith.constant 0 : index
    %c12_212 = arith.constant 12 : index
    %266 = vector.load %arg73[%c0_211, %c12_212] : memref<32x128xf32, #tpu.memory_space<vmem>>, vector<16x32xf32>
    %c0_213 = arith.constant 0 : index
    %c15_214 = arith.constant 15 : index
    %267 = vector.load %arg73[%c0_213, %c15_214] : memref<32x128xf32, #tpu.memory_space<vmem>>, vector<16x32xf32>
    %c0_215 = arith.constant 0 : index
    %c18_216 = arith.constant 18 : index
    %268 = vector.load %arg73[%c0_215, %c18_216] : memref<32x128xf32, #tpu.memory_space<vmem>>, vector<16x32xf32>
    %269 = tpu.concatenate %262, %263, %264, %265, %266, %267, %268 in 0 : vector<16x32xf32>, vector<16x32xf32>, vector<16x32xf32>, vector<16x32xf32>, vector<16x32xf32>, vector<16x32xf32>, vector<16x32xf32> -> vector<112x32xf32>
    %c0_217 = arith.constant 0 : index
    %c0_218 = arith.constant 0 : index
    %270 = vector.load %arg42[%c0_217, %c0_218] : memref<16x112xbf16, #tpu.memory_space<vmem>>, vector<16x112xbf16>
    %271 = arith.truncf %269 : vector<112x32xf32> to vector<112x32xbf16>
    %cst_219 = arith.constant dense<0.000000e+00> : vector<16x32xf32>
    %272 = tpu.matmul %270, %271, %cst_219 {dimension_numbers = #tpu.dot_dimension_numbers<[1], [0], [0], [1], [0, 0, 1, 1], [], []>} : vector<16x112xbf16>, vector<112x32xbf16>, vector<16x32xf32> -> vector<16x32xf32>
    %c0_220 = arith.constant 0 : index
    %c0_221 = arith.constant 0 : index
    %273 = vector.load %arg43[%c0_220, %c0_221] : memref<16x1xf32, #tpu.memory_space<vmem>>, vector<16x1xf32>
    %274 = vector.broadcast %273 : vector<16x1xf32> to vector<16x32xf32>
    %275 = arith.addf %272, %274 : vector<16x32xf32>
    %c0_222 = arith.constant 0 : index
    %c0_223 = arith.constant 0 : index
    %276 = vector.load %arg45[%c0_222, %c0_223] : memref<16x1xf32, #tpu.memory_space<vmem>>, vector<16x1xf32>
    %c0_224 = arith.constant 0 : index
    %c0_225 = arith.constant 0 : index
    %277 = vector.load %arg44[%c0_224, %c0_225] : memref<16x1xf32, #tpu.memory_space<vmem>>, vector<16x1xf32>
    %278 = vector.broadcast %277 : vector<16x1xf32> to vector<16x32xf32>
    %279 = arith.mulf %278, %275 : vector<16x32xf32>
    %280 = math.sin %279 : vector<16x32xf32>
    %281 = arith.mulf %280, %280 : vector<16x32xf32>
    %282 = vector.broadcast %276 : vector<16x1xf32> to vector<16x32xf32>
    %283 = arith.mulf %282, %281 : vector<16x32xf32>
    %284 = arith.addf %275, %283 : vector<16x32xf32>
    %c0_226 = arith.constant 0 : index
    %c0_227 = arith.constant 0 : index
    %285 = vector.load %arg46[%c0_226, %c0_227] : memref<16x16xbf16, #tpu.memory_space<vmem>>, vector<16x16xbf16>
    %286 = arith.truncf %284 : vector<16x32xf32> to vector<16x32xbf16>
    %cst_228 = arith.constant dense<0.000000e+00> : vector<16x32xf32>
    %287 = tpu.matmul %285, %286, %cst_228 {dimension_numbers = #tpu.dot_dimension_numbers<[1], [0], [0], [1], [0, 0, 1, 1], [], []>} : vector<16x16xbf16>, vector<16x32xbf16>, vector<16x32xf32> -> vector<16x32xf32>
    %c0_229 = arith.constant 0 : index
    %c0_230 = arith.constant 0 : index
    %288 = vector.load %arg47[%c0_229, %c0_230] : memref<16x1xf32, #tpu.memory_space<vmem>>, vector<16x1xf32>
    %289 = vector.broadcast %288 : vector<16x1xf32> to vector<16x32xf32>
    %290 = arith.addf %287, %289 : vector<16x32xf32>
    %291 = arith.addf %290, %249 : vector<16x32xf32>
    %c0_231 = arith.constant 0 : index
    %c0_232 = arith.constant 0 : index
    %292 = vector.load %arg49[%c0_231, %c0_232] : memref<16x1xf32, #tpu.memory_space<vmem>>, vector<16x1xf32>
    %c0_233 = arith.constant 0 : index
    %c0_234 = arith.constant 0 : index
    %293 = vector.load %arg48[%c0_233, %c0_234] : memref<16x1xf32, #tpu.memory_space<vmem>>, vector<16x1xf32>
    %294 = vector.broadcast %293 : vector<16x1xf32> to vector<16x32xf32>
    %295 = arith.mulf %294, %291 : vector<16x32xf32>
    %296 = math.sin %295 : vector<16x32xf32>
    %297 = arith.mulf %296, %296 : vector<16x32xf32>
    %298 = vector.broadcast %292 : vector<16x1xf32> to vector<16x32xf32>
    %299 = arith.mulf %298, %297 : vector<16x32xf32>
    %300 = arith.addf %291, %299 : vector<16x32xf32>
    %cst_235 = arith.constant 0.000000e+00 : f32
    %301 = vector.broadcast %cst_235 : f32 to vector<16x128xf32>
    %c0_236 = arith.constant 0 : index
    %c0_237 = arith.constant 0 : index
    %302 = vector.load %arg73[%c0_236, %c0_237] : memref<32x128xf32, #tpu.memory_space<vmem>>, vector<16x128xf32>
    tpu.vector_store %arg73[%c0_236, %c0_237], %301 {strides = array<i32>} : memref<32x128xf32, #tpu.memory_space<vmem>>, vector<16x128xf32>,
    %c0_238 = arith.constant 0 : index
    %c27_239 = arith.constant 27 : index
    %303 = vector.load %arg73[%c0_238, %c27_239] : memref<32x128xf32, #tpu.memory_space<vmem>>, vector<16x32xf32>
    tpu.vector_store %arg73[%c0_238, %c27_239], %300 {strides = array<i32>} : memref<32x128xf32, #tpu.memory_space<vmem>>, vector<16x32xf32>,
    %c0_240 = arith.constant 0 : index
    %c0_241 = arith.constant 0 : index
    %304 = vector.load %arg73[%c0_240, %c0_241] : memref<32x128xf32, #tpu.memory_space<vmem>>, vector<16x32xf32>
    %c0_242 = arith.constant 0 : index
    %c9_243 = arith.constant 9 : index
    %305 = vector.load %arg73[%c0_242, %c9_243] : memref<32x128xf32, #tpu.memory_space<vmem>>, vector<16x32xf32>
    %c0_244 = arith.constant 0 : index
    %c18_245 = arith.constant 18 : index
    %306 = vector.load %arg73[%c0_244, %c18_245] : memref<32x128xf32, #tpu.memory_space<vmem>>, vector<16x32xf32>
    %c0_246 = arith.constant 0 : index
    %c27_247 = arith.constant 27 : index
    %307 = vector.load %arg73[%c0_246, %c27_247] : memref<32x128xf32, #tpu.memory_space<vmem>>, vector<16x32xf32>
    %c0_248 = arith.constant 0 : index
    %c36_249 = arith.constant 36 : index
    %308 = vector.load %arg73[%c0_248, %c36_249] : memref<32x128xf32, #tpu.memory_space<vmem>>, vector<16x32xf32>
    %c0_250 = arith.constant 0 : index
    %c45_251 = arith.constant 45 : index
    %309 = vector.load %arg73[%c0_250, %c45_251] : memref<32x128xf32, #tpu.memory_space<vmem>>, vector<16x32xf32>
    %c0_252 = arith.constant 0 : index
    %c54_253 = arith.constant 54 : index
    %310 = vector.load %arg73[%c0_252, %c54_253] : memref<32x128xf32, #tpu.memory_space<vmem>>, vector<16x32xf32>
    %311 = tpu.concatenate %304, %305, %306, %307, %308, %309, %310 in 0 : vector<16x32xf32>, vector<16x32xf32>, vector<16x32xf32>, vector<16x32xf32>, vector<16x32xf32>, vector<16x32xf32>, vector<16x32xf32> -> vector<112x32xf32>
    %c0_254 = arith.constant 0 : index
    %c0_255 = arith.constant 0 : index
    %312 = vector.load %arg50[%c0_254, %c0_255] : memref<16x112xbf16, #tpu.memory_space<vmem>>, vector<16x112xbf16>
    %313 = arith.truncf %311 : vector<112x32xf32> to vector<112x32xbf16>
    %cst_256 = arith.constant dense<0.000000e+00> : vector<16x32xf32>
    %314 = tpu.matmul %312, %313, %cst_256 {dimension_numbers = #tpu.dot_dimension_numbers<[1], [0], [0], [1], [0, 0, 1, 1], [], []>} : vector<16x112xbf16>, vector<112x32xbf16>, vector<16x32xf32> -> vector<16x32xf32>
    %c0_257 = arith.constant 0 : index
    %c0_258 = arith.constant 0 : index
    %315 = vector.load %arg51[%c0_257, %c0_258] : memref<16x1xf32, #tpu.memory_space<vmem>>, vector<16x1xf32>
    %316 = vector.broadcast %315 : vector<16x1xf32> to vector<16x32xf32>
    %317 = arith.addf %314, %316 : vector<16x32xf32>
    %c0_259 = arith.constant 0 : index
    %c0_260 = arith.constant 0 : index
    %318 = vector.load %arg53[%c0_259, %c0_260] : memref<16x1xf32, #tpu.memory_space<vmem>>, vector<16x1xf32>
    %c0_261 = arith.constant 0 : index
    %c0_262 = arith.constant 0 : index
    %319 = vector.load %arg52[%c0_261, %c0_262] : memref<16x1xf32, #tpu.memory_space<vmem>>, vector<16x1xf32>
    %320 = vector.broadcast %319 : vector<16x1xf32> to vector<16x32xf32>
    %321 = arith.mulf %320, %317 : vector<16x32xf32>
    %322 = math.sin %321 : vector<16x32xf32>
    %323 = arith.mulf %322, %322 : vector<16x32xf32>
    %324 = vector.broadcast %318 : vector<16x1xf32> to vector<16x32xf32>
    %325 = arith.mulf %324, %323 : vector<16x32xf32>
    %326 = arith.addf %317, %325 : vector<16x32xf32>
    %c0_263 = arith.constant 0 : index
    %c0_264 = arith.constant 0 : index
    %327 = vector.load %arg54[%c0_263, %c0_264] : memref<16x16xbf16, #tpu.memory_space<vmem>>, vector<16x16xbf16>
    %328 = arith.truncf %326 : vector<16x32xf32> to vector<16x32xbf16>
    %cst_265 = arith.constant dense<0.000000e+00> : vector<16x32xf32>
    %329 = tpu.matmul %327, %328, %cst_265 {dimension_numbers = #tpu.dot_dimension_numbers<[1], [0], [0], [1], [0, 0, 1, 1], [], []>} : vector<16x16xbf16>, vector<16x32xbf16>, vector<16x32xf32> -> vector<16x32xf32>
    %c0_266 = arith.constant 0 : index
    %c0_267 = arith.constant 0 : index
    %330 = vector.load %arg55[%c0_266, %c0_267] : memref<16x1xf32, #tpu.memory_space<vmem>>, vector<16x1xf32>
    %331 = vector.broadcast %330 : vector<16x1xf32> to vector<16x32xf32>
    %332 = arith.addf %329, %331 : vector<16x32xf32>
    %333 = arith.addf %332, %291 : vector<16x32xf32>
    %c0_268 = arith.constant 0 : index
    %c0_269 = arith.constant 0 : index
    %334 = vector.load %arg57[%c0_268, %c0_269] : memref<16x1xf32, #tpu.memory_space<vmem>>, vector<16x1xf32>
    %c0_270 = arith.constant 0 : index
    %c0_271 = arith.constant 0 : index
    %335 = vector.load %arg56[%c0_270, %c0_271] : memref<16x1xf32, #tpu.memory_space<vmem>>, vector<16x1xf32>
    %336 = vector.broadcast %335 : vector<16x1xf32> to vector<16x32xf32>
    %337 = arith.mulf %336, %333 : vector<16x32xf32>
    %338 = math.sin %337 : vector<16x32xf32>
    %339 = arith.mulf %338, %338 : vector<16x32xf32>
    %340 = vector.broadcast %334 : vector<16x1xf32> to vector<16x32xf32>
    %341 = arith.mulf %340, %339 : vector<16x32xf32>
    %342 = arith.addf %333, %341 : vector<16x32xf32>
    %cst_272 = arith.constant 0.000000e+00 : f32
    %343 = vector.broadcast %cst_272 : f32 to vector<16x128xf32>
    %c0_273 = arith.constant 0 : index
    %c0_274 = arith.constant 0 : index
    %344 = vector.load %arg73[%c0_273, %c0_274] : memref<32x128xf32, #tpu.memory_space<vmem>>, vector<16x128xf32>
    tpu.vector_store %arg73[%c0_273, %c0_274], %343 {strides = array<i32>} : memref<32x128xf32, #tpu.memory_space<vmem>>, vector<16x128xf32>,
    %c0_275 = arith.constant 0 : index
    %c2_276 = arith.constant 2 : index
    %345 = vector.load %arg73[%c0_275, %c2_276] : memref<32x128xf32, #tpu.memory_space<vmem>>, vector<16x32xf32>
    tpu.vector_store %arg73[%c0_275, %c2_276], %342 {strides = array<i32>} : memref<32x128xf32, #tpu.memory_space<vmem>>, vector<16x32xf32>,
    %c0_277 = arith.constant 0 : index
    %c0_278 = arith.constant 0 : index
    %346 = vector.load %arg73[%c0_277, %c0_278] : memref<32x128xf32, #tpu.memory_space<vmem>>, vector<16x29xf32>
    %c0_279 = arith.constant 0 : index
    %c1_280 = arith.constant 1 : index
    %347 = vector.load %arg73[%c0_279, %c1_280] : memref<32x128xf32, #tpu.memory_space<vmem>>, vector<16x29xf32>
    %c0_281 = arith.constant 0 : index
    %c2_282 = arith.constant 2 : index
    %348 = vector.load %arg73[%c0_281, %c2_282] : memref<32x128xf32, #tpu.memory_space<vmem>>, vector<16x29xf32>
    %c0_283 = arith.constant 0 : index
    %c3_284 = arith.constant 3 : index
    %349 = vector.load %arg73[%c0_283, %c3_284] : memref<32x128xf32, #tpu.memory_space<vmem>>, vector<16x29xf32>
    %c0_285 = arith.constant 0 : index
    %c4_286 = arith.constant 4 : index
    %350 = vector.load %arg73[%c0_285, %c4_286] : memref<32x128xf32, #tpu.memory_space<vmem>>, vector<16x29xf32>
    %c0_287 = arith.constant 0 : index
    %c5_288 = arith.constant 5 : index
    %351 = vector.load %arg73[%c0_287, %c5_288] : memref<32x128xf32, #tpu.memory_space<vmem>>, vector<16x29xf32>
    %c0_289 = arith.constant 0 : index
    %c6_290 = arith.constant 6 : index
    %352 = vector.load %arg73[%c0_289, %c6_290] : memref<32x128xf32, #tpu.memory_space<vmem>>, vector<16x29xf32>
    %c0_291 = arith.constant 0 : index
    %c7 = arith.constant 7 : index
    %353 = vector.load %arg73[%c0_291, %c7] : memref<32x128xf32, #tpu.memory_space<vmem>>, vector<16x29xf32>
    %354 = tpu.concatenate %346, %347, %348, %349, %350, %351, %352, %353 in 0 : vector<16x29xf32>, vector<16x29xf32>, vector<16x29xf32>, vector<16x29xf32>, vector<16x29xf32>, vector<16x29xf32>, vector<16x29xf32>, vector<16x29xf32> -> vector<128x29xf32>
    %c0_292 = arith.constant 0 : index
    %c0_293 = arith.constant 0 : index
    %355 = vector.load %arg58[%c0_292, %c0_293] : memref<32x128xbf16, #tpu.memory_space<vmem>>, vector<32x128xbf16>
    %356 = arith.truncf %354 : vector<128x29xf32> to vector<128x29xbf16>
    %cst_294 = arith.constant dense<0.000000e+00> : vector<32x29xf32>
    %357 = tpu.matmul %355, %356, %cst_294 {dimension_numbers = #tpu.dot_dimension_numbers<[1], [0], [0], [1], [0, 0, 1, 1], [], []>} : vector<32x128xbf16>, vector<128x29xbf16>, vector<32x29xf32> -> vector<32x29xf32>
    %c0_295 = arith.constant 0 : index
    %c0_296 = arith.constant 0 : index
    %358 = vector.load %arg59[%c0_295, %c0_296] : memref<32x1xf32, #tpu.memory_space<vmem>>, vector<32x1xf32>
    %359 = vector.broadcast %358 : vector<32x1xf32> to vector<32x29xf32>
    %360 = arith.addf %357, %359 : vector<32x29xf32>
    %361 = tpu.iota {dimensions = array<i32: 0>} : vector<29x8xi32>
    %362 = tpu.iota {dimensions = array<i32: 1>} : vector<29x8xi32>
    %c4_i32 = arith.constant 4 : i32
    %363 = vector.broadcast %c4_i32 : i32 to vector<29x8xi32>
    %364 = arith.muli %362, %363 : vector<29x8xi32>
    %365 = arith.cmpi eq, %361, %364 : vector<29x8xi32>
    %366 = arith.extui %365 : vector<29x8xi1> to vector<29x8xi32>
    %367 = arith.sitofp %366 : vector<29x8xi32> to vector<29x8xf32>
    %cst_297 = arith.constant dense<0.000000e+00> : vector<32x8xf32>
    %368 = tpu.matmul %360, %367, %cst_297 {dimension_numbers = #tpu.dot_dimension_numbers<[1], [0], [0], [1], [0, 0, 1, 1], [], []>} : vector<32x29xf32>, vector<29x8xf32>, vector<32x8xf32> -> vector<32x8xf32>
    %c0_298 = arith.constant 0 : index
    %c0_299 = arith.constant 0 : index
    %369 = vector.load %arg61[%c0_298, %c0_299] : memref<32x1xf32, #tpu.memory_space<vmem>>, vector<32x1xf32>
    %c0_300 = arith.constant 0 : index
    %c0_301 = arith.constant 0 : index
    %370 = vector.load %arg60[%c0_300, %c0_301] : memref<32x1xf32, #tpu.memory_space<vmem>>, vector<32x1xf32>
    %371 = vector.broadcast %370 : vector<32x1xf32> to vector<32x8xf32>
    %372 = arith.mulf %371, %368 : vector<32x8xf32>
    %373 = math.sin %372 : vector<32x8xf32>
    %374 = arith.mulf %373, %373 : vector<32x8xf32>
    %375 = vector.broadcast %369 : vector<32x1xf32> to vector<32x8xf32>
    %376 = arith.mulf %375, %374 : vector<32x8xf32>
    %377 = arith.addf %368, %376 : vector<32x8xf32>
    %cst_302 = arith.constant 0.000000e+00 : f32
    %378 = vector.broadcast %cst_302 : f32 to vector<32x128xf32>
    %c0_303 = arith.constant 0 : index
    %c0_304 = arith.constant 0 : index
    %379 = vector.load %arg73[%c0_303, %c0_304] : memref<32x128xf32, #tpu.memory_space<vmem>>, vector<32x128xf32>
    tpu.vector_store %arg73[%c0_303, %c0_304], %378 {strides = array<i32>} : memref<32x128xf32, #tpu.memory_space<vmem>>, vector<32x128xf32>,
    %c0_305 = arith.constant 0 : index
    %c1_306 = arith.constant 1 : index
    %380 = vector.load %arg73[%c0_305, %c1_306] : memref<32x128xf32, #tpu.memory_space<vmem>>, vector<32x8xf32>
    tpu.vector_store %arg73[%c0_305, %c1_306], %377 {strides = array<i32>} : memref<32x128xf32, #tpu.memory_space<vmem>>, vector<32x8xf32>,
    %c0_307 = arith.constant 0 : index
    %c0_308 = arith.constant 0 : index
    %381 = vector.load %arg73[%c0_307, %c0_308] : memref<32x128xf32, #tpu.memory_space<vmem>>, vector<32x8xf32>
    %c0_309 = arith.constant 0 : index
    %c1_310 = arith.constant 1 : index
    %382 = vector.load %arg73[%c0_309, %c1_310] : memref<32x128xf32, #tpu.memory_space<vmem>>, vector<32x8xf32>
    %c0_311 = arith.constant 0 : index
    %c2_312 = arith.constant 2 : index
    %383 = vector.load %arg73[%c0_311, %c2_312] : memref<32x128xf32, #tpu.memory_space<vmem>>, vector<32x8xf32>
    %384 = tpu.concatenate %381, %382, %383 in 0 : vector<32x8xf32>, vector<32x8xf32>, vector<32x8xf32> -> vector<96x8xf32>
    %c0_313 = arith.constant 0 : index
    %c0_314 = arith.constant 0 : index
    %385 = vector.load %arg62[%c0_313, %c0_314] : memref<32x96xbf16, #tpu.memory_space<vmem>>, vector<32x96xbf16>
    %386 = arith.truncf %384 : vector<96x8xf32> to vector<96x8xbf16>
    %cst_315 = arith.constant dense<0.000000e+00> : vector<32x8xf32>
    %387 = tpu.matmul %385, %386, %cst_315 {dimension_numbers = #tpu.dot_dimension_numbers<[1], [0], [0], [1], [0, 0, 1, 1], [], []>} : vector<32x96xbf16>, vector<96x8xbf16>, vector<32x8xf32> -> vector<32x8xf32>
    %c0_316 = arith.constant 0 : index
    %c0_317 = arith.constant 0 : index
    %388 = vector.load %arg63[%c0_316, %c0_317] : memref<32x1xf32, #tpu.memory_space<vmem>>, vector<32x1xf32>
    %389 = vector.broadcast %388 : vector<32x1xf32> to vector<32x8xf32>
    %390 = arith.addf %387, %389 : vector<32x8xf32>
    %cst_318 = arith.constant 0.000000e+00 : f32
    %391 = vector.broadcast %cst_318 : f32 to vector<32x8xf32>
    %c0_319 = arith.constant 0 : index
    %c0_320 = arith.constant 0 : index
    %c0_321 = arith.constant 0 : index
    %392 = vector.load %arg64[%c0_319, %c0_320, %c0_321] : memref<3x8x32xf32, #tpu.memory_space<vmem>>, vector<1x8x32xf32>
    %393 = vector.shape_cast %392 : vector<1x8x32xf32> to vector<8x32xf32>
    %cst_322 = arith.constant dense<0.000000e+00> : vector<8x8xf32>
    %394 = tpu.matmul %393, %390, %cst_322 {dimension_numbers = #tpu.dot_dimension_numbers<[1], [0], [0], [1], [0, 0, 1, 1], [], []>} : vector<8x32xf32>, vector<32x8xf32>, vector<8x8xf32> -> vector<8x8xf32>
    %c0_323 = arith.constant 0 : index
    %c0_324 = arith.constant 0 : index
    %c0_325 = arith.constant 0 : index
    %395 = vector.load %arg65[%c0_323, %c0_324, %c0_325] : memref<3x8x1xf32, #tpu.memory_space<vmem>>, vector<1x8x1xf32>
    %396 = vector.shape_cast %395 : vector<1x8x1xf32> to vector<8x1xf32>
    %397 = vector.broadcast %396 : vector<8x1xf32> to vector<8x8xf32>
    %398 = arith.addf %394, %397 : vector<8x8xf32>
    %c0_326 = arith.constant 0 : index
    %c0_327 = arith.constant 0 : index
    %c0_328 = arith.constant 0 : index
    %399 = vector.load %arg72[%c0_326, %c0_327, %c0_328] : memref<1x24x8xf32, #tpu.memory_space<vmem>>, vector<1x8x8xf32>
    %400 = vector.shape_cast %399 : vector<1x8x8xf32> to vector<8x8xf32>
    %401 = vector.shape_cast %398 : vector<8x8xf32> to vector<1x8x8xf32>
    tpu.vector_store %arg72[%c0_326, %c0_327, %c0_328], %401 {strides = array<i32>} : memref<1x24x8xf32, #tpu.memory_space<vmem>>, vector<1x8x8xf32>,
    %402 = arith.mulf %398, %398 : vector<8x8xf32>
    %cst_329 = arith.constant dense<0.000000e+00> : vector<8xf32>
    %403 = vector.multi_reduction <add>, %402, %cst_329 [0] : vector<8x8xf32> to vector<8xf32>
    %404 = vector.shape_cast %403 : vector<8xf32> to vector<1x8xf32>
    %405 = math.sqrt %404 : vector<1x8xf32>
    %cst_330 = arith.constant 9.99999996E-13 : f32
    %406 = vector.broadcast %cst_330 : f32 to vector<1x8xf32>
    %407 = arith.maximumf %405, %406 : vector<1x8xf32>
    %408 = vector.broadcast %407 : vector<1x8xf32> to vector<8x8xf32>
    %409 = arith.divf %398, %408 : vector<8x8xf32>
    %c0_331 = arith.constant 0 : index
    %c0_332 = arith.constant 0 : index
    %c0_333 = arith.constant 0 : index
    %410 = vector.load %arg66[%c0_331, %c0_332, %c0_333] : memref<3x64x8xf32, #tpu.memory_space<vmem>>, vector<1x64x8xf32>
    %411 = vector.shape_cast %410 : vector<1x64x8xf32> to vector<64x8xf32>
    %cst_334 = arith.constant dense<0.000000e+00> : vector<64x8xf32>
    %412 = tpu.matmul %411, %409, %cst_334 {dimension_numbers = #tpu.dot_dimension_numbers<[1], [0], [0], [1], [0, 0, 1, 1], [], []>} : vector<64x8xf32>, vector<8x8xf32>, vector<64x8xf32> -> vector<64x8xf32>
    %413 = tpu.iota {dimensions = array<i32: 0>} : vector<64x8xi32>
    %cst_335 = arith.constant dense<0xFF800000> : vector<8xf32>
    %414 = vector.multi_reduction <maximumf>, %412, %cst_335 [0] : vector<64x8xf32> to vector<8xf32>
    %415 = vector.shape_cast %414 : vector<8xf32> to vector<1x8xf32>
    %416 = vector.broadcast %415 : vector<1x8xf32> to vector<64x8xf32>
    %417 = arith.cmpf oge, %412, %416 : vector<64x8xf32>
    %c64_i32 = arith.constant 64 : i32
    %418 = vector.broadcast %c64_i32 : i32 to vector<64x8xi32>
    %419 = arith.select %417, %413, %418 : vector<64x8xi1>, vector<64x8xi32>
    %cst_336 = arith.constant dense<2147483647> : vector<8xi32>
    %420 = vector.multi_reduction <minsi>, %419, %cst_336 [0] : vector<64x8xi32> to vector<8xi32>
    %421 = vector.shape_cast %420 : vector<8xi32> to vector<1x8xi32>
    %c0_337 = arith.constant 0 : index
    %c0_338 = arith.constant 0 : index
    %c0_339 = arith.constant 0 : index
    %422 = vector.load %arg71[%c0_337, %c0_338, %c0_339] : memref<1x3x8xi32, #tpu.memory_space<vmem>>, vector<1x1x8xi32>
    %423 = vector.shape_cast %422 : vector<1x1x8xi32> to vector<1x8xi32>
    %424 = vector.shape_cast %421 : vector<1x8xi32> to vector<1x1x8xi32>
    tpu.vector_store %arg71[%c0_337, %c0_338, %c0_339], %424 {strides = array<i32>} : memref<1x3x8xi32, #tpu.memory_space<vmem>>, vector<1x1x8xi32>,
    %425 = vector.broadcast %421 : vector<1x8xi32> to vector<64x8xi32>
    %426 = arith.cmpi eq, %413, %425 : vector<64x8xi32>
    %427 = arith.extui %426 : vector<64x8xi1> to vector<64x8xi32>
    %428 = arith.sitofp %427 : vector<64x8xi32> to vector<64x8xf32>
    %c0_340 = arith.constant 0 : index
    %c0_341 = arith.constant 0 : index
    %c0_342 = arith.constant 0 : index
    %429 = vector.load %arg67[%c0_340, %c0_341, %c0_342] : memref<3x8x64xf32, #tpu.memory_space<vmem>>, vector<1x8x64xf32>
    %430 = vector.shape_cast %429 : vector<1x8x64xf32> to vector<8x64xf32>
    %cst_343 = arith.constant dense<0.000000e+00> : vector<8x8xf32>
    %431 = tpu.matmul %430, %428, %cst_343 {dimension_numbers = #tpu.dot_dimension_numbers<[1], [0], [0], [1], [0, 0, 1, 1], [], []>} : vector<8x64xf32>, vector<64x8xf32>, vector<8x8xf32> -> vector<8x8xf32>
    %c0_344 = arith.constant 0 : index
    %c0_345 = arith.constant 0 : index
    %c0_346 = arith.constant 0 : index
    %432 = vector.load %arg68[%c0_344, %c0_345, %c0_346] : memref<3x32x8xf32, #tpu.memory_space<vmem>>, vector<1x32x8xf32>
    %433 = vector.shape_cast %432 : vector<1x32x8xf32> to vector<32x8xf32>
    %cst_347 = arith.constant dense<0.000000e+00> : vector<32x8xf32>
    %434 = tpu.matmul %433, %431, %cst_347 {dimension_numbers = #tpu.dot_dimension_numbers<[1], [0], [0], [1], [0, 0, 1, 1], [], []>} : vector<32x8xf32>, vector<8x8xf32>, vector<32x8xf32> -> vector<32x8xf32>
    %c0_348 = arith.constant 0 : index
    %c0_349 = arith.constant 0 : index
    %c0_350 = arith.constant 0 : index
    %435 = vector.load %arg69[%c0_348, %c0_349, %c0_350] : memref<3x32x1xf32, #tpu.memory_space<vmem>>, vector<1x32x1xf32>
    %436 = vector.shape_cast %435 : vector<1x32x1xf32> to vector<32x1xf32>
    %437 = vector.broadcast %436 : vector<32x1xf32> to vector<32x8xf32>
    %438 = arith.addf %434, %437 : vector<32x8xf32>
    %439 = arith.addf %391, %438 : vector<32x8xf32>
    %440 = arith.subf %390, %438 : vector<32x8xf32>
    %c1_351 = arith.constant 1 : index
    %c0_352 = arith.constant 0 : index
    %c0_353 = arith.constant 0 : index
    %441 = vector.load %arg64[%c1_351, %c0_352, %c0_353] : memref<3x8x32xf32, #tpu.memory_space<vmem>>, vector<1x8x32xf32>
    %442 = vector.shape_cast %441 : vector<1x8x32xf32> to vector<8x32xf32>
    %cst_354 = arith.constant dense<0.000000e+00> : vector<8x8xf32>
    %443 = tpu.matmul %442, %440, %cst_354 {dimension_numbers = #tpu.dot_dimension_numbers<[1], [0], [0], [1], [0, 0, 1, 1], [], []>} : vector<8x32xf32>, vector<32x8xf32>, vector<8x8xf32> -> vector<8x8xf32>
    %c1_355 = arith.constant 1 : index
    %c0_356 = arith.constant 0 : index
    %c0_357 = arith.constant 0 : index
    %444 = vector.load %arg65[%c1_355, %c0_356, %c0_357] : memref<3x8x1xf32, #tpu.memory_space<vmem>>, vector<1x8x1xf32>
    %445 = vector.shape_cast %444 : vector<1x8x1xf32> to vector<8x1xf32>
    %446 = vector.broadcast %445 : vector<8x1xf32> to vector<8x8xf32>
    %447 = arith.addf %443, %446 : vector<8x8xf32>
    %c0_358 = arith.constant 0 : index
    %c8 = arith.constant 8 : index
    %c0_359 = arith.constant 0 : index
    %448 = vector.load %arg72[%c0_358, %c8, %c0_359] : memref<1x24x8xf32, #tpu.memory_space<vmem>>, vector<1x8x8xf32>
    %449 = vector.shape_cast %448 : vector<1x8x8xf32> to vector<8x8xf32>
    %450 = vector.shape_cast %447 : vector<8x8xf32> to vector<1x8x8xf32>
    tpu.vector_store %arg72[%c0_358, %c8, %c0_359], %450 {strides = array<i32>} : memref<1x24x8xf32, #tpu.memory_space<vmem>>, vector<1x8x8xf32>,
    %451 = arith.mulf %447, %447 : vector<8x8xf32>
    %cst_360 = arith.constant dense<0.000000e+00> : vector<8xf32>
    %452 = vector.multi_reduction <add>, %451, %cst_360 [0] : vector<8x8xf32> to vector<8xf32>
    %453 = vector.shape_cast %452 : vector<8xf32> to vector<1x8xf32>
    %454 = math.sqrt %453 : vector<1x8xf32>
    %cst_361 = arith.constant 9.99999996E-13 : f32
    %455 = vector.broadcast %cst_361 : f32 to vector<1x8xf32>
    %456 = arith.maximumf %454, %455 : vector<1x8xf32>
    %457 = vector.broadcast %456 : vector<1x8xf32> to vector<8x8xf32>
    %458 = arith.divf %447, %457 : vector<8x8xf32>
    %c1_362 = arith.constant 1 : index
    %c0_363 = arith.constant 0 : index
    %c0_364 = arith.constant 0 : index
    %459 = vector.load %arg66[%c1_362, %c0_363, %c0_364] : memref<3x64x8xf32, #tpu.memory_space<vmem>>, vector<1x64x8xf32>
    %460 = vector.shape_cast %459 : vector<1x64x8xf32> to vector<64x8xf32>
    %cst_365 = arith.constant dense<0.000000e+00> : vector<64x8xf32>
    %461 = tpu.matmul %460, %458, %cst_365 {dimension_numbers = #tpu.dot_dimension_numbers<[1], [0], [0], [1], [0, 0, 1, 1], [], []>} : vector<64x8xf32>, vector<8x8xf32>, vector<64x8xf32> -> vector<64x8xf32>
    %462 = tpu.iota {dimensions = array<i32: 0>} : vector<64x8xi32>
    %cst_366 = arith.constant dense<0xFF800000> : vector<8xf32>
    %463 = vector.multi_reduction <maximumf>, %461, %cst_366 [0] : vector<64x8xf32> to vector<8xf32>
    %464 = vector.shape_cast %463 : vector<8xf32> to vector<1x8xf32>
    %465 = vector.broadcast %464 : vector<1x8xf32> to vector<64x8xf32>
    %466 = arith.cmpf oge, %461, %465 : vector<64x8xf32>
    %c64_i32_367 = arith.constant 64 : i32
    %467 = vector.broadcast %c64_i32_367 : i32 to vector<64x8xi32>
    %468 = arith.select %466, %462, %467 : vector<64x8xi1>, vector<64x8xi32>
    %cst_368 = arith.constant dense<2147483647> : vector<8xi32>
    %469 = vector.multi_reduction <minsi>, %468, %cst_368 [0] : vector<64x8xi32> to vector<8xi32>
    %470 = vector.shape_cast %469 : vector<8xi32> to vector<1x8xi32>
    %c0_369 = arith.constant 0 : index
    %c1_370 = arith.constant 1 : index
    %c0_371 = arith.constant 0 : index
    %471 = vector.load %arg71[%c0_369, %c1_370, %c0_371] : memref<1x3x8xi32, #tpu.memory_space<vmem>>, vector<1x1x8xi32>
    %472 = vector.shape_cast %471 : vector<1x1x8xi32> to vector<1x8xi32>
    %473 = vector.shape_cast %470 : vector<1x8xi32> to vector<1x1x8xi32>
    tpu.vector_store %arg71[%c0_369, %c1_370, %c0_371], %473 {strides = array<i32>} : memref<1x3x8xi32, #tpu.memory_space<vmem>>, vector<1x1x8xi32>,
    %474 = vector.broadcast %470 : vector<1x8xi32> to vector<64x8xi32>
    %475 = arith.cmpi eq, %462, %474 : vector<64x8xi32>
    %476 = arith.extui %475 : vector<64x8xi1> to vector<64x8xi32>
    %477 = arith.sitofp %476 : vector<64x8xi32> to vector<64x8xf32>
    %c1_372 = arith.constant 1 : index
    %c0_373 = arith.constant 0 : index
    %c0_374 = arith.constant 0 : index
    %478 = vector.load %arg67[%c1_372, %c0_373, %c0_374] : memref<3x8x64xf32, #tpu.memory_space<vmem>>, vector<1x8x64xf32>
    %479 = vector.shape_cast %478 : vector<1x8x64xf32> to vector<8x64xf32>
    %cst_375 = arith.constant dense<0.000000e+00> : vector<8x8xf32>
    %480 = tpu.matmul %479, %477, %cst_375 {dimension_numbers = #tpu.dot_dimension_numbers<[1], [0], [0], [1], [0, 0, 1, 1], [], []>} : vector<8x64xf32>, vector<64x8xf32>, vector<8x8xf32> -> vector<8x8xf32>
    %c1_376 = arith.constant 1 : index
    %c0_377 = arith.constant 0 : index
    %c0_378 = arith.constant 0 : index
    %481 = vector.load %arg68[%c1_376, %c0_377, %c0_378] : memref<3x32x8xf32, #tpu.memory_space<vmem>>, vector<1x32x8xf32>
    %482 = vector.shape_cast %481 : vector<1x32x8xf32> to vector<32x8xf32>
    %cst_379 = arith.constant dense<0.000000e+00> : vector<32x8xf32>
    %483 = tpu.matmul %482, %480, %cst_379 {dimension_numbers = #tpu.dot_dimension_numbers<[1], [0], [0], [1], [0, 0, 1, 1], [], []>} : vector<32x8xf32>, vector<8x8xf32>, vector<32x8xf32> -> vector<32x8xf32>
    %c1_380 = arith.constant 1 : index
    %c0_381 = arith.constant 0 : index
    %c0_382 = arith.constant 0 : index
    %484 = vector.load %arg69[%c1_380, %c0_381, %c0_382] : memref<3x32x1xf32, #tpu.memory_space<vmem>>, vector<1x32x1xf32>
    %485 = vector.shape_cast %484 : vector<1x32x1xf32> to vector<32x1xf32>
    %486 = vector.broadcast %485 : vector<32x1xf32> to vector<32x8xf32>
    %487 = arith.addf %483, %486 : vector<32x8xf32>
    %488 = arith.addf %439, %487 : vector<32x8xf32>
    %489 = arith.subf %440, %487 : vector<32x8xf32>
    %c2_383 = arith.constant 2 : index
    %c0_384 = arith.constant 0 : index
    %c0_385 = arith.constant 0 : index
    %490 = vector.load %arg64[%c2_383, %c0_384, %c0_385] : memref<3x8x32xf32, #tpu.memory_space<vmem>>, vector<1x8x32xf32>
    %491 = vector.shape_cast %490 : vector<1x8x32xf32> to vector<8x32xf32>
    %cst_386 = arith.constant dense<0.000000e+00> : vector<8x8xf32>
    %492 = tpu.matmul %491, %489, %cst_386 {dimension_numbers = #tpu.dot_dimension_numbers<[1], [0], [0], [1], [0, 0, 1, 1], [], []>} : vector<8x32xf32>, vector<32x8xf32>, vector<8x8xf32> -> vector<8x8xf32>
    %c2_387 = arith.constant 2 : index
    %c0_388 = arith.constant 0 : index
    %c0_389 = arith.constant 0 : index
    %493 = vector.load %arg65[%c2_387, %c0_388, %c0_389] : memref<3x8x1xf32, #tpu.memory_space<vmem>>, vector<1x8x1xf32>
    %494 = vector.shape_cast %493 : vector<1x8x1xf32> to vector<8x1xf32>
    %495 = vector.broadcast %494 : vector<8x1xf32> to vector<8x8xf32>
    %496 = arith.addf %492, %495 : vector<8x8xf32>
    %c0_390 = arith.constant 0 : index
    %c16 = arith.constant 16 : index
    %c0_391 = arith.constant 0 : index
    %497 = vector.load %arg72[%c0_390, %c16, %c0_391] : memref<1x24x8xf32, #tpu.memory_space<vmem>>, vector<1x8x8xf32>
    %498 = vector.shape_cast %497 : vector<1x8x8xf32> to vector<8x8xf32>
    %499 = vector.shape_cast %496 : vector<8x8xf32> to vector<1x8x8xf32>
    tpu.vector_store %arg72[%c0_390, %c16, %c0_391], %499 {strides = array<i32>} : memref<1x24x8xf32, #tpu.memory_space<vmem>>, vector<1x8x8xf32>,
    %500 = arith.mulf %496, %496 : vector<8x8xf32>
    %cst_392 = arith.constant dense<0.000000e+00> : vector<8xf32>
    %501 = vector.multi_reduction <add>, %500, %cst_392 [0] : vector<8x8xf32> to vector<8xf32>
    %502 = vector.shape_cast %501 : vector<8xf32> to vector<1x8xf32>
    %503 = math.sqrt %502 : vector<1x8xf32>
    %cst_393 = arith.constant 9.99999996E-13 : f32
    %504 = vector.broadcast %cst_393 : f32 to vector<1x8xf32>
    %505 = arith.maximumf %503, %504 : vector<1x8xf32>
    %506 = vector.broadcast %505 : vector<1x8xf32> to vector<8x8xf32>
    %507 = arith.divf %496, %506 : vector<8x8xf32>
    %c2_394 = arith.constant 2 : index
    %c0_395 = arith.constant 0 : index
    %c0_396 = arith.constant 0 : index
    %508 = vector.load %arg66[%c2_394, %c0_395, %c0_396] : memref<3x64x8xf32, #tpu.memory_space<vmem>>, vector<1x64x8xf32>
    %509 = vector.shape_cast %508 : vector<1x64x8xf32> to vector<64x8xf32>
    %cst_397 = arith.constant dense<0.000000e+00> : vector<64x8xf32>
    %510 = tpu.matmul %509, %507, %cst_397 {dimension_numbers = #tpu.dot_dimension_numbers<[1], [0], [0], [1], [0, 0, 1, 1], [], []>} : vector<64x8xf32>, vector<8x8xf32>, vector<64x8xf32> -> vector<64x8xf32>
    %511 = tpu.iota {dimensions = array<i32: 0>} : vector<64x8xi32>
    %cst_398 = arith.constant dense<0xFF800000> : vector<8xf32>
    %512 = vector.multi_reduction <maximumf>, %510, %cst_398 [0] : vector<64x8xf32> to vector<8xf32>
    %513 = vector.shape_cast %512 : vector<8xf32> to vector<1x8xf32>
    %514 = vector.broadcast %513 : vector<1x8xf32> to vector<64x8xf32>
    %515 = arith.cmpf oge, %510, %514 : vector<64x8xf32>
    %c64_i32_399 = arith.constant 64 : i32
    %516 = vector.broadcast %c64_i32_399 : i32 to vector<64x8xi32>
    %517 = arith.select %515, %511, %516 : vector<64x8xi1>, vector<64x8xi32>
    %cst_400 = arith.constant dense<2147483647> : vector<8xi32>
    %518 = vector.multi_reduction <minsi>, %517, %cst_400 [0] : vector<64x8xi32> to vector<8xi32>
    %519 = vector.shape_cast %518 : vector<8xi32> to vector<1x8xi32>
    %c0_401 = arith.constant 0 : index
    %c2_402 = arith.constant 2 : index
    %c0_403 = arith.constant 0 : index
    %520 = vector.load %arg71[%c0_401, %c2_402, %c0_403] : memref<1x3x8xi32, #tpu.memory_space<vmem>>, vector<1x1x8xi32>
    %521 = vector.shape_cast %520 : vector<1x1x8xi32> to vector<1x8xi32>
    %522 = vector.shape_cast %519 : vector<1x8xi32> to vector<1x1x8xi32>
    tpu.vector_store %arg71[%c0_401, %c2_402, %c0_403], %522 {strides = array<i32>} : memref<1x3x8xi32, #tpu.memory_space<vmem>>, vector<1x1x8xi32>,
    %523 = vector.broadcast %519 : vector<1x8xi32> to vector<64x8xi32>
    %524 = arith.cmpi eq, %511, %523 : vector<64x8xi32>
    %525 = arith.extui %524 : vector<64x8xi1> to vector<64x8xi32>
    %526 = arith.sitofp %525 : vector<64x8xi32> to vector<64x8xf32>
    %c2_404 = arith.constant 2 : index
    %c0_405 = arith.constant 0 : index
    %c0_406 = arith.constant 0 : index
    %527 = vector.load %arg67[%c2_404, %c0_405, %c0_406] : memref<3x8x64xf32, #tpu.memory_space<vmem>>, vector<1x8x64xf32>
    %528 = vector.shape_cast %527 : vector<1x8x64xf32> to vector<8x64xf32>
    %cst_407 = arith.constant dense<0.000000e+00> : vector<8x8xf32>
    %529 = tpu.matmul %528, %526, %cst_407 {dimension_numbers = #tpu.dot_dimension_numbers<[1], [0], [0], [1], [0, 0, 1, 1], [], []>} : vector<8x64xf32>, vector<64x8xf32>, vector<8x8xf32> -> vector<8x8xf32>
    %c2_408 = arith.constant 2 : index
    %c0_409 = arith.constant 0 : index
    %c0_410 = arith.constant 0 : index
    %530 = vector.load %arg68[%c2_408, %c0_409, %c0_410] : memref<3x32x8xf32, #tpu.memory_space<vmem>>, vector<1x32x8xf32>
    %531 = vector.shape_cast %530 : vector<1x32x8xf32> to vector<32x8xf32>
    %cst_411 = arith.constant dense<0.000000e+00> : vector<32x8xf32>
    %532 = tpu.matmul %531, %529, %cst_411 {dimension_numbers = #tpu.dot_dimension_numbers<[1], [0], [0], [1], [0, 0, 1, 1], [], []>} : vector<32x8xf32>, vector<8x8xf32>, vector<32x8xf32> -> vector<32x8xf32>
    %c2_412 = arith.constant 2 : index
    %c0_413 = arith.constant 0 : index
    %c0_414 = arith.constant 0 : index
    %533 = vector.load %arg69[%c2_412, %c0_413, %c0_414] : memref<3x32x1xf32, #tpu.memory_space<vmem>>, vector<1x32x1xf32>
    %534 = vector.shape_cast %533 : vector<1x32x1xf32> to vector<32x1xf32>
    %535 = vector.broadcast %534 : vector<32x1xf32> to vector<32x8xf32>
    %536 = arith.addf %532, %535 : vector<32x8xf32>
    %537 = arith.addf %488, %536 : vector<32x8xf32>
    %c0_415 = arith.constant 0 : index
    %c0_416 = arith.constant 0 : index
    %c0_417 = arith.constant 0 : index
    %538 = vector.load %arg70[%c0_415, %c0_416, %c0_417] : memref<1x32x8xf32, #tpu.memory_space<vmem>>, vector<1x32x8xf32>
    %539 = vector.shape_cast %538 : vector<1x32x8xf32> to vector<32x8xf32>
    %540 = vector.shape_cast %537 : vector<32x8xf32> to vector<1x32x8xf32>
    tpu.vector_store %arg70[%c0_415, %c0_416, %c0_417], %540 {strides = array<i32>} : memref<1x32x8xf32, #tpu.memory_space<vmem>>, vector<1x32x8xf32>,
    return
  }
  func.func @transform_0(%arg0: i32) -> (i32, i32, i32) {
    %c0_i32 = arith.constant 0 : i32
    %c0_i32_0 = arith.constant 0 : i32
    %c0_i32_1 = arith.constant 0 : i32
    return %arg0, %c0_i32, %c0_i32_0 : i32, i32, i32
  }
  func.func @transform_1(%arg0: i32) -> (i32, i32) {
    %c0_i32 = arith.constant 0 : i32
    %c0_i32_0 = arith.constant 0 : i32
    %c0_i32_1 = arith.constant 0 : i32
    return %c0_i32, %c0_i32_0 : i32, i32
  }
  func.func @transform_2(%arg0: i32) -> (i32, i32) {
    %c0_i32 = arith.constant 0 : i32
    %c0_i32_0 = arith.constant 0 : i32
    %c0_i32_1 = arith.constant 0 : i32
    return %c0_i32, %c0_i32_0 : i32, i32
  }
  func.func @transform_3(%arg0: i32) -> (i32, i32) {
    %c0_i32 = arith.constant 0 : i32
    %c0_i32_0 = arith.constant 0 : i32
    %c0_i32_1 = arith.constant 0 : i32
    return %c0_i32, %c0_i32_0 : i32, i32
  }
  func.func @transform_4(%arg0: i32) -> (i32, i32) {
    %c0_i32 = arith.constant 0 : i32
    %c0_i32_0 = arith.constant 0 : i32
    %c0_i32_1 = arith.constant 0 : i32
    return %c0_i32, %c0_i32_0 : i32, i32
  }
  func.func @transform_5(%arg0: i32) -> (i32, i32) {
    %c0_i32 = arith.constant 0 : i32
    %c0_i32_0 = arith.constant 0 : i32
    %c0_i32_1 = arith.constant 0 : i32
    return %c0_i32, %c0_i32_0 : i32, i32
  }
  func.func @transform_6(%arg0: i32) -> (i32, i32) {
    %c0_i32 = arith.constant 0 : i32
    %c0_i32_0 = arith.constant 0 : i32
    %c0_i32_1 = arith.constant 0 : i32
    return %c0_i32, %c0_i32_0 : i32, i32
  }
  func.func @transform_7(%arg0: i32) -> (i32, i32) {
    %c0_i32 = arith.constant 0 : i32
    %c0_i32_0 = arith.constant 0 : i32
    %c0_i32_1 = arith.constant 0 : i32
    return %c0_i32, %c0_i32_0 : i32, i32
  }
  func.func @transform_8(%arg0: i32) -> (i32, i32) {
    %c0_i32 = arith.constant 0 : i32
    %c0_i32_0 = arith.constant 0 : i32
    %c0_i32_1 = arith.constant 0 : i32
    return %c0_i32, %c0_i32_0 : i32, i32
  }
  func.func @transform_9(%arg0: i32) -> (i32, i32) {
    %c0_i32 = arith.constant 0 : i32
    %c0_i32_0 = arith.constant 0 : i32
    %c0_i32_1 = arith.constant 0 : i32
    return %c0_i32, %c0_i32_0 : i32, i32
  }
  func.func @transform_10(%arg0: i32) -> (i32, i32) {
    %c0_i32 = arith.constant 0 : i32
    %c0_i32_0 = arith.constant 0 : i32
    %c0_i32_1 = arith.constant 0 : i32
    return %c0_i32, %c0_i32_0 : i32, i32
  }
  func.func @transform_11(%arg0: i32) -> (i32, i32) {
    %c0_i32 = arith.constant 0 : i32
    %c0_i32_0 = arith.constant 0 : i32
    %c0_i32_1 = arith.constant 0 : i32
    return %c0_i32, %c0_i32_0 : i32, i32
  }
  func.func @transform_12(%arg0: i32) -> (i32, i32) {
    %c0_i32 = arith.constant 0 : i32
    %c0_i32_0 = arith.constant 0 : i32
    %c0_i32_1 = arith.constant 0 : i32
    return %c0_i32, %c0_i32_0 : i32, i32
  }
  func.func @transform_13(%arg0: i32) -> (i32, i32) {
    %c0_i32 = arith.constant 0 : i32
    %c0_i32_0 = arith.constant 0 : i32
    %c0_i32_1 = arith.constant 0 : i32
    return %c0_i32, %c0_i32_0 : i32, i32
  }
  func.func @transform_14(%arg0: i32) -> (i32, i32) {
    %c0_i32 = arith.constant 0 : i32
    %c0_i32_0 = arith.constant 0 : i32
    %c0_i32_1 = arith.constant 0 : i32
    return %c0_i32, %c0_i32_0 : i32, i32
  }
  func.func @transform_15(%arg0: i32) -> (i32, i32) {
    %c0_i32 = arith.constant 0 : i32
    %c0_i32_0 = arith.constant 0 : i32
    %c0_i32_1 = arith.constant 0 : i32
    return %c0_i32, %c0_i32_0 : i32, i32
  }
  func.func @transform_16(%arg0: i32) -> (i32, i32) {
    %c0_i32 = arith.constant 0 : i32
    %c0_i32_0 = arith.constant 0 : i32
    %c0_i32_1 = arith.constant 0 : i32
    return %c0_i32, %c0_i32_0 : i32, i32
  }
  func.func @transform_17(%arg0: i32) -> (i32, i32) {
    %c0_i32 = arith.constant 0 : i32
    %c0_i32_0 = arith.constant 0 : i32
    %c0_i32_1 = arith.constant 0 : i32
    return %c0_i32, %c0_i32_0 : i32, i32
  }
  func.func @transform_18(%arg0: i32) -> (i32, i32) {
    %c0_i32 = arith.constant 0 : i32
    %c0_i32_0 = arith.constant 0 : i32
    %c0_i32_1 = arith.constant 0 : i32
    return %c0_i32, %c0_i32_0 : i32, i32
  }
  func.func @transform_19(%arg0: i32) -> (i32, i32) {
    %c0_i32 = arith.constant 0 : i32
    %c0_i32_0 = arith.constant 0 : i32
    %c0_i32_1 = arith.constant 0 : i32
    return %c0_i32, %c0_i32_0 : i32, i32
  }
  func.func @transform_20(%arg0: i32) -> (i32, i32) {
    %c0_i32 = arith.constant 0 : i32
    %c0_i32_0 = arith.constant 0 : i32
    %c0_i32_1 = arith.constant 0 : i32
    return %c0_i32, %c0_i32_0 : i32, i32
  }
  func.func @transform_21(%arg0: i32) -> (i32, i32) {
    %c0_i32 = arith.constant 0 : i32
    %c0_i32_0 = arith.constant 0 : i32
    %c0_i32_1 = arith.constant 0 : i32
    return %c0_i32, %c0_i32_0 : i32, i32
  }
  func.func @transform_22(%arg0: i32) -> (i32, i32) {
    %c0_i32 = arith.constant 0 : i32
    %c0_i32_0 = arith.constant 0 : i32
    %c0_i32_1 = arith.constant 0 : i32
    return %c0_i32, %c0_i32_0 : i32, i32
  }
  func.func @transform_23(%arg0: i32) -> (i32, i32) {
    %c0_i32 = arith.constant 0 : i32
    %c0_i32_0 = arith.constant 0 : i32
    %c0_i32_1 = arith.constant 0 : i32
    return %c0_i32, %c0_i32_0 : i32, i32
  }
  func.func @transform_24(%arg0: i32) -> (i32, i32) {
    %c0_i32 = arith.constant 0 : i32
    %c0_i32_0 = arith.constant 0 : i32
    %c0_i32_1 = arith.constant 0 : i32
    return %c0_i32, %c0_i32_0 : i32, i32
  }
  func.func @transform_25(%arg0: i32) -> (i32, i32) {
    %c0_i32 = arith.constant 0 : i32
    %c0_i32_0 = arith.constant 0 : i32
    %c0_i32_1 = arith.constant 0 : i32
    return %c0_i32, %c0_i32_0 : i32, i32
  }
  func.func @transform_26(%arg0: i32) -> (i32, i32) {
    %c0_i32 = arith.constant 0 : i32
    %c0_i32_0 = arith.constant 0 : i32
    %c0_i32_1 = arith.constant 0 : i32
    return %c0_i32, %c0_i32_0 : i32, i32
  }
  func.func @transform_27(%arg0: i32) -> (i32, i32) {
    %c0_i32 = arith.constant 0 : i32
    %c0_i32_0 = arith.constant 0 : i32
    %c0_i32_1 = arith.constant 0 : i32
    return %c0_i32, %c0_i32_0 : i32, i32
  }
  func.func @transform_28(%arg0: i32) -> (i32, i32) {
    %c0_i32 = arith.constant 0 : i32
    %c0_i32_0 = arith.constant 0 : i32
    %c0_i32_1 = arith.constant 0 : i32
    return %c0_i32, %c0_i32_0 : i32, i32
  }
  func.func @transform_29(%arg0: i32) -> (i32, i32) {
    %c0_i32 = arith.constant 0 : i32
    %c0_i32_0 = arith.constant 0 : i32
    %c0_i32_1 = arith.constant 0 : i32
    return %c0_i32, %c0_i32_0 : i32, i32
  }
  func.func @transform_30(%arg0: i32) -> (i32, i32) {
    %c0_i32 = arith.constant 0 : i32
    %c0_i32_0 = arith.constant 0 : i32
    %c0_i32_1 = arith.constant 0 : i32
    return %c0_i32, %c0_i32_0 : i32, i32
  }
  func.func @transform_31(%arg0: i32) -> (i32, i32) {
    %c0_i32 = arith.constant 0 : i32
    %c0_i32_0 = arith.constant 0 : i32
    %c0_i32_1 = arith.constant 0 : i32
    return %c0_i32, %c0_i32_0 : i32, i32
  }
  func.func @transform_32(%arg0: i32) -> (i32, i32) {
    %c0_i32 = arith.constant 0 : i32
    %c0_i32_0 = arith.constant 0 : i32
    %c0_i32_1 = arith.constant 0 : i32
    return %c0_i32, %c0_i32_0 : i32, i32
  }
  func.func @transform_33(%arg0: i32) -> (i32, i32) {
    %c0_i32 = arith.constant 0 : i32
    %c0_i32_0 = arith.constant 0 : i32
    %c0_i32_1 = arith.constant 0 : i32
    return %c0_i32, %c0_i32_0 : i32, i32
  }
  func.func @transform_34(%arg0: i32) -> (i32, i32) {
    %c0_i32 = arith.constant 0 : i32
    %c0_i32_0 = arith.constant 0 : i32
    %c0_i32_1 = arith.constant 0 : i32
    return %c0_i32, %c0_i32_0 : i32, i32
  }
  func.func @transform_35(%arg0: i32) -> (i32, i32) {
    %c0_i32 = arith.constant 0 : i32
    %c0_i32_0 = arith.constant 0 : i32
    %c0_i32_1 = arith.constant 0 : i32
    return %c0_i32, %c0_i32_0 : i32, i32
  }
  func.func @transform_36(%arg0: i32) -> (i32, i32) {
    %c0_i32 = arith.constant 0 : i32
    %c0_i32_0 = arith.constant 0 : i32
    %c0_i32_1 = arith.constant 0 : i32
    return %c0_i32, %c0_i32_0 : i32, i32
  }
  func.func @transform_37(%arg0: i32) -> (i32, i32) {
    %c0_i32 = arith.constant 0 : i32
    %c0_i32_0 = arith.constant 0 : i32
    %c0_i32_1 = arith.constant 0 : i32
    return %c0_i32, %c0_i32_0 : i32, i32
  }
  func.func @transform_38(%arg0: i32) -> (i32, i32) {
    %c0_i32 = arith.constant 0 : i32
    %c0_i32_0 = arith.constant 0 : i32
    %c0_i32_1 = arith.constant 0 : i32
    return %c0_i32, %c0_i32_0 : i32, i32
  }
  func.func @transform_39(%arg0: i32) -> (i32, i32) {
    %c0_i32 = arith.constant 0 : i32
    %c0_i32_0 = arith.constant 0 : i32
    %c0_i32_1 = arith.constant 0 : i32
    return %c0_i32, %c0_i32_0 : i32, i32
  }
  func.func @transform_40(%arg0: i32) -> (i32, i32) {
    %c0_i32 = arith.constant 0 : i32
    %c0_i32_0 = arith.constant 0 : i32
    %c0_i32_1 = arith.constant 0 : i32
    return %c0_i32, %c0_i32_0 : i32, i32
  }
  func.func @transform_41(%arg0: i32) -> (i32, i32) {
    %c0_i32 = arith.constant 0 : i32
    %c0_i32_0 = arith.constant 0 : i32
    %c0_i32_1 = arith.constant 0 : i32
    return %c0_i32, %c0_i32_0 : i32, i32
  }
  func.func @transform_42(%arg0: i32) -> (i32, i32) {
    %c0_i32 = arith.constant 0 : i32
    %c0_i32_0 = arith.constant 0 : i32
    %c0_i32_1 = arith.constant 0 : i32
    return %c0_i32, %c0_i32_0 : i32, i32
  }
  func.func @transform_43(%arg0: i32) -> (i32, i32) {
    %c0_i32 = arith.constant 0 : i32
    %c0_i32_0 = arith.constant 0 : i32
    %c0_i32_1 = arith.constant 0 : i32
    return %c0_i32, %c0_i32_0 : i32, i32
  }
  func.func @transform_44(%arg0: i32) -> (i32, i32) {
    %c0_i32 = arith.constant 0 : i32
    %c0_i32_0 = arith.constant 0 : i32
    %c0_i32_1 = arith.constant 0 : i32
    return %c0_i32, %c0_i32_0 : i32, i32
  }
  func.func @transform_45(%arg0: i32) -> (i32, i32) {
    %c0_i32 = arith.constant 0 : i32
    %c0_i32_0 = arith.constant 0 : i32
    %c0_i32_1 = arith.constant 0 : i32
    return %c0_i32, %c0_i32_0 : i32, i32
  }
  func.func @transform_46(%arg0: i32) -> (i32, i32) {
    %c0_i32 = arith.constant 0 : i32
    %c0_i32_0 = arith.constant 0 : i32
    %c0_i32_1 = arith.constant 0 : i32
    return %c0_i32, %c0_i32_0 : i32, i32
  }
  func.func @transform_47(%arg0: i32) -> (i32, i32) {
    %c0_i32 = arith.constant 0 : i32
    %c0_i32_0 = arith.constant 0 : i32
    %c0_i32_1 = arith.constant 0 : i32
    return %c0_i32, %c0_i32_0 : i32, i32
  }
  func.func @transform_48(%arg0: i32) -> (i32, i32) {
    %c0_i32 = arith.constant 0 : i32
    %c0_i32_0 = arith.constant 0 : i32
    %c0_i32_1 = arith.constant 0 : i32
    return %c0_i32, %c0_i32_0 : i32, i32
  }
  func.func @transform_49(%arg0: i32) -> (i32, i32) {
    %c0_i32 = arith.constant 0 : i32
    %c0_i32_0 = arith.constant 0 : i32
    %c0_i32_1 = arith.constant 0 : i32
    return %c0_i32, %c0_i32_0 : i32, i32
  }
  func.func @transform_50(%arg0: i32) -> (i32, i32) {
    %c0_i32 = arith.constant 0 : i32
    %c0_i32_0 = arith.constant 0 : i32
    %c0_i32_1 = arith.constant 0 : i32
    return %c0_i32, %c0_i32_0 : i32, i32
  }
  func.func @transform_51(%arg0: i32) -> (i32, i32) {
    %c0_i32 = arith.constant 0 : i32
    %c0_i32_0 = arith.constant 0 : i32
    %c0_i32_1 = arith.constant 0 : i32
    return %c0_i32, %c0_i32_0 : i32, i32
  }
  func.func @transform_52(%arg0: i32) -> (i32, i32) {
    %c0_i32 = arith.constant 0 : i32
    %c0_i32_0 = arith.constant 0 : i32
    %c0_i32_1 = arith.constant 0 : i32
    return %c0_i32, %c0_i32_0 : i32, i32
  }
  func.func @transform_53(%arg0: i32) -> (i32, i32) {
    %c0_i32 = arith.constant 0 : i32
    %c0_i32_0 = arith.constant 0 : i32
    %c0_i32_1 = arith.constant 0 : i32
    return %c0_i32, %c0_i32_0 : i32, i32
  }
  func.func @transform_54(%arg0: i32) -> (i32, i32) {
    %c0_i32 = arith.constant 0 : i32
    %c0_i32_0 = arith.constant 0 : i32
    %c0_i32_1 = arith.constant 0 : i32
    return %c0_i32, %c0_i32_0 : i32, i32
  }
  func.func @transform_55(%arg0: i32) -> (i32, i32) {
    %c0_i32 = arith.constant 0 : i32
    %c0_i32_0 = arith.constant 0 : i32
    %c0_i32_1 = arith.constant 0 : i32
    return %c0_i32, %c0_i32_0 : i32, i32
  }
  func.func @transform_56(%arg0: i32) -> (i32, i32) {
    %c0_i32 = arith.constant 0 : i32
    %c0_i32_0 = arith.constant 0 : i32
    %c0_i32_1 = arith.constant 0 : i32
    return %c0_i32, %c0_i32_0 : i32, i32
  }
  func.func @transform_57(%arg0: i32) -> (i32, i32) {
    %c0_i32 = arith.constant 0 : i32
    %c0_i32_0 = arith.constant 0 : i32
    %c0_i32_1 = arith.constant 0 : i32
    return %c0_i32, %c0_i32_0 : i32, i32
  }
  func.func @transform_58(%arg0: i32) -> (i32, i32) {
    %c0_i32 = arith.constant 0 : i32
    %c0_i32_0 = arith.constant 0 : i32
    %c0_i32_1 = arith.constant 0 : i32
    return %c0_i32, %c0_i32_0 : i32, i32
  }
  func.func @transform_59(%arg0: i32) -> (i32, i32) {
    %c0_i32 = arith.constant 0 : i32
    %c0_i32_0 = arith.constant 0 : i32
    %c0_i32_1 = arith.constant 0 : i32
    return %c0_i32, %c0_i32_0 : i32, i32
  }
  func.func @transform_60(%arg0: i32) -> (i32, i32) {
    %c0_i32 = arith.constant 0 : i32
    %c0_i32_0 = arith.constant 0 : i32
    %c0_i32_1 = arith.constant 0 : i32
    return %c0_i32, %c0_i32_0 : i32, i32
  }
  func.func @transform_61(%arg0: i32) -> (i32, i32) {
    %c0_i32 = arith.constant 0 : i32
    %c0_i32_0 = arith.constant 0 : i32
    %c0_i32_1 = arith.constant 0 : i32
    return %c0_i32, %c0_i32_0 : i32, i32
  }
  func.func @transform_62(%arg0: i32) -> (i32, i32) {
    %c0_i32 = arith.constant 0 : i32
    %c0_i32_0 = arith.constant 0 : i32
    %c0_i32_1 = arith.constant 0 : i32
    return %c0_i32, %c0_i32_0 : i32, i32
  }
  func.func @transform_63(%arg0: i32) -> (i32, i32, i32) {
    %c0_i32 = arith.constant 0 : i32
    %c0_i32_0 = arith.constant 0 : i32
    %c0_i32_1 = arith.constant 0 : i32
    %c0_i32_2 = arith.constant 0 : i32
    return %c0_i32, %c0_i32_0, %c0_i32_1 : i32, i32, i32
  }
  func.func @transform_64(%arg0: i32) -> (i32, i32, i32) {
    %c0_i32 = arith.constant 0 : i32
    %c0_i32_0 = arith.constant 0 : i32
    %c0_i32_1 = arith.constant 0 : i32
    %c0_i32_2 = arith.constant 0 : i32
    return %c0_i32, %c0_i32_0, %c0_i32_1 : i32, i32, i32
  }
  func.func @transform_65(%arg0: i32) -> (i32, i32, i32) {
    %c0_i32 = arith.constant 0 : i32
    %c0_i32_0 = arith.constant 0 : i32
    %c0_i32_1 = arith.constant 0 : i32
    %c0_i32_2 = arith.constant 0 : i32
    return %c0_i32, %c0_i32_0, %c0_i32_1 : i32, i32, i32
  }
  func.func @transform_66(%arg0: i32) -> (i32, i32, i32) {
    %c0_i32 = arith.constant 0 : i32
    %c0_i32_0 = arith.constant 0 : i32
    %c0_i32_1 = arith.constant 0 : i32
    %c0_i32_2 = arith.constant 0 : i32
    return %c0_i32, %c0_i32_0, %c0_i32_1 : i32, i32, i32
  }
  func.func @transform_67(%arg0: i32) -> (i32, i32, i32) {
    %c0_i32 = arith.constant 0 : i32
    %c0_i32_0 = arith.constant 0 : i32
    %c0_i32_1 = arith.constant 0 : i32
    %c0_i32_2 = arith.constant 0 : i32
    return %c0_i32, %c0_i32_0, %c0_i32_1 : i32, i32, i32
  }
  func.func @transform_68(%arg0: i32) -> (i32, i32, i32) {
    %c0_i32 = arith.constant 0 : i32
    %c0_i32_0 = arith.constant 0 : i32
    %c0_i32_1 = arith.constant 0 : i32
    %c0_i32_2 = arith.constant 0 : i32
    return %c0_i32, %c0_i32_0, %c0_i32_1 : i32, i32, i32
  }
  func.func @transform_69(%arg0: i32) -> (i32, i32, i32) {
    %c0_i32 = arith.constant 0 : i32
    %c0_i32_0 = arith.constant 0 : i32
    %c0_i32_1 = arith.constant 0 : i32
    return %arg0, %c0_i32, %c0_i32_0 : i32, i32, i32
  }
  func.func @transform_70(%arg0: i32) -> (i32, i32, i32) {
    %c0_i32 = arith.constant 0 : i32
    %c0_i32_0 = arith.constant 0 : i32
    %c0_i32_1 = arith.constant 0 : i32
    return %arg0, %c0_i32, %c0_i32_0 : i32, i32, i32
  }
  func.func @transform_71(%arg0: i32) -> (i32, i32, i32) {
    %c0_i32 = arith.constant 0 : i32
    %c0_i32_0 = arith.constant 0 : i32
    %c0_i32_1 = arith.constant 0 : i32
    return %arg0, %c0_i32, %c0_i32_0 : i32, i32, i32
  }
}

</mosaic_0001>

<llo_original>
// kernel: _encode_impl.1
$region0: #{_encode_impl.1}
  #allocation0 [shape = 'u32[]', space=smem, size = 0x4, offset = 0x4, fixed_abs, tag = 'smem constant byte address 0x4 - core index']
  #allocation1 [shape = 'u32[72,128]{1,0:T(1,128)}', space=vmem, size = 0x9000, scoped, tag = 'internal scratch']
  #allocation2 [shape = 'f32[32,128]{1,0:T(8,128)}', space=vmem, size = 0x4000, scoped, tag = 'scratch operand']
  %s0 = inlined_call_operand.smem [shape: u32[72], index: -1, kind: input, shape index: {}]
  %s1 = sld [smem:[%s0]]
  %s2 = scalar_lea.smem %s0, 1
  %s3 = sld [smem:[%s2]]
  %s4 = scalar_lea.smem %s0, 2
  %s5 = sld [smem:[%s4]]
  %s6 = scalar_lea.smem %s0, 3
  %s7 = sld [smem:[%s6]]
  %s8 = scalar_lea.smem %s0, 4
  %s9 = sld [smem:[%s8]]
  %s10 = scalar_lea.smem %s0, 5
  %s11 = sld [smem:[%s10]]
  %s12 = scalar_lea.smem %s0, 6
  %s13 = sld [smem:[%s12]]
  %s14 = scalar_lea.smem %s0, 7
  %s15 = sld [smem:[%s14]]
  %s16 = scalar_lea.smem %s0, 8
  %s17 = sld [smem:[%s16]]
  %s18 = scalar_lea.smem %s0, 9
  %s19 = sld [smem:[%s18]]
  %s20 = scalar_lea.smem %s0, 10
  %s21 = sld [smem:[%s20]]
  %s22 = scalar_lea.smem %s0, 11
  %s23 = sld [smem:[%s22]]
  %s24 = scalar_lea.smem %s0, 12
  %s25 = sld [smem:[%s24]]
  %s26 = scalar_lea.smem %s0, 13
  %s27 = sld [smem:[%s26]]
  %s28 = scalar_lea.smem %s0, 14
  %s29 = sld [smem:[%s28]]
  %s30 = scalar_lea.smem %s0, 15
  %s31 = sld [smem:[%s30]]
  %s32 = scalar_lea.smem %s0, 16
  %s33 = sld [smem:[%s32]]
  %s34 = scalar_lea.smem %s0, 17
  %s35 = sld [smem:[%s34]]
  %s36 = scalar_lea.smem %s0, 18
  %s37 = sld [smem:[%s36]]
  %s38 = scalar_lea.smem %s0, 19
  %s39 = sld [smem:[%s38]]
  %s40 = scalar_lea.smem %s0, 20
  %s41 = sld [smem:[%s40]]
  %s42 = scalar_lea.smem %s0, 21
  %s43 = sld [smem:[%s42]]
  %s44 = scalar_lea.smem %s0, 22
  %s45 = sld [smem:[%s44]]
  %s46 = scalar_lea.smem %s0, 23
  %s47 = sld [smem:[%s46]]
  %s48 = scalar_lea.smem %s0, 24
  %s49 = sld [smem:[%s48]]
  %s50 = scalar_lea.smem %s0, 25
  %s51 = sld [smem:[%s50]]
  %s52 = scalar_lea.smem %s0, 26
  %s53 = sld [smem:[%s52]]
  %s54 = scalar_lea.smem %s0, 27
  %s55 = sld [smem:[%s54]]
  %s56 = scalar_lea.smem %s0, 28
  %s57 = sld [smem:[%s56]]
  %s58 = scalar_lea.smem %s0, 29
  %s59 = sld [smem:[%s58]]
  %s60 = scalar_lea.smem %s0, 30
  %s61 = sld [smem:[%s60]]
  %s62 = scalar_lea.smem %s0, 31
  %s63 = sld [smem:[%s62]]
  %s64 = scalar_lea.smem %s0, 32
  %s65 = sld [smem:[%s64]]
  %s66 = scalar_lea.smem %s0, 33
  %s67 = sld [smem:[%s66]]
  %s68 = scalar_lea.smem %s0, 34
  %s69 = sld [smem:[%s68]]
  %s70 = scalar_lea.smem %s0, 35
  %s71 = sld [smem:[%s70]]
  %s72 = scalar_lea.smem %s0, 36
  %s73 = sld [smem:[%s72]]
  %s74 = scalar_lea.smem %s0, 37
  %s75 = sld [smem:[%s74]]
  %s76 = scalar_lea.smem %s0, 38
  %s77 = sld [smem:[%s76]]
  %s78 = scalar_lea.smem %s0, 39
  %s79 = sld [smem:[%s78]]
  %s80 = scalar_lea.smem %s0, 40
  %s81 = sld [smem:[%s80]]
  %s82 = scalar_lea.smem %s0, 41
  %s83 = sld [smem:[%s82]]
  %s84 = scalar_lea.smem %s0, 42
  %s85 = sld [smem:[%s84]]
  %s86 = scalar_lea.smem %s0, 43
  %s87 = sld [smem:[%s86]]
  %s88 = scalar_lea.smem %s0, 44
  %s89 = sld [smem:[%s88]]
  %s90 = scalar_lea.smem %s0, 45
  %s91 = sld [smem:[%s90]]
  %s92 = scalar_lea.smem %s0, 46
  %s93 = sld [smem:[%s92]]
  %s94 = scalar_lea.smem %s0, 47
  %s95 = sld [smem:[%s94]]
  %s96 = scalar_lea.smem %s0, 48
  %s97 = sld [smem:[%s96]]
  %s98 = scalar_lea.smem %s0, 49
  %s99 = sld [smem:[%s98]]
  %s100 = scalar_lea.smem %s0, 50
  %s101 = sld [smem:[%s100]]
  %s102 = scalar_lea.smem %s0, 51
  %s103 = sld [smem:[%s102]]
  %s104 = scalar_lea.smem %s0, 52
  %s105 = sld [smem:[%s104]]
  %s106 = scalar_lea.smem %s0, 53
  %s107 = sld [smem:[%s106]]
  %s108 = scalar_lea.smem %s0, 54
  %s109 = sld [smem:[%s108]]
  %s110 = scalar_lea.smem %s0, 55
  %s111 = sld [smem:[%s110]]
  %s112 = scalar_lea.smem %s0, 56
  %s113 = sld [smem:[%s112]]
  %s114 = scalar_lea.smem %s0, 57
  %s115 = sld [smem:[%s114]]
  %s116 = scalar_lea.smem %s0, 58
  %s117 = sld [smem:[%s116]]
  %s118 = scalar_lea.smem %s0, 59
  %s119 = sld [smem:[%s118]]
  %s120 = scalar_lea.smem %s0, 60
  %s121 = sld [smem:[%s120]]
  %s122 = scalar_lea.smem %s0, 61
  %s123 = sld [smem:[%s122]]
  %s124 = scalar_lea.smem %s0, 62
  %s125 = sld [smem:[%s124]]
  %s126 = scalar_lea.smem %s0, 63
  %s127 = sld [smem:[%s126]]
  %s128 = scalar_lea.smem %s0, 64
  %s129 = sld [smem:[%s128]]
  %s130 = scalar_lea.smem %s0, 65
  %s131 = sld [smem:[%s130]]
  %s132 = scalar_lea.smem %s0, 66
  %s133 = sld [smem:[%s132]]
  %s134 = scalar_lea.smem %s0, 67
  %s135 = sld [smem:[%s134]]
  %s136 = scalar_lea.smem %s0, 68
  %s137 = sld [smem:[%s136]]
  %s138 = scalar_lea.smem %s0, 69
  %s139 = sld [smem:[%s138]]
  %s140 = scalar_lea.smem %s0, 70
  %s141 = sld [smem:[%s140]]
  %s142 = scalar_lea.smem %s0, 71
  %s143 = sld [smem:[%s142]]
  %144 = xla_tuple %s139, %s141, %s143
  %s145 = sld [smem:[#allocation0]]
  $region389: #{_encode_impl.1} parent=0
    _
  %s147 = ssub.s32 1, %s145
  %s148 = scalar_select 0, %s147, %s145
  $region1: #{_encode_impl.1} parent=0
    #allocation3 [shape = 'u8[1024]{0}', space=vmem, size = 0x400, scoped, tag = 'input window, operand 0']
    #allocation4 [shape = 's32[2]{0}', space=sflag, size = 0x8, scoped, tag = 'scoped memory for _encode_impl.1']
    #allocation5 [shape = 'u8[4096]{0}', space=vmem, size = 0x1000, scoped, tag = 'input window, operand 1, single buffered']
    #allocation6 [shape = 's32[1]{0}', space=sflag, size = 0x4, scoped, tag = 'scoped memory for _encode_impl.1']
    #allocation7 [shape = 'u8[2048]{0}', space=vmem, size = 0x800, scoped, tag = 'input window, operand 5, single buffered']
    #allocation8 [shape = 'u8[2048]{0}', space=vmem, size = 0x800, scoped, tag = 'input window, operand 9, single buffered']
    #allocation9 [shape = 's32[1]{0}', space=sflag, size = 0x4, scoped, tag = 'scoped memory for _encode_impl.1']
    #allocation10 [shape = 'u8[2048]{0}', space=vmem, size = 0x800, scoped, tag = 'input window, operand 13, single buffered']
    #allocation11 [shape = 'u8[2048]{0}', space=vmem, size = 0x800, scoped, tag = 'input window, operand 17, single buffered']
    #allocation12 [shape = 's32[1]{0}', space=sflag, size = 0x4, scoped, tag = 'scoped memory for _encode_impl.1']
    #allocation13 [shape = 'u8[2048]{0}', space=vmem, size = 0x800, scoped, tag = 'input window, operand 21, single buffered']
    #allocation14 [shape = 'u8[4096]{0}', space=vmem, size = 0x1000, scoped, tag = 'input window, operand 29, single buffered']
    #allocation15 [shape = 's32[1]{0}', space=sflag, size = 0x4, scoped, tag = 'scoped memory for _encode_impl.1']
    #allocation16 [shape = 'u8[4096]{0}', space=vmem, size = 0x1000, scoped, tag = 'input window, operand 33, single buffered']
    #allocation17 [shape = 'u8[4096]{0}', space=vmem, size = 0x1000, scoped, tag = 'input window, operand 37, single buffered']
    #allocation18 [shape = 's32[1]{0}', space=sflag, size = 0x4, scoped, tag = 'scoped memory for _encode_impl.1']
    #allocation19 [shape = 'u8[4096]{0}', space=vmem, size = 0x1000, scoped, tag = 'input window, operand 41, single buffered']
    #allocation20 [shape = 'u8[4096]{0}', space=vmem, size = 0x1000, scoped, tag = 'input window, operand 45, single buffered']
    #allocation21 [shape = 's32[1]{0}', space=sflag, size = 0x4, scoped, tag = 'scoped memory for _encode_impl.1']
    #allocation22 [shape = 'u8[4096]{0}', space=vmem, size = 0x1000, scoped, tag = 'input window, operand 49, single buffered']
    #allocation23 [shape = 'u8[4096]{0}', space=vmem, size = 0x1000, scoped, tag = 'input window, operand 53, single buffered']
    #allocation24 [shape = 's32[1]{0}', space=sflag, size = 0x4, scoped, tag = 'scoped memory for _encode_impl.1']
    #allocation25 [shape = 'u8[8192]{0}', space=vmem, size = 0x2000, scoped, tag = 'input window, operand 57, single buffered']
    #allocation26 [shape = 'u8[49152]{0}', space=vmem, size = 0xc000, scoped, tag = 'input window, operand 67, single buffered']
    #allocation27 [shape = 's32[1]{0}', space=sflag, size = 0x4, scoped, tag = 'scoped memory for _encode_impl.1']
    %149 = vsyncpa [#allocation4], 0
    %s150 = scalar_lea.sflag [#allocation4], 1
    %151 = vsyncpa %s150, 0
    %152 = vsyncpa [#allocation6], 0
    %153 = vsyncpa [#allocation9], 0
    %154 = vsyncpa [#allocation12], 0
    %155 = vsyncpa [#allocation15], 0
    %156 = vsyncpa [#allocation18], 0
    %157 = vsyncpa [#allocation21], 0
    %158 = vsyncpa [#allocation24], 0
    %159 = vsyncpa [#allocation27], 0
    loop: start=0, step=1, limit=4
    $region2: #{_encode_impl.1} parent=1 // loop_pre_header
      _
    $region3: #{_encode_impl.1} parent=1 // loop_header
      %s161 = sphi 0, %s165
      %p162 = scmp.ge.s32.totalorder %s161, 4
      %s171 = sphi 0, %s173
      %s174 = sphi 0, %s171
      %s175 = sphi 0, %s174
      %s191 = sphi 0, %s175
      %s195 = sphi 0, %s195
      %s197 = sphi 0, %s195
      %s198 = sphi 0, %s197
      %s212 = sphi 0, %s198
      %s216 = sphi 0, %s216
      %s218 = sphi 0, %s216
      %s219 = sphi 0, %s218
      %s233 = sphi 0, %s219
      %s237 = sphi 0, %s237
      %s239 = sphi 0, %s237
      %s240 = sphi 0, %s239
      %s254 = sphi 0, %s240
      %s258 = sphi 0, %s258
      %s260 = sphi 0, %s258
      %s261 = sphi 0, %s260
      %s275 = sphi 0, %s261
      %s279 = sphi 0, %s279
      %s281 = sphi 0, %s279
      %s282 = sphi 0, %s281
      %s296 = sphi 0, %s282
      %s300 = sphi 0, %s300
      %s302 = sphi 0, %s300
      %s303 = sphi 0, %s302
      %s317 = sphi 0, %s303
      %s321 = sphi 0, %s321
      %s323 = sphi 0, %s321
      %s324 = sphi 0, %s323
      %s338 = sphi 0, %s324
      %s342 = sphi 0, %s342
      %s344 = sphi 0, %s342
      %s345 = sphi 0, %s344
      %s359 = sphi 0, %s345
      %s363 = sphi 0, %s363
      %s365 = sphi 0, %s363
      %s366 = sphi 0, %s365
      %s380 = sphi 0, %s366
      %s384 = sphi 0, %s384
      %s386 = sphi 0, %s384
      %s387 = sphi 0, %s386
      %s401 = sphi 0, %s387
      %s405 = sphi 0, %s405
      %s407 = sphi 0, %s405
      %s408 = sphi 0, %s407
      %s422 = sphi 0, %s408
      %s426 = sphi 0, %s426
      %s428 = sphi 0, %s426
      %s429 = sphi 0, %s428
      %s443 = sphi 0, %s429
      %s447 = sphi 0, %s447
      %s449 = sphi 0, %s447
      %s450 = sphi 0, %s449
      %s464 = sphi 0, %s450
      %s468 = sphi 0, %s468
      %s470 = sphi 0, %s468
      %s471 = sphi 0, %s470
      %s485 = sphi 0, %s471
      %s489 = sphi 0, %s489
      %s491 = sphi 0, %s489
      %s492 = sphi 0, %s491
      %s506 = sphi 0, %s492
      %s510 = sphi 0, %s510
      %s512 = sphi 0, %s510
      %s513 = sphi 0, %s512
      %s527 = sphi 0, %s513
      %s531 = sphi 0, %s531
      %s533 = sphi 0, %s531
      %s534 = sphi 0, %s533
      %s548 = sphi 0, %s534
      %s552 = sphi 0, %s552
      %s554 = sphi 0, %s552
      %s555 = sphi 0, %s554
      %s569 = sphi 0, %s555
      %s573 = sphi 0, %s573
      %s575 = sphi 0, %s573
      %s576 = sphi 0, %s575
      %s590 = sphi 0, %s576
      %s594 = sphi 0, %s594
      %s596 = sphi 0, %s594
      %s597 = sphi 0, %s596
      %s611 = sphi 0, %s597
      %s615 = sphi 0, %s615
      %s617 = sphi 0, %s615
      %s618 = sphi 0, %s617
      %s632 = sphi 0, %s618
      %s636 = sphi 0, %s636
      %s638 = sphi 0, %s636
      %s639 = sphi 0, %s638
      %s653 = sphi 0, %s639
      %s657 = sphi 0, %s657
      %s659 = sphi 0, %s657
      %s660 = sphi 0, %s659
      %s674 = sphi 0, %s660
      %s678 = sphi 0, %s678
      %s680 = sphi 0, %s678
      %s681 = sphi 0, %s680
      %s695 = sphi 0, %s681
      %s699 = sphi 0, %s699
      %s701 = sphi 0, %s699
      %s702 = sphi 0, %s701
      %s716 = sphi 0, %s702
      %s720 = sphi 0, %s720
      %s722 = sphi 0, %s720
      %s723 = sphi 0, %s722
      %s737 = sphi 0, %s723
      %s741 = sphi 0, %s741
      %s743 = sphi 0, %s741
      %s744 = sphi 0, %s743
      %s758 = sphi 0, %s744
      %s762 = sphi 0, %s762
      %s764 = sphi 0, %s762
      %s765 = sphi 0, %s764
      %s779 = sphi 0, %s765
      %s783 = sphi 0, %s783
      %s785 = sphi 0, %s783
      %s786 = sphi 0, %s785
      %s800 = sphi 0, %s786
      %s804 = sphi 0, %s804
      %s806 = sphi 0, %s804
      %s807 = sphi 0, %s806
      %s821 = sphi 0, %s807
      %s825 = sphi 0, %s825
      %s827 = sphi 0, %s825
      %s828 = sphi 0, %s827
      %s842 = sphi 0, %s828
      %s846 = sphi 0, %s846
      %s848 = sphi 0, %s846
      %s849 = sphi 0, %s848
      %s863 = sphi 0, %s849
      %s867 = sphi 0, %s867
      %s869 = sphi 0, %s867
      %s870 = sphi 0, %s869
      %s884 = sphi 0, %s870
      %s888 = sphi 0, %s888
      %s890 = sphi 0, %s888
      %s891 = sphi 0, %s890
      %s905 = sphi 0, %s891
      %s909 = sphi 0, %s909
      %s911 = sphi 0, %s909
      %s912 = sphi 0, %s911
      %s926 = sphi 0, %s912
      %s930 = sphi 0, %s930
      %s932 = sphi 0, %s930
      %s933 = sphi 0, %s932
      %s947 = sphi 0, %s933
      %s951 = sphi 0, %s951
      %s953 = sphi 0, %s951
      %s954 = sphi 0, %s953
      %s968 = sphi 0, %s954
      %s972 = sphi 0, %s972
      %s974 = sphi 0, %s972
      %s975 = sphi 0, %s974
      %s989 = sphi 0, %s975
      %s993 = sphi 0, %s993
      %s995 = sphi 0, %s993
      %s996 = sphi 0, %s995
      %s1010 = sphi 0, %s996
      %s1014 = sphi 0, %s1014
      %s1016 = sphi 0, %s1014
      %s1017 = sphi 0, %s1016
      %s1031 = sphi 0, %s1017
      %s1035 = sphi 0, %s1035
      %s1037 = sphi 0, %s1035
      %s1038 = sphi 0, %s1037
      %s1052 = sphi 0, %s1038
      %s1056 = sphi 0, %s1056
      %s1058 = sphi 0, %s1056
      %s1059 = sphi 0, %s1058
      %s1073 = sphi 0, %s1059
      %s1077 = sphi 0, %s1077
      %s1079 = sphi 0, %s1077
      %s1080 = sphi 0, %s1079
      %s1094 = sphi 0, %s1080
      %s1098 = sphi 0, %s1098
      %s1100 = sphi 0, %s1098
      %s1101 = sphi 0, %s1100
      %s1115 = sphi 0, %s1101
      %s1119 = sphi 0, %s1119
      %s1121 = sphi 0, %s1119
      %s1122 = sphi 0, %s1121
      %s1136 = sphi 0, %s1122
      %s1140 = sphi 0, %s1140
      %s1142 = sphi 0, %s1140
      %s1143 = sphi 0, %s1142
      %s1157 = sphi 0, %s1143
      %s1161 = sphi 0, %s1161
      %s1163 = sphi 0, %s1161
      %s1164 = sphi 0, %s1163
      %s1178 = sphi 0, %s1164
      %s1182 = sphi 0, %s1182
      %s1184 = sphi 0, %s1182
      %s1185 = sphi 0, %s1184
      %s1199 = sphi 0, %s1185
      %s1203 = sphi 0, %s1203
      %s1205 = sphi 0, %s1203
      %s1206 = sphi 0, %s1205
      %s1220 = sphi 0, %s1206
      %s1224 = sphi 0, %s1224
      %s1226 = sphi 0, %s1224
      %s1227 = sphi 0, %s1226
      %s1241 = sphi 0, %s1227
      %s1245 = sphi 0, %s1245
      %s1247 = sphi 0, %s1245
      %s1248 = sphi 0, %s1247
      %s1262 = sphi 0, %s1248
      %s1266 = sphi 0, %s1266
      %s1268 = sphi 0, %s1266
      %s1269 = sphi 0, %s1268
      %s1283 = sphi 0, %s1269
      %s1287 = sphi 0, %s1287
      %s1289 = sphi 0, %s1287
      %s1290 = sphi 0, %s1289
      %s1304 = sphi 0, %s1290
      %s1308 = sphi 0, %s1308
      %s1310 = sphi 0, %s1308
      %s1311 = sphi 0, %s1310
      %s1325 = sphi 0, %s1311
      %s1329 = sphi 0, %s1329
      %s1331 = sphi 0, %s1329
      %s1332 = sphi 0, %s1331
      %s1346 = sphi 0, %s1332
      %s1350 = sphi 0, %s1350
      %s1352 = sphi 0, %s1350
      %s1353 = sphi 0, %s1352
      %s1367 = sphi 0, %s1353
      %s1371 = sphi 0, %s1371
      %s1373 = sphi 0, %s1371
      %s1374 = sphi 0, %s1373
      %s1388 = sphi 0, %s1374
      %s1392 = sphi 0, %s1392
      %s1394 = sphi 0, %s1392
      %s1395 = sphi 0, %s1394
      %s1409 = sphi 0, %s1395
      %s1413 = sphi 0, %s1413
      %s1415 = sphi 0, %s1413
      %s1416 = sphi 0, %s1415
      %s1430 = sphi 0, %s1416
      %s1434 = sphi 0, %s1434
      %s1436 = sphi 0, %s1434
      %s1437 = sphi 0, %s1436
      %s1451 = sphi 0, %s1437
      %s1455 = sphi 0, %s1455
      %s1457 = sphi 0, %s1455
      %s1458 = sphi 0, %s1457
      %s1472 = sphi 0, %s1458
      %s1476 = sphi 0, %s1476
      %s1478 = sphi 0, %s1476
      %s1479 = sphi 0, %s1478
      %s1493 = sphi 0, %s1479
      %s1497 = sphi 0, %s1497
      %s1499 = sphi 0, %s1497
      %s1500 = sphi 0, %s1499
      %s1514 = sphi 0, %s1500
      %s1518 = sphi 0, %s1518
      %s1520 = sphi 0, %s1518
      %s1521 = sphi 0, %s1520
      %s1535 = sphi 0, %s1521
      %s1539 = sphi 0, %s1539
      %s1541 = sphi 0, %s1539
      %s1542 = sphi 0, %s1541
      %s1556 = sphi 0, %s1542
      %s1560 = sphi 0, %s1560
      %s1562 = sphi 0, %s1560
      %s1563 = sphi 0, %s1562
      %s1577 = sphi 0, %s1563
      %s1581 = sphi 0, %s1581
      %s1583 = sphi 0, %s1581
      %s1584 = sphi 0, %s1583
      %s1598 = sphi 0, %s1584
      %s1602 = sphi 0, %s1602
      %s1604 = sphi 0, %s1602
      %s1605 = sphi 0, %s1604
      %s1619 = sphi 0, %s1605
      %s1625 = sphi 0, %s1627
      %s1628 = sphi 0, %s1625
      %s1629 = sphi 0, %s1628
      %s1645 = sphi 0, %s1629
      %s1651 = sphi 0, %s1653
      %s1654 = sphi 0, %s1651
      %s1655 = sphi 0, %s1654
      %s1671 = sphi 0, %s1655
      %s1677 = sphi 0, %s1679
      %s1680 = sphi 0, %s1677
      %s1681 = sphi 0, %s1680
      %s1697 = sphi 0, %s1681
    $region4: #{_encode_impl.1} parent=1 // loop_header_branch
      %164 = sbr.rel (%p162) target = $region8
    $region5: #{_encode_impl.1} parent=1 // loop_body
      %s166 = ssub.s32 %s161, 1
      %s167 = ssub.s32 %s161, 2
      %s168 = sadd.s32 %s161, 1
      %s169 = ssub.s32 %s161, %s168
      %p170 = scmp.eq.s32.totalorder %s169, 0
      %s172 = sadd.s32 %s171, 1
      %s173 = scalar_select %p170, %s171, %s172
      %p176 = pneg %p170
      %p177 = scmp.eq.s32.totalorder %s161, 1
      %p178 = por %p176, %p177
      %p179 = scmp.ne.s32.totalorder %s171, %s174
      %p180 = scmp.eq.s32.totalorder %s161, 0
      %p181 = por %p179, %p180
      %p182 = scmp.ne.s32.totalorder %s171, %s174
      %p183 = scmp.eq.s32.totalorder %s166, 1
      %p184 = por %p182, %p183
      %p185 = scmp.ne.s32.totalorder %s174, %s175
      %p186 = scmp.eq.s32.totalorder %s166, 0
      %p187 = por %p185, %p186
      %p188 = scmp.ne.s32.totalorder %s174, %s175
      %p189 = scmp.eq.s32.totalorder %s167, 1
      %p190 = por %p188, %p189
      %p192 = scmp.ne.s32.totalorder %s175, %s191
      %p193 = scmp.eq.s32.totalorder %s167, 0
      %p194 = por %p192, %p193
      %s196 = sadd.s32 %s195, 1
      %p199 = scmp.eq.s32.totalorder %s161, 1
      %p200 = scmp.ne.s32.totalorder %s195, %s197
      %p201 = scmp.eq.s32.totalorder %s161, 0
      %p202 = por %p200, %p201
      %p203 = scmp.ne.s32.totalorder %s195, %s197
      %p204 = scmp.eq.s32.totalorder %s166, 1
      %p205 = por %p203, %p204
      %p206 = scmp.ne.s32.totalorder %s197, %s198
      %p207 = scmp.eq.s32.totalorder %s166, 0
      %p208 = por %p206, %p207
      %p209 = scmp.ne.s32.totalorder %s197, %s198
      %p210 = scmp.eq.s32.totalorder %s167, 1
      %p211 = por %p209, %p210
      %p213 = scmp.ne.s32.totalorder %s198, %s212
      %p214 = scmp.eq.s32.totalorder %s167, 0
      %p215 = por %p213, %p214
      %s217 = sadd.s32 %s216, 1
      %p220 = scmp.eq.s32.totalorder %s161, 1
      %p221 = scmp.ne.s32.totalorder %s216, %s218
      %p222 = scmp.eq.s32.totalorder %s161, 0
      %p223 = por %p221, %p222
      %p224 = scmp.ne.s32.totalorder %s216, %s218
      %p225 = scmp.eq.s32.totalorder %s166, 1
      %p226 = por %p224, %p225
      %p227 = scmp.ne.s32.totalorder %s218, %s219
      %p228 = scmp.eq.s32.totalorder %s166, 0
      %p229 = por %p227, %p228
      %p230 = scmp.ne.s32.totalorder %s218, %s219
      %p231 = scmp.eq.s32.totalorder %s167, 1
      %p232 = por %p230, %p231
      %p234 = scmp.ne.s32.totalorder %s219, %s233
      %p235 = scmp.eq.s32.totalorder %s167, 0
      %p236 = por %p234, %p235
      %s238 = sadd.s32 %s237, 1
      %p241 = scmp.eq.s32.totalorder %s161, 1
      %p242 = scmp.ne.s32.totalorder %s237, %s239
      %p243 = scmp.eq.s32.totalorder %s161, 0
      %p244 = por %p242, %p243
      %p245 = scmp.ne.s32.totalorder %s237, %s239
      %p246 = scmp.eq.s32.totalorder %s166, 1
      %p247 = por %p245, %p246
      %p248 = scmp.ne.s32.totalorder %s239, %s240
      %p249 = scmp.eq.s32.totalorder %s166, 0
      %p250 = por %p248, %p249
      %p251 = scmp.ne.s32.totalorder %s239, %s240
      %p252 = scmp.eq.s32.totalorder %s167, 1
      %p253 = por %p251, %p252
      %p255 = scmp.ne.s32.totalorder %s240, %s254
      %p256 = scmp.eq.s32.totalorder %s167, 0
      %p257 = por %p255, %p256
      %s259 = sadd.s32 %s258, 1
      %p262 = scmp.eq.s32.totalorder %s161, 1
      %p263 = scmp.ne.s32.totalorder %s258, %s260
      %p264 = scmp.eq.s32.totalorder %s161, 0
      %p265 = por %p263, %p264
      %p266 = scmp.ne.s32.totalorder %s258, %s260
      %p267 = scmp.eq.s32.totalorder %s166, 1
      %p268 = por %p266, %p267
      %p269 = scmp.ne.s32.totalorder %s260, %s261
      %p270 = scmp.eq.s32.totalorder %s166, 0
      %p271 = por %p269, %p270
      %p272 = scmp.ne.s32.totalorder %s260, %s261
      %p273 = scmp.eq.s32.totalorder %s167, 1
      %p274 = por %p272, %p273
      %p276 = scmp.ne.s32.totalorder %s261, %s275
      %p277 = scmp.eq.s32.totalorder %s167, 0
      %p278 = por %p276, %p277
      %s280 = sadd.s32 %s279, 1
      %p283 = scmp.eq.s32.totalorder %s161, 1
      %p284 = scmp.ne.s32.totalorder %s279, %s281
      %p285 = scmp.eq.s32.totalorder %s161, 0
      %p286 = por %p284, %p285
      %p287 = scmp.ne.s32.totalorder %s279, %s281
      %p288 = scmp.eq.s32.totalorder %s166, 1
      %p289 = por %p287, %p288
      %p290 = scmp.ne.s32.totalorder %s281, %s282
      %p291 = scmp.eq.s32.totalorder %s166, 0
      %p292 = por %p290, %p291
      %p293 = scmp.ne.s32.totalorder %s281, %s282
      %p294 = scmp.eq.s32.totalorder %s167, 1
      %p295 = por %p293, %p294
      %p297 = scmp.ne.s32.totalorder %s282, %s296
      %p298 = scmp.eq.s32.totalorder %s167, 0
      %p299 = por %p297, %p298
      %s301 = sadd.s32 %s300, 1
      %p304 = scmp.eq.s32.totalorder %s161, 1
      %p305 = scmp.ne.s32.totalorder %s300, %s302
      %p306 = scmp.eq.s32.totalorder %s161, 0
      %p307 = por %p305, %p306
      %p308 = scmp.ne.s32.totalorder %s300, %s302
      %p309 = scmp.eq.s32.totalorder %s166, 1
      %p310 = por %p308, %p309
      %p311 = scmp.ne.s32.totalorder %s302, %s303
      %p312 = scmp.eq.s32.totalorder %s166, 0
      %p313 = por %p311, %p312
      %p314 = scmp.ne.s32.totalorder %s302, %s303
      %p315 = scmp.eq.s32.totalorder %s167, 1
      %p316 = por %p314, %p315
      %p318 = scmp.ne.s32.totalorder %s303, %s317
      %p319 = scmp.eq.s32.totalorder %s167, 0
      %p320 = por %p318, %p319
      %s322 = sadd.s32 %s321, 1
      %p325 = scmp.eq.s32.totalorder %s161, 1
      %p326 = scmp.ne.s32.totalorder %s321, %s323
      %p327 = scmp.eq.s32.totalorder %s161, 0
      %p328 = por %p326, %p327
      %p329 = scmp.ne.s32.totalorder %s321, %s323
      %p330 = scmp.eq.s32.totalorder %s166, 1
      %p331 = por %p329, %p330
      %p332 = scmp.ne.s32.totalorder %s323, %s324
      %p333 = scmp.eq.s32.totalorder %s166, 0
      %p334 = por %p332, %p333
      %p335 = scmp.ne.s32.totalorder %s323, %s324
      %p336 = scmp.eq.s32.totalorder %s167, 1
      %p337 = por %p335, %p336
      %p339 = scmp.ne.s32.totalorder %s324, %s338
      %p340 = scmp.eq.s32.totalorder %s167, 0
      %p341 = por %p339, %p340
      %s343 = sadd.s32 %s342, 1
      %p346 = scmp.eq.s32.totalorder %s161, 1
      %p347 = scmp.ne.s32.totalorder %s342, %s344
      %p348 = scmp.eq.s32.totalorder %s161, 0
      %p349 = por %p347, %p348
      %p350 = scmp.ne.s32.totalorder %s342, %s344
      %p351 = scmp.eq.s32.totalorder %s166, 1
      %p352 = por %p350, %p351
      %p353 = scmp.ne.s32.totalorder %s344, %s345
      %p354 = scmp.eq.s32.totalorder %s166, 0
      %p355 = por %p353, %p354
      %p356 = scmp.ne.s32.totalorder %s344, %s345
      %p357 = scmp.eq.s32.totalorder %s167, 1
      %p358 = por %p356, %p357
      %p360 = scmp.ne.s32.totalorder %s345, %s359
      %p361 = scmp.eq.s32.totalorder %s167, 0
      %p362 = por %p360, %p361
      %s364 = sadd.s32 %s363, 1
      %p367 = scmp.eq.s32.totalorder %s161, 1
      %p368 = scmp.ne.s32.totalorder %s363, %s365
      %p369 = scmp.eq.s32.totalorder %s161, 0
      %p370 = por %p368, %p369
      %p371 = scmp.ne.s32.totalorder %s363, %s365
      %p372 = scmp.eq.s32.totalorder %s166, 1
      %p373 = por %p371, %p372
      %p374 = scmp.ne.s32.totalorder %s365, %s366
      %p375 = scmp.eq.s32.totalorder %s166, 0
      %p376 = por %p374, %p375
      %p377 = scmp.ne.s32.totalorder %s365, %s366
      %p378 = scmp.eq.s32.totalorder %s167, 1
      %p379 = por %p377, %p378
      %p381 = scmp.ne.s32.totalorder %s366, %s380
      %p382 = scmp.eq.s32.totalorder %s167, 0
      %p383 = por %p381, %p382
      %s385 = sadd.s32 %s384, 1
      %p388 = scmp.eq.s32.totalorder %s161, 1
      %p389 = scmp.ne.s32.totalorder %s384, %s386
      %p390 = scmp.eq.s32.totalorder %s161, 0
      %p391 = por %p389, %p390
      %p392 = scmp.ne.s32.totalorder %s384, %s386
      %p393 = scmp.eq.s32.totalorder %s166, 1
      %p394 = por %p392, %p393
      %p395 = scmp.ne.s32.totalorder %s386, %s387
      %p396 = scmp.eq.s32.totalorder %s166, 0
      %p397 = por %p395, %p396
      %p398 = scmp.ne.s32.totalorder %s386, %s387
      %p399 = scmp.eq.s32.totalorder %s167, 1
      %p400 = por %p398, %p399
      %p402 = scmp.ne.s32.totalorder %s387, %s401
      %p403 = scmp.eq.s32.totalorder %s167, 0
      %p404 = por %p402, %p403
      %s406 = sadd.s32 %s405, 1
      %p409 = scmp.eq.s32.totalorder %s161, 1
      %p410 = scmp.ne.s32.totalorder %s405, %s407
      %p411 = scmp.eq.s32.totalorder %s161, 0
      %p412 = por %p410, %p411
      %p413 = scmp.ne.s32.totalorder %s405, %s407
      %p414 = scmp.eq.s32.totalorder %s166, 1
      %p415 = por %p413, %p414
      %p416 = scmp.ne.s32.totalorder %s407, %s408
      %p417 = scmp.eq.s32.totalorder %s166, 0
      %p418 = por %p416, %p417
      %p419 = scmp.ne.s32.totalorder %s407, %s408
      %p420 = scmp.eq.s32.totalorder %s167, 1
      %p421 = por %p419, %p420
      %p423 = scmp.ne.s32.totalorder %s408, %s422
      %p424 = scmp.eq.s32.totalorder %s167, 0
      %p425 = por %p423, %p424
      %s427 = sadd.s32 %s426, 1
      %p430 = scmp.eq.s32.totalorder %s161, 1
      %p431 = scmp.ne.s32.totalorder %s426, %s428
      %p432 = scmp.eq.s32.totalorder %s161, 0
      %p433 = por %p431, %p432
      %p434 = scmp.ne.s32.totalorder %s426, %s428
      %p435 = scmp.eq.s32.totalorder %s166, 1
      %p436 = por %p434, %p435
      %p437 = scmp.ne.s32.totalorder %s428, %s429
      %p438 = scmp.eq.s32.totalorder %s166, 0
      %p439 = por %p437, %p438
      %p440 = scmp.ne.s32.totalorder %s428, %s429
      %p441 = scmp.eq.s32.totalorder %s167, 1
      %p442 = por %p440, %p441
      %p444 = scmp.ne.s32.totalorder %s429, %s443
      %p445 = scmp.eq.s32.totalorder %s167, 0
      %p446 = por %p444, %p445
      %s448 = sadd.s32 %s447, 1
      %p451 = scmp.eq.s32.totalorder %s161, 1
      %p452 = scmp.ne.s32.totalorder %s447, %s449
      %p453 = scmp.eq.s32.totalorder %s161, 0
      %p454 = por %p452, %p453
      %p455 = scmp.ne.s32.totalorder %s447, %s449
      %p456 = scmp.eq.s32.totalorder %s166, 1
      %p457 = por %p455, %p456
      %p458 = scmp.ne.s32.totalorder %s449, %s450
      %p459 = scmp.eq.s32.totalorder %s166, 0
      %p460 = por %p458, %p459
      %p461 = scmp.ne.s32.totalorder %s449, %s450
      %p462 = scmp.eq.s32.totalorder %s167, 1
      %p463 = por %p461, %p462
      %p465 = scmp.ne.s32.totalorder %s450, %s464
      %p466 = scmp.eq.s32.totalorder %s167, 0
      %p467 = por %p465, %p466
      %s469 = sadd.s32 %s468, 1
      %p472 = scmp.eq.s32.totalorder %s161, 1
      %p473 = scmp.ne.s32.totalorder %s468, %s470
      %p474 = scmp.eq.s32.totalorder %s161, 0
      %p475 = por %p473, %p474
      %p476 = scmp.ne.s32.totalorder %s468, %s470
      %p477 = scmp.eq.s32.totalorder %s166, 1
      %p478 = por %p476, %p477
      %p479 = scmp.ne.s32.totalorder %s470, %s471
      %p480 = scmp.eq.s32.totalorder %s166, 0
      %p481 = por %p479, %p480
      %p482 = scmp.ne.s32.totalorder %s470, %s471
      %p483 = scmp.eq.s32.totalorder %s167, 1
      %p484 = por %p482, %p483
      %p486 = scmp.ne.s32.totalorder %s471, %s485
      %p487 = scmp.eq.s32.totalorder %s167, 0
      %p488 = por %p486, %p487
      %s490 = sadd.s32 %s489, 1
      %p493 = scmp.eq.s32.totalorder %s161, 1
      %p494 = scmp.ne.s32.totalorder %s489, %s491
      %p495 = scmp.eq.s32.totalorder %s161, 0
      %p496 = por %p494, %p495
      %p497 = scmp.ne.s32.totalorder %s489, %s491
      %p498 = scmp.eq.s32.totalorder %s166, 1
      %p499 = por %p497, %p498
      %p500 = scmp.ne.s32.totalorder %s491, %s492
      %p501 = scmp.eq.s32.totalorder %s166, 0
      %p502 = por %p500, %p501
      %p503 = scmp.ne.s32.totalorder %s491, %s492
      %p504 = scmp.eq.s32.totalorder %s167, 1
      %p505 = por %p503, %p504
      %p507 = scmp.ne.s32.totalorder %s492, %s506
      %p508 = scmp.eq.s32.totalorder %s167, 0
      %p509 = por %p507, %p508
      %s511 = sadd.s32 %s510, 1
      %p514 = scmp.eq.s32.totalorder %s161, 1
      %p515 = scmp.ne.s32.totalorder %s510, %s512
      %p516 = scmp.eq.s32.totalorder %s161, 0
      %p517 = por %p515, %p516
      %p518 = scmp.ne.s32.totalorder %s510, %s512
      %p519 = scmp.eq.s32.totalorder %s166, 1
      %p520 = por %p518, %p519
      %p521 = scmp.ne.s32.totalorder %s512, %s513
      %p522 = scmp.eq.s32.totalorder %s166, 0
      %p523 = por %p521, %p522
      %p524 = scmp.ne.s32.totalorder %s512, %s513
      %p525 = scmp.eq.s32.totalorder %s167, 1
      %p526 = por %p524, %p525
      %p528 = scmp.ne.s32.totalorder %s513, %s527
      %p529 = scmp.eq.s32.totalorder %s167, 0
      %p530 = por %p528, %p529
      %s532 = sadd.s32 %s531, 1
      %p535 = scmp.eq.s32.totalorder %s161, 1
      %p536 = scmp.ne.s32.totalorder %s531, %s533
      %p537 = scmp.eq.s32.totalorder %s161, 0
      %p538 = por %p536, %p537
      %p539 = scmp.ne.s32.totalorder %s531, %s533
      %p540 = scmp.eq.s32.totalorder %s166, 1
      %p541 = por %p539, %p540
      %p542 = scmp.ne.s32.totalorder %s533, %s534
      %p543 = scmp.eq.s32.totalorder %s166, 0
      %p544 = por %p542, %p543
      %p545 = scmp.ne.s32.totalorder %s533, %s534
      %p546 = scmp.eq.s32.totalorder %s167, 1
      %p547 = por %p545, %p546
      %p549 = scmp.ne.s32.totalorder %s534, %s548
      %p550 = scmp.eq.s32.totalorder %s167, 0
      %p551 = por %p549, %p550
      %s553 = sadd.s32 %s552, 1
      %p556 = scmp.eq.s32.totalorder %s161, 1
      %p557 = scmp.ne.s32.totalorder %s552, %s554
      %p558 = scmp.eq.s32.totalorder %s161, 0
      %p559 = por %p557, %p558
      %p560 = scmp.ne.s32.totalorder %s552, %s554
      %p561 = scmp.eq.s32.totalorder %s166, 1
      %p562 = por %p560, %p561
      %p563 = scmp.ne.s32.totalorder %s554, %s555
      %p564 = scmp.eq.s32.totalorder %s166, 0
      %p565 = por %p563, %p564
      %p566 = scmp.ne.s32.totalorder %s554, %s555
      %p567 = scmp.eq.s32.totalorder %s167, 1
      %p568 = por %p566, %p567
      %p570 = scmp.ne.s32.totalorder %s555, %s569
      %p571 = scmp.eq.s32.totalorder %s167, 0
      %p572 = por %p570, %p571
      %s574 = sadd.s32 %s573, 1
      %p577 = scmp.eq.s32.totalorder %s161, 1
      %p578 = scmp.ne.s32.totalorder %s573, %s575
      %p579 = scmp.eq.s32.totalorder %s161, 0
      %p580 = por %p578, %p579
      %p581 = scmp.ne.s32.totalorder %s573, %s575
      %p582 = scmp.eq.s32.totalorder %s166, 1
      %p583 = por %p581, %p582
      %p584 = scmp.ne.s32.totalorder %s575, %s576
      %p585 = scmp.eq.s32.totalorder %s166, 0
      %p586 = por %p584, %p585
      %p587 = scmp.ne.s32.totalorder %s575, %s576
      %p588 = scmp.eq.s32.totalorder %s167, 1
      %p589 = por %p587, %p588
      %p591 = scmp.ne.s32.totalorder %s576, %s590
      %p592 = scmp.eq.s32.totalorder %s167, 0
      %p593 = por %p591, %p592
      %s595 = sadd.s32 %s594, 1
      %p598 = scmp.eq.s32.totalorder %s161, 1
      %p599 = scmp.ne.s32.totalorder %s594, %s596
      %p600 = scmp.eq.s32.totalorder %s161, 0
      %p601 = por %p599, %p600
      %p602 = scmp.ne.s32.totalorder %s594, %s596
      %p603 = scmp.eq.s32.totalorder %s166, 1
      %p604 = por %p602, %p603
      %p605 = scmp.ne.s32.totalorder %s596, %s597
      %p606 = scmp.eq.s32.totalorder %s166, 0
      %p607 = por %p605, %p606
      %p608 = scmp.ne.s32.totalorder %s596, %s597
      %p609 = scmp.eq.s32.totalorder %s167, 1
      %p610 = por %p608, %p609
      %p612 = scmp.ne.s32.totalorder %s597, %s611
      %p613 = scmp.eq.s32.totalorder %s167, 0
      %p614 = por %p612, %p613
      %s616 = sadd.s32 %s615, 1
      %p619 = scmp.eq.s32.totalorder %s161, 1
      %p620 = scmp.ne.s32.totalorder %s615, %s617
      %p621 = scmp.eq.s32.totalorder %s161, 0
      %p622 = por %p620, %p621
      %p623 = scmp.ne.s32.totalorder %s615, %s617
      %p624 = scmp.eq.s32.totalorder %s166, 1
      %p625 = por %p623, %p624
      %p626 = scmp.ne.s32.totalorder %s617, %s618
      %p627 = scmp.eq.s32.totalorder %s166, 0
      %p628 = por %p626, %p627
      %p629 = scmp.ne.s32.totalorder %s617, %s618
      %p630 = scmp.eq.s32.totalorder %s167, 1
      %p631 = por %p629, %p630
      %p633 = scmp.ne.s32.totalorder %s618, %s632
      %p634 = scmp.eq.s32.totalorder %s167, 0
      %p635 = por %p633, %p634
      %s637 = sadd.s32 %s636, 1
      %p640 = scmp.eq.s32.totalorder %s161, 1
      %p641 = scmp.ne.s32.totalorder %s636, %s638
      %p642 = scmp.eq.s32.totalorder %s161, 0
      %p643 = por %p641, %p642
      %p644 = scmp.ne.s32.totalorder %s636, %s638
      %p645 = scmp.eq.s32.totalorder %s166, 1
      %p646 = por %p644, %p645
      %p647 = scmp.ne.s32.totalorder %s638, %s639
      %p648 = scmp.eq.s32.totalorder %s166, 0
      %p649 = por %p647, %p648
      %p650 = scmp.ne.s32.totalorder %s638, %s639
      %p651 = scmp.eq.s32.totalorder %s167, 1
      %p652 = por %p650, %p651
      %p654 = scmp.ne.s32.totalorder %s639, %s653
      %p655 = scmp.eq.s32.totalorder %s167, 0
      %p656 = por %p654, %p655
      %s658 = sadd.s32 %s657, 1
      %p661 = scmp.eq.s32.totalorder %s161, 1
      %p662 = scmp.ne.s32.totalorder %s657, %s659
      %p663 = scmp.eq.s32.totalorder %s161, 0
      %p664 = por %p662, %p663
      %p665 = scmp.ne.s32.totalorder %s657, %s659
      %p666 = scmp.eq.s32.totalorder %s166, 1
      %p667 = por %p665, %p666
      %p668 = scmp.ne.s32.totalorder %s659, %s660
      %p669 = scmp.eq.s32.totalorder %s166, 0
      %p670 = por %p668, %p669
      %p671 = scmp.ne.s32.totalorder %s659, %s660
      %p672 = scmp.eq.s32.totalorder %s167, 1
      %p673 = por %p671, %p672
      %p675 = scmp.ne.s32.totalorder %s660, %s674
      %p676 = scmp.eq.s32.totalorder %s167, 0
      %p677 = por %p675, %p676
      %s679 = sadd.s32 %s678, 1
      %p682 = scmp.eq.s32.totalorder %s161, 1
      %p683 = scmp.ne.s32.totalorder %s678, %s680
      %p684 = scmp.eq.s32.totalorder %s161, 0
      %p685 = por %p683, %p684
      %p686 = scmp.ne.s32.totalorder %s678, %s680
      %p687 = scmp.eq.s32.totalorder %s166, 1
      %p688 = por %p686, %p687
      %p689 = scmp.ne.s32.totalorder %s680, %s681
      %p690 = scmp.eq.s32.totalorder %s166, 0
      %p691 = por %p689, %p690
      %p692 = scmp.ne.s32.totalorder %s680, %s681
      %p693 = scmp.eq.s32.totalorder %s167, 1
      %p694 = por %p692, %p693
      %p696 = scmp.ne.s32.totalorder %s681, %s695
      %p697 = scmp.eq.s32.totalorder %s167, 0
      %p698 = por %p696, %p697
      %s700 = sadd.s32 %s699, 1
      %p703 = scmp.eq.s32.totalorder %s161, 1
      %p704 = scmp.ne.s32.totalorder %s699, %s701
      %p705 = scmp.eq.s32.totalorder %s161, 0
      %p706 = por %p704, %p705
      %p707 = scmp.ne.s32.totalorder %s699, %s701
      %p708 = scmp.eq.s32.totalorder %s166, 1
      %p709 = por %p707, %p708
      %p710 = scmp.ne.s32.totalorder %s701, %s702
      %p711 = scmp.eq.s32.totalorder %s166, 0
      %p712 = por %p710, %p711
      %p713 = scmp.ne.s32.totalorder %s701, %s702
      %p714 = scmp.eq.s32.totalorder %s167, 1
      %p715 = por %p713, %p714
      %p717 = scmp.ne.s32.totalorder %s702, %s716
      %p718 = scmp.eq.s32.totalorder %s167, 0
      %p719 = por %p717, %p718
      %s721 = sadd.s32 %s720, 1
      %p724 = scmp.eq.s32.totalorder %s161, 1
      %p725 = scmp.ne.s32.totalorder %s720, %s722
      %p726 = scmp.eq.s32.totalorder %s161, 0
      %p727 = por %p725, %p726
      %p728 = scmp.ne.s32.totalorder %s720, %s722
      %p729 = scmp.eq.s32.totalorder %s166, 1
      %p730 = por %p728, %p729
      %p731 = scmp.ne.s32.totalorder %s722, %s723
      %p732 = scmp.eq.s32.totalorder %s166, 0
      %p733 = por %p731, %p732
      %p734 = scmp.ne.s32.totalorder %s722, %s723
      %p735 = scmp.eq.s32.totalorder %s167, 1
      %p736 = por %p734, %p735
      %p738 = scmp.ne.s32.totalorder %s723, %s737
      %p739 = scmp.eq.s32.totalorder %s167, 0
      %p740 = por %p738, %p739
      %s742 = sadd.s32 %s741, 1
      %p745 = scmp.eq.s32.totalorder %s161, 1
      %p746 = scmp.ne.s32.totalorder %s741, %s743
      %p747 = scmp.eq.s32.totalorder %s161, 0
      %p748 = por %p746, %p747
      %p749 = scmp.ne.s32.totalorder %s741, %s743
      %p750 = scmp.eq.s32.totalorder %s166, 1
      %p751 = por %p749, %p750
      %p752 = scmp.ne.s32.totalorder %s743, %s744
      %p753 = scmp.eq.s32.totalorder %s166, 0
      %p754 = por %p752, %p753
      %p755 = scmp.ne.s32.totalorder %s743, %s744
      %p756 = scmp.eq.s32.totalorder %s167, 1
      %p757 = por %p755, %p756
      %p759 = scmp.ne.s32.totalorder %s744, %s758
      %p760 = scmp.eq.s32.totalorder %s167, 0
      %p761 = por %p759, %p760
      %s763 = sadd.s32 %s762, 1
      %p766 = scmp.eq.s32.totalorder %s161, 1
      %p767 = scmp.ne.s32.totalorder %s762, %s764
      %p768 = scmp.eq.s32.totalorder %s161, 0
      %p769 = por %p767, %p768
      %p770 = scmp.ne.s32.totalorder %s762, %s764
      %p771 = scmp.eq.s32.totalorder %s166, 1
      %p772 = por %p770, %p771
      %p773 = scmp.ne.s32.totalorder %s764, %s765
      %p774 = scmp.eq.s32.totalorder %s166, 0
      %p775 = por %p773, %p774
      %p776 = scmp.ne.s32.totalorder %s764, %s765
      %p777 = scmp.eq.s32.totalorder %s167, 1
      %p778 = por %p776, %p777
      %p780 = scmp.ne.s32.totalorder %s765, %s779
      %p781 = scmp.eq.s32.totalorder %s167, 0
      %p782 = por %p780, %p781
      %s784 = sadd.s32 %s783, 1
      %p787 = scmp.eq.s32.totalorder %s161, 1
      %p788 = scmp.ne.s32.totalorder %s783, %s785
      %p789 = scmp.eq.s32.totalorder %s161, 0
      %p790 = por %p788, %p789
      %p791 = scmp.ne.s32.totalorder %s783, %s785
      %p792 = scmp.eq.s32.totalorder %s166, 1
      %p793 = por %p791, %p792
      %p794 = scmp.ne.s32.totalorder %s785, %s786
      %p795 = scmp.eq.s32.totalorder %s166, 0
      %p796 = por %p794, %p795
      %p797 = scmp.ne.s32.totalorder %s785, %s786
      %p798 = scmp.eq.s32.totalorder %s167, 1
      %p799 = por %p797, %p798
      %p801 = scmp.ne.s32.totalorder %s786, %s800
      %p802 = scmp.eq.s32.totalorder %s167, 0
      %p803 = por %p801, %p802
      %s805 = sadd.s32 %s804, 1
      %p808 = scmp.eq.s32.totalorder %s161, 1
      %p809 = scmp.ne.s32.totalorder %s804, %s806
      %p810 = scmp.eq.s32.totalorder %s161, 0
      %p811 = por %p809, %p810
      %p812 = scmp.ne.s32.totalorder %s804, %s806
      %p813 = scmp.eq.s32.totalorder %s166, 1
      %p814 = por %p812, %p813
      %p815 = scmp.ne.s32.totalorder %s806, %s807
      %p816 = scmp.eq.s32.totalorder %s166, 0
      %p817 = por %p815, %p816
      %p818 = scmp.ne.s32.totalorder %s806, %s807
      %p819 = scmp.eq.s32.totalorder %s167, 1
      %p820 = por %p818, %p819
      %p822 = scmp.ne.s32.totalorder %s807, %s821
      %p823 = scmp.eq.s32.totalorder %s167, 0
      %p824 = por %p822, %p823
      %s826 = sadd.s32 %s825, 1
      %p829 = scmp.eq.s32.totalorder %s161, 1
      %p830 = scmp.ne.s32.totalorder %s825, %s827
      %p831 = scmp.eq.s32.totalorder %s161, 0
      %p832 = por %p830, %p831
      %p833 = scmp.ne.s32.totalorder %s825, %s827
      %p834 = scmp.eq.s32.totalorder %s166, 1
      %p835 = por %p833, %p834
      %p836 = scmp.ne.s32.totalorder %s827, %s828
      %p837 = scmp.eq.s32.totalorder %s166, 0
      %p838 = por %p836, %p837
      %p839 = scmp.ne.s32.totalorder %s827, %s828
      %p840 = scmp.eq.s32.totalorder %s167, 1
      %p841 = por %p839, %p840
      %p843 = scmp.ne.s32.totalorder %s828, %s842
      %p844 = scmp.eq.s32.totalorder %s167, 0
      %p845 = por %p843, %p844
      %s847 = sadd.s32 %s846, 1
      %p850 = scmp.eq.s32.totalorder %s161, 1
      %p851 = scmp.ne.s32.totalorder %s846, %s848
      %p852 = scmp.eq.s32.totalorder %s161, 0
      %p853 = por %p851, %p852
      %p854 = scmp.ne.s32.totalorder %s846, %s848
      %p855 = scmp.eq.s32.totalorder %s166, 1
      %p856 = por %p854, %p855
      %p857 = scmp.ne.s32.totalorder %s848, %s849
      %p858 = scmp.eq.s32.totalorder %s166, 0
      %p859 = por %p857, %p858
      %p860 = scmp.ne.s32.totalorder %s848, %s849
      %p861 = scmp.eq.s32.totalorder %s167, 1
      %p862 = por %p860, %p861
      %p864 = scmp.ne.s32.totalorder %s849, %s863
      %p865 = scmp.eq.s32.totalorder %s167, 0
      %p866 = por %p864, %p865
      %s868 = sadd.s32 %s867, 1
      %p871 = scmp.eq.s32.totalorder %s161, 1
      %p872 = scmp.ne.s32.totalorder %s867, %s869
      %p873 = scmp.eq.s32.totalorder %s161, 0
      %p874 = por %p872, %p873
      %p875 = scmp.ne.s32.totalorder %s867, %s869
      %p876 = scmp.eq.s32.totalorder %s166, 1
      %p877 = por %p875, %p876
      %p878 = scmp.ne.s32.totalorder %s869, %s870
      %p879 = scmp.eq.s32.totalorder %s166, 0
      %p880 = por %p878, %p879
      %p881 = scmp.ne.s32.totalorder %s869, %s870
      %p882 = scmp.eq.s32.totalorder %s167, 1
      %p883 = por %p881, %p882
      %p885 = scmp.ne.s32.totalorder %s870, %s884
      %p886 = scmp.eq.s32.totalorder %s167, 0
      %p887 = por %p885, %p886
      %s889 = sadd.s32 %s888, 1
      %p892 = scmp.eq.s32.totalorder %s161, 1
      %p893 = scmp.ne.s32.totalorder %s888, %s890
      %p894 = scmp.eq.s32.totalorder %s161, 0
      %p895 = por %p893, %p894
      %p896 = scmp.ne.s32.totalorder %s888, %s890
      %p897 = scmp.eq.s32.totalorder %s166, 1
      %p898 = por %p896, %p897
      %p899 = scmp.ne.s32.totalorder %s890, %s891
      %p900 = scmp.eq.s32.totalorder %s166, 0
      %p901 = por %p899, %p900
      %p902 = scmp.ne.s32.totalorder %s890, %s891
      %p903 = scmp.eq.s32.totalorder %s167, 1
      %p904 = por %p902, %p903
      %p906 = scmp.ne.s32.totalorder %s891, %s905
      %p907 = scmp.eq.s32.totalorder %s167, 0
      %p908 = por %p906, %p907
      %s910 = sadd.s32 %s909, 1
      %p913 = scmp.eq.s32.totalorder %s161, 1
      %p914 = scmp.ne.s32.totalorder %s909, %s911
      %p915 = scmp.eq.s32.totalorder %s161, 0
      %p916 = por %p914, %p915
      %p917 = scmp.ne.s32.totalorder %s909, %s911
      %p918 = scmp.eq.s32.totalorder %s166, 1
      %p919 = por %p917, %p918
      %p920 = scmp.ne.s32.totalorder %s911, %s912
      %p921 = scmp.eq.s32.totalorder %s166, 0
      %p922 = por %p920, %p921
      %p923 = scmp.ne.s32.totalorder %s911, %s912
      %p924 = scmp.eq.s32.totalorder %s167, 1
      %p925 = por %p923, %p924
      %p927 = scmp.ne.s32.totalorder %s912, %s926
      %p928 = scmp.eq.s32.totalorder %s167, 0
      %p929 = por %p927, %p928
      %s931 = sadd.s32 %s930, 1
      %p934 = scmp.eq.s32.totalorder %s161, 1
      %p935 = scmp.ne.s32.totalorder %s930, %s932
      %p936 = scmp.eq.s32.totalorder %s161, 0
      %p937 = por %p935, %p936
      %p938 = scmp.ne.s32.totalorder %s930, %s932
      %p939 = scmp.eq.s32.totalorder %s166, 1
      %p940 = por %p938, %p939
      %p941 = scmp.ne.s32.totalorder %s932, %s933
      %p942 = scmp.eq.s32.totalorder %s166, 0
      %p943 = por %p941, %p942
      %p944 = scmp.ne.s32.totalorder %s932, %s933
      %p945 = scmp.eq.s32.totalorder %s167, 1
      %p946 = por %p944, %p945
      %p948 = scmp.ne.s32.totalorder %s933, %s947
      %p949 = scmp.eq.s32.totalorder %s167, 0
      %p950 = por %p948, %p949
      %s952 = sadd.s32 %s951, 1
      %p955 = scmp.eq.s32.totalorder %s161, 1
      %p956 = scmp.ne.s32.totalorder %s951, %s953
      %p957 = scmp.eq.s32.totalorder %s161, 0
      %p958 = por %p956, %p957
      %p959 = scmp.ne.s32.totalorder %s951, %s953
      %p960 = scmp.eq.s32.totalorder %s166, 1
      %p961 = por %p959, %p960
      %p962 = scmp.ne.s32.totalorder %s953, %s954
      %p963 = scmp.eq.s32.totalorder %s166, 0
      %p964 = por %p962, %p963
      %p965 = scmp.ne.s32.totalorder %s953, %s954
      %p966 = scmp.eq.s32.totalorder %s167, 1
      %p967 = por %p965, %p966
      %p969 = scmp.ne.s32.totalorder %s954, %s968
      %p970 = scmp.eq.s32.totalorder %s167, 0
      %p971 = por %p969, %p970
      %s973 = sadd.s32 %s972, 1
      %p976 = scmp.eq.s32.totalorder %s161, 1
      %p977 = scmp.ne.s32.totalorder %s972, %s974
      %p978 = scmp.eq.s32.totalorder %s161, 0
      %p979 = por %p977, %p978
      %p980 = scmp.ne.s32.totalorder %s972, %s974
      %p981 = scmp.eq.s32.totalorder %s166, 1
      %p982 = por %p980, %p981
      %p983 = scmp.ne.s32.totalorder %s974, %s975
      %p984 = scmp.eq.s32.totalorder %s166, 0
      %p985 = por %p983, %p984
      %p986 = scmp.ne.s32.totalorder %s974, %s975
      %p987 = scmp.eq.s32.totalorder %s167, 1
      %p988 = por %p986, %p987
      %p990 = scmp.ne.s32.totalorder %s975, %s989
      %p991 = scmp.eq.s32.totalorder %s167, 0
      %p992 = por %p990, %p991
      %s994 = sadd.s32 %s993, 1
      %p997 = scmp.eq.s32.totalorder %s161, 1
      %p998 = scmp.ne.s32.totalorder %s993, %s995
      %p999 = scmp.eq.s32.totalorder %s161, 0
      %p1000 = por %p998, %p999
      %p1001 = scmp.ne.s32.totalorder %s993, %s995
      %p1002 = scmp.eq.s32.totalorder %s166, 1
      %p1003 = por %p1001, %p1002
      %p1004 = scmp.ne.s32.totalorder %s995, %s996
      %p1005 = scmp.eq.s32.totalorder %s166, 0
      %p1006 = por %p1004, %p1005
      %p1007 = scmp.ne.s32.totalorder %s995, %s996
      %p1008 = scmp.eq.s32.totalorder %s167, 1
      %p1009 = por %p1007, %p1008
      %p1011 = scmp.ne.s32.totalorder %s996, %s1010
      %p1012 = scmp.eq.s32.totalorder %s167, 0
      %p1013 = por %p1011, %p1012
      %s1015 = sadd.s32 %s1014, 1
      %p1018 = scmp.eq.s32.totalorder %s161, 1
      %p1019 = scmp.ne.s32.totalorder %s1014, %s1016
      %p1020 = scmp.eq.s32.totalorder %s161, 0
      %p1021 = por %p1019, %p1020
      %p1022 = scmp.ne.s32.totalorder %s1014, %s1016
      %p1023 = scmp.eq.s32.totalorder %s166, 1
      %p1024 = por %p1022, %p1023
      %p1025 = scmp.ne.s32.totalorder %s1016, %s1017
      %p1026 = scmp.eq.s32.totalorder %s166, 0
      %p1027 = por %p1025, %p1026
      %p1028 = scmp.ne.s32.totalorder %s1016, %s1017
      %p1029 = scmp.eq.s32.totalorder %s167, 1
      %p1030 = por %p1028, %p1029
      %p1032 = scmp.ne.s32.totalorder %s1017, %s1031
      %p1033 = scmp.eq.s32.totalorder %s167, 0
      %p1034 = por %p1032, %p1033
      %s1036 = sadd.s32 %s1035, 1
      %p1039 = scmp.eq.s32.totalorder %s161, 1
      %p1040 = scmp.ne.s32.totalorder %s1035, %s1037
      %p1041 = scmp.eq.s32.totalorder %s161, 0
      %p1042 = por %p1040, %p1041
      %p1043 = scmp.ne.s32.totalorder %s1035, %s1037
      %p1044 = scmp.eq.s32.totalorder %s166, 1
      %p1045 = por %p1043, %p1044
      %p1046 = scmp.ne.s32.totalorder %s1037, %s1038
      %p1047 = scmp.eq.s32.totalorder %s166, 0
      %p1048 = por %p1046, %p1047
      %p1049 = scmp.ne.s32.totalorder %s1037, %s1038
      %p1050 = scmp.eq.s32.totalorder %s167, 1
      %p1051 = por %p1049, %p1050
      %p1053 = scmp.ne.s32.totalorder %s1038, %s1052
      %p1054 = scmp.eq.s32.totalorder %s167, 0
      %p1055 = por %p1053, %p1054
      %s1057 = sadd.s32 %s1056, 1
      %p1060 = scmp.eq.s32.totalorder %s161, 1
      %p1061 = scmp.ne.s32.totalorder %s1056, %s1058
      %p1062 = scmp.eq.s32.totalorder %s161, 0
      %p1063 = por %p1061, %p1062
      %p1064 = scmp.ne.s32.totalorder %s1056, %s1058
      %p1065 = scmp.eq.s32.totalorder %s166, 1
      %p1066 = por %p1064, %p1065
      %p1067 = scmp.ne.s32.totalorder %s1058, %s1059
      %p1068 = scmp.eq.s32.totalorder %s166, 0
      %p1069 = por %p1067, %p1068
      %p1070 = scmp.ne.s32.totalorder %s1058, %s1059
      %p1071 = scmp.eq.s32.totalorder %s167, 1
      %p1072 = por %p1070, %p1071
      %p1074 = scmp.ne.s32.totalorder %s1059, %s1073
      %p1075 = scmp.eq.s32.totalorder %s167, 0
      %p1076 = por %p1074, %p1075
      %s1078 = sadd.s32 %s1077, 1
      %p1081 = scmp.eq.s32.totalorder %s161, 1
      %p1082 = scmp.ne.s32.totalorder %s1077, %s1079
      %p1083 = scmp.eq.s32.totalorder %s161, 0
      %p1084 = por %p1082, %p1083
      %p1085 = scmp.ne.s32.totalorder %s1077, %s1079
      %p1086 = scmp.eq.s32.totalorder %s166, 1
      %p1087 = por %p1085, %p1086
      %p1088 = scmp.ne.s32.totalorder %s1079, %s1080
      %p1089 = scmp.eq.s32.totalorder %s166, 0
      %p1090 = por %p1088, %p1089
      %p1091 = scmp.ne.s32.totalorder %s1079, %s1080
      %p1092 = scmp.eq.s32.totalorder %s167, 1
      %p1093 = por %p1091, %p1092
      %p1095 = scmp.ne.s32.totalorder %s1080, %s1094
      %p1096 = scmp.eq.s32.totalorder %s167, 0
      %p1097 = por %p1095, %p1096
      %s1099 = sadd.s32 %s1098, 1
      %p1102 = scmp.eq.s32.totalorder %s161, 1
      %p1103 = scmp.ne.s32.totalorder %s1098, %s1100
      %p1104 = scmp.eq.s32.totalorder %s161, 0
      %p1105 = por %p1103, %p1104
      %p1106 = scmp.ne.s32.totalorder %s1098, %s1100
      %p1107 = scmp.eq.s32.totalorder %s166, 1
      %p1108 = por %p1106, %p1107
      %p1109 = scmp.ne.s32.totalorder %s1100, %s1101
      %p1110 = scmp.eq.s32.totalorder %s166, 0
      %p1111 = por %p1109, %p1110
      %p1112 = scmp.ne.s32.totalorder %s1100, %s1101
      %p1113 = scmp.eq.s32.totalorder %s167, 1
      %p1114 = por %p1112, %p1113
      %p1116 = scmp.ne.s32.totalorder %s1101, %s1115
      %p1117 = scmp.eq.s32.totalorder %s167, 0
      %p1118 = por %p1116, %p1117
      %s1120 = sadd.s32 %s1119, 1
      %p1123 = scmp.eq.s32.totalorder %s161, 1
      %p1124 = scmp.ne.s32.totalorder %s1119, %s1121
      %p1125 = scmp.eq.s32.totalorder %s161, 0
      %p1126 = por %p1124, %p1125
      %p1127 = scmp.ne.s32.totalorder %s1119, %s1121
      %p1128 = scmp.eq.s32.totalorder %s166, 1
      %p1129 = por %p1127, %p1128
      %p1130 = scmp.ne.s32.totalorder %s1121, %s1122
      %p1131 = scmp.eq.s32.totalorder %s166, 0
      %p1132 = por %p1130, %p1131
      %p1133 = scmp.ne.s32.totalorder %s1121, %s1122
      %p1134 = scmp.eq.s32.totalorder %s167, 1
      %p1135 = por %p1133, %p1134
      %p1137 = scmp.ne.s32.totalorder %s1122, %s1136
      %p1138 = scmp.eq.s32.totalorder %s167, 0
      %p1139 = por %p1137, %p1138
      %s1141 = sadd.s32 %s1140, 1
      %p1144 = scmp.eq.s32.totalorder %s161, 1
      %p1145 = scmp.ne.s32.totalorder %s1140, %s1142
      %p1146 = scmp.eq.s32.totalorder %s161, 0
      %p1147 = por %p1145, %p1146
      %p1148 = scmp.ne.s32.totalorder %s1140, %s1142
      %p1149 = scmp.eq.s32.totalorder %s166, 1
      %p1150 = por %p1148, %p1149
      %p1151 = scmp.ne.s32.totalorder %s1142, %s1143
      %p1152 = scmp.eq.s32.totalorder %s166, 0
      %p1153 = por %p1151, %p1152
      %p1154 = scmp.ne.s32.totalorder %s1142, %s1143
      %p1155 = scmp.eq.s32.totalorder %s167, 1
      %p1156 = por %p1154, %p1155
      %p1158 = scmp.ne.s32.totalorder %s1143, %s1157
      %p1159 = scmp.eq.s32.totalorder %s167, 0
      %p1160 = por %p1158, %p1159
      %s1162 = sadd.s32 %s1161, 1
      %p1165 = scmp.eq.s32.totalorder %s161, 1
      %p1166 = scmp.ne.s32.totalorder %s1161, %s1163
      %p1167 = scmp.eq.s32.totalorder %s161, 0
      %p1168 = por %p1166, %p1167
      %p1169 = scmp.ne.s32.totalorder %s1161, %s1163
      %p1170 = scmp.eq.s32.totalorder %s166, 1
      %p1171 = por %p1169, %p1170
      %p1172 = scmp.ne.s32.totalorder %s1163, %s1164
      %p1173 = scmp.eq.s32.totalorder %s166, 0
      %p1174 = por %p1172, %p1173
      %p1175 = scmp.ne.s32.totalorder %s1163, %s1164
      %p1176 = scmp.eq.s32.totalorder %s167, 1
      %p1177 = por %p1175, %p1176
      %p1179 = scmp.ne.s32.totalorder %s1164, %s1178
      %p1180 = scmp.eq.s32.totalorder %s167, 0
      %p1181 = por %p1179, %p1180
      %s1183 = sadd.s32 %s1182, 1
      %p1186 = scmp.eq.s32.totalorder %s161, 1
      %p1187 = scmp.ne.s32.totalorder %s1182, %s1184
      %p1188 = scmp.eq.s32.totalorder %s161, 0
      %p1189 = por %p1187, %p1188
      %p1190 = scmp.ne.s32.totalorder %s1182, %s1184
      %p1191 = scmp.eq.s32.totalorder %s166, 1
      %p1192 = por %p1190, %p1191
      %p1193 = scmp.ne.s32.totalorder %s1184, %s1185
      %p1194 = scmp.eq.s32.totalorder %s166, 0
      %p1195 = por %p1193, %p1194
      %p1196 = scmp.ne.s32.totalorder %s1184, %s1185
      %p1197 = scmp.eq.s32.totalorder %s167, 1
      %p1198 = por %p1196, %p1197
      %p1200 = scmp.ne.s32.totalorder %s1185, %s1199
      %p1201 = scmp.eq.s32.totalorder %s167, 0
      %p1202 = por %p1200, %p1201
      %s1204 = sadd.s32 %s1203, 1
      %p1207 = scmp.eq.s32.totalorder %s161, 1
      %p1208 = scmp.ne.s32.totalorder %s1203, %s1205
      %p1209 = scmp.eq.s32.totalorder %s161, 0
      %p1210 = por %p1208, %p1209
      %p1211 = scmp.ne.s32.totalorder %s1203, %s1205
      %p1212 = scmp.eq.s32.totalorder %s166, 1
      %p1213 = por %p1211, %p1212
      %p1214 = scmp.ne.s32.totalorder %s1205, %s1206
      %p1215 = scmp.eq.s32.totalorder %s166, 0
      %p1216 = por %p1214, %p1215
      %p1217 = scmp.ne.s32.totalorder %s1205, %s1206
      %p1218 = scmp.eq.s32.totalorder %s167, 1
      %p1219 = por %p1217, %p1218
      %p1221 = scmp.ne.s32.totalorder %s1206, %s1220
      %p1222 = scmp.eq.s32.totalorder %s167, 0
      %p1223 = por %p1221, %p1222
      %s1225 = sadd.s32 %s1224, 1
      %p1228 = scmp.eq.s32.totalorder %s161, 1
      %p1229 = scmp.ne.s32.totalorder %s1224, %s1226
      %p1230 = scmp.eq.s32.totalorder %s161, 0
      %p1231 = por %p1229, %p1230
      %p1232 = scmp.ne.s32.totalorder %s1224, %s1226
      %p1233 = scmp.eq.s32.totalorder %s166, 1
      %p1234 = por %p1232, %p1233
      %p1235 = scmp.ne.s32.totalorder %s1226, %s1227
      %p1236 = scmp.eq.s32.totalorder %s166, 0
      %p1237 = por %p1235, %p1236
      %p1238 = scmp.ne.s32.totalorder %s1226, %s1227
      %p1239 = scmp.eq.s32.totalorder %s167, 1
      %p1240 = por %p1238, %p1239
      %p1242 = scmp.ne.s32.totalorder %s1227, %s1241
      %p1243 = scmp.eq.s32.totalorder %s167, 0
      %p1244 = por %p1242, %p1243
      %s1246 = sadd.s32 %s1245, 1
      %p1249 = scmp.eq.s32.totalorder %s161, 1
      %p1250 = scmp.ne.s32.totalorder %s1245, %s1247
      %p1251 = scmp.eq.s32.totalorder %s161, 0
      %p1252 = por %p1250, %p1251
      %p1253 = scmp.ne.s32.totalorder %s1245, %s1247
      %p1254 = scmp.eq.s32.totalorder %s166, 1
      %p1255 = por %p1253, %p1254
      %p1256 = scmp.ne.s32.totalorder %s1247, %s1248
      %p1257 = scmp.eq.s32.totalorder %s166, 0
      %p1258 = por %p1256, %p1257
      %p1259 = scmp.ne.s32.totalorder %s1247, %s1248
      %p1260 = scmp.eq.s32.totalorder %s167, 1
      %p1261 = por %p1259, %p1260
      %p1263 = scmp.ne.s32.totalorder %s1248, %s1262
      %p1264 = scmp.eq.s32.totalorder %s167, 0
      %p1265 = por %p1263, %p1264
      %s1267 = sadd.s32 %s1266, 1
      %p1270 = scmp.eq.s32.totalorder %s161, 1
      %p1271 = scmp.ne.s32.totalorder %s1266, %s1268
      %p1272 = scmp.eq.s32.totalorder %s161, 0
      %p1273 = por %p1271, %p1272
      %p1274 = scmp.ne.s32.totalorder %s1266, %s1268
      %p1275 = scmp.eq.s32.totalorder %s166, 1
      %p1276 = por %p1274, %p1275
      %p1277 = scmp.ne.s32.totalorder %s1268, %s1269
      %p1278 = scmp.eq.s32.totalorder %s166, 0
      %p1279 = por %p1277, %p1278
      %p1280 = scmp.ne.s32.totalorder %s1268, %s1269
      %p1281 = scmp.eq.s32.totalorder %s167, 1
      %p1282 = por %p1280, %p1281
      %p1284 = scmp.ne.s32.totalorder %s1269, %s1283
      %p1285 = scmp.eq.s32.totalorder %s167, 0
      %p1286 = por %p1284, %p1285
      %s1288 = sadd.s32 %s1287, 1
      %p1291 = scmp.eq.s32.totalorder %s161, 1
      %p1292 = scmp.ne.s32.totalorder %s1287, %s1289
      %p1293 = scmp.eq.s32.totalorder %s161, 0
      %p1294 = por %p1292, %p1293
      %p1295 = scmp.ne.s32.totalorder %s1287, %s1289
      %p1296 = scmp.eq.s32.totalorder %s166, 1
      %p1297 = por %p1295, %p1296
      %p1298 = scmp.ne.s32.totalorder %s1289, %s1290
      %p1299 = scmp.eq.s32.totalorder %s166, 0
      %p1300 = por %p1298, %p1299
      %p1301 = scmp.ne.s32.totalorder %s1289, %s1290
      %p1302 = scmp.eq.s32.totalorder %s167, 1
      %p1303 = por %p1301, %p1302
      %p1305 = scmp.ne.s32.totalorder %s1290, %s1304
      %p1306 = scmp.eq.s32.totalorder %s167, 0
      %p1307 = por %p1305, %p1306
      %s1309 = sadd.s32 %s1308, 1
      %p1312 = scmp.eq.s32.totalorder %s161, 1
      %p1313 = scmp.ne.s32.totalorder %s1308, %s1310
      %p1314 = scmp.eq.s32.totalorder %s161, 0
      %p1315 = por %p1313, %p1314
      %p1316 = scmp.ne.s32.totalorder %s1308, %s1310
      %p1317 = scmp.eq.s32.totalorder %s166, 1
      %p1318 = por %p1316, %p1317
      %p1319 = scmp.ne.s32.totalorder %s1310, %s1311
      %p1320 = scmp.eq.s32.totalorder %s166, 0
      %p1321 = por %p1319, %p1320
      %p1322 = scmp.ne.s32.totalorder %s1310, %s1311
      %p1323 = scmp.eq.s32.totalorder %s167, 1
      %p1324 = por %p1322, %p1323
      %p1326 = scmp.ne.s32.totalorder %s1311, %s1325
      %p1327 = scmp.eq.s32.totalorder %s167, 0
      %p1328 = por %p1326, %p1327
      %s1330 = sadd.s32 %s1329, 1
      %p1333 = scmp.eq.s32.totalorder %s161, 1
      %p1334 = scmp.ne.s32.totalorder %s1329, %s1331
      %p1335 = scmp.eq.s32.totalorder %s161, 0
      %p1336 = por %p1334, %p1335
      %p1337 = scmp.ne.s32.totalorder %s1329, %s1331
      %p1338 = scmp.eq.s32.totalorder %s166, 1
      %p1339 = por %p1337, %p1338
      %p1340 = scmp.ne.s32.totalorder %s1331, %s1332
      %p1341 = scmp.eq.s32.totalorder %s166, 0
      %p1342 = por %p1340, %p1341
      %p1343 = scmp.ne.s32.totalorder %s1331, %s1332
      %p1344 = scmp.eq.s32.totalorder %s167, 1
      %p1345 = por %p1343, %p1344
      %p1347 = scmp.ne.s32.totalorder %s1332, %s1346
      %p1348 = scmp.eq.s32.totalorder %s167, 0
      %p1349 = por %p1347, %p1348
      %s1351 = sadd.s32 %s1350, 1
      %p1354 = scmp.eq.s32.totalorder %s161, 1
      %p1355 = scmp.ne.s32.totalorder %s1350, %s1352
      %p1356 = scmp.eq.s32.totalorder %s161, 0
      %p1357 = por %p1355, %p1356
      %p1358 = scmp.ne.s32.totalorder %s1350, %s1352
      %p1359 = scmp.eq.s32.totalorder %s166, 1
      %p1360 = por %p1358, %p1359
      %p1361 = scmp.ne.s32.totalorder %s1352, %s1353
      %p1362 = scmp.eq.s32.totalorder %s166, 0
      %p1363 = por %p1361, %p1362
      %p1364 = scmp.ne.s32.totalorder %s1352, %s1353
      %p1365 = scmp.eq.s32.totalorder %s167, 1
      %p1366 = por %p1364, %p1365
      %p1368 = scmp.ne.s32.totalorder %s1353, %s1367
      %p1369 = scmp.eq.s32.totalorder %s167, 0
      %p1370 = por %p1368, %p1369
      %s1372 = sadd.s32 %s1371, 1
      %p1375 = scmp.eq.s32.totalorder %s161, 1
      %p1376 = scmp.ne.s32.totalorder %s1371, %s1373
      %p1377 = scmp.eq.s32.totalorder %s161, 0
      %p1378 = por %p1376, %p1377
      %p1379 = scmp.ne.s32.totalorder %s1371, %s1373
      %p1380 = scmp.eq.s32.totalorder %s166, 1
      %p1381 = por %p1379, %p1380
      %p1382 = scmp.ne.s32.totalorder %s1373, %s1374
      %p1383 = scmp.eq.s32.totalorder %s166, 0
      %p1384 = por %p1382, %p1383
      %p1385 = scmp.ne.s32.totalorder %s1373, %s1374
      %p1386 = scmp.eq.s32.totalorder %s167, 1
      %p1387 = por %p1385, %p1386
      %p1389 = scmp.ne.s32.totalorder %s1374, %s1388
      %p1390 = scmp.eq.s32.totalorder %s167, 0
      %p1391 = por %p1389, %p1390
      %s1393 = sadd.s32 %s1392, 1
      %p1396 = scmp.eq.s32.totalorder %s161, 1
      %p1397 = scmp.ne.s32.totalorder %s1392, %s1394
      %p1398 = scmp.eq.s32.totalorder %s161, 0
      %p1399 = por %p1397, %p1398
      %p1400 = scmp.ne.s32.totalorder %s1392, %s1394
      %p1401 = scmp.eq.s32.totalorder %s166, 1
      %p1402 = por %p1400, %p1401
      %p1403 = scmp.ne.s32.totalorder %s1394, %s1395
      %p1404 = scmp.eq.s32.totalorder %s166, 0
      %p1405 = por %p1403, %p1404
      %p1406 = scmp.ne.s32.totalorder %s1394, %s1395
      %p1407 = scmp.eq.s32.totalorder %s167, 1
      %p1408 = por %p1406, %p1407
      %p1410 = scmp.ne.s32.totalorder %s1395, %s1409
      %p1411 = scmp.eq.s32.totalorder %s167, 0
      %p1412 = por %p1410, %p1411
      %s1414 = sadd.s32 %s1413, 1
      %p1417 = scmp.eq.s32.totalorder %s161, 1
      %p1418 = scmp.ne.s32.totalorder %s1413, %s1415
      %p1419 = scmp.eq.s32.totalorder %s161, 0
      %p1420 = por %p1418, %p1419
      %p1421 = scmp.ne.s32.totalorder %s1413, %s1415
      %p1422 = scmp.eq.s32.totalorder %s166, 1
      %p1423 = por %p1421, %p1422
      %p1424 = scmp.ne.s32.totalorder %s1415, %s1416
      %p1425 = scmp.eq.s32.totalorder %s166, 0
      %p1426 = por %p1424, %p1425
      %p1427 = scmp.ne.s32.totalorder %s1415, %s1416
      %p1428 = scmp.eq.s32.totalorder %s167, 1
      %p1429 = por %p1427, %p1428
      %p1431 = scmp.ne.s32.totalorder %s1416, %s1430
      %p1432 = scmp.eq.s32.totalorder %s167, 0
      %p1433 = por %p1431, %p1432
      %s1435 = sadd.s32 %s1434, 1
      %p1438 = scmp.eq.s32.totalorder %s161, 1
      %p1439 = scmp.ne.s32.totalorder %s1434, %s1436
      %p1440 = scmp.eq.s32.totalorder %s161, 0
      %p1441 = por %p1439, %p1440
      %p1442 = scmp.ne.s32.totalorder %s1434, %s1436
      %p1443 = scmp.eq.s32.totalorder %s166, 1
      %p1444 = por %p1442, %p1443
      %p1445 = scmp.ne.s32.totalorder %s1436, %s1437
      %p1446 = scmp.eq.s32.totalorder %s166, 0
      %p1447 = por %p1445, %p1446
      %p1448 = scmp.ne.s32.totalorder %s1436, %s1437
      %p1449 = scmp.eq.s32.totalorder %s167, 1
      %p1450 = por %p1448, %p1449
      %p1452 = scmp.ne.s32.totalorder %s1437, %s1451
      %p1453 = scmp.eq.s32.totalorder %s167, 0
      %p1454 = por %p1452, %p1453
      %s1456 = sadd.s32 %s1455, 1
      %p1459 = scmp.eq.s32.totalorder %s161, 1
      %p1460 = scmp.ne.s32.totalorder %s1455, %s1457
      %p1461 = scmp.eq.s32.totalorder %s161, 0
      %p1462 = por %p1460, %p1461
      %p1463 = scmp.ne.s32.totalorder %s1455, %s1457
      %p1464 = scmp.eq.s32.totalorder %s166, 1
      %p1465 = por %p1463, %p1464
      %p1466 = scmp.ne.s32.totalorder %s1457, %s1458
      %p1467 = scmp.eq.s32.totalorder %s166, 0
      %p1468 = por %p1466, %p1467
      %p1469 = scmp.ne.s32.totalorder %s1457, %s1458
      %p1470 = scmp.eq.s32.totalorder %s167, 1
      %p1471 = por %p1469, %p1470
      %p1473 = scmp.ne.s32.totalorder %s1458, %s1472
      %p1474 = scmp.eq.s32.totalorder %s167, 0
      %p1475 = por %p1473, %p1474
      %s1477 = sadd.s32 %s1476, 1
      %p1480 = scmp.eq.s32.totalorder %s161, 1
      %p1481 = scmp.ne.s32.totalorder %s1476, %s1478
      %p1482 = scmp.eq.s32.totalorder %s161, 0
      %p1483 = por %p1481, %p1482
      %p1484 = scmp.ne.s32.totalorder %s1476, %s1478
      %p1485 = scmp.eq.s32.totalorder %s166, 1
      %p1486 = por %p1484, %p1485
      %p1487 = scmp.ne.s32.totalorder %s1478, %s1479
      %p1488 = scmp.eq.s32.totalorder %s166, 0
      %p1489 = por %p1487, %p1488
      %p1490 = scmp.ne.s32.totalorder %s1478, %s1479
      %p1491 = scmp.eq.s32.totalorder %s167, 1
      %p1492 = por %p1490, %p1491
      %p1494 = scmp.ne.s32.totalorder %s1479, %s1493
      %p1495 = scmp.eq.s32.totalorder %s167, 0
      %p1496 = por %p1494, %p1495
      %s1498 = sadd.s32 %s1497, 1
      %p1501 = scmp.eq.s32.totalorder %s161, 1
      %p1502 = scmp.ne.s32.totalorder %s1497, %s1499
      %p1503 = scmp.eq.s32.totalorder %s161, 0
      %p1504 = por %p1502, %p1503
      %p1505 = scmp.ne.s32.totalorder %s1497, %s1499
      %p1506 = scmp.eq.s32.totalorder %s166, 1
      %p1507 = por %p1505, %p1506
      %p1508 = scmp.ne.s32.totalorder %s1499, %s1500
      %p1509 = scmp.eq.s32.totalorder %s166, 0
      %p1510 = por %p1508, %p1509
      %p1511 = scmp.ne.s32.totalorder %s1499, %s1500
      %p1512 = scmp.eq.s32.totalorder %s167, 1
      %p1513 = por %p1511, %p1512
      %p1515 = scmp.ne.s32.totalorder %s1500, %s1514
      %p1516 = scmp.eq.s32.totalorder %s167, 0
      %p1517 = por %p1515, %p1516
      %s1519 = sadd.s32 %s1518, 1
      %p1522 = scmp.eq.s32.totalorder %s161, 1
      %p1523 = scmp.ne.s32.totalorder %s1518, %s1520
      %p1524 = scmp.eq.s32.totalorder %s161, 0
      %p1525 = por %p1523, %p1524
      %p1526 = scmp.ne.s32.totalorder %s1518, %s1520
      %p1527 = scmp.eq.s32.totalorder %s166, 1
      %p1528 = por %p1526, %p1527
      %p1529 = scmp.ne.s32.totalorder %s1520, %s1521
      %p1530 = scmp.eq.s32.totalorder %s166, 0
      %p1531 = por %p1529, %p1530
      %p1532 = scmp.ne.s32.totalorder %s1520, %s1521
      %p1533 = scmp.eq.s32.totalorder %s167, 1
      %p1534 = por %p1532, %p1533
      %p1536 = scmp.ne.s32.totalorder %s1521, %s1535
      %p1537 = scmp.eq.s32.totalorder %s167, 0
      %p1538 = por %p1536, %p1537
      %s1540 = sadd.s32 %s1539, 1
      %p1543 = scmp.eq.s32.totalorder %s161, 1
      %p1544 = scmp.ne.s32.totalorder %s1539, %s1541
      %p1545 = scmp.eq.s32.totalorder %s161, 0
      %p1546 = por %p1544, %p1545
      %p1547 = scmp.ne.s32.totalorder %s1539, %s1541
      %p1548 = scmp.eq.s32.totalorder %s166, 1
      %p1549 = por %p1547, %p1548
      %p1550 = scmp.ne.s32.totalorder %s1541, %s1542
      %p1551 = scmp.eq.s32.totalorder %s166, 0
      %p1552 = por %p1550, %p1551
      %p1553 = scmp.ne.s32.totalorder %s1541, %s1542
      %p1554 = scmp.eq.s32.totalorder %s167, 1
      %p1555 = por %p1553, %p1554
      %p1557 = scmp.ne.s32.totalorder %s1542, %s1556
      %p1558 = scmp.eq.s32.totalorder %s167, 0
      %p1559 = por %p1557, %p1558
      %s1561 = sadd.s32 %s1560, 1
      %p1564 = scmp.eq.s32.totalorder %s161, 1
      %p1565 = scmp.ne.s32.totalorder %s1560, %s1562
      %p1566 = scmp.eq.s32.totalorder %s161, 0
      %p1567 = por %p1565, %p1566
      %p1568 = scmp.ne.s32.totalorder %s1560, %s1562
      %p1569 = scmp.eq.s32.totalorder %s166, 1
      %p1570 = por %p1568, %p1569
      %p1571 = scmp.ne.s32.totalorder %s1562, %s1563
      %p1572 = scmp.eq.s32.totalorder %s166, 0
      %p1573 = por %p1571, %p1572
      %p1574 = scmp.ne.s32.totalorder %s1562, %s1563
      %p1575 = scmp.eq.s32.totalorder %s167, 1
      %p1576 = por %p1574, %p1575
      %p1578 = scmp.ne.s32.totalorder %s1563, %s1577
      %p1579 = scmp.eq.s32.totalorder %s167, 0
      %p1580 = por %p1578, %p1579
      %s1582 = sadd.s32 %s1581, 1
      %p1585 = scmp.eq.s32.totalorder %s161, 1
      %p1586 = scmp.ne.s32.totalorder %s1581, %s1583
      %p1587 = scmp.eq.s32.totalorder %s161, 0
      %p1588 = por %p1586, %p1587
      %p1589 = scmp.ne.s32.totalorder %s1581, %s1583
      %p1590 = scmp.eq.s32.totalorder %s166, 1
      %p1591 = por %p1589, %p1590
      %p1592 = scmp.ne.s32.totalorder %s1583, %s1584
      %p1593 = scmp.eq.s32.totalorder %s166, 0
      %p1594 = por %p1592, %p1593
      %p1595 = scmp.ne.s32.totalorder %s1583, %s1584
      %p1596 = scmp.eq.s32.totalorder %s167, 1
      %p1597 = por %p1595, %p1596
      %p1599 = scmp.ne.s32.totalorder %s1584, %s1598
      %p1600 = scmp.eq.s32.totalorder %s167, 0
      %p1601 = por %p1599, %p1600
      %s1603 = sadd.s32 %s1602, 1
      %p1606 = scmp.eq.s32.totalorder %s161, 1
      %p1607 = scmp.ne.s32.totalorder %s1602, %s1604
      %p1608 = scmp.eq.s32.totalorder %s161, 0
      %p1609 = por %p1607, %p1608
      %p1610 = scmp.ne.s32.totalorder %s1602, %s1604
      %p1611 = scmp.eq.s32.totalorder %s166, 1
      %p1612 = por %p1610, %p1611
      %p1613 = scmp.ne.s32.totalorder %s1604, %s1605
      %p1614 = scmp.eq.s32.totalorder %s166, 0
      %p1615 = por %p1613, %p1614
      %p1616 = scmp.ne.s32.totalorder %s1604, %s1605
      %p1617 = scmp.eq.s32.totalorder %s167, 1
      %p1618 = por %p1616, %p1617
      %p1620 = scmp.ne.s32.totalorder %s1605, %s1619
      %p1621 = scmp.eq.s32.totalorder %s167, 0
      %p1622 = por %p1620, %p1621
      %s1623 = ssub.s32 %s161, %s168
      %p1624 = scmp.eq.s32.totalorder %s1623, 0
      %s1626 = sadd.s32 %s1625, 1
      %s1627 = scalar_select %p1624, %s1625, %s1626
      %p1630 = pneg %p1624
      %p1631 = scmp.eq.s32.totalorder %s161, 1
      %p1632 = por %p1630, %p1631
      %p1633 = scmp.ne.s32.totalorder %s1625, %s1628
      %p1634 = scmp.eq.s32.totalorder %s161, 0
      %p1635 = por %p1633, %p1634
      %p1636 = scmp.ne.s32.totalorder %s1625, %s1628
      %p1637 = scmp.eq.s32.totalorder %s166, 1
      %p1638 = por %p1636, %p1637
      %p1639 = scmp.ne.s32.totalorder %s1628, %s1629
      %p1640 = scmp.eq.s32.totalorder %s166, 0
      %p1641 = por %p1639, %p1640
      %p1642 = scmp.ne.s32.totalorder %s1628, %s1629
      %p1643 = scmp.eq.s32.totalorder %s167, 1
      %p1644 = por %p1642, %p1643
      %p1646 = scmp.ne.s32.totalorder %s1629, %s1645
      %p1647 = scmp.eq.s32.totalorder %s167, 0
      %p1648 = por %p1646, %p1647
      %s1649 = ssub.s32 %s161, %s168
      %p1650 = scmp.eq.s32.totalorder %s1649, 0
      %s1652 = sadd.s32 %s1651, 1
      %s1653 = scalar_select %p1650, %s1651, %s1652
      %p1656 = pneg %p1650
      %p1657 = scmp.eq.s32.totalorder %s161, 1
      %p1658 = por %p1656, %p1657
      %p1659 = scmp.ne.s32.totalorder %s1651, %s1654
      %p1660 = scmp.eq.s32.totalorder %s161, 0
      %p1661 = por %p1659, %p1660
      %p1662 = scmp.ne.s32.totalorder %s1651, %s1654
      %p1663 = scmp.eq.s32.totalorder %s166, 1
      %p1664 = por %p1662, %p1663
      %p1665 = scmp.ne.s32.totalorder %s1654, %s1655
      %p1666 = scmp.eq.s32.totalorder %s166, 0
      %p1667 = por %p1665, %p1666
      %p1668 = scmp.ne.s32.totalorder %s1654, %s1655
      %p1669 = scmp.eq.s32.totalorder %s167, 1
      %p1670 = por %p1668, %p1669
      %p1672 = scmp.ne.s32.totalorder %s1655, %s1671
      %p1673 = scmp.eq.s32.totalorder %s167, 0
      %p1674 = por %p1672, %p1673
      %s1675 = ssub.s32 %s161, %s168
      %p1676 = scmp.eq.s32.totalorder %s1675, 0
      %s1678 = sadd.s32 %s1677, 1
      %s1679 = scalar_select %p1676, %s1677, %s1678
      %p1682 = pneg %p1676
      %p1683 = scmp.eq.s32.totalorder %s161, 1
      %p1684 = por %p1682, %p1683
      %p1685 = scmp.ne.s32.totalorder %s1677, %s1680
      %p1686 = scmp.eq.s32.totalorder %s161, 0
      %p1687 = por %p1685, %p1686
      %p1688 = scmp.ne.s32.totalorder %s1677, %s1680
      %p1689 = scmp.eq.s32.totalorder %s166, 1
      %p1690 = por %p1688, %p1689
      %p1691 = scmp.ne.s32.totalorder %s1680, %s1681
      %p1692 = scmp.eq.s32.totalorder %s166, 0
      %p1693 = por %p1691, %p1692
      %p1694 = scmp.ne.s32.totalorder %s1680, %s1681
      %p1695 = scmp.eq.s32.totalorder %s167, 1
      %p1696 = por %p1694, %p1695
      %p1698 = scmp.ne.s32.totalorder %s1681, %s1697
      %p1699 = scmp.eq.s32.totalorder %s167, 0
      %p1700 = por %p1698, %p1699
      %p1701 = scmp.le.s32.totalorder 1, %s161
      %p1702 = scmp.lt.s32.totalorder %s161, 3
      %p1703 = pnand %p1701, %p1702
      %p1704 = pneg %p1703
      // Predicated region
      $region9: #{_encode_impl.1} parent=5 // pred_check
        _
      $region10: #{_encode_impl.1} parent=5 // pred_check_branch
        %1706 = sbr.rel (%p1703) target = $region12
      $region11: #{_encode_impl.1} parent=5 // pred_region
        %s1707 = ssub.s32 %s161, 1
        // Predicated region
        $region13: #{_encode_impl.1} parent=11 // pred_check
          %p1708 = pneg %p208
        $region14: #{_encode_impl.1} parent=11 // pred_check_branch
          %1710 = sbr.rel (%p1708) target = $region16
        $region15: #{_encode_impl.1} parent=11 // pred_region
          %1712 = vsyncadd [#allocation6], 0
          %s1714 = sshll.u32 %s3, 4
          %s1715 = int_to_ptr.hbm [resolvable:$true] %s1714
          %s1716 = sshll.u32 [#allocation5], 4
          %s1717 = int_to_ptr.vmem [resolvable:$true] %s1716
          %1719 = dma.hbm_to_vmem [thread:$0]  %s1715, 128, %s1717, [#allocation6]
        $region16: #{_encode_impl.1} parent=11 // pred_fallthru
          _
        // Predicated region
        $region17: #{_encode_impl.1} parent=11 // pred_check
          %p1720 = pneg %p229
        $region18: #{_encode_impl.1} parent=11 // pred_check_branch
          %1722 = sbr.rel (%p1720) target = $region20
        $region19: #{_encode_impl.1} parent=11 // pred_region
          _
        $region20: #{_encode_impl.1} parent=11 // pred_fallthru
          _
        // Predicated region
        $region21: #{_encode_impl.1} parent=11 // pred_check
          %p1723 = pneg %p250
        $region22: #{_encode_impl.1} parent=11 // pred_check_branch
          %1725 = sbr.rel (%p1723) target = $region24
        $region23: #{_encode_impl.1} parent=11 // pred_region
          _
        $region24: #{_encode_impl.1} parent=11 // pred_fallthru
          _
        // Predicated region
        $region25: #{_encode_impl.1} parent=11 // pred_check
          %p1726 = pneg %p271
        $region26: #{_encode_impl.1} parent=11 // pred_check_branch
          %1728 = sbr.rel (%p1726) target = $region28
        $region27: #{_encode_impl.1} parent=11 // pred_region
          _
        $region28: #{_encode_impl.1} parent=11 // pred_fallthru
          _
        // Predicated region
        $region29: #{_encode_impl.1} parent=11 // pred_check
          %p1729 = pneg %p292
        $region30: #{_encode_impl.1} parent=11 // pred_check_branch
          %1731 = sbr.rel (%p1729) target = $region32
        $region31: #{_encode_impl.1} parent=11 // pred_region
          %1733 = vsyncadd [#allocation6], 0
          %s1735 = sshll.u32 %s11, 4
          %s1736 = int_to_ptr.hbm [resolvable:$true] %s1735
          %s1737 = sshll.u32 [#allocation7], 4
          %s1738 = int_to_ptr.vmem [resolvable:$true] %s1737
          %1740 = dma.hbm_to_vmem [thread:$0]  %s1736, 64, %s1738, [#allocation6]
        $region32: #{_encode_impl.1} parent=11 // pred_fallthru
          _
        // Predicated region
        $region33: #{_encode_impl.1} parent=11 // pred_check
          %p1741 = pneg %p313
        $region34: #{_encode_impl.1} parent=11 // pred_check_branch
          %1743 = sbr.rel (%p1741) target = $region36
        $region35: #{_encode_impl.1} parent=11 // pred_region
          _
        $region36: #{_encode_impl.1} parent=11 // pred_fallthru
          _
        // Predicated region
        $region37: #{_encode_impl.1} parent=11 // pred_check
          %p1744 = pneg %p334
        $region38: #{_encode_impl.1} parent=11 // pred_check_branch
          %1746 = sbr.rel (%p1744) target = $region40
        $region39: #{_encode_impl.1} parent=11 // pred_region
          _
        $region40: #{_encode_impl.1} parent=11 // pred_fallthru
          _
        // Predicated region
        $region41: #{_encode_impl.1} parent=11 // pred_check
          %p1747 = pneg %p355
        $region42: #{_encode_impl.1} parent=11 // pred_check_branch
          %1749 = sbr.rel (%p1747) target = $region44
        $region43: #{_encode_impl.1} parent=11 // pred_region
          _
        $region44: #{_encode_impl.1} parent=11 // pred_fallthru
          _
        // Predicated region
        $region45: #{_encode_impl.1} parent=11 // pred_check
          %p1750 = pneg %p376
        $region46: #{_encode_impl.1} parent=11 // pred_check_branch
          %1752 = sbr.rel (%p1750) target = $region48
        $region47: #{_encode_impl.1} parent=11 // pred_region
          %1754 = vsyncadd [#allocation9], 0
          %s1756 = sshll.u32 %s19, 4
          %s1757 = int_to_ptr.hbm [resolvable:$true] %s1756
          %s1758 = sshll.u32 [#allocation8], 4
          %s1759 = int_to_ptr.vmem [resolvable:$true] %s1758
          %1761 = dma.hbm_to_vmem [thread:$0]  %s1757, 64, %s1759, [#allocation9]
        $region48: #{_encode_impl.1} parent=11 // pred_fallthru
          _
        // Predicated region
        $region49: #{_encode_impl.1} parent=11 // pred_check
          %p1762 = pneg %p397
        $region50: #{_encode_impl.1} parent=11 // pred_check_branch
          %1764 = sbr.rel (%p1762) target = $region52
        $region51: #{_encode_impl.1} parent=11 // pred_region
          _
        $region52: #{_encode_impl.1} parent=11 // pred_fallthru
          _
        // Predicated region
        $region53: #{_encode_impl.1} parent=11 // pred_check
          %p1765 = pneg %p418
        $region54: #{_encode_impl.1} parent=11 // pred_check_branch
          %1767 = sbr.rel (%p1765) target = $region56
        $region55: #{_encode_impl.1} parent=11 // pred_region
          _
        $region56: #{_encode_impl.1} parent=11 // pred_fallthru
          _
        // Predicated region
        $region57: #{_encode_impl.1} parent=11 // pred_check
          %p1768 = pneg %p439
        $region58: #{_encode_impl.1} parent=11 // pred_check_branch
          %1770 = sbr.rel (%p1768) target = $region60
        $region59: #{_encode_impl.1} parent=11 // pred_region
          _
        $region60: #{_encode_impl.1} parent=11 // pred_fallthru
          _
        // Predicated region
        $region61: #{_encode_impl.1} parent=11 // pred_check
          %p1771 = pneg %p460
        $region62: #{_encode_impl.1} parent=11 // pred_check_branch
          %1773 = sbr.rel (%p1771) target = $region64
        $region63: #{_encode_impl.1} parent=11 // pred_region
          %1775 = vsyncadd [#allocation9], 0
          %s1777 = sshll.u32 %s27, 4
          %s1778 = int_to_ptr.hbm [resolvable:$true] %s1777
          %s1779 = sshll.u32 [#allocation10], 4
          %s1780 = int_to_ptr.vmem [resolvable:$true] %s1779
          %1782 = dma.hbm_to_vmem [thread:$0]  %s1778, 64, %s1780, [#allocation9]
        $region64: #{_encode_impl.1} parent=11 // pred_fallthru
          _
        // Predicated region
        $region65: #{_encode_impl.1} parent=11 // pred_check
          %p1783 = pneg %p481
        $region66: #{_encode_impl.1} parent=11 // pred_check_branch
          %1785 = sbr.rel (%p1783) target = $region68
        $region67: #{_encode_impl.1} parent=11 // pred_region
          _
        $region68: #{_encode_impl.1} parent=11 // pred_fallthru
          _
        // Predicated region
        $region69: #{_encode_impl.1} parent=11 // pred_check
          %p1786 = pneg %p502
        $region70: #{_encode_impl.1} parent=11 // pred_check_branch
          %1788 = sbr.rel (%p1786) target = $region72
        $region71: #{_encode_impl.1} parent=11 // pred_region
          _
        $region72: #{_encode_impl.1} parent=11 // pred_fallthru
          _
        // Predicated region
        $region73: #{_encode_impl.1} parent=11 // pred_check
          %p1789 = pneg %p523
        $region74: #{_encode_impl.1} parent=11 // pred_check_branch
          %1791 = sbr.rel (%p1789) target = $region76
        $region75: #{_encode_impl.1} parent=11 // pred_region
          _
        $region76: #{_encode_impl.1} parent=11 // pred_fallthru
          _
        // Predicated region
        $region77: #{_encode_impl.1} parent=11 // pred_check
          %p1792 = pneg %p544
        $region78: #{_encode_impl.1} parent=11 // pred_check_branch
          %1794 = sbr.rel (%p1792) target = $region80
        $region79: #{_encode_impl.1} parent=11 // pred_region
          %1796 = vsyncadd [#allocation12], 0
          %s1798 = sshll.u32 %s35, 4
          %s1799 = int_to_ptr.hbm [resolvable:$true] %s1798
          %s1800 = sshll.u32 [#allocation11], 4
          %s1801 = int_to_ptr.vmem [resolvable:$true] %s1800
          %1803 = dma.hbm_to_vmem [thread:$0]  %s1799, 64, %s1801, [#allocation12]
        $region80: #{_encode_impl.1} parent=11 // pred_fallthru
          _
        // Predicated region
        $region81: #{_encode_impl.1} parent=11 // pred_check
          %p1804 = pneg %p565
        $region82: #{_encode_impl.1} parent=11 // pred_check_branch
          %1806 = sbr.rel (%p1804) target = $region84
        $region83: #{_encode_impl.1} parent=11 // pred_region
          _
        $region84: #{_encode_impl.1} parent=11 // pred_fallthru
          _
        // Predicated region
        $region85: #{_encode_impl.1} parent=11 // pred_check
          %p1807 = pneg %p586
        $region86: #{_encode_impl.1} parent=11 // pred_check_branch
          %1809 = sbr.rel (%p1807) target = $region88
        $region87: #{_encode_impl.1} parent=11 // pred_region
          _
        $region88: #{_encode_impl.1} parent=11 // pred_fallthru
          _
        // Predicated region
        $region89: #{_encode_impl.1} parent=11 // pred_check
          %p1810 = pneg %p607
        $region90: #{_encode_impl.1} parent=11 // pred_check_branch
          %1812 = sbr.rel (%p1810) target = $region92
        $region91: #{_encode_impl.1} parent=11 // pred_region
          _
        $region92: #{_encode_impl.1} parent=11 // pred_fallthru
          _
        // Predicated region
        $region93: #{_encode_impl.1} parent=11 // pred_check
          %p1813 = pneg %p628
        $region94: #{_encode_impl.1} parent=11 // pred_check_branch
          %1815 = sbr.rel (%p1813) target = $region96
        $region95: #{_encode_impl.1} parent=11 // pred_region
          %1817 = vsyncadd [#allocation12], 0
          %s1819 = sshll.u32 %s43, 4
          %s1820 = int_to_ptr.hbm [resolvable:$true] %s1819
          %s1821 = sshll.u32 [#allocation13], 4
          %s1822 = int_to_ptr.vmem [resolvable:$true] %s1821
          %1824 = dma.hbm_to_vmem [thread:$0]  %s1820, 64, %s1822, [#allocation12]
        $region96: #{_encode_impl.1} parent=11 // pred_fallthru
          _
        // Predicated region
        $region97: #{_encode_impl.1} parent=11 // pred_check
          %p1825 = pneg %p649
        $region98: #{_encode_impl.1} parent=11 // pred_check_branch
          %1827 = sbr.rel (%p1825) target = $region100
        $region99: #{_encode_impl.1} parent=11 // pred_region
          _
        $region100: #{_encode_impl.1} parent=11 // pred_fallthru
          _
        // Predicated region
        $region101: #{_encode_impl.1} parent=11 // pred_check
          %p1828 = pneg %p670
        $region102: #{_encode_impl.1} parent=11 // pred_check_branch
          %1830 = sbr.rel (%p1828) target = $region104
        $region103: #{_encode_impl.1} parent=11 // pred_region
          _
        $region104: #{_encode_impl.1} parent=11 // pred_fallthru
          _
        // Predicated region
        $region105: #{_encode_impl.1} parent=11 // pred_check
          %p1831 = pneg %p691
        $region106: #{_encode_impl.1} parent=11 // pred_check_branch
          %1833 = sbr.rel (%p1831) target = $region108
        $region107: #{_encode_impl.1} parent=11 // pred_region
          _
        $region108: #{_encode_impl.1} parent=11 // pred_fallthru
          _
        // Predicated region
        $region109: #{_encode_impl.1} parent=11 // pred_check
          %p1834 = pneg %p712
        $region110: #{_encode_impl.1} parent=11 // pred_check_branch
          %1836 = sbr.rel (%p1834) target = $region112
        $region111: #{_encode_impl.1} parent=11 // pred_region
          _
        $region112: #{_encode_impl.1} parent=11 // pred_fallthru
          _
        // Predicated region
        $region113: #{_encode_impl.1} parent=11 // pred_check
          %p1837 = pneg %p733
        $region114: #{_encode_impl.1} parent=11 // pred_check_branch
          %1839 = sbr.rel (%p1837) target = $region116
        $region115: #{_encode_impl.1} parent=11 // pred_region
          _
        $region116: #{_encode_impl.1} parent=11 // pred_fallthru
          _
        // Predicated region
        $region117: #{_encode_impl.1} parent=11 // pred_check
          %p1840 = pneg %p754
        $region118: #{_encode_impl.1} parent=11 // pred_check_branch
          %1842 = sbr.rel (%p1840) target = $region120
        $region119: #{_encode_impl.1} parent=11 // pred_region
          _
        $region120: #{_encode_impl.1} parent=11 // pred_fallthru
          _
        // Predicated region
        $region121: #{_encode_impl.1} parent=11 // pred_check
          %p1843 = pneg %p775
        $region122: #{_encode_impl.1} parent=11 // pred_check_branch
          %1845 = sbr.rel (%p1843) target = $region124
        $region123: #{_encode_impl.1} parent=11 // pred_region
          _
        $region124: #{_encode_impl.1} parent=11 // pred_fallthru
          _
        // Predicated region
        $region125: #{_encode_impl.1} parent=11 // pred_check
          %p1846 = pneg %p796
        $region126: #{_encode_impl.1} parent=11 // pred_check_branch
          %1848 = sbr.rel (%p1846) target = $region128
        $region127: #{_encode_impl.1} parent=11 // pred_region
          %1850 = vsyncadd [#allocation15], 0
          %s1851 = sshll.u32 %s59, 4
          %s1852 = int_to_ptr.hbm [resolvable:$true] %s1851
          %s1853 = sshll.u32 [#allocation14], 4
          %s1854 = int_to_ptr.vmem [resolvable:$true] %s1853
          %1859 = dma.hbm_to_vmem [thread:$0]  %s1852, 128, %s1854, [#allocation15], 64, 64, 4
        $region128: #{_encode_impl.1} parent=11 // pred_fallthru
          _
        // Predicated region
        $region129: #{_encode_impl.1} parent=11 // pred_check
          %p1860 = pneg %p817
        $region130: #{_encode_impl.1} parent=11 // pred_check_branch
          %1862 = sbr.rel (%p1860) target = $region132
        $region131: #{_encode_impl.1} parent=11 // pred_region
          _
        $region132: #{_encode_impl.1} parent=11 // pred_fallthru
          _
        // Predicated region
        $region133: #{_encode_impl.1} parent=11 // pred_check
          %p1863 = pneg %p838
        $region134: #{_encode_impl.1} parent=11 // pred_check_branch
          %1865 = sbr.rel (%p1863) target = $region136
        $region135: #{_encode_impl.1} parent=11 // pred_region
          _
        $region136: #{_encode_impl.1} parent=11 // pred_fallthru
          _
        // Predicated region
        $region137: #{_encode_impl.1} parent=11 // pred_check
          %p1866 = pneg %p859
        $region138: #{_encode_impl.1} parent=11 // pred_check_branch
          %1868 = sbr.rel (%p1866) target = $region140
        $region139: #{_encode_impl.1} parent=11 // pred_region
          _
        $region140: #{_encode_impl.1} parent=11 // pred_fallthru
          _
        // Predicated region
        $region141: #{_encode_impl.1} parent=11 // pred_check
          %p1869 = pneg %p880
        $region142: #{_encode_impl.1} parent=11 // pred_check_branch
          %1871 = sbr.rel (%p1869) target = $region144
        $region143: #{_encode_impl.1} parent=11 // pred_region
          %1873 = vsyncadd [#allocation15], 0
          %s1874 = sshll.u32 %s67, 4
          %s1875 = int_to_ptr.hbm [resolvable:$true] %s1874
          %s1876 = sshll.u32 [#allocation16], 4
          %s1877 = int_to_ptr.vmem [resolvable:$true] %s1876
          %1882 = dma.hbm_to_vmem [thread:$0]  %s1875, 128, %s1877, [#allocation15], 64, 64, 4
        $region144: #{_encode_impl.1} parent=11 // pred_fallthru
          _
        // Predicated region
        $region145: #{_encode_impl.1} parent=11 // pred_check
          %p1883 = pneg %p901
        $region146: #{_encode_impl.1} parent=11 // pred_check_branch
          %1885 = sbr.rel (%p1883) target = $region148
        $region147: #{_encode_impl.1} parent=11 // pred_region
          _
        $region148: #{_encode_impl.1} parent=11 // pred_fallthru
          _
        // Predicated region
        $region149: #{_encode_impl.1} parent=11 // pred_check
          %p1886 = pneg %p922
        $region150: #{_encode_impl.1} parent=11 // pred_check_branch
          %1888 = sbr.rel (%p1886) target = $region152
        $region151: #{_encode_impl.1} parent=11 // pred_region
          _
        $region152: #{_encode_impl.1} parent=11 // pred_fallthru
          _
        // Predicated region
        $region153: #{_encode_impl.1} parent=11 // pred_check
          %p1889 = pneg %p943
        $region154: #{_encode_impl.1} parent=11 // pred_check_branch
          %1891 = sbr.rel (%p1889) target = $region156
        $region155: #{_encode_impl.1} parent=11 // pred_region
          _
        $region156: #{_encode_impl.1} parent=11 // pred_fallthru
          _
        // Predicated region
        $region157: #{_encode_impl.1} parent=11 // pred_check
          %p1892 = pneg %p964
        $region158: #{_encode_impl.1} parent=11 // pred_check_branch
          %1894 = sbr.rel (%p1892) target = $region160
        $region159: #{_encode_impl.1} parent=11 // pred_region
          %1896 = vsyncadd [#allocation18], 0
          %s1897 = sshll.u32 %s75, 4
          %s1898 = int_to_ptr.hbm [resolvable:$true] %s1897
          %s1899 = sshll.u32 [#allocation17], 4
          %s1900 = int_to_ptr.vmem [resolvable:$true] %s1899
          %1905 = dma.hbm_to_vmem [thread:$0]  %s1898, 128, %s1900, [#allocation18], 64, 64, 4
        $region160: #{_encode_impl.1} parent=11 // pred_fallthru
          _
        // Predicated region
        $region161: #{_encode_impl.1} parent=11 // pred_check
          %p1906 = pneg %p985
        $region162: #{_encode_impl.1} parent=11 // pred_check_branch
          %1908 = sbr.rel (%p1906) target = $region164
        $region163: #{_encode_impl.1} parent=11 // pred_region
          _
        $region164: #{_encode_impl.1} parent=11 // pred_fallthru
          _
        // Predicated region
        $region165: #{_encode_impl.1} parent=11 // pred_check
          %p1909 = pneg %p1006
        $region166: #{_encode_impl.1} parent=11 // pred_check_branch
          %1911 = sbr.rel (%p1909) target = $region168
        $region167: #{_encode_impl.1} parent=11 // pred_region
          _
        $region168: #{_encode_impl.1} parent=11 // pred_fallthru
          _
        // Predicated region
        $region169: #{_encode_impl.1} parent=11 // pred_check
          %p1912 = pneg %p1027
        $region170: #{_encode_impl.1} parent=11 // pred_check_branch
          %1914 = sbr.rel (%p1912) target = $region172
        $region171: #{_encode_impl.1} parent=11 // pred_region
          _
        $region172: #{_encode_impl.1} parent=11 // pred_fallthru
          _
        // Predicated region
        $region173: #{_encode_impl.1} parent=11 // pred_check
          %p1915 = pneg %p1048
        $region174: #{_encode_impl.1} parent=11 // pred_check_branch
          %1917 = sbr.rel (%p1915) target = $region176
        $region175: #{_encode_impl.1} parent=11 // pred_region
          %1919 = vsyncadd [#allocation18], 0
          %s1920 = sshll.u32 %s83, 4
          %s1921 = int_to_ptr.hbm [resolvable:$true] %s1920
          %s1922 = sshll.u32 [#allocation19], 4
          %s1923 = int_to_ptr.vmem [resolvable:$true] %s1922
          %1928 = dma.hbm_to_vmem [thread:$0]  %s1921, 128, %s1923, [#allocation18], 64, 64, 4
        $region176: #{_encode_impl.1} parent=11 // pred_fallthru
          _
        // Predicated region
        $region177: #{_encode_impl.1} parent=11 // pred_check
          %p1929 = pneg %p1069
        $region178: #{_encode_impl.1} parent=11 // pred_check_branch
          %1931 = sbr.rel (%p1929) target = $region180
        $region179: #{_encode_impl.1} parent=11 // pred_region
          _
        $region180: #{_encode_impl.1} parent=11 // pred_fallthru
          _
        // Predicated region
        $region181: #{_encode_impl.1} parent=11 // pred_check
          %p1932 = pneg %p1090
        $region182: #{_encode_impl.1} parent=11 // pred_check_branch
          %1934 = sbr.rel (%p1932) target = $region184
        $region183: #{_encode_impl.1} parent=11 // pred_region
          _
        $region184: #{_encode_impl.1} parent=11 // pred_fallthru
          _
        // Predicated region
        $region185: #{_encode_impl.1} parent=11 // pred_check
          %p1935 = pneg %p1111
        $region186: #{_encode_impl.1} parent=11 // pred_check_branch
          %1937 = sbr.rel (%p1935) target = $region188
        $region187: #{_encode_impl.1} parent=11 // pred_region
          _
        $region188: #{_encode_impl.1} parent=11 // pred_fallthru
          _
        // Predicated region
        $region189: #{_encode_impl.1} parent=11 // pred_check
          %p1938 = pneg %p1132
        $region190: #{_encode_impl.1} parent=11 // pred_check_branch
          %1940 = sbr.rel (%p1938) target = $region192
        $region191: #{_encode_impl.1} parent=11 // pred_region
          %1942 = vsyncadd [#allocation21], 0
          %s1943 = sshll.u32 %s91, 4
          %s1944 = int_to_ptr.hbm [resolvable:$true] %s1943
          %s1945 = sshll.u32 [#allocation20], 4
          %s1946 = int_to_ptr.vmem [resolvable:$true] %s1945
          %1951 = dma.hbm_to_vmem [thread:$0]  %s1944, 128, %s1946, [#allocation21], 64, 64, 4
        $region192: #{_encode_impl.1} parent=11 // pred_fallthru
          _
        // Predicated region
        $region193: #{_encode_impl.1} parent=11 // pred_check
          %p1952 = pneg %p1153
        $region194: #{_encode_impl.1} parent=11 // pred_check_branch
          %1954 = sbr.rel (%p1952) target = $region196
        $region195: #{_encode_impl.1} parent=11 // pred_region
          _
        $region196: #{_encode_impl.1} parent=11 // pred_fallthru
          _
        // Predicated region
        $region197: #{_encode_impl.1} parent=11 // pred_check
          %p1955 = pneg %p1174
        $region198: #{_encode_impl.1} parent=11 // pred_check_branch
          %1957 = sbr.rel (%p1955) target = $region200
        $region199: #{_encode_impl.1} parent=11 // pred_region
          _
        $region200: #{_encode_impl.1} parent=11 // pred_fallthru
          _
        // Predicated region
        $region201: #{_encode_impl.1} parent=11 // pred_check
          %p1958 = pneg %p1195
        $region202: #{_encode_impl.1} parent=11 // pred_check_branch
          %1960 = sbr.rel (%p1958) target = $region204
        $region203: #{_encode_impl.1} parent=11 // pred_region
          _
        $region204: #{_encode_impl.1} parent=11 // pred_fallthru
          _
        // Predicated region
        $region205: #{_encode_impl.1} parent=11 // pred_check
          %p1961 = pneg %p1216
        $region206: #{_encode_impl.1} parent=11 // pred_check_branch
          %1963 = sbr.rel (%p1961) target = $region208
        $region207: #{_encode_impl.1} parent=11 // pred_region
          %1965 = vsyncadd [#allocation21], 0
          %s1966 = sshll.u32 %s99, 4
          %s1967 = int_to_ptr.hbm [resolvable:$true] %s1966
          %s1968 = sshll.u32 [#allocation22], 4
          %s1969 = int_to_ptr.vmem [resolvable:$true] %s1968
          %1974 = dma.hbm_to_vmem [thread:$0]  %s1967, 128, %s1969, [#allocation21], 64, 64, 4
        $region208: #{_encode_impl.1} parent=11 // pred_fallthru
          _
        // Predicated region
        $region209: #{_encode_impl.1} parent=11 // pred_check
          %p1975 = pneg %p1237
        $region210: #{_encode_impl.1} parent=11 // pred_check_branch
          %1977 = sbr.rel (%p1975) target = $region212
        $region211: #{_encode_impl.1} parent=11 // pred_region
          _
        $region212: #{_encode_impl.1} parent=11 // pred_fallthru
          _
        // Predicated region
        $region213: #{_encode_impl.1} parent=11 // pred_check
          %p1978 = pneg %p1258
        $region214: #{_encode_impl.1} parent=11 // pred_check_branch
          %1980 = sbr.rel (%p1978) target = $region216
        $region215: #{_encode_impl.1} parent=11 // pred_region
          _
        $region216: #{_encode_impl.1} parent=11 // pred_fallthru
          _
        // Predicated region
        $region217: #{_encode_impl.1} parent=11 // pred_check
          %p1981 = pneg %p1279
        $region218: #{_encode_impl.1} parent=11 // pred_check_branch
          %1983 = sbr.rel (%p1981) target = $region220
        $region219: #{_encode_impl.1} parent=11 // pred_region
          _
        $region220: #{_encode_impl.1} parent=11 // pred_fallthru
          _
        // Predicated region
        $region221: #{_encode_impl.1} parent=11 // pred_check
          %p1984 = pneg %p1300
        $region222: #{_encode_impl.1} parent=11 // pred_check_branch
          %1986 = sbr.rel (%p1984) target = $region224
        $region223: #{_encode_impl.1} parent=11 // pred_region
          %1988 = vsyncadd [#allocation24], 0
          %s1989 = sshll.u32 %s107, 4
          %s1990 = int_to_ptr.hbm [resolvable:$true] %s1989
          %s1991 = sshll.u32 [#allocation23], 4
          %s1992 = int_to_ptr.vmem [resolvable:$true] %s1991
          %1997 = dma.hbm_to_vmem [thread:$0]  %s1990, 128, %s1992, [#allocation24], 64, 64, 4
        $region224: #{_encode_impl.1} parent=11 // pred_fallthru
          _
        // Predicated region
        $region225: #{_encode_impl.1} parent=11 // pred_check
          %p1998 = pneg %p1321
        $region226: #{_encode_impl.1} parent=11 // pred_check_branch
          %2000 = sbr.rel (%p1998) target = $region228
        $region227: #{_encode_impl.1} parent=11 // pred_region
          _
        $region228: #{_encode_impl.1} parent=11 // pred_fallthru
          _
        // Predicated region
        $region229: #{_encode_impl.1} parent=11 // pred_check
          %p2001 = pneg %p1342
        $region230: #{_encode_impl.1} parent=11 // pred_check_branch
          %2003 = sbr.rel (%p2001) target = $region232
        $region231: #{_encode_impl.1} parent=11 // pred_region
          _
        $region232: #{_encode_impl.1} parent=11 // pred_fallthru
          _
        // Predicated region
        $region233: #{_encode_impl.1} parent=11 // pred_check
          %p2004 = pneg %p1363
        $region234: #{_encode_impl.1} parent=11 // pred_check_branch
          %2006 = sbr.rel (%p2004) target = $region236
        $region235: #{_encode_impl.1} parent=11 // pred_region
          _
        $region236: #{_encode_impl.1} parent=11 // pred_fallthru
          _
        // Predicated region
        $region237: #{_encode_impl.1} parent=11 // pred_check
          %p2007 = pneg %p1384
        $region238: #{_encode_impl.1} parent=11 // pred_check_branch
          %2009 = sbr.rel (%p2007) target = $region240
        $region239: #{_encode_impl.1} parent=11 // pred_region
          %2011 = vsyncadd [#allocation24], 0
          %s2012 = sshll.u32 %s115, 4
          %s2013 = int_to_ptr.hbm [resolvable:$true] %s2012
          %s2014 = sshll.u32 [#allocation25], 4
          %s2015 = int_to_ptr.vmem [resolvable:$true] %s2014
          %2020 = dma.hbm_to_vmem [thread:$0]  %s2013, 256, %s2015, [#allocation24], 64, 64, 4
        $region240: #{_encode_impl.1} parent=11 // pred_fallthru
          _
        // Predicated region
        $region241: #{_encode_impl.1} parent=11 // pred_check
          %p2021 = pneg %p1405
        $region242: #{_encode_impl.1} parent=11 // pred_check_branch
          %2023 = sbr.rel (%p2021) target = $region244
        $region243: #{_encode_impl.1} parent=11 // pred_region
          _
        $region244: #{_encode_impl.1} parent=11 // pred_fallthru
          _
        // Predicated region
        $region245: #{_encode_impl.1} parent=11 // pred_check
          %p2024 = pneg %p1426
        $region246: #{_encode_impl.1} parent=11 // pred_check_branch
          %2026 = sbr.rel (%p2024) target = $region248
        $region247: #{_encode_impl.1} parent=11 // pred_region
          _
        $region248: #{_encode_impl.1} parent=11 // pred_fallthru
          _
        // Predicated region
        $region249: #{_encode_impl.1} parent=11 // pred_check
          %p2027 = pneg %p1447
        $region250: #{_encode_impl.1} parent=11 // pred_check_branch
          %2029 = sbr.rel (%p2027) target = $region252
        $region251: #{_encode_impl.1} parent=11 // pred_region
          _
        $region252: #{_encode_impl.1} parent=11 // pred_fallthru
          _
        // Predicated region
        $region253: #{_encode_impl.1} parent=11 // pred_check
          %p2030 = pneg %p1468
        $region254: #{_encode_impl.1} parent=11 // pred_check_branch
          %2032 = sbr.rel (%p2030) target = $region256
        $region255: #{_encode_impl.1} parent=11 // pred_region
          _
        $region256: #{_encode_impl.1} parent=11 // pred_fallthru
          _
        // Predicated region
        $region257: #{_encode_impl.1} parent=11 // pred_check
          %p2033 = pneg %p1489
        $region258: #{_encode_impl.1} parent=11 // pred_check_branch
          %2035 = sbr.rel (%p2033) target = $region260
        $region259: #{_encode_impl.1} parent=11 // pred_region
          _
        $region260: #{_encode_impl.1} parent=11 // pred_fallthru
          _
        // Predicated region
        $region261: #{_encode_impl.1} parent=11 // pred_check
          %p2036 = pneg %p1510
        $region262: #{_encode_impl.1} parent=11 // pred_check_branch
          %2038 = sbr.rel (%p2036) target = $region264
        $region263: #{_encode_impl.1} parent=11 // pred_region
          _
        $region264: #{_encode_impl.1} parent=11 // pred_fallthru
          _
        // Predicated region
        $region265: #{_encode_impl.1} parent=11 // pred_check
          %p2039 = pneg %p1531
        $region266: #{_encode_impl.1} parent=11 // pred_check_branch
          %2041 = sbr.rel (%p2039) target = $region268
        $region267: #{_encode_impl.1} parent=11 // pred_region
          _
        $region268: #{_encode_impl.1} parent=11 // pred_fallthru
          _
        // Predicated region
        $region269: #{_encode_impl.1} parent=11 // pred_check
          %p2042 = pneg %p1552
        $region270: #{_encode_impl.1} parent=11 // pred_check_branch
          %2044 = sbr.rel (%p2042) target = $region272
        $region271: #{_encode_impl.1} parent=11 // pred_region
          _
        $region272: #{_encode_impl.1} parent=11 // pred_fallthru
          _
        // Predicated region
        $region273: #{_encode_impl.1} parent=11 // pred_check
          %p2045 = pneg %p1573
        $region274: #{_encode_impl.1} parent=11 // pred_check_branch
          %2047 = sbr.rel (%p2045) target = $region276
        $region275: #{_encode_impl.1} parent=11 // pred_region
          _
        $region276: #{_encode_impl.1} parent=11 // pred_fallthru
          _
        // Predicated region
        $region277: #{_encode_impl.1} parent=11 // pred_check
          %p2048 = pneg %p1594
        $region278: #{_encode_impl.1} parent=11 // pred_check_branch
          %2050 = sbr.rel (%p2048) target = $region280
        $region279: #{_encode_impl.1} parent=11 // pred_region
          %2052 = vsyncadd [#allocation27], 0
          %s2053 = sshll.u32 %s135, 4
          %s2054 = int_to_ptr.hbm [resolvable:$true] %s2053
          %s2055 = sshll.u32 [#allocation26], 4
          %s2056 = int_to_ptr.vmem [resolvable:$true] %s2055
          %2061 = dma.hbm_to_vmem [thread:$0]  %s2054, 1536, %s2056, [#allocation27], 128, 128, 8
        $region280: #{_encode_impl.1} parent=11 // pred_fallthru
          _
        // Predicated region
        $region281: #{_encode_impl.1} parent=11 // pred_check
          %p2062 = pneg %p1615
        $region282: #{_encode_impl.1} parent=11 // pred_check_branch
          %2064 = sbr.rel (%p2062) target = $region284
        $region283: #{_encode_impl.1} parent=11 // pred_region
          _
        $region284: #{_encode_impl.1} parent=11 // pred_fallthru
          _
      $region12: #{_encode_impl.1} parent=5 // pred_fallthru
        _
      %p2065 = scmp.lt.s32.totalorder %s161, 2
      // Predicated region
      $region285: #{_encode_impl.1} parent=5 // pred_check
        %p2066 = pneg %p2065
      $region286: #{_encode_impl.1} parent=5 // pred_check_branch
        %2068 = sbr.rel (%p2066) target = $region288
      $region287: #{_encode_impl.1} parent=5 // pred_region
        // Predicated region
        $region289: #{_encode_impl.1} parent=287 // pred_check
          %p2069 = pneg %p181
        $region290: #{_encode_impl.1} parent=287 // pred_check_branch
          %2071 = sbr.rel (%p2069) target = $region292
        $region291: #{_encode_impl.1} parent=287 // pred_region
          %s2072 = sand.u32 %s171, 1
          %s2073 = scalar_lea.sflag [#allocation4], %s2072
          %s2074 = sand.u32 %s171, 1
          %s2075 = scalar_lea.vmem [#allocation3], %s2074
          %2077 = vsyncadd %s2073, 0
          %s2078 = scalar_lea.hbm %s1, %s161
          %s2080 = sshll.u32 %s2078, 4
          %s2081 = int_to_ptr.hbm [resolvable:$true] %s2080
          %s2082 = sshll.u32 %s2075, 4
          %s2083 = int_to_ptr.vmem [resolvable:$true] %s2082
          %2085 = dma.hbm_to_vmem [thread:$0]  %s2081, 16, %s2083, %s2073
        $region292: #{_encode_impl.1} parent=287 // pred_fallthru
          _
      $region288: #{_encode_impl.1} parent=5 // pred_fallthru
        _
      %p2086 = scmp.le.s32.totalorder 1, %s161
      %p2087 = scmp.lt.s32.totalorder %s161, 3
      %p2088 = pnand %p2086, %p2087
      %p2089 = pneg %p2088
      // Predicated region
      $region293: #{_encode_impl.1} parent=5 // pred_check
        _
      $region294: #{_encode_impl.1} parent=5 // pred_check_branch
        %2091 = sbr.rel (%p2088) target = $region296
      $region295: #{_encode_impl.1} parent=5 // pred_region
        %s2092 = ssub.s32 %s161, 1
        %s2093 = sand.u32 %s174, 1
        %s2094 = scalar_lea.sflag [#allocation4], %s2093
        %s2095 = sand.u32 %s174, 1
        %s2096 = scalar_lea.vmem [#allocation3], %s2095
        // Predicated region
        $region297: #{_encode_impl.1} parent=295 // pred_check
          %p2097 = pneg %p187
        $region298: #{_encode_impl.1} parent=295 // pred_check_branch
          %2099 = sbr.rel (%p2097) target = $region300
        $region299: #{_encode_impl.1} parent=295 // pred_region
          %2101 = dma.done %s2094, 16
        $region300: #{_encode_impl.1} parent=295 // pred_fallthru
          _
        // Predicated region
        $region301: #{_encode_impl.1} parent=295 // pred_check
          %p2102 = pneg %p208
        $region302: #{_encode_impl.1} parent=295 // pred_check_branch
          %2104 = sbr.rel (%p2102) target = $region304
        $region303: #{_encode_impl.1} parent=295 // pred_region
          %2106 = dma.done [#allocation6], 128
        $region304: #{_encode_impl.1} parent=295 // pred_fallthru
          _
        // Predicated region
        $region305: #{_encode_impl.1} parent=295 // pred_check
          %p2107 = pneg %p292
        $region306: #{_encode_impl.1} parent=295 // pred_check_branch
          %2109 = sbr.rel (%p2107) target = $region308
        $region307: #{_encode_impl.1} parent=295 // pred_region
          %2111 = dma.done [#allocation6], 64
        $region308: #{_encode_impl.1} parent=295 // pred_fallthru
          _
        // Predicated region
        $region309: #{_encode_impl.1} parent=295 // pred_check
          %p2112 = pneg %p376
        $region310: #{_encode_impl.1} parent=295 // pred_check_branch
          %2114 = sbr.rel (%p2112) target = $region312
        $region311: #{_encode_impl.1} parent=295 // pred_region
          %2116 = dma.done [#allocation9], 64
        $region312: #{_encode_impl.1} parent=295 // pred_fallthru
          _
        // Predicated region
        $region313: #{_encode_impl.1} parent=295 // pred_check
          %p2117 = pneg %p460
        $region314: #{_encode_impl.1} parent=295 // pred_check_branch
          %2119 = sbr.rel (%p2117) target = $region316
        $region315: #{_encode_impl.1} parent=295 // pred_region
          %2121 = dma.done [#allocation9], 64
        $region316: #{_encode_impl.1} parent=295 // pred_fallthru
          _
        // Predicated region
        $region317: #{_encode_impl.1} parent=295 // pred_check
          %p2122 = pneg %p544
        $region318: #{_encode_impl.1} parent=295 // pred_check_branch
          %2124 = sbr.rel (%p2122) target = $region320
        $region319: #{_encode_impl.1} parent=295 // pred_region
          %2126 = dma.done [#allocation12], 64
        $region320: #{_encode_impl.1} parent=295 // pred_fallthru
          _
        // Predicated region
        $region321: #{_encode_impl.1} parent=295 // pred_check
          %p2127 = pneg %p628
        $region322: #{_encode_impl.1} parent=295 // pred_check_branch
          %2129 = sbr.rel (%p2127) target = $region324
        $region323: #{_encode_impl.1} parent=295 // pred_region
          %2131 = dma.done [#allocation12], 64
        $region324: #{_encode_impl.1} parent=295 // pred_fallthru
          _
        // Predicated region
        $region325: #{_encode_impl.1} parent=295 // pred_check
          %p2132 = pneg %p796
        $region326: #{_encode_impl.1} parent=295 // pred_check_branch
          %2134 = sbr.rel (%p2132) target = $region328
        $region327: #{_encode_impl.1} parent=295 // pred_region
          %2136 = dma.done [#allocation15], 128
        $region328: #{_encode_impl.1} parent=295 // pred_fallthru
          _
        // Predicated region
        $region329: #{_encode_impl.1} parent=295 // pred_check
          %p2137 = pneg %p880
        $region330: #{_encode_impl.1} parent=295 // pred_check_branch
          %2139 = sbr.rel (%p2137) target = $region332
        $region331: #{_encode_impl.1} parent=295 // pred_region
          %2141 = dma.done [#allocation15], 128
        $region332: #{_encode_impl.1} parent=295 // pred_fallthru
          _
        // Predicated region
        $region333: #{_encode_impl.1} parent=295 // pred_check
          %p2142 = pneg %p964
        $region334: #{_encode_impl.1} parent=295 // pred_check_branch
          %2144 = sbr.rel (%p2142) target = $region336
        $region335: #{_encode_impl.1} parent=295 // pred_region
          %2146 = dma.done [#allocation18], 128
        $region336: #{_encode_impl.1} parent=295 // pred_fallthru
          _
        // Predicated region
        $region337: #{_encode_impl.1} parent=295 // pred_check
          %p2147 = pneg %p1048
        $region338: #{_encode_impl.1} parent=295 // pred_check_branch
          %2149 = sbr.rel (%p2147) target = $region340
        $region339: #{_encode_impl.1} parent=295 // pred_region
          %2151 = dma.done [#allocation18], 128
        $region340: #{_encode_impl.1} parent=295 // pred_fallthru
          _
        // Predicated region
        $region341: #{_encode_impl.1} parent=295 // pred_check
          %p2152 = pneg %p1132
        $region342: #{_encode_impl.1} parent=295 // pred_check_branch
          %2154 = sbr.rel (%p2152) target = $region344
        $region343: #{_encode_impl.1} parent=295 // pred_region
          %2156 = dma.done [#allocation21], 128
        $region344: #{_encode_impl.1} parent=295 // pred_fallthru
          _
        // Predicated region
        $region345: #{_encode_impl.1} parent=295 // pred_check
          %p2157 = pneg %p1216
        $region346: #{_encode_impl.1} parent=295 // pred_check_branch
          %2159 = sbr.rel (%p2157) target = $region348
        $region347: #{_encode_impl.1} parent=295 // pred_region
          %2161 = dma.done [#allocation21], 128
        $region348: #{_encode_impl.1} parent=295 // pred_fallthru
          _
        // Predicated region
        $region349: #{_encode_impl.1} parent=295 // pred_check
          %p2162 = pneg %p1300
        $region350: #{_encode_impl.1} parent=295 // pred_check_branch
          %2164 = sbr.rel (%p2162) target = $region352
        $region351: #{_encode_impl.1} parent=295 // pred_region
          %2166 = dma.done [#allocation24], 128
        $region352: #{_encode_impl.1} parent=295 // pred_fallthru
          _
        // Predicated region
        $region353: #{_encode_impl.1} parent=295 // pred_check
          %p2167 = pneg %p1384
        $region354: #{_encode_impl.1} parent=295 // pred_check_branch
          %2169 = sbr.rel (%p2167) target = $region356
        $region355: #{_encode_impl.1} parent=295 // pred_region
          %2171 = dma.done [#allocation24], 256
        $region356: #{_encode_impl.1} parent=295 // pred_fallthru
          _
        // Predicated region
        $region357: #{_encode_impl.1} parent=295 // pred_check
          %p2172 = pneg %p1594
        $region358: #{_encode_impl.1} parent=295 // pred_check_branch
          %2174 = sbr.rel (%p2172) target = $region360
        $region359: #{_encode_impl.1} parent=295 // pred_region
          %2176 = dma.done [#allocation27], 1536
        $region360: #{_encode_impl.1} parent=295 // pred_fallthru
          _
        %s2177 = sand.u32 %s174, 1
        %s2178 = scalar_lea.sflag [#allocation4], %s2177
        %s2179 = sand.u32 %s174, 1
        %s2180 = scalar_lea.vmem [#allocation3], %s2179
        %p2181 = pneg %p187
        %p2182 = pneg %p184
        %p2183 = pneg %p208
        %p2184 = pneg %p205
        %p2185 = pneg %p229
        %p2186 = pneg %p226
        %p2187 = pneg %p250
        %p2188 = pneg %p247
        %p2189 = pneg %p271
        %p2190 = pneg %p268
        %p2191 = pneg %p292
        %p2192 = pneg %p289
        %p2193 = pneg %p313
        %p2194 = pneg %p310
        %p2195 = pneg %p334
        %p2196 = pneg %p331
        %p2197 = pneg %p355
        %p2198 = pneg %p352
        %p2199 = pneg %p376
        %p2200 = pneg %p373
        %p2201 = pneg %p397
        %p2202 = pneg %p394
        %p2203 = pneg %p418
        %p2204 = pneg %p415
        %p2205 = pneg %p439
        %p2206 = pneg %p436
        %p2207 = pneg %p460
        %p2208 = pneg %p457
        %p2209 = pneg %p481
        %p2210 = pneg %p478
        %p2211 = pneg %p502
        %p2212 = pneg %p499
        %p2213 = pneg %p523
        %p2214 = pneg %p520
        %p2215 = pneg %p544
        %p2216 = pneg %p541
        %p2217 = pneg %p565
        %p2218 = pneg %p562
        %p2219 = pneg %p586
        %p2220 = pneg %p583
        %p2221 = pneg %p607
        %p2222 = pneg %p604
        %p2223 = pneg %p628
        %p2224 = pneg %p625
        %p2225 = pneg %p649
        %p2226 = pneg %p646
        %p2227 = pneg %p670
        %p2228 = pneg %p667
        %p2229 = pneg %p691
        %p2230 = pneg %p688
        %p2231 = pneg %p712
        %p2232 = pneg %p709
        %p2233 = pneg %p733
        %p2234 = pneg %p730
        %p2235 = pneg %p754
        %p2236 = pneg %p751
        %p2237 = pneg %p775
        %p2238 = pneg %p772
        %p2239 = pneg %p796
        %p2240 = pneg %p793
        %p2241 = pneg %p817
        %p2242 = pneg %p814
        %p2243 = pneg %p838
        %p2244 = pneg %p835
        %p2245 = pneg %p859
        %p2246 = pneg %p856
        %p2247 = pneg %p880
        %p2248 = pneg %p877
        %p2249 = pneg %p901
        %p2250 = pneg %p898
        %p2251 = pneg %p922
        %p2252 = pneg %p919
        %p2253 = pneg %p943
        %p2254 = pneg %p940
        %p2255 = pneg %p964
        %p2256 = pneg %p961
        %p2257 = pneg %p985
        %p2258 = pneg %p982
        %p2259 = pneg %p1006
        %p2260 = pneg %p1003
        %p2261 = pneg %p1027
        %p2262 = pneg %p1024
        %p2263 = pneg %p1048
        %p2264 = pneg %p1045
        %p2265 = pneg %p1069
        %p2266 = pneg %p1066
        %p2267 = pneg %p1090
        %p2268 = pneg %p1087
        %p2269 = pneg %p1111
        %p2270 = pneg %p1108
        %p2271 = pneg %p1132
        %p2272 = pneg %p1129
        %p2273 = pneg %p1153
        %p2274 = pneg %p1150
        %p2275 = pneg %p1174
        %p2276 = pneg %p1171
        %p2277 = pneg %p1195
        %p2278 = pneg %p1192
        %p2279 = pneg %p1216
        %p2280 = pneg %p1213
        %p2281 = pneg %p1237
        %p2282 = pneg %p1234
        %p2283 = pneg %p1258
        %p2284 = pneg %p1255
        %p2285 = pneg %p1279
        %p2286 = pneg %p1276
        %p2287 = pneg %p1300
        %p2288 = pneg %p1297
        %p2289 = pneg %p1321
        %p2290 = pneg %p1318
        %p2291 = pneg %p1342
        %p2292 = pneg %p1339
        %p2293 = pneg %p1363
        %p2294 = pneg %p1360
        %p2295 = pneg %p1384
        %p2296 = pneg %p1381
        %p2297 = pneg %p1405
        %p2298 = pneg %p1402
        %p2299 = pneg %p1426
        %p2300 = pneg %p1423
        %p2301 = pneg %p1447
        %p2302 = pneg %p1444
        %p2303 = pneg %p1468
        %p2304 = pneg %p1465
        %p2305 = pneg %p1489
        %p2306 = pneg %p1486
        %p2307 = pneg %p1510
        %p2308 = pneg %p1507
        %p2309 = pneg %p1531
        %p2310 = pneg %p1528
        %p2311 = pneg %p1552
        %p2312 = pneg %p1549
        %p2313 = pneg %p1573
        %p2314 = pneg %p1570
        %p2315 = pneg %p1594
        %p2316 = pneg %p1591
        %p2317 = pneg %p1615
        %p2318 = pneg %p1612
        %p2319 = pneg %p1641
        %p2320 = pneg %p1638
        %p2321 = scmp.lt.s32.totalorder %s166, 1
        %s2322 = scalar_select %p2321, %s166, 1
        %s2323 = smul.addr %s2322, 4
        %s2324 = smul.addr %s2323, 8
        %s2325 = scalar_lea.vmem %s139, %s2324
        %p2326 = pneg %p1667
        %p2327 = pneg %p1664
        %p2328 = scmp.lt.s32.totalorder %s166, 1
        %s2329 = scalar_select %p2328, %s166, 1
        %s2330 = smul.addr %s2329, 4
        %s2331 = scalar_lea.vmem %s141, %s2330
        %p2332 = pneg %p1693
        %p2333 = pneg %p1690
        %p2334 = scmp.lt.s32.totalorder %s166, 1
        %s2335 = scalar_select %p2334, %s166, 1
        %s2336 = smul.addr %s2335, 3
        %s2337 = smul.addr %s2336, 8
        %s2338 = scalar_lea.vmem %s143, %s2337
        %p2339 = scmp.lt.s32.totalorder %s166, 1
        %s2340 = scalar_select %p2339, %s166, 1
        %s2341 = smul.addr %s2340, 4
        %s2342 = smul.addr %s2341, 8
        %s2343 = scalar_lea.vmem %s139, %s2342
        %p2344 = scmp.lt.s32.totalorder %s166, 1
        %s2345 = scalar_select %p2344, %s166, 1
        %s2346 = smul.addr %s2345, 4
        %s2347 = scalar_lea.vmem %s141, %s2346
        %p2348 = scmp.lt.s32.totalorder %s166, 1
        %s2349 = scalar_select %p2348, %s166, 1
        %s2350 = smul.addr %s2349, 3
        %s2351 = smul.addr %s2350, 8
        %s2352 = scalar_lea.vmem %s143, %s2351
        %v2354 = vld [vmem:[%s2096] sm:$0x1]
        %2355 = vst [vmem:[#allocation2] sm:$0x1] 0.0
        %v2357 = vperm.slane %v2354, 0
        %2358 = vrot.lane.b32.xlu0 %v2357, 3
        %v2359 = vpop.permute.xlu0 %2358
        %vm2361 = vcmask 540696
        %2362 = vst.msk [vmem:[#allocation2] sm:$0x1] %vm2361, %v2359
        %v2363 = vld [vmem:[#allocation5] sm:$0xff]
        %v2364 = vld [vmem:[#allocation2] sm:$0x1]
        %2366 = vset.pattern.permute.xlu0 0
        %2367 = vperm.xlu0 %2366, %v2363
        %v2368 = vpop.permute.xlu0 %2367
        %v2370 = vperm.slane %v2364, 0
        %v2371 = vmul.f32 %v2368, %v2370
        %v2372 = vadd.f32 %v2371, 0.0
        %2373 = vset.pattern.permute.xlu0 1
        %2374 = vperm.xlu0 %2373, %v2363
        %v2375 = vpop.permute.xlu0 %2374
        %v2377 = vmul.f32 %v2375, %v2370
        %2379 = vrot.lane.b32.xlu0 %v2377, 127
        %v2380 = vpop.permute.xlu0 %2379
        %v2382 = vadd.f32 %v2372, %v2380
        %2383 = vset.pattern.permute.xlu0 2
        %2384 = vperm.xlu0 %2383, %v2363
        %v2385 = vpop.permute.xlu0 %2384
        %v2387 = vmul.f32 %v2385, %v2370
        %2389 = vrot.lane.b32.xlu0 %v2387, 126
        %v2390 = vpop.permute.xlu0 %2389
        %v2392 = vadd.f32 %v2382, %v2390
        %2393 = vset.pattern.permute.xlu0 3
        %2394 = vperm.xlu0 %2393, %v2363
        %v2395 = vpop.permute.xlu0 %2394
        %v2397 = vmul.f32 %v2395, %v2370
        %2399 = vrot.lane.b32.xlu0 %v2397, 125
        %v2400 = vpop.permute.xlu0 %2399
        %v2402 = vadd.f32 %v2392, %v2400
        %2403 = vset.pattern.permute.xlu0 4
        %2404 = vperm.xlu0 %2403, %v2363
        %v2405 = vpop.permute.xlu0 %2404
        %v2407 = vmul.f32 %v2405, %v2370
        %2409 = vrot.lane.b32.xlu0 %v2407, 124
        %v2410 = vpop.permute.xlu0 %2409
        %v2412 = vadd.f32 %v2402, %v2410
        %2413 = vset.pattern.permute.xlu0 5
        %2414 = vperm.xlu0 %2413, %v2363
        %v2415 = vpop.permute.xlu0 %2414
        %v2417 = vmul.f32 %v2415, %v2370
        %2419 = vrot.lane.b32.xlu0 %v2417, 123
        %v2420 = vpop.permute.xlu0 %2419
        %v2422 = vadd.f32 %v2412, %v2420
        %2423 = vset.pattern.permute.xlu0 6
        %2424 = vperm.xlu0 %2423, %v2363
        %v2425 = vpop.permute.xlu0 %2424
        %v2427 = vmul.f32 %v2425, %v2370
        %2429 = vrot.lane.b32.xlu0 %v2427, 122
        %v2430 = vpop.permute.xlu0 %2429
        %v2432 = vadd.f32 %v2422, %v2430
        %v2433 = vld [vmem:[%s5] sm:$0xff]
        %2435 = vset.pattern.permute.xlu0 0
        %2436 = vperm.xlu0 %2435, %v2433
        %v2437 = vpop.permute.xlu0 %2436
        %v2439 = vadd.f32 %v2432, %v2437
        %v2440 = vld [vmem:[%s9] sm:$0xff]
        %v2441 = vld [vmem:[%s7] sm:$0xff]
        %2443 = vset.pattern.permute.xlu0 0
        %2444 = vperm.xlu0 %2443, %v2441
        %v2445 = vpop.permute.xlu0 %2444
        %v2447 = vmul.f32 %v2445, %v2439
        %v2448 = vand.u32 2147483647, %v2447
        %vm2449 = vcmp.le.f32.partialorder %v2448, 0.7853982
        %vm2450 = vcmp.lt.s32.totalorder %v2447, 0
        %v2451 = vand.u32 %v2447, 2139095040
        %v2452 = vshrl.u32 %v2451, 23
        %v2453 = vsub.s32 %v2452, 127
        %v2454 = vand.u32 2147483647, %v2447
        %v2455 = vand.u32 %v2454, 8388607
        %v2456 = vor.u32 %v2455, 8388608
        %v2457 = vsub.s32 0, %v2456
        %v2458 = vadd.s32 %v2453, 1
        %vm2459 = vcmp.gt.s32.totalorder %v2458, 0
        %v2460 = vsel %vm2459, %v2458, 0
        %v2461 = vshrl.u32 %v2460, 5
        %v2462 = vand.u32 %v2460, 31
        %v2463 = vsub.s32 32, %v2462
        %v2464 = vshrl.u32 683565275, %v2463
        %v2465 = vshll.u32 683565275, %v2462
        %v2466 = vshrl.u32 2475754826, %v2463
        %v2467 = vor.u32 %v2465, %v2466
        %v2468 = vshll.u32 2475754826, %v2462
        %v2469 = vshrl.u32 2131351028, %v2463
        %v2470 = vor.u32 %v2468, %v2469
        %v2471 = vshll.u32 2131351028, %v2462
        %v2472 = vshrl.u32 2102212464, %v2463
        %v2473 = vor.u32 %v2471, %v2472
        %v2474 = vshll.u32 2102212464, %v2462
        %v2475 = vshrl.u32 920167782, %v2463
        %v2476 = vor.u32 %v2474, %v2475
        %v2477 = vshll.u32 920167782, %v2462
        %v2478 = vshrl.u32 1326507024, %v2463
        %v2479 = vor.u32 %v2477, %v2478
        %vm2480 = vcmp.lt.s32.totalorder %v2461, 1
        %vm2481 = vcmp.lt.s32.totalorder %v2461, 2
        %vm2482 = vcmp.lt.s32.totalorder %v2461, 3
        %vm2483 = vcmp.lt.s32.totalorder %v2461, 4
        %v2484 = vsel %vm2480, %v2464, %v2467
        %v2485 = vsel %vm2483, %v2473, 2102212464
        %v2486 = vsel %vm2482, %v2470, %v2485
        %v2487 = vsel %vm2481, %v2484, %v2486
        %v2488 = vsel %vm2480, %v2467, %v2470
        %v2489 = vsel %vm2483, %v2476, 920167782
        %v2490 = vsel %vm2482, %v2473, %v2489
        %v2491 = vsel %vm2481, %v2488, %v2490
        %v2492 = vsel %vm2480, %v2470, %v2473
        %v2493 = vsel %vm2483, %v2479, 1326507024
        %v2494 = vsel %vm2482, %v2476, %v2493
        %v2495 = vsel %vm2481, %v2492, %v2494
        %v2496 = vshll.u32 %v2456, 8
        %v2497 = vand.u32 %v2496, 65535
        %v2498 = vshrl.u32 %v2496, 16
        %v2499 = vand.u32 %v2495, 65535
        %v2500 = vshrl.u32 %v2495, 16
        %v2501 = vmul.u32 %v2497, %v2499
        %v2502 = vmul.u32 %v2497, %v2500
        %v2503 = vmul.u32 %v2498, %v2499
        %v2504 = vmul.u32 %v2498, %v2500
        %v2505 = vshll.u32 %v2502, 16
        %v2506 = vshrl.u32 %v2502, 16
        %v2507 = vshll.u32 %v2503, 16
        %v2508 = vshrl.u32 %v2503, 16
        %vm2509 = vc.u32 %v2501, %v2505
        %v2510 = vsel %vm2509, 1, 0
        %v2511 = vadd.s32 %v2501, %v2505
        %v2512 = vadd.s32 %v2504, %v2510
        %vm2513 = vc.u32 %v2511, %v2507
        %v2514 = vsel %vm2513, 1, 0
        %v2515 = vadd.s32 %v2511, %v2507
        %v2516 = vadd.s32 %v2512, %v2514
        %v2517 = vadd.s32 %v2516, %v2506
        %v2518 = vadd.s32 %v2517, %v2508
        %v2519 = vand.u32 %v2496, 65535
        %v2520 = vshrl.u32 %v2496, 16
        %v2521 = vand.u32 %v2491, 65535
        %v2522 = vshrl.u32 %v2491, 16
        %v2523 = vmul.u32 %v2519, %v2521
        %v2524 = vmul.u32 %v2519, %v2522
        %v2525 = vmul.u32 %v2520, %v2521
        %v2526 = vmul.u32 %v2520, %v2522
        %v2527 = vshll.u32 %v2524, 16
        %v2528 = vshrl.u32 %v2524, 16
        %v2529 = vshll.u32 %v2525, 16
        %v2530 = vshrl.u32 %v2525, 16
        %vm2531 = vc.u32 %v2523, %v2527
        %v2532 = vsel %vm2531, 1, 0
        %v2533 = vadd.s32 %v2523, %v2527
        %v2534 = vadd.s32 %v2526, %v2532
        %vm2535 = vc.u32 %v2533, %v2529
        %v2536 = vsel %vm2535, 1, 0
        %v2537 = vadd.s32 %v2533, %v2529
        %v2538 = vadd.s32 %v2534, %v2536
        %v2539 = vadd.s32 %v2538, %v2528
        %v2540 = vadd.s32 %v2539, %v2530
        %v2541 = vmul.u32 %v2496, %v2487
        %v2542 = vadd.s32 %v2518, %v2537
        %vm2543 = vc.u32 %v2518, %v2537
        %v2544 = vadd.s32 %v2540, 1
        %v2545 = vsel %vm2543, %v2544, %v2540
        %v2546 = vadd.s32 %v2541, %v2545
        %v2547 = vadd.s32 %v2546, 536870912
        %v2548 = vshrl.u32 %v2547, 30
        %v2549 = vshll.u32 %v2548, 30
        %v2550 = vsub.s32 %v2546, %v2549
        %vm2551 = vcmp.lt.s32.totalorder %v2550, 0
        %v2552 = vsub.s32 0, %v2550
        %v2553 = vsel %vm2551, %v2552, %v2550
        %v2554 = vclz %v2553
        %v2555 = vsub.s32 %v2554, 2
        %vm2556 = vcmp.gt.s32.totalorder 0, %v2555
        %v2557 = vsel %vm2556, 0, %v2555
        %v2558 = vsub.s32 32, %v2557
        %v2559 = vshll.u32 %v2550, %v2557
        %v2560 = vshrl.u32 %v2542, %v2558
        %v2561 = vor.u32 %v2559, %v2560
        %v2562 = vsub.s32 4294967266, %v2557
        %v2563 = vadd.s32 %v2562, 127
        %v2564 = vshll.u32 %v2563, 23
        %v2565 = vor.u32 4788187, %v2564
        %v2566 = vand.u32 2147483647, %v2565
        %v2568 = vcvt.s32.f32 %v2561
        %v2569 = vmul.f32 %v2568, %v2566
        %v2570 = vxor.u32 %v2569, 2147483648
        %v2571 = vsel %vm2450, %v2570, %v2569
        %v2572 = vsub.s32 4, %v2548
        %v2573 = vsel %vm2450, %v2572, %v2548
        %v2574 = vsel %vm2449, %v2447, %v2571
        %v2575 = vsel %vm2449, 0, %v2573
        %v2576 = vmul.f32 %v2574, %v2574
        %v2577 = vmul.f32 %v2576, -0.001358992
        %v2578 = vadd.f32 %v2577, 0.041655596
        %v2579 = vmul.f32 %v2576, %v2578
        %v2580 = vadd.f32 %v2579, -0.4999988
        %v2581 = vmul.f32 %v2576, %v2580
        %v2582 = vadd.f32 1.0, %v2581
        %v2583 = vmul.f32 %v2574, %v2574
        %v2584 = vmul.f32 %v2583, -0.00019511016
        %v2585 = vadd.f32 %v2584, 0.008332121
        %v2586 = vmul.f32 %v2583, %v2585
        %v2587 = vadd.f32 %v2586, -0.16666654
        %v2588 = vmul.f32 %v2583, %v2587
        %v2589 = vadd.f32 %v2588, 1.0
        %v2590 = vmul.f32 %v2589, %v2574
        %vm2591 = vweird.f32 %v2447
        %v2592 = vadd.s32 %v2575, 3
        %v2593 = vand.u32 %v2592, 3
        %vm2594 = vcmp.lt.s32.totalorder %v2593, 2
        %vm2595 = vcmp.eq.s32.totalorder %v2593, 0
        %v2596 = vxor.u32 %v2590, 2147483648
        %v2597 = vsel %vm2595, %v2582, %v2596
        %vm2598 = vcmp.eq.s32.totalorder %v2593, 2
        %v2599 = vxor.u32 %v2582, 2147483648
        %v2600 = vsel %vm2598, %v2599, %v2590
        %v2601 = vsel %vm2594, %v2597, %v2600
        %v2602 = vsel %vm2591, nan, %v2601
        %v2603 = vmul.f32 %v2602, %v2602
        %2605 = vset.pattern.permute.xlu0 0
        %2606 = vperm.xlu0 %2605, %v2440
        %v2607 = vpop.permute.xlu0 %2606
        %v2609 = vmul.f32 %v2607, %v2603
        %v2610 = vadd.f32 %v2439, %v2609
        %2611 = vst [vmem:[#allocation2] sm:$0xff] 0.0
        %2613 = vrot.lane.b32.xlu0 %v2610, 3
        %v2614 = vpop.permute.xlu0 %2613
        %vm2616 = vcmask 547864
        %2617 = vst.msk [vmem:[#allocation2] sm:$0xff] %vm2616, %v2614
        %v2618 = vld [vmem:[#allocation2] sm:$0xff]
        %2620 = vrot.lane.b32.xlu0 %v2618, 127
        %v2621 = vpop.permute.xlu0 %2620
        %2623 = vrot.lane.b32.xlu0 %v2618, 126
        %v2624 = vpop.permute.xlu0 %2623
        %2626 = vrot.lane.b32.xlu0 %v2618, 125
        %v2627 = vpop.permute.xlu0 %2626
        %2629 = vrot.lane.b32.xlu0 %v2618, 124
        %v2630 = vpop.permute.xlu0 %2629
        %2632 = vrot.lane.b32.xlu0 %v2618, 123
        %v2633 = vpop.permute.xlu0 %2632
        %2635 = vrot.lane.b32.xlu0 %v2618, 122
        %v2636 = vpop.permute.xlu0 %2635
        %v2638 = vld [vmem:[#allocation7] sm:$0xf]
        %v2639 = vpack.c.bf16 %v2621, %v2618
        %v2640 = vpack.c.bf16 %v2627, %v2624
        %v2641 = vpack.c.bf16 %v2633, %v2630
        %v2642 = vpack.c.bf16 %v2636, %v2636
        %v2643 = vld [vmem:[%s13] sm:$0xff]
        %2645 = vset.pattern.permute.xlu0 0
        %2646 = vperm.xlu0 %2645, %v2643
        %v2647 = vpop.permute.xlu0 %2646
        %vm2649 = vcmask 457728
        %v2651 = vsel %vm2649, %v2638, 0
        %vm2653 = vcmask 1043456
        %v2655 = vsel %vm2653, %v2642, 0
        %2657 = vmatpush.bf16.msra.mxu0 0
        %2658 = vmatpush.bf16.msra.mxu0 0
        %2659 = vmatpush.bf16.msra.mxu0 0
        %2660 = vmatpush.bf16.msra.mxu0 0
        %2661 = vmatpush.bf16.msra.mxu0 %v2655
        %2662 = vmatpush.bf16.msra.mxu0 %v2641
        %2663 = vmatpush.bf16.msra.mxu0 %v2640
        %2664 = vmatpush.bf16.msra.mxu0 %v2639
        %2665 = vmatmul.bf16.gmra.mxu0 %v2651
        %v2666 = vpop.f32.mrf.mxu0
        %v2667 = vadd.f32 %v2647, %v2666
        %v2668 = vpop.f32.mrf.mxu0
        %2669 = vdwg.mxu0
        %v2670 = vld [vmem:[%s17] sm:$0xff]
        %v2671 = vld [vmem:[%s15] sm:$0xff]
        %2673 = vset.pattern.permute.xlu0 0
        %2674 = vperm.xlu0 %2673, %v2671
        %v2675 = vpop.permute.xlu0 %2674
        %v2677 = vmul.f32 %v2675, %v2667
        %v2678 = vand.u32 2147483647, %v2677
        %vm2679 = vcmp.le.f32.partialorder %v2678, 0.7853982
        %vm2680 = vcmp.lt.s32.totalorder %v2677, 0
        %v2681 = vand.u32 %v2677, 2139095040
        %v2682 = vshrl.u32 %v2681, 23
        %v2683 = vsub.s32 %v2682, 127
        %v2684 = vand.u32 2147483647, %v2677
        %v2685 = vand.u32 %v2684, 8388607
        %v2686 = vor.u32 %v2685, 8388608
        %v2687 = vsub.s32 0, %v2686
        %v2688 = vadd.s32 %v2683, 1
        %vm2689 = vcmp.gt.s32.totalorder %v2688, 0
        %v2690 = vsel %vm2689, %v2688, 0
        %v2691 = vshrl.u32 %v2690, 5
        %v2692 = vand.u32 %v2690, 31
        %v2693 = vsub.s32 32, %v2692
        %v2694 = vshrl.u32 683565275, %v2693
        %v2695 = vshll.u32 683565275, %v2692
        %v2696 = vshrl.u32 2475754826, %v2693
        %v2697 = vor.u32 %v2695, %v2696
        %v2698 = vshll.u32 2475754826, %v2692
        %v2699 = vshrl.u32 2131351028, %v2693
        %v2700 = vor.u32 %v2698, %v2699
        %v2701 = vshll.u32 2131351028, %v2692
        %v2702 = vshrl.u32 2102212464, %v2693
        %v2703 = vor.u32 %v2701, %v2702
        %v2704 = vshll.u32 2102212464, %v2692
        %v2705 = vshrl.u32 920167782, %v2693
        %v2706 = vor.u32 %v2704, %v2705
        %v2707 = vshll.u32 920167782, %v2692
        %v2708 = vshrl.u32 1326507024, %v2693
        %v2709 = vor.u32 %v2707, %v2708
        %vm2710 = vcmp.lt.s32.totalorder %v2691, 1
        %vm2711 = vcmp.lt.s32.totalorder %v2691, 2
        %vm2712 = vcmp.lt.s32.totalorder %v2691, 3
        %vm2713 = vcmp.lt.s32.totalorder %v2691, 4
        %v2714 = vsel %vm2710, %v2694, %v2697
        %v2715 = vsel %vm2713, %v2703, 2102212464
        %v2716 = vsel %vm2712, %v2700, %v2715
        %v2717 = vsel %vm2711, %v2714, %v2716
        %v2718 = vsel %vm2710, %v2697, %v2700
        %v2719 = vsel %vm2713, %v2706, 920167782
        %v2720 = vsel %vm2712, %v2703, %v2719
        %v2721 = vsel %vm2711, %v2718, %v2720
        %v2722 = vsel %vm2710, %v2700, %v2703
        %v2723 = vsel %vm2713, %v2709, 1326507024
        %v2724 = vsel %vm2712, %v2706, %v2723
        %v2725 = vsel %vm2711, %v2722, %v2724
        %v2726 = vshll.u32 %v2686, 8
        %v2727 = vand.u32 %v2726, 65535
        %v2728 = vshrl.u32 %v2726, 16
        %v2729 = vand.u32 %v2725, 65535
        %v2730 = vshrl.u32 %v2725, 16
        %v2731 = vmul.u32 %v2727, %v2729
        %v2732 = vmul.u32 %v2727, %v2730
        %v2733 = vmul.u32 %v2728, %v2729
        %v2734 = vmul.u32 %v2728, %v2730
        %v2735 = vshll.u32 %v2732, 16
        %v2736 = vshrl.u32 %v2732, 16
        %v2737 = vshll.u32 %v2733, 16
        %v2738 = vshrl.u32 %v2733, 16
        %vm2739 = vc.u32 %v2731, %v2735
        %v2740 = vsel %vm2739, 1, 0
        %v2741 = vadd.s32 %v2731, %v2735
        %v2742 = vadd.s32 %v2734, %v2740
        %vm2743 = vc.u32 %v2741, %v2737
        %v2744 = vsel %vm2743, 1, 0
        %v2745 = vadd.s32 %v2741, %v2737
        %v2746 = vadd.s32 %v2742, %v2744
        %v2747 = vadd.s32 %v2746, %v2736
        %v2748 = vadd.s32 %v2747, %v2738
        %v2749 = vand.u32 %v2726, 65535
        %v2750 = vshrl.u32 %v2726, 16
        %v2751 = vand.u32 %v2721, 65535
        %v2752 = vshrl.u32 %v2721, 16
        %v2753 = vmul.u32 %v2749, %v2751
        %v2754 = vmul.u32 %v2749, %v2752
        %v2755 = vmul.u32 %v2750, %v2751
        %v2756 = vmul.u32 %v2750, %v2752
        %v2757 = vshll.u32 %v2754, 16
        %v2758 = vshrl.u32 %v2754, 16
        %v2759 = vshll.u32 %v2755, 16
        %v2760 = vshrl.u32 %v2755, 16
        %vm2761 = vc.u32 %v2753, %v2757
        %v2762 = vsel %vm2761, 1, 0
        %v2763 = vadd.s32 %v2753, %v2757
        %v2764 = vadd.s32 %v2756, %v2762
        %vm2765 = vc.u32 %v2763, %v2759
        %v2766 = vsel %vm2765, 1, 0
        %v2767 = vadd.s32 %v2763, %v2759
        %v2768 = vadd.s32 %v2764, %v2766
        %v2769 = vadd.s32 %v2768, %v2758
        %v2770 = vadd.s32 %v2769, %v2760
        %v2771 = vmul.u32 %v2726, %v2717
        %v2772 = vadd.s32 %v2748, %v2767
        %vm2773 = vc.u32 %v2748, %v2767
        %v2774 = vadd.s32 %v2770, 1
        %v2775 = vsel %vm2773, %v2774, %v2770
        %v2776 = vadd.s32 %v2771, %v2775
        %v2777 = vadd.s32 %v2776, 536870912
        %v2778 = vshrl.u32 %v2777, 30
        %v2779 = vshll.u32 %v2778, 30
        %v2780 = vsub.s32 %v2776, %v2779
        %vm2781 = vcmp.lt.s32.totalorder %v2780, 0
        %v2782 = vsub.s32 0, %v2780
        %v2783 = vsel %vm2781, %v2782, %v2780
        %v2784 = vclz %v2783
        %v2785 = vsub.s32 %v2784, 2
        %vm2786 = vcmp.gt.s32.totalorder 0, %v2785
        %v2787 = vsel %vm2786, 0, %v2785
        %v2788 = vsub.s32 32, %v2787
        %v2789 = vshll.u32 %v2780, %v2787
        %v2790 = vshrl.u32 %v2772, %v2788
        %v2791 = vor.u32 %v2789, %v2790
        %v2792 = vsub.s32 4294967266, %v2787
        %v2793 = vadd.s32 %v2792, 127
        %v2794 = vshll.u32 %v2793, 23
        %v2795 = vor.u32 4788187, %v2794
        %v2796 = vand.u32 2147483647, %v2795
        %v2798 = vcvt.s32.f32 %v2791
        %v2799 = vmul.f32 %v2798, %v2796
        %v2800 = vxor.u32 %v2799, 2147483648
        %v2801 = vsel %vm2680, %v2800, %v2799
        %v2802 = vsub.s32 4, %v2778
        %v2803 = vsel %vm2680, %v2802, %v2778
        %v2804 = vsel %vm2679, %v2677, %v2801
        %v2805 = vsel %vm2679, 0, %v2803
        %v2806 = vmul.f32 %v2804, %v2804
        %v2807 = vmul.f32 %v2806, -0.001358992
        %v2808 = vadd.f32 %v2807, 0.041655596
        %v2809 = vmul.f32 %v2806, %v2808
        %v2810 = vadd.f32 %v2809, -0.4999988
        %v2811 = vmul.f32 %v2806, %v2810
        %v2812 = vadd.f32 1.0, %v2811
        %v2813 = vmul.f32 %v2804, %v2804
        %v2814 = vmul.f32 %v2813, -0.00019511016
        %v2815 = vadd.f32 %v2814, 0.008332121
        %v2816 = vmul.f32 %v2813, %v2815
        %v2817 = vadd.f32 %v2816, -0.16666654
        %v2818 = vmul.f32 %v2813, %v2817
        %v2819 = vadd.f32 %v2818, 1.0
        %v2820 = vmul.f32 %v2819, %v2804
        %vm2821 = vweird.f32 %v2677
        %v2822 = vadd.s32 %v2805, 3
        %v2823 = vand.u32 %v2822, 3
        %vm2824 = vcmp.lt.s32.totalorder %v2823, 2
        %vm2825 = vcmp.eq.s32.totalorder %v2823, 0
        %v2826 = vxor.u32 %v2820, 2147483648
        %v2827 = vsel %vm2825, %v2812, %v2826
        %vm2828 = vcmp.eq.s32.totalorder %v2823, 2
        %v2829 = vxor.u32 %v2812, 2147483648
        %v2830 = vsel %vm2828, %v2829, %v2820
        %v2831 = vsel %vm2824, %v2827, %v2830
        %v2832 = vsel %vm2821, nan, %v2831
        %v2833 = vmul.f32 %v2832, %v2832
        %2835 = vset.pattern.permute.xlu0 0
        %2836 = vperm.xlu0 %2835, %v2670
        %v2837 = vpop.permute.xlu0 %2836
        %v2839 = vmul.f32 %v2837, %v2833
        %v2840 = vadd.f32 %v2667, %v2839
        %v2841 = vld [vmem:[#allocation8] sm:$0xf]
        %v2842 = vpack.c.bf16 %v2840, %v2840
        %v2843 = vld [vmem:[%s21] sm:$0xff]
        %2845 = vset.pattern.permute.xlu0 0
        %2846 = vperm.xlu0 %2845, %v2843
        %v2847 = vpop.permute.xlu0 %2846
        %vm2849 = vcmask 64512
        %v2851 = vsel %vm2849, %v2841, 0
        %v2854 = vsel %vm2653, %v2842, 0
        %2856 = vmatpush.bf16.msra.mxu0 0
        %2857 = vmatpush.bf16.msra.mxu0 0
        %2858 = vmatpush.bf16.msra.mxu0 0
        %2859 = vmatpush.bf16.msra.mxu0 0
        %2860 = vmatpush.bf16.msra.mxu0 0
        %2861 = vmatpush.bf16.msra.mxu0 0
        %2862 = vmatpush.bf16.msra.mxu0 0
        %2863 = vmatpush.bf16.msra.mxu0 %v2854
        %2864 = vmatmul.bf16.gmra.mxu0 %v2851
        %v2865 = vpop.f32.mrf.mxu0
        %v2866 = vadd.f32 %v2847, %v2865
        %v2867 = vpop.f32.mrf.mxu0
        %2868 = vdwg.mxu0
        %v2869 = vadd.f32 %v2866, %v2439
        %v2870 = vld [vmem:[%s25] sm:$0xff]
        %v2871 = vld [vmem:[%s23] sm:$0xff]
        %2873 = vset.pattern.permute.xlu0 0
        %2874 = vperm.xlu0 %2873, %v2871
        %v2875 = vpop.permute.xlu0 %2874
        %v2877 = vmul.f32 %v2875, %v2869
        %v2878 = vand.u32 2147483647, %v2877
        %vm2879 = vcmp.le.f32.partialorder %v2878, 0.7853982
        %vm2880 = vcmp.lt.s32.totalorder %v2877, 0
        %v2881 = vand.u32 %v2877, 2139095040
        %v2882 = vshrl.u32 %v2881, 23
        %v2883 = vsub.s32 %v2882, 127
        %v2884 = vand.u32 2147483647, %v2877
        %v2885 = vand.u32 %v2884, 8388607
        %v2886 = vor.u32 %v2885, 8388608
        %v2887 = vsub.s32 0, %v2886
        %v2888 = vadd.s32 %v2883, 1
        %vm2889 = vcmp.gt.s32.totalorder %v2888, 0
        %v2890 = vsel %vm2889, %v2888, 0
        %v2891 = vshrl.u32 %v2890, 5
        %v2892 = vand.u32 %v2890, 31
        %v2893 = vsub.s32 32, %v2892
        %v2894 = vshrl.u32 683565275, %v2893
        %v2895 = vshll.u32 683565275, %v2892
        %v2896 = vshrl.u32 2475754826, %v2893
        %v2897 = vor.u32 %v2895, %v2896
        %v2898 = vshll.u32 2475754826, %v2892
        %v2899 = vshrl.u32 2131351028, %v2893
        %v2900 = vor.u32 %v2898, %v2899
        %v2901 = vshll.u32 2131351028, %v2892
        %v2902 = vshrl.u32 2102212464, %v2893
        %v2903 = vor.u32 %v2901, %v2902
        %v2904 = vshll.u32 2102212464, %v2892
        %v2905 = vshrl.u32 920167782, %v2893
        %v2906 = vor.u32 %v2904, %v2905
        %v2907 = vshll.u32 920167782, %v2892
        %v2908 = vshrl.u32 1326507024, %v2893
        %v2909 = vor.u32 %v2907, %v2908
        %vm2910 = vcmp.lt.s32.totalorder %v2891, 1
        %vm2911 = vcmp.lt.s32.totalorder %v2891, 2
        %vm2912 = vcmp.lt.s32.totalorder %v2891, 3
        %vm2913 = vcmp.lt.s32.totalorder %v2891, 4
        %v2914 = vsel %vm2910, %v2894, %v2897
        %v2915 = vsel %vm2913, %v2903, 2102212464
        %v2916 = vsel %vm2912, %v2900, %v2915
        %v2917 = vsel %vm2911, %v2914, %v2916
        %v2918 = vsel %vm2910, %v2897, %v2900
        %v2919 = vsel %vm2913, %v2906, 920167782
        %v2920 = vsel %vm2912, %v2903, %v2919
        %v2921 = vsel %vm2911, %v2918, %v2920
        %v2922 = vsel %vm2910, %v2900, %v2903
        %v2923 = vsel %vm2913, %v2909, 1326507024
        %v2924 = vsel %vm2912, %v2906, %v2923
        %v2925 = vsel %vm2911, %v2922, %v2924
        %v2926 = vshll.u32 %v2886, 8
        %v2927 = vand.u32 %v2926, 65535
        %v2928 = vshrl.u32 %v2926, 16
        %v2929 = vand.u32 %v2925, 65535
        %v2930 = vshrl.u32 %v2925, 16
        %v2931 = vmul.u32 %v2927, %v2929
        %v2932 = vmul.u32 %v2927, %v2930
        %v2933 = vmul.u32 %v2928, %v2929
        %v2934 = vmul.u32 %v2928, %v2930
        %v2935 = vshll.u32 %v2932, 16
        %v2936 = vshrl.u32 %v2932, 16
        %v2937 = vshll.u32 %v2933, 16
        %v2938 = vshrl.u32 %v2933, 16
        %vm2939 = vc.u32 %v2931, %v2935
        %v2940 = vsel %vm2939, 1, 0
        %v2941 = vadd.s32 %v2931, %v2935
        %v2942 = vadd.s32 %v2934, %v2940
        %vm2943 = vc.u32 %v2941, %v2937
        %v2944 = vsel %vm2943, 1, 0
        %v2945 = vadd.s32 %v2941, %v2937
        %v2946 = vadd.s32 %v2942, %v2944
        %v2947 = vadd.s32 %v2946, %v2936
        %v2948 = vadd.s32 %v2947, %v2938
        %v2949 = vand.u32 %v2926, 65535
        %v2950 = vshrl.u32 %v2926, 16
        %v2951 = vand.u32 %v2921, 65535
        %v2952 = vshrl.u32 %v2921, 16
        %v2953 = vmul.u32 %v2949, %v2951
        %v2954 = vmul.u32 %v2949, %v2952
        %v2955 = vmul.u32 %v2950, %v2951
        %v2956 = vmul.u32 %v2950, %v2952
        %v2957 = vshll.u32 %v2954, 16
        %v2958 = vshrl.u32 %v2954, 16
        %v2959 = vshll.u32 %v2955, 16
        %v2960 = vshrl.u32 %v2955, 16
        %vm2961 = vc.u32 %v2953, %v2957
        %v2962 = vsel %vm2961, 1, 0
        %v2963 = vadd.s32 %v2953, %v2957
        %v2964 = vadd.s32 %v2956, %v2962
        %vm2965 = vc.u32 %v2963, %v2959
        %v2966 = vsel %vm2965, 1, 0
        %v2967 = vadd.s32 %v2963, %v2959
        %v2968 = vadd.s32 %v2964, %v2966
        %v2969 = vadd.s32 %v2968, %v2958
        %v2970 = vadd.s32 %v2969, %v2960
        %v2971 = vmul.u32 %v2926, %v2917
        %v2972 = vadd.s32 %v2948, %v2967
        %vm2973 = vc.u32 %v2948, %v2967
        %v2974 = vadd.s32 %v2970, 1
        %v2975 = vsel %vm2973, %v2974, %v2970
        %v2976 = vadd.s32 %v2971, %v2975
        %v2977 = vadd.s32 %v2976, 536870912
        %v2978 = vshrl.u32 %v2977, 30
        %v2979 = vshll.u32 %v2978, 30
        %v2980 = vsub.s32 %v2976, %v2979
        %vm2981 = vcmp.lt.s32.totalorder %v2980, 0
        %v2982 = vsub.s32 0, %v2980
        %v2983 = vsel %vm2981, %v2982, %v2980
        %v2984 = vclz %v2983
        %v2985 = vsub.s32 %v2984, 2
        %vm2986 = vcmp.gt.s32.totalorder 0, %v2985
        %v2987 = vsel %vm2986, 0, %v2985
        %v2988 = vsub.s32 32, %v2987
        %v2989 = vshll.u32 %v2980, %v2987
        %v2990 = vshrl.u32 %v2972, %v2988
        %v2991 = vor.u32 %v2989, %v2990
        %v2992 = vsub.s32 4294967266, %v2987
        %v2993 = vadd.s32 %v2992, 127
        %v2994 = vshll.u32 %v2993, 23
        %v2995 = vor.u32 4788187, %v2994
        %v2996 = vand.u32 2147483647, %v2995
        %v2998 = vcvt.s32.f32 %v2991
        %v2999 = vmul.f32 %v2998, %v2996
        %v3000 = vxor.u32 %v2999, 2147483648
        %v3001 = vsel %vm2880, %v3000, %v2999
        %v3002 = vsub.s32 4, %v2978
        %v3003 = vsel %vm2880, %v3002, %v2978
        %v3004 = vsel %vm2879, %v2877, %v3001
        %v3005 = vsel %vm2879, 0, %v3003
        %v3006 = vmul.f32 %v3004, %v3004
        %v3007 = vmul.f32 %v3006, -0.001358992
        %v3008 = vadd.f32 %v3007, 0.041655596
        %v3009 = vmul.f32 %v3006, %v3008
        %v3010 = vadd.f32 %v3009, -0.4999988
        %v3011 = vmul.f32 %v3006, %v3010
        %v3012 = vadd.f32 1.0, %v3011
        %v3013 = vmul.f32 %v3004, %v3004
        %v3014 = vmul.f32 %v3013, -0.00019511016
        %v3015 = vadd.f32 %v3014, 0.008332121
        %v3016 = vmul.f32 %v3013, %v3015
        %v3017 = vadd.f32 %v3016, -0.16666654
        %v3018 = vmul.f32 %v3013, %v3017
        %v3019 = vadd.f32 %v3018, 1.0
        %v3020 = vmul.f32 %v3019, %v3004
        %vm3021 = vweird.f32 %v2877
        %v3022 = vadd.s32 %v3005, 3
        %v3023 = vand.u32 %v3022, 3
        %vm3024 = vcmp.lt.s32.totalorder %v3023, 2
        %vm3025 = vcmp.eq.s32.totalorder %v3023, 0
        %v3026 = vxor.u32 %v3020, 2147483648
        %v3027 = vsel %vm3025, %v3012, %v3026
        %vm3028 = vcmp.eq.s32.totalorder %v3023, 2
        %v3029 = vxor.u32 %v3012, 2147483648
        %v3030 = vsel %vm3028, %v3029, %v3020
        %v3031 = vsel %vm3024, %v3027, %v3030
        %v3032 = vsel %vm3021, nan, %v3031
        %v3033 = vmul.f32 %v3032, %v3032
        %3035 = vset.pattern.permute.xlu0 0
        %3036 = vperm.xlu0 %3035, %v2870
        %v3037 = vpop.permute.xlu0 %3036
        %v3039 = vmul.f32 %v3037, %v3033
        %v3040 = vadd.f32 %v2869, %v3039
        %3041 = vst [vmem:[#allocation2] sm:$0xff] 0.0
        %3043 = vrot.lane.b32.xlu0 %v3040, 9
        %v3044 = vpop.permute.xlu0 %3043
        %vm3046 = vcmask 597064
        %3047 = vst.msk [vmem:[#allocation2] sm:$0xff] %vm3046, %v3044
        %v3048 = vld [vmem:[#allocation2] sm:$0xff]
        %3050 = vrot.lane.b32.xlu0 %v3048, 125
        %v3051 = vpop.permute.xlu0 %3050
        %3053 = vrot.lane.b32.xlu0 %v3048, 122
        %v3054 = vpop.permute.xlu0 %3053
        %3056 = vrot.lane.b32.xlu0 %v3048, 119
        %v3057 = vpop.permute.xlu0 %3056
        %3059 = vrot.lane.b32.xlu0 %v3048, 116
        %v3060 = vpop.permute.xlu0 %3059
        %3062 = vrot.lane.b32.xlu0 %v3048, 113
        %v3063 = vpop.permute.xlu0 %3062
        %3065 = vrot.lane.b32.xlu0 %v3048, 110
        %v3066 = vpop.permute.xlu0 %3065
        %v3068 = vld [vmem:[#allocation10] sm:$0xf]
        %v3069 = vpack.c.bf16 %v3051, %v3048
        %v3070 = vpack.c.bf16 %v3057, %v3054
        %v3071 = vpack.c.bf16 %v3063, %v3060
        %v3072 = vpack.c.bf16 %v3066, %v3066
        %v3073 = vld [vmem:[%s29] sm:$0xff]
        %3075 = vset.pattern.permute.xlu0 0
        %3076 = vperm.xlu0 %3075, %v3073
        %v3077 = vpop.permute.xlu0 %3076
        %v3080 = vsel %vm2649, %v3068, 0
        %v3083 = vsel %vm2653, %v3072, 0
        %3085 = vmatpush.bf16.msra.mxu0 0
        %3086 = vmatpush.bf16.msra.mxu0 0
        %3087 = vmatpush.bf16.msra.mxu0 0
        %3088 = vmatpush.bf16.msra.mxu0 0
        %3089 = vmatpush.bf16.msra.mxu0 %v3083
        %3090 = vmatpush.bf16.msra.mxu0 %v3071
        %3091 = vmatpush.bf16.msra.mxu0 %v3070
        %3092 = vmatpush.bf16.msra.mxu0 %v3069
        %3093 = vmatmul.bf16.gmra.mxu0 %v3080
        %v3094 = vpop.f32.mrf.mxu0
        %v3095 = vadd.f32 %v3077, %v3094
        %v3096 = vpop.f32.mrf.mxu0
        %3097 = vdwg.mxu0
        %v3098 = vld [vmem:[%s33] sm:$0xff]
        %v3099 = vld [vmem:[%s31] sm:$0xff]
        %3101 = vset.pattern.permute.xlu0 0
        %3102 = vperm.xlu0 %3101, %v3099
        %v3103 = vpop.permute.xlu0 %3102
        %v3105 = vmul.f32 %v3103, %v3095
        %v3106 = vand.u32 2147483647, %v3105
        %vm3107 = vcmp.le.f32.partialorder %v3106, 0.7853982
        %vm3108 = vcmp.lt.s32.totalorder %v3105, 0
        %v3109 = vand.u32 %v3105, 2139095040
        %v3110 = vshrl.u32 %v3109, 23
        %v3111 = vsub.s32 %v3110, 127
        %v3112 = vand.u32 2147483647, %v3105
        %v3113 = vand.u32 %v3112, 8388607
        %v3114 = vor.u32 %v3113, 8388608
        %v3115 = vsub.s32 0, %v3114
        %v3116 = vadd.s32 %v3111, 1
        %vm3117 = vcmp.gt.s32.totalorder %v3116, 0
        %v3118 = vsel %vm3117, %v3116, 0
        %v3119 = vshrl.u32 %v3118, 5
        %v3120 = vand.u32 %v3118, 31
        %v3121 = vsub.s32 32, %v3120
        %v3122 = vshrl.u32 683565275, %v3121
        %v3123 = vshll.u32 683565275, %v3120
        %v3124 = vshrl.u32 2475754826, %v3121
        %v3125 = vor.u32 %v3123, %v3124
        %v3126 = vshll.u32 2475754826, %v3120
        %v3127 = vshrl.u32 2131351028, %v3121
        %v3128 = vor.u32 %v3126, %v3127
        %v3129 = vshll.u32 2131351028, %v3120
        %v3130 = vshrl.u32 2102212464, %v3121
        %v3131 = vor.u32 %v3129, %v3130
        %v3132 = vshll.u32 2102212464, %v3120
        %v3133 = vshrl.u32 920167782, %v3121
        %v3134 = vor.u32 %v3132, %v3133
        %v3135 = vshll.u32 920167782, %v3120
        %v3136 = vshrl.u32 1326507024, %v3121
        %v3137 = vor.u32 %v3135, %v3136
        %vm3138 = vcmp.lt.s32.totalorder %v3119, 1
        %vm3139 = vcmp.lt.s32.totalorder %v3119, 2
        %vm3140 = vcmp.lt.s32.totalorder %v3119, 3
        %vm3141 = vcmp.lt.s32.totalorder %v3119, 4
        %v3142 = vsel %vm3138, %v3122, %v3125
        %v3143 = vsel %vm3141, %v3131, 2102212464
        %v3144 = vsel %vm3140, %v3128, %v3143
        %v3145 = vsel %vm3139, %v3142, %v3144
        %v3146 = vsel %vm3138, %v3125, %v3128
        %v3147 = vsel %vm3141, %v3134, 920167782
        %v3148 = vsel %vm3140, %v3131, %v3147
        %v3149 = vsel %vm3139, %v3146, %v3148
        %v3150 = vsel %vm3138, %v3128, %v3131
        %v3151 = vsel %vm3141, %v3137, 1326507024
        %v3152 = vsel %vm3140, %v3134, %v3151
        %v3153 = vsel %vm3139, %v3150, %v3152
        %v3154 = vshll.u32 %v3114, 8
        %v3155 = vand.u32 %v3154, 65535
        %v3156 = vshrl.u32 %v3154, 16
        %v3157 = vand.u32 %v3153, 65535
        %v3158 = vshrl.u32 %v3153, 16
        %v3159 = vmul.u32 %v3155, %v3157
        %v3160 = vmul.u32 %v3155, %v3158
        %v3161 = vmul.u32 %v3156, %v3157
        %v3162 = vmul.u32 %v3156, %v3158
        %v3163 = vshll.u32 %v3160, 16
        %v3164 = vshrl.u32 %v3160, 16
        %v3165 = vshll.u32 %v3161, 16
        %v3166 = vshrl.u32 %v3161, 16
        %vm3167 = vc.u32 %v3159, %v3163
        %v3168 = vsel %vm3167, 1, 0
        %v3169 = vadd.s32 %v3159, %v3163
        %v3170 = vadd.s32 %v3162, %v3168
        %vm3171 = vc.u32 %v3169, %v3165
        %v3172 = vsel %vm3171, 1, 0
        %v3173 = vadd.s32 %v3169, %v3165
        %v3174 = vadd.s32 %v3170, %v3172
        %v3175 = vadd.s32 %v3174, %v3164
        %v3176 = vadd.s32 %v3175, %v3166
        %v3177 = vand.u32 %v3154, 65535
        %v3178 = vshrl.u32 %v3154, 16
        %v3179 = vand.u32 %v3149, 65535
        %v3180 = vshrl.u32 %v3149, 16
        %v3181 = vmul.u32 %v3177, %v3179
        %v3182 = vmul.u32 %v3177, %v3180
        %v3183 = vmul.u32 %v3178, %v3179
        %v3184 = vmul.u32 %v3178, %v3180
        %v3185 = vshll.u32 %v3182, 16
        %v3186 = vshrl.u32 %v3182, 16
        %v3187 = vshll.u32 %v3183, 16
        %v3188 = vshrl.u32 %v3183, 16
        %vm3189 = vc.u32 %v3181, %v3185
        %v3190 = vsel %vm3189, 1, 0
        %v3191 = vadd.s32 %v3181, %v3185
        %v3192 = vadd.s32 %v3184, %v3190
        %vm3193 = vc.u32 %v3191, %v3187
        %v3194 = vsel %vm3193, 1, 0
        %v3195 = vadd.s32 %v3191, %v3187
        %v3196 = vadd.s32 %v3192, %v3194
        %v3197 = vadd.s32 %v3196, %v3186
        %v3198 = vadd.s32 %v3197, %v3188
        %v3199 = vmul.u32 %v3154, %v3145
        %v3200 = vadd.s32 %v3176, %v3195
        %vm3201 = vc.u32 %v3176, %v3195
        %v3202 = vadd.s32 %v3198, 1
        %v3203 = vsel %vm3201, %v3202, %v3198
        %v3204 = vadd.s32 %v3199, %v3203
        %v3205 = vadd.s32 %v3204, 536870912
        %v3206 = vshrl.u32 %v3205, 30
        %v3207 = vshll.u32 %v3206, 30
        %v3208 = vsub.s32 %v3204, %v3207
        %vm3209 = vcmp.lt.s32.totalorder %v3208, 0
        %v3210 = vsub.s32 0, %v3208
        %v3211 = vsel %vm3209, %v3210, %v3208
        %v3212 = vclz %v3211
        %v3213 = vsub.s32 %v3212, 2
        %vm3214 = vcmp.gt.s32.totalorder 0, %v3213
        %v3215 = vsel %vm3214, 0, %v3213
        %v3216 = vsub.s32 32, %v3215
        %v3217 = vshll.u32 %v3208, %v3215
        %v3218 = vshrl.u32 %v3200, %v3216
        %v3219 = vor.u32 %v3217, %v3218
        %v3220 = vsub.s32 4294967266, %v3215
        %v3221 = vadd.s32 %v3220, 127
        %v3222 = vshll.u32 %v3221, 23
        %v3223 = vor.u32 4788187, %v3222
        %v3224 = vand.u32 2147483647, %v3223
        %v3226 = vcvt.s32.f32 %v3219
        %v3227 = vmul.f32 %v3226, %v3224
        %v3228 = vxor.u32 %v3227, 2147483648
        %v3229 = vsel %vm3108, %v3228, %v3227
        %v3230 = vsub.s32 4, %v3206
        %v3231 = vsel %vm3108, %v3230, %v3206
        %v3232 = vsel %vm3107, %v3105, %v3229
        %v3233 = vsel %vm3107, 0, %v3231
        %v3234 = vmul.f32 %v3232, %v3232
        %v3235 = vmul.f32 %v3234, -0.001358992
        %v3236 = vadd.f32 %v3235, 0.041655596
        %v3237 = vmul.f32 %v3234, %v3236
        %v3238 = vadd.f32 %v3237, -0.4999988
        %v3239 = vmul.f32 %v3234, %v3238
        %v3240 = vadd.f32 1.0, %v3239
        %v3241 = vmul.f32 %v3232, %v3232
        %v3242 = vmul.f32 %v3241, -0.00019511016
        %v3243 = vadd.f32 %v3242, 0.008332121
        %v3244 = vmul.f32 %v3241, %v3243
        %v3245 = vadd.f32 %v3244, -0.16666654
        %v3246 = vmul.f32 %v3241, %v3245
        %v3247 = vadd.f32 %v3246, 1.0
        %v3248 = vmul.f32 %v3247, %v3232
        %vm3249 = vweird.f32 %v3105
        %v3250 = vadd.s32 %v3233, 3
        %v3251 = vand.u32 %v3250, 3
        %vm3252 = vcmp.lt.s32.totalorder %v3251, 2
        %vm3253 = vcmp.eq.s32.totalorder %v3251, 0
        %v3254 = vxor.u32 %v3248, 2147483648
        %v3255 = vsel %vm3253, %v3240, %v3254
        %vm3256 = vcmp.eq.s32.totalorder %v3251, 2
        %v3257 = vxor.u32 %v3240, 2147483648
        %v3258 = vsel %vm3256, %v3257, %v3248
        %v3259 = vsel %vm3252, %v3255, %v3258
        %v3260 = vsel %vm3249, nan, %v3259
        %v3261 = vmul.f32 %v3260, %v3260
        %3263 = vset.pattern.permute.xlu0 0
        %3264 = vperm.xlu0 %3263, %v3098
        %v3265 = vpop.permute.xlu0 %3264
        %v3267 = vmul.f32 %v3265, %v3261
        %v3268 = vadd.f32 %v3095, %v3267
        %v3269 = vld [vmem:[#allocation11] sm:$0xf]
        %v3270 = vpack.c.bf16 %v3268, %v3268
        %v3271 = vld [vmem:[%s37] sm:$0xff]
        %3273 = vset.pattern.permute.xlu0 0
        %3274 = vperm.xlu0 %3273, %v3271
        %v3275 = vpop.permute.xlu0 %3274
        %v3278 = vsel %vm2849, %v3269, 0
        %v3281 = vsel %vm2653, %v3270, 0
        %3283 = vmatpush.bf16.msra.mxu0 0
        %3284 = vmatpush.bf16.msra.mxu0 0
        %3285 = vmatpush.bf16.msra.mxu0 0
        %3286 = vmatpush.bf16.msra.mxu0 0
        %3287 = vmatpush.bf16.msra.mxu0 0
        %3288 = vmatpush.bf16.msra.mxu0 0
        %3289 = vmatpush.bf16.msra.mxu0 0
        %3290 = vmatpush.bf16.msra.mxu0 %v3281
        %3291 = vmatmul.bf16.gmra.mxu0 %v3278
        %v3292 = vpop.f32.mrf.mxu0
        %v3293 = vadd.f32 %v3275, %v3292
        %v3294 = vpop.f32.mrf.mxu0
        %3295 = vdwg.mxu0
        %v3296 = vadd.f32 %v3293, %v2869
        %v3297 = vld [vmem:[%s41] sm:$0xff]
        %v3298 = vld [vmem:[%s39] sm:$0xff]
        %3300 = vset.pattern.permute.xlu0 0
        %3301 = vperm.xlu0 %3300, %v3298
        %v3302 = vpop.permute.xlu0 %3301
        %v3304 = vmul.f32 %v3302, %v3296
        %v3305 = vand.u32 2147483647, %v3304
        %vm3306 = vcmp.le.f32.partialorder %v3305, 0.7853982
        %vm3307 = vcmp.lt.s32.totalorder %v3304, 0
        %v3308 = vand.u32 %v3304, 2139095040
        %v3309 = vshrl.u32 %v3308, 23
        %v3310 = vsub.s32 %v3309, 127
        %v3311 = vand.u32 2147483647, %v3304
        %v3312 = vand.u32 %v3311, 8388607
        %v3313 = vor.u32 %v3312, 8388608
        %v3314 = vsub.s32 0, %v3313
        %v3315 = vadd.s32 %v3310, 1
        %vm3316 = vcmp.gt.s32.totalorder %v3315, 0
        %v3317 = vsel %vm3316, %v3315, 0
        %v3318 = vshrl.u32 %v3317, 5
        %v3319 = vand.u32 %v3317, 31
        %v3320 = vsub.s32 32, %v3319
        %v3321 = vshrl.u32 683565275, %v3320
        %v3322 = vshll.u32 683565275, %v3319
        %v3323 = vshrl.u32 2475754826, %v3320
        %v3324 = vor.u32 %v3322, %v3323
        %v3325 = vshll.u32 2475754826, %v3319
        %v3326 = vshrl.u32 2131351028, %v3320
        %v3327 = vor.u32 %v3325, %v3326
        %v3328 = vshll.u32 2131351028, %v3319
        %v3329 = vshrl.u32 2102212464, %v3320
        %v3330 = vor.u32 %v3328, %v3329
        %v3331 = vshll.u32 2102212464, %v3319
        %v3332 = vshrl.u32 920167782, %v3320
        %v3333 = vor.u32 %v3331, %v3332
        %v3334 = vshll.u32 920167782, %v3319
        %v3335 = vshrl.u32 1326507024, %v3320
        %v3336 = vor.u32 %v3334, %v3335
        %vm3337 = vcmp.lt.s32.totalorder %v3318, 1
        %vm3338 = vcmp.lt.s32.totalorder %v3318, 2
        %vm3339 = vcmp.lt.s32.totalorder %v3318, 3
        %vm3340 = vcmp.lt.s32.totalorder %v3318, 4
        %v3341 = vsel %vm3337, %v3321, %v3324
        %v3342 = vsel %vm3340, %v3330, 2102212464
        %v3343 = vsel %vm3339, %v3327, %v3342
        %v3344 = vsel %vm3338, %v3341, %v3343
        %v3345 = vsel %vm3337, %v3324, %v3327
        %v3346 = vsel %vm3340, %v3333, 920167782
        %v3347 = vsel %vm3339, %v3330, %v3346
        %v3348 = vsel %vm3338, %v3345, %v3347
        %v3349 = vsel %vm3337, %v3327, %v3330
        %v3350 = vsel %vm3340, %v3336, 1326507024
        %v3351 = vsel %vm3339, %v3333, %v3350
        %v3352 = vsel %vm3338, %v3349, %v3351
        %v3353 = vshll.u32 %v3313, 8
        %v3354 = vand.u32 %v3353, 65535
        %v3355 = vshrl.u32 %v3353, 16
        %v3356 = vand.u32 %v3352, 65535
        %v3357 = vshrl.u32 %v3352, 16
        %v3358 = vmul.u32 %v3354, %v3356
        %v3359 = vmul.u32 %v3354, %v3357
        %v3360 = vmul.u32 %v3355, %v3356
        %v3361 = vmul.u32 %v3355, %v3357
        %v3362 = vshll.u32 %v3359, 16
        %v3363 = vshrl.u32 %v3359, 16
        %v3364 = vshll.u32 %v3360, 16
        %v3365 = vshrl.u32 %v3360, 16
        %vm3366 = vc.u32 %v3358, %v3362
        %v3367 = vsel %vm3366, 1, 0
        %v3368 = vadd.s32 %v3358, %v3362
        %v3369 = vadd.s32 %v3361, %v3367
        %vm3370 = vc.u32 %v3368, %v3364
        %v3371 = vsel %vm3370, 1, 0
        %v3372 = vadd.s32 %v3368, %v3364
        %v3373 = vadd.s32 %v3369, %v3371
        %v3374 = vadd.s32 %v3373, %v3363
        %v3375 = vadd.s32 %v3374, %v3365
        %v3376 = vand.u32 %v3353, 65535
        %v3377 = vshrl.u32 %v3353, 16
        %v3378 = vand.u32 %v3348, 65535
        %v3379 = vshrl.u32 %v3348, 16
        %v3380 = vmul.u32 %v3376, %v3378
        %v3381 = vmul.u32 %v3376, %v3379
        %v3382 = vmul.u32 %v3377, %v3378
        %v3383 = vmul.u32 %v3377, %v3379
        %v3384 = vshll.u32 %v3381, 16
        %v3385 = vshrl.u32 %v3381, 16
        %v3386 = vshll.u32 %v3382, 16
        %v3387 = vshrl.u32 %v3382, 16
        %vm3388 = vc.u32 %v3380, %v3384
        %v3389 = vsel %vm3388, 1, 0
        %v3390 = vadd.s32 %v3380, %v3384
        %v3391 = vadd.s32 %v3383, %v3389
        %vm3392 = vc.u32 %v3390, %v3386
        %v3393 = vsel %vm3392, 1, 0
        %v3394 = vadd.s32 %v3390, %v3386
        %v3395 = vadd.s32 %v3391, %v3393
        %v3396 = vadd.s32 %v3395, %v3385
        %v3397 = vadd.s32 %v3396, %v3387
        %v3398 = vmul.u32 %v3353, %v3344
        %v3399 = vadd.s32 %v3375, %v3394
        %vm3400 = vc.u32 %v3375, %v3394
        %v3401 = vadd.s32 %v3397, 1
        %v3402 = vsel %vm3400, %v3401, %v3397
        %v3403 = vadd.s32 %v3398, %v3402
        %v3404 = vadd.s32 %v3403, 536870912
        %v3405 = vshrl.u32 %v3404, 30
        %v3406 = vshll.u32 %v3405, 30
        %v3407 = vsub.s32 %v3403, %v3406
        %vm3408 = vcmp.lt.s32.totalorder %v3407, 0
        %v3409 = vsub.s32 0, %v3407
        %v3410 = vsel %vm3408, %v3409, %v3407
        %v3411 = vclz %v3410
        %v3412 = vsub.s32 %v3411, 2
        %vm3413 = vcmp.gt.s32.totalorder 0, %v3412
        %v3414 = vsel %vm3413, 0, %v3412
        %v3415 = vsub.s32 32, %v3414
        %v3416 = vshll.u32 %v3407, %v3414
        %v3417 = vshrl.u32 %v3399, %v3415
        %v3418 = vor.u32 %v3416, %v3417
        %v3419 = vsub.s32 4294967266, %v3414
        %v3420 = vadd.s32 %v3419, 127
        %v3421 = vshll.u32 %v3420, 23
        %v3422 = vor.u32 4788187, %v3421
        %v3423 = vand.u32 2147483647, %v3422
        %v3425 = vcvt.s32.f32 %v3418
        %v3426 = vmul.f32 %v3425, %v3423
        %v3427 = vxor.u32 %v3426, 2147483648
        %v3428 = vsel %vm3307, %v3427, %v3426
        %v3429 = vsub.s32 4, %v3405
        %v3430 = vsel %vm3307, %v3429, %v3405
        %v3431 = vsel %vm3306, %v3304, %v3428
        %v3432 = vsel %vm3306, 0, %v3430
        %v3433 = vmul.f32 %v3431, %v3431
        %v3434 = vmul.f32 %v3433, -0.001358992
        %v3435 = vadd.f32 %v3434, 0.041655596
        %v3436 = vmul.f32 %v3433, %v3435
        %v3437 = vadd.f32 %v3436, -0.4999988
        %v3438 = vmul.f32 %v3433, %v3437
        %v3439 = vadd.f32 1.0, %v3438
        %v3440 = vmul.f32 %v3431, %v3431
        %v3441 = vmul.f32 %v3440, -0.00019511016
        %v3442 = vadd.f32 %v3441, 0.008332121
        %v3443 = vmul.f32 %v3440, %v3442
        %v3444 = vadd.f32 %v3443, -0.16666654
        %v3445 = vmul.f32 %v3440, %v3444
        %v3446 = vadd.f32 %v3445, 1.0
        %v3447 = vmul.f32 %v3446, %v3431
        %vm3448 = vweird.f32 %v3304
        %v3449 = vadd.s32 %v3432, 3
        %v3450 = vand.u32 %v3449, 3
        %vm3451 = vcmp.lt.s32.totalorder %v3450, 2
        %vm3452 = vcmp.eq.s32.totalorder %v3450, 0
        %v3453 = vxor.u32 %v3447, 2147483648
        %v3454 = vsel %vm3452, %v3439, %v3453
        %vm3455 = vcmp.eq.s32.totalorder %v3450, 2
        %v3456 = vxor.u32 %v3439, 2147483648
        %v3457 = vsel %vm3455, %v3456, %v3447
        %v3458 = vsel %vm3451, %v3454, %v3457
        %v3459 = vsel %vm3448, nan, %v3458
        %v3460 = vmul.f32 %v3459, %v3459
        %3462 = vset.pattern.permute.xlu0 0
        %3463 = vperm.xlu0 %3462, %v3297
        %v3464 = vpop.permute.xlu0 %3463
        %v3466 = vmul.f32 %v3464, %v3460
        %v3467 = vadd.f32 %v3296, %v3466
        %3468 = vst [vmem:[#allocation2] sm:$0xff] 0.0
        %3470 = vrot.lane.b32.xlu0 %v3467, 27
        %v3471 = vpop.permute.xlu0 %3470
        %vm3473 = vcmask 744664
        %3474 = vst.msk [vmem:[#allocation2] sm:$0xff] %vm3473, %v3471
        %v3475 = vld [vmem:[#allocation2] sm:$0xff]
        %3477 = vrot.lane.b32.xlu0 %v3475, 119
        %v3478 = vpop.permute.xlu0 %3477
        %3480 = vrot.lane.b32.xlu0 %v3475, 110
        %v3481 = vpop.permute.xlu0 %3480
        %3483 = vrot.lane.b32.xlu0 %v3475, 101
        %v3484 = vpop.permute.xlu0 %3483
        %3486 = vrot.lane.b32.xlu0 %v3475, 92
        %v3487 = vpop.permute.xlu0 %3486
        %3489 = vrot.lane.b32.xlu0 %v3475, 83
        %v3490 = vpop.permute.xlu0 %3489
        %3492 = vrot.lane.b32.xlu0 %v3475, 74
        %v3493 = vpop.permute.xlu0 %3492
        %v3495 = vld [vmem:[#allocation13] sm:$0xf]
        %v3496 = vpack.c.bf16 %v3478, %v3475
        %v3497 = vpack.c.bf16 %v3484, %v3481
        %v3498 = vpack.c.bf16 %v3490, %v3487
        %v3499 = vpack.c.bf16 %v3493, %v3493
        %v3500 = vld [vmem:[%s45] sm:$0xff]
        %3502 = vset.pattern.permute.xlu0 0
        %3503 = vperm.xlu0 %3502, %v3500
        %v3504 = vpop.permute.xlu0 %3503
        %v3507 = vsel %vm2649, %v3495, 0
        %v3510 = vsel %vm2653, %v3499, 0
        %3512 = vmatpush.bf16.msra.mxu0 0
        %3513 = vmatpush.bf16.msra.mxu0 0
        %3514 = vmatpush.bf16.msra.mxu0 0
        %3515 = vmatpush.bf16.msra.mxu0 0
        %3516 = vmatpush.bf16.msra.mxu0 %v3510
        %3517 = vmatpush.bf16.msra.mxu0 %v3498
        %3518 = vmatpush.bf16.msra.mxu0 %v3497
        %3519 = vmatpush.bf16.msra.mxu0 %v3496
        %3520 = vmatmul.bf16.gmra.mxu0 %v3507
        %v3521 = vpop.f32.mrf.mxu0
        %v3522 = vadd.f32 %v3504, %v3521
        %v3523 = vpop.f32.mrf.mxu0
        %3524 = vdwg.mxu0
        %v3525 = vld [vmem:[%s49] sm:$0xff]
        %v3526 = vld [vmem:[%s47] sm:$0xff]
        %3528 = vset.pattern.permute.xlu0 0
        %3529 = vperm.xlu0 %3528, %v3526
        %v3530 = vpop.permute.xlu0 %3529
        %v3532 = vmul.f32 %v3530, %v3522
        %v3533 = vand.u32 2147483647, %v3532
        %vm3534 = vcmp.le.f32.partialorder %v3533, 0.7853982
        %vm3535 = vcmp.lt.s32.totalorder %v3532, 0
        %v3536 = vand.u32 %v3532, 2139095040
        %v3537 = vshrl.u32 %v3536, 23
        %v3538 = vsub.s32 %v3537, 127
        %v3539 = vand.u32 2147483647, %v3532
        %v3540 = vand.u32 %v3539, 8388607
        %v3541 = vor.u32 %v3540, 8388608
        %v3542 = vsub.s32 0, %v3541
        %v3543 = vadd.s32 %v3538, 1
        %vm3544 = vcmp.gt.s32.totalorder %v3543, 0
        %v3545 = vsel %vm3544, %v3543, 0
        %v3546 = vshrl.u32 %v3545, 5
        %v3547 = vand.u32 %v3545, 31
        %v3548 = vsub.s32 32, %v3547
        %v3549 = vshrl.u32 683565275, %v3548
        %v3550 = vshll.u32 683565275, %v3547
        %v3551 = vshrl.u32 2475754826, %v3548
        %v3552 = vor.u32 %v3550, %v3551
        %v3553 = vshll.u32 2475754826, %v3547
        %v3554 = vshrl.u32 2131351028, %v3548
        %v3555 = vor.u32 %v3553, %v3554
        %v3556 = vshll.u32 2131351028, %v3547
        %v3557 = vshrl.u32 2102212464, %v3548
        %v3558 = vor.u32 %v3556, %v3557
        %v3559 = vshll.u32 2102212464, %v3547
        %v3560 = vshrl.u32 920167782, %v3548
        %v3561 = vor.u32 %v3559, %v3560
        %v3562 = vshll.u32 920167782, %v3547
        %v3563 = vshrl.u32 1326507024, %v3548
        %v3564 = vor.u32 %v3562, %v3563
        %vm3565 = vcmp.lt.s32.totalorder %v3546, 1
        %vm3566 = vcmp.lt.s32.totalorder %v3546, 2
        %vm3567 = vcmp.lt.s32.totalorder %v3546, 3
        %vm3568 = vcmp.lt.s32.totalorder %v3546, 4
        %v3569 = vsel %vm3565, %v3549, %v3552
        %v3570 = vsel %vm3568, %v3558, 2102212464
        %v3571 = vsel %vm3567, %v3555, %v3570
        %v3572 = vsel %vm3566, %v3569, %v3571
        %v3573 = vsel %vm3565, %v3552, %v3555
        %v3574 = vsel %vm3568, %v3561, 920167782
        %v3575 = vsel %vm3567, %v3558, %v3574
        %v3576 = vsel %vm3566, %v3573, %v3575
        %v3577 = vsel %vm3565, %v3555, %v3558
        %v3578 = vsel %vm3568, %v3564, 1326507024
        %v3579 = vsel %vm3567, %v3561, %v3578
        %v3580 = vsel %vm3566, %v3577, %v3579
        %v3581 = vshll.u32 %v3541, 8
        %v3582 = vand.u32 %v3581, 65535
        %v3583 = vshrl.u32 %v3581, 16
        %v3584 = vand.u32 %v3580, 65535
        %v3585 = vshrl.u32 %v3580, 16
        %v3586 = vmul.u32 %v3582, %v3584
        %v3587 = vmul.u32 %v3582, %v3585
        %v3588 = vmul.u32 %v3583, %v3584
        %v3589 = vmul.u32 %v3583, %v3585
        %v3590 = vshll.u32 %v3587, 16
        %v3591 = vshrl.u32 %v3587, 16
        %v3592 = vshll.u32 %v3588, 16
        %v3593 = vshrl.u32 %v3588, 16
        %vm3594 = vc.u32 %v3586, %v3590
        %v3595 = vsel %vm3594, 1, 0
        %v3596 = vadd.s32 %v3586, %v3590
        %v3597 = vadd.s32 %v3589, %v3595
        %vm3598 = vc.u32 %v3596, %v3592
        %v3599 = vsel %vm3598, 1, 0
        %v3600 = vadd.s32 %v3596, %v3592
        %v3601 = vadd.s32 %v3597, %v3599
        %v3602 = vadd.s32 %v3601, %v3591
        %v3603 = vadd.s32 %v3602, %v3593
        %v3604 = vand.u32 %v3581, 65535
        %v3605 = vshrl.u32 %v3581, 16
        %v3606 = vand.u32 %v3576, 65535
        %v3607 = vshrl.u32 %v3576, 16
        %v3608 = vmul.u32 %v3604, %v3606
        %v3609 = vmul.u32 %v3604, %v3607
        %v3610 = vmul.u32 %v3605, %v3606
        %v3611 = vmul.u32 %v3605, %v3607
        %v3612 = vshll.u32 %v3609, 16
        %v3613 = vshrl.u32 %v3609, 16
        %v3614 = vshll.u32 %v3610, 16
        %v3615 = vshrl.u32 %v3610, 16
        %vm3616 = vc.u32 %v3608, %v3612
        %v3617 = vsel %vm3616, 1, 0
        %v3618 = vadd.s32 %v3608, %v3612
        %v3619 = vadd.s32 %v3611, %v3617
        %vm3620 = vc.u32 %v3618, %v3614
        %v3621 = vsel %vm3620, 1, 0
        %v3622 = vadd.s32 %v3618, %v3614
        %v3623 = vadd.s32 %v3619, %v3621
        %v3624 = vadd.s32 %v3623, %v3613
        %v3625 = vadd.s32 %v3624, %v3615
        %v3626 = vmul.u32 %v3581, %v3572
        %v3627 = vadd.s32 %v3603, %v3622
        %vm3628 = vc.u32 %v3603, %v3622
        %v3629 = vadd.s32 %v3625, 1
        %v3630 = vsel %vm3628, %v3629, %v3625
        %v3631 = vadd.s32 %v3626, %v3630
        %v3632 = vadd.s32 %v3631, 536870912
        %v3633 = vshrl.u32 %v3632, 30
        %v3634 = vshll.u32 %v3633, 30
        %v3635 = vsub.s32 %v3631, %v3634
        %vm3636 = vcmp.lt.s32.totalorder %v3635, 0
        %v3637 = vsub.s32 0, %v3635
        %v3638 = vsel %vm3636, %v3637, %v3635
        %v3639 = vclz %v3638
        %v3640 = vsub.s32 %v3639, 2
        %vm3641 = vcmp.gt.s32.totalorder 0, %v3640
        %v3642 = vsel %vm3641, 0, %v3640
        %v3643 = vsub.s32 32, %v3642
        %v3644 = vshll.u32 %v3635, %v3642
        %v3645 = vshrl.u32 %v3627, %v3643
        %v3646 = vor.u32 %v3644, %v3645
        %v3647 = vsub.s32 4294967266, %v3642
        %v3648 = vadd.s32 %v3647, 127
        %v3649 = vshll.u32 %v3648, 23
        %v3650 = vor.u32 4788187, %v3649
        %v3651 = vand.u32 2147483647, %v3650
        %v3653 = vcvt.s32.f32 %v3646
        %v3654 = vmul.f32 %v3653, %v3651
        %v3655 = vxor.u32 %v3654, 2147483648
        %v3656 = vsel %vm3535, %v3655, %v3654
        %v3657 = vsub.s32 4, %v3633
        %v3658 = vsel %vm3535, %v3657, %v3633
        %v3659 = vsel %vm3534, %v3532, %v3656
        %v3660 = vsel %vm3534, 0, %v3658
        %v3661 = vmul.f32 %v3659, %v3659
        %v3662 = vmul.f32 %v3661, -0.001358992
        %v3663 = vadd.f32 %v3662, 0.041655596
        %v3664 = vmul.f32 %v3661, %v3663
        %v3665 = vadd.f32 %v3664, -0.4999988
        %v3666 = vmul.f32 %v3661, %v3665
        %v3667 = vadd.f32 1.0, %v3666
        %v3668 = vmul.f32 %v3659, %v3659
        %v3669 = vmul.f32 %v3668, -0.00019511016
        %v3670 = vadd.f32 %v3669, 0.008332121
        %v3671 = vmul.f32 %v3668, %v3670
        %v3672 = vadd.f32 %v3671, -0.16666654
        %v3673 = vmul.f32 %v3668, %v3672
        %v3674 = vadd.f32 %v3673, 1.0
        %v3675 = vmul.f32 %v3674, %v3659
        %vm3676 = vweird.f32 %v3532
        %v3677 = vadd.s32 %v3660, 3
        %v3678 = vand.u32 %v3677, 3
        %vm3679 = vcmp.lt.s32.totalorder %v3678, 2
        %vm3680 = vcmp.eq.s32.totalorder %v3678, 0
        %v3681 = vxor.u32 %v3675, 2147483648
        %v3682 = vsel %vm3680, %v3667, %v3681
        %vm3683 = vcmp.eq.s32.totalorder %v3678, 2
        %v3684 = vxor.u32 %v3667, 2147483648
        %v3685 = vsel %vm3683, %v3684, %v3675
        %v3686 = vsel %vm3679, %v3682, %v3685
        %v3687 = vsel %vm3676, nan, %v3686
        %v3688 = vmul.f32 %v3687, %v3687
        %3690 = vset.pattern.permute.xlu0 0
        %3691 = vperm.xlu0 %3690, %v3525
        %v3692 = vpop.permute.xlu0 %3691
        %v3694 = vmul.f32 %v3692, %v3688
        %v3695 = vadd.f32 %v3522, %v3694
        %v3696 = vld [vmem:[%s51] sm:$0xf]
        %v3697 = vpack.c.bf16 %v3695, %v3695
        %v3698 = vld [vmem:[%s53] sm:$0xff]
        %3700 = vset.pattern.permute.xlu0 0
        %3701 = vperm.xlu0 %3700, %v3698
        %v3702 = vpop.permute.xlu0 %3701
        %v3705 = vsel %vm2849, %v3696, 0
        %v3708 = vsel %vm2653, %v3697, 0
        %3710 = vmatpush.bf16.msra.mxu0 0
        %3711 = vmatpush.bf16.msra.mxu0 0
        %3712 = vmatpush.bf16.msra.mxu0 0
        %3713 = vmatpush.bf16.msra.mxu0 0
        %3714 = vmatpush.bf16.msra.mxu0 0
        %3715 = vmatpush.bf16.msra.mxu0 0
        %3716 = vmatpush.bf16.msra.mxu0 0
        %3717 = vmatpush.bf16.msra.mxu0 %v3708
        %3718 = vmatmul.bf16.gmra.mxu0 %v3705
        %v3719 = vpop.f32.mrf.mxu0
        %v3720 = vadd.f32 %v3702, %v3719
        %v3721 = vpop.f32.mrf.mxu0
        %3722 = vdwg.mxu0
        %v3723 = vadd.f32 %v3720, %v3296
        %v3724 = vld [vmem:[%s57] sm:$0xff]
        %v3725 = vld [vmem:[%s55] sm:$0xff]
        %3727 = vset.pattern.permute.xlu0 0
        %3728 = vperm.xlu0 %3727, %v3725
        %v3729 = vpop.permute.xlu0 %3728
        %v3731 = vmul.f32 %v3729, %v3723
        %v3732 = vand.u32 2147483647, %v3731
        %vm3733 = vcmp.le.f32.partialorder %v3732, 0.7853982
        %vm3734 = vcmp.lt.s32.totalorder %v3731, 0
        %v3735 = vand.u32 %v3731, 2139095040
        %v3736 = vshrl.u32 %v3735, 23
        %v3737 = vsub.s32 %v3736, 127
        %v3738 = vand.u32 2147483647, %v3731
        %v3739 = vand.u32 %v3738, 8388607
        %v3740 = vor.u32 %v3739, 8388608
        %v3741 = vsub.s32 0, %v3740
        %v3742 = vadd.s32 %v3737, 1
        %vm3743 = vcmp.gt.s32.totalorder %v3742, 0
        %v3744 = vsel %vm3743, %v3742, 0
        %v3745 = vshrl.u32 %v3744, 5
        %v3746 = vand.u32 %v3744, 31
        %v3747 = vsub.s32 32, %v3746
        %v3748 = vshrl.u32 683565275, %v3747
        %v3749 = vshll.u32 683565275, %v3746
        %v3750 = vshrl.u32 2475754826, %v3747
        %v3751 = vor.u32 %v3749, %v3750
        %v3752 = vshll.u32 2475754826, %v3746
        %v3753 = vshrl.u32 2131351028, %v3747
        %v3754 = vor.u32 %v3752, %v3753
        %v3755 = vshll.u32 2131351028, %v3746
        %v3756 = vshrl.u32 2102212464, %v3747
        %v3757 = vor.u32 %v3755, %v3756
        %v3758 = vshll.u32 2102212464, %v3746
        %v3759 = vshrl.u32 920167782, %v3747
        %v3760 = vor.u32 %v3758, %v3759
        %v3761 = vshll.u32 920167782, %v3746
        %v3762 = vshrl.u32 1326507024, %v3747
        %v3763 = vor.u32 %v3761, %v3762
        %vm3764 = vcmp.lt.s32.totalorder %v3745, 1
        %vm3765 = vcmp.lt.s32.totalorder %v3745, 2
        %vm3766 = vcmp.lt.s32.totalorder %v3745, 3
        %vm3767 = vcmp.lt.s32.totalorder %v3745, 4
        %v3768 = vsel %vm3764, %v3748, %v3751
        %v3769 = vsel %vm3767, %v3757, 2102212464
        %v3770 = vsel %vm3766, %v3754, %v3769
        %v3771 = vsel %vm3765, %v3768, %v3770
        %v3772 = vsel %vm3764, %v3751, %v3754
        %v3773 = vsel %vm3767, %v3760, 920167782
        %v3774 = vsel %vm3766, %v3757, %v3773
        %v3775 = vsel %vm3765, %v3772, %v3774
        %v3776 = vsel %vm3764, %v3754, %v3757
        %v3777 = vsel %vm3767, %v3763, 1326507024
        %v3778 = vsel %vm3766, %v3760, %v3777
        %v3779 = vsel %vm3765, %v3776, %v3778
        %v3780 = vshll.u32 %v3740, 8
        %v3781 = vand.u32 %v3780, 65535
        %v3782 = vshrl.u32 %v3780, 16
        %v3783 = vand.u32 %v3779, 65535
        %v3784 = vshrl.u32 %v3779, 16
        %v3785 = vmul.u32 %v3781, %v3783
        %v3786 = vmul.u32 %v3781, %v3784
        %v3787 = vmul.u32 %v3782, %v3783
        %v3788 = vmul.u32 %v3782, %v3784
        %v3789 = vshll.u32 %v3786, 16
        %v3790 = vshrl.u32 %v3786, 16
        %v3791 = vshll.u32 %v3787, 16
        %v3792 = vshrl.u32 %v3787, 16
        %vm3793 = vc.u32 %v3785, %v3789
        %v3794 = vsel %vm3793, 1, 0
        %v3795 = vadd.s32 %v3785, %v3789
        %v3796 = vadd.s32 %v3788, %v3794
        %vm3797 = vc.u32 %v3795, %v3791
        %v3798 = vsel %vm3797, 1, 0
        %v3799 = vadd.s32 %v3795, %v3791
        %v3800 = vadd.s32 %v3796, %v3798
        %v3801 = vadd.s32 %v3800, %v3790
        %v3802 = vadd.s32 %v3801, %v3792
        %v3803 = vand.u32 %v3780, 65535
        %v3804 = vshrl.u32 %v3780, 16
        %v3805 = vand.u32 %v3775, 65535
        %v3806 = vshrl.u32 %v3775, 16
        %v3807 = vmul.u32 %v3803, %v3805
        %v3808 = vmul.u32 %v3803, %v3806
        %v3809 = vmul.u32 %v3804, %v3805
        %v3810 = vmul.u32 %v3804, %v3806
        %v3811 = vshll.u32 %v3808, 16
        %v3812 = vshrl.u32 %v3808, 16
        %v3813 = vshll.u32 %v3809, 16
        %v3814 = vshrl.u32 %v3809, 16
        %vm3815 = vc.u32 %v3807, %v3811
        %v3816 = vsel %vm3815, 1, 0
        %v3817 = vadd.s32 %v3807, %v3811
        %v3818 = vadd.s32 %v3810, %v3816
        %vm3819 = vc.u32 %v3817, %v3813
        %v3820 = vsel %vm3819, 1, 0
        %v3821 = vadd.s32 %v3817, %v3813
        %v3822 = vadd.s32 %v3818, %v3820
        %v3823 = vadd.s32 %v3822, %v3812
        %v3824 = vadd.s32 %v3823, %v3814
        %v3825 = vmul.u32 %v3780, %v3771
        %v3826 = vadd.s32 %v3802, %v3821
        %vm3827 = vc.u32 %v3802, %v3821
        %v3828 = vadd.s32 %v3824, 1
        %v3829 = vsel %vm3827, %v3828, %v3824
        %v3830 = vadd.s32 %v3825, %v3829
        %v3831 = vadd.s32 %v3830, 536870912
        %v3832 = vshrl.u32 %v3831, 30
        %v3833 = vshll.u32 %v3832, 30
        %v3834 = vsub.s32 %v3830, %v3833
        %vm3835 = vcmp.lt.s32.totalorder %v3834, 0
        %v3836 = vsub.s32 0, %v3834
        %v3837 = vsel %vm3835, %v3836, %v3834
        %v3838 = vclz %v3837
        %v3839 = vsub.s32 %v3838, 2
        %vm3840 = vcmp.gt.s32.totalorder 0, %v3839
        %v3841 = vsel %vm3840, 0, %v3839
        %v3842 = vsub.s32 32, %v3841
        %v3843 = vshll.u32 %v3834, %v3841
        %v3844 = vshrl.u32 %v3826, %v3842
        %v3845 = vor.u32 %v3843, %v3844
        %v3846 = vsub.s32 4294967266, %v3841
        %v3847 = vadd.s32 %v3846, 127
        %v3848 = vshll.u32 %v3847, 23
        %v3849 = vor.u32 4788187, %v3848
        %v3850 = vand.u32 2147483647, %v3849
        %v3852 = vcvt.s32.f32 %v3845
        %v3853 = vmul.f32 %v3852, %v3850
        %v3854 = vxor.u32 %v3853, 2147483648
        %v3855 = vsel %vm3734, %v3854, %v3853
        %v3856 = vsub.s32 4, %v3832
        %v3857 = vsel %vm3734, %v3856, %v3832
        %v3858 = vsel %vm3733, %v3731, %v3855
        %v3859 = vsel %vm3733, 0, %v3857
        %v3860 = vmul.f32 %v3858, %v3858
        %v3861 = vmul.f32 %v3860, -0.001358992
        %v3862 = vadd.f32 %v3861, 0.041655596
        %v3863 = vmul.f32 %v3860, %v3862
        %v3864 = vadd.f32 %v3863, -0.4999988
        %v3865 = vmul.f32 %v3860, %v3864
        %v3866 = vadd.f32 1.0, %v3865
        %v3867 = vmul.f32 %v3858, %v3858
        %v3868 = vmul.f32 %v3867, -0.00019511016
        %v3869 = vadd.f32 %v3868, 0.008332121
        %v3870 = vmul.f32 %v3867, %v3869
        %v3871 = vadd.f32 %v3870, -0.16666654
        %v3872 = vmul.f32 %v3867, %v3871
        %v3873 = vadd.f32 %v3872, 1.0
        %v3874 = vmul.f32 %v3873, %v3858
        %vm3875 = vweird.f32 %v3731
        %v3876 = vadd.s32 %v3859, 3
        %v3877 = vand.u32 %v3876, 3
        %vm3878 = vcmp.lt.s32.totalorder %v3877, 2
        %vm3879 = vcmp.eq.s32.totalorder %v3877, 0
        %v3880 = vxor.u32 %v3874, 2147483648
        %v3881 = vsel %vm3879, %v3866, %v3880
        %vm3882 = vcmp.eq.s32.totalorder %v3877, 2
        %v3883 = vxor.u32 %v3866, 2147483648
        %v3884 = vsel %vm3882, %v3883, %v3874
        %v3885 = vsel %vm3878, %v3881, %v3884
        %v3886 = vsel %vm3875, nan, %v3885
        %v3887 = vmul.f32 %v3886, %v3886
        %3889 = vset.pattern.permute.xlu0 0
        %3890 = vperm.xlu0 %3889, %v3724
        %v3891 = vpop.permute.xlu0 %3890
        %v3893 = vmul.f32 %v3891, %v3887
        %v3894 = vadd.f32 %v3723, %v3893
        %3895 = vst [vmem:[#allocation2] sm:$0xff] 0.0
        %3897 = vrot.lane.b32.xlu0 %v3894, 1
        %v3898 = vpop.permute.xlu0 %3897
        %vm3900 = vcmask 531464
        %3901 = vst.msk [vmem:[#allocation2] sm:$0xff] %vm3900, %v3898
        %v3902 = vld [vmem:[#allocation2] sm:$0xff]
        %3904 = vrot.lane.b32.xlu0 %v3902, 127
        %v3905 = vpop.permute.xlu0 %3904
        %3907 = vrot.lane.b32.xlu0 %v3902, 126
        %v3908 = vpop.permute.xlu0 %3907
        %3910 = vrot.lane.b32.xlu0 %v3902, 125
        %v3911 = vpop.permute.xlu0 %3910
        %v3913 = vld [vmem:[#allocation14] sm:$0xf]
        %v3914 = vld [vmem:[#allocation14 + $0x4] sm:$0xf]
        %v3915 = vpack.c.bf16 %v3905, %v3902
        %v3916 = vpack.c.bf16 %v3911, %v3908
        %v3917 = vld [vmem:[%s61] sm:$0xff]
        %v3918 = vld [vmem:[%s61 + $0x8] sm:$0xff]
        %3920 = vset.pattern.permute.xlu0 0
        %3921 = vperm.xlu0 %3920, %v3917
        %v3922 = vpop.permute.xlu0 %3921
        %3925 = vset.pattern.permute.xlu0 0
        %3926 = vperm.xlu0 %3925, %v3918
        %v3927 = vpop.permute.xlu0 %3926
        %v3931 = vunpack.c.l.b16 %v3913
        %v3932 = vunpack.c.l.b16 %v3914
        %v3933 = vpack.c.b16 %v3932, %v3931
        %vm3934 = vcmask 261120
        %v3936 = vsel %vm3934, %v3933, 0
        %3938 = vmatpush.bf16.msra.mxu0 0
        %3939 = vmatpush.bf16.msra.mxu0 0
        %3940 = vmatpush.bf16.msra.mxu0 0
        %3941 = vmatpush.bf16.msra.mxu0 0
        %3942 = vmatpush.bf16.msra.mxu0 0
        %3943 = vmatpush.bf16.msra.mxu0 0
        %3944 = vmatpush.bf16.msra.mxu0 %v3916
        %3945 = vmatpush.bf16.msra.mxu0 %v3915
        %3946 = vmatmul.bf16.gmra.mxu0 %v3936
        %v3947 = vpop.f32.mrf.mxu0
        %v3948 = vadd.f32 %v3922, %v3947
        %v3949 = vpop.f32.mrf.mxu0
        %v3950 = vadd.f32 %v3927, %v3949
        %3951 = vdwg.mxu0
        %v3952 = vlaneseq
        %v3953 = vshrl.u32 %v3952, 7
        %v3954 = vadd.s32 %v3953, 8
        %v3955 = vadd.s32 %v3953, 16
        %v3956 = vadd.s32 %v3953, 24
        %v3957 = vadd.s32 %v3953, 32
        %v3958 = vadd.s32 %v3953, 40
        %v3959 = vadd.s32 %v3953, 48
        %v3960 = vadd.s32 %v3953, 56
        %v3961 = vlaneseq
        %v3962 = vand.u32 %v3961, 127
        %v3963 = vmul.u32 %v3962, 2
        %vm3964 = vcmp.eq.s32.totalorder %v3953, %v3963
        %vm3965 = vcmp.eq.s32.totalorder %v3954, %v3963
        %vm3966 = vcmp.eq.s32.totalorder %v3955, %v3963
        %vm3967 = vcmp.eq.s32.totalorder %v3956, %v3963
        %vm3968 = vcmp.eq.s32.totalorder %v3957, %v3963
        %vm3969 = vcmp.eq.s32.totalorder %v3958, %v3963
        %vm3970 = vcmp.eq.s32.totalorder %v3959, %v3963
        %vm3971 = vcmp.eq.s32.totalorder %v3960, %v3963
        %v3972 = vsel %vm3964, 1, 0
        %v3973 = vsel %vm3965, 1, 0
        %v3974 = vsel %vm3966, 1, 0
        %v3975 = vsel %vm3967, 1, 0
        %v3976 = vsel %vm3968, 1, 0
        %v3977 = vsel %vm3969, 1, 0
        %v3978 = vsel %vm3970, 1, 0
        %v3979 = vsel %vm3971, 1, 0
        %v3980 = vcvt.s32.f32 %v3972
        %v3981 = vcvt.s32.f32 %v3973
        %v3982 = vcvt.s32.f32 %v3974
        %v3983 = vcvt.s32.f32 %v3975
        %v3984 = vcvt.s32.f32 %v3976
        %v3985 = vcvt.s32.f32 %v3977
        %v3986 = vcvt.s32.f32 %v3978
        %v3987 = vcvt.s32.f32 %v3979
        %vm3988 = vcmask 515072
        %v3990 = vsel %vm3988, %v3948, 0
        %v3993 = vsel %vm3988, %v3950, 0
        %vm3995 = vcmask 1046528
        %v3997 = vsel %vm3995, %v3987, 0
        %3999 = vmatpush.msra.mxu0 0.0
        %4000 = vmatpush.msra.mxu0 0.0
        %4001 = vmatpush.msra.mxu0 0.0
        %4002 = vmatpush.msra.mxu0 0.0
        %4003 = vmatpush.msra.mxu0 0.0
        %4004 = vmatpush.msra.mxu0 0.0
        %4005 = vmatpush.msra.mxu0 0.0
        %4006 = vmatpush.msra.mxu0 0.0
        %4007 = vmatpush.msra.mxu0 %v3997
        %4008 = vmatpush.msra.mxu0 %v3986
        %4009 = vmatpush.msra.mxu0 %v3985
        %4010 = vmatpush.msra.mxu0 %v3984
        %4011 = vmatpush.msra.mxu0 %v3983
        %4012 = vmatpush.msra.mxu0 %v3982
        %4013 = vmatpush.msra.mxu0 %v3981
        %4014 = vmatpush.msra.mxu0 %v3980
        %4015 = vmatmul.f32.gmra.mxu0 %v3990
        %v4016 = vpop.f32.mrf.mxu0
        %v4017 = vadd.f32 0.0, %v4016
        %4018 = vmatmul.f32.gmra.mxu0 %v3993
        %v4019 = vpop.f32.mrf.mxu0
        %v4020 = vadd.f32 0.0, %v4019
        %4021 = vdwg.mxu0
        %v4022 = vld [vmem:[%s65] sm:$0xff]
        %v4023 = vld [vmem:[%s65 + $0x8] sm:$0xff]
        %v4024 = vld [vmem:[%s63] sm:$0xff]
        %v4025 = vld [vmem:[%s63 + $0x8] sm:$0xff]
        %4027 = vset.pattern.permute.xlu0 0
        %4028 = vperm.xlu0 %4027, %v4024
        %v4029 = vpop.permute.xlu0 %4028
        %4032 = vset.pattern.permute.xlu0 0
        %4033 = vperm.xlu0 %4032, %v4025
        %v4034 = vpop.permute.xlu0 %4033
        %v4036 = vmul.f32 %v4029, %v4017
        %v4037 = vmul.f32 %v4034, %v4020
        %v4038 = vand.u32 2147483647, %v4036
        %vm4039 = vcmp.le.f32.partialorder %v4038, 0.7853982
        %vm4040 = vcmp.lt.s32.totalorder %v4036, 0
        %v4041 = vand.u32 %v4036, 2139095040
        %v4042 = vshrl.u32 %v4041, 23
        %v4043 = vsub.s32 %v4042, 127
        %v4044 = vand.u32 2147483647, %v4036
        %v4045 = vand.u32 %v4044, 8388607
        %v4046 = vor.u32 %v4045, 8388608
        %v4047 = vsub.s32 0, %v4046
        %v4048 = vadd.s32 %v4043, 1
        %vm4049 = vcmp.gt.s32.totalorder %v4048, 0
        %v4050 = vsel %vm4049, %v4048, 0
        %v4051 = vshrl.u32 %v4050, 5
        %v4052 = vand.u32 %v4050, 31
        %v4053 = vsub.s32 32, %v4052
        %v4054 = vshrl.u32 683565275, %v4053
        %v4055 = vshll.u32 683565275, %v4052
        %v4056 = vshrl.u32 2475754826, %v4053
        %v4057 = vor.u32 %v4055, %v4056
        %v4058 = vshll.u32 2475754826, %v4052
        %v4059 = vshrl.u32 2131351028, %v4053
        %v4060 = vor.u32 %v4058, %v4059
        %v4061 = vshll.u32 2131351028, %v4052
        %v4062 = vshrl.u32 2102212464, %v4053
        %v4063 = vor.u32 %v4061, %v4062
        %v4064 = vshll.u32 2102212464, %v4052
        %v4065 = vshrl.u32 920167782, %v4053
        %v4066 = vor.u32 %v4064, %v4065
        %v4067 = vshll.u32 920167782, %v4052
        %v4068 = vshrl.u32 1326507024, %v4053
        %v4069 = vor.u32 %v4067, %v4068
        %vm4070 = vcmp.lt.s32.totalorder %v4051, 1
        %vm4071 = vcmp.lt.s32.totalorder %v4051, 2
        %vm4072 = vcmp.lt.s32.totalorder %v4051, 3
        %vm4073 = vcmp.lt.s32.totalorder %v4051, 4
        %v4074 = vsel %vm4070, %v4054, %v4057
        %v4075 = vsel %vm4073, %v4063, 2102212464
        %v4076 = vsel %vm4072, %v4060, %v4075
        %v4077 = vsel %vm4071, %v4074, %v4076
        %v4078 = vsel %vm4070, %v4057, %v4060
        %v4079 = vsel %vm4073, %v4066, 920167782
        %v4080 = vsel %vm4072, %v4063, %v4079
        %v4081 = vsel %vm4071, %v4078, %v4080
        %v4082 = vsel %vm4070, %v4060, %v4063
        %v4083 = vsel %vm4073, %v4069, 1326507024
        %v4084 = vsel %vm4072, %v4066, %v4083
        %v4085 = vsel %vm4071, %v4082, %v4084
        %v4086 = vshll.u32 %v4046, 8
        %v4087 = vand.u32 %v4086, 65535
        %v4088 = vshrl.u32 %v4086, 16
        %v4089 = vand.u32 %v4085, 65535
        %v4090 = vshrl.u32 %v4085, 16
        %v4091 = vmul.u32 %v4087, %v4089
        %v4092 = vmul.u32 %v4087, %v4090
        %v4093 = vmul.u32 %v4088, %v4089
        %v4094 = vmul.u32 %v4088, %v4090
        %v4095 = vshll.u32 %v4092, 16
        %v4096 = vshrl.u32 %v4092, 16
        %v4097 = vshll.u32 %v4093, 16
        %v4098 = vshrl.u32 %v4093, 16
        %vm4099 = vc.u32 %v4091, %v4095
        %v4100 = vsel %vm4099, 1, 0
        %v4101 = vadd.s32 %v4091, %v4095
        %v4102 = vadd.s32 %v4094, %v4100
        %vm4103 = vc.u32 %v4101, %v4097
        %v4104 = vsel %vm4103, 1, 0
        %v4105 = vadd.s32 %v4101, %v4097
        %v4106 = vadd.s32 %v4102, %v4104
        %v4107 = vadd.s32 %v4106, %v4096
        %v4108 = vadd.s32 %v4107, %v4098
        %v4109 = vand.u32 %v4086, 65535
        %v4110 = vshrl.u32 %v4086, 16
        %v4111 = vand.u32 %v4081, 65535
        %v4112 = vshrl.u32 %v4081, 16
        %v4113 = vmul.u32 %v4109, %v4111
        %v4114 = vmul.u32 %v4109, %v4112
        %v4115 = vmul.u32 %v4110, %v4111
        %v4116 = vmul.u32 %v4110, %v4112
        %v4117 = vshll.u32 %v4114, 16
        %v4118 = vshrl.u32 %v4114, 16
        %v4119 = vshll.u32 %v4115, 16
        %v4120 = vshrl.u32 %v4115, 16
        %vm4121 = vc.u32 %v4113, %v4117
        %v4122 = vsel %vm4121, 1, 0
        %v4123 = vadd.s32 %v4113, %v4117
        %v4124 = vadd.s32 %v4116, %v4122
        %vm4125 = vc.u32 %v4123, %v4119
        %v4126 = vsel %vm4125, 1, 0
        %v4127 = vadd.s32 %v4123, %v4119
        %v4128 = vadd.s32 %v4124, %v4126
        %v4129 = vadd.s32 %v4128, %v4118
        %v4130 = vadd.s32 %v4129, %v4120
        %v4131 = vmul.u32 %v4086, %v4077
        %v4132 = vadd.s32 %v4108, %v4127
        %vm4133 = vc.u32 %v4108, %v4127
        %v4134 = vadd.s32 %v4130, 1
        %v4135 = vsel %vm4133, %v4134, %v4130
        %v4136 = vadd.s32 %v4131, %v4135
        %v4137 = vadd.s32 %v4136, 536870912
        %v4138 = vshrl.u32 %v4137, 30
        %v4139 = vshll.u32 %v4138, 30
        %v4140 = vsub.s32 %v4136, %v4139
        %vm4141 = vcmp.lt.s32.totalorder %v4140, 0
        %v4142 = vsub.s32 0, %v4140
        %v4143 = vsel %vm4141, %v4142, %v4140
        %v4144 = vclz %v4143
        %v4145 = vsub.s32 %v4144, 2
        %vm4146 = vcmp.gt.s32.totalorder 0, %v4145
        %v4147 = vsel %vm4146, 0, %v4145
        %v4148 = vsub.s32 32, %v4147
        %v4149 = vshll.u32 %v4140, %v4147
        %v4150 = vshrl.u32 %v4132, %v4148
        %v4151 = vor.u32 %v4149, %v4150
        %v4152 = vsub.s32 4294967266, %v4147
        %v4153 = vadd.s32 %v4152, 127
        %v4154 = vshll.u32 %v4153, 23
        %v4155 = vor.u32 4788187, %v4154
        %v4156 = vand.u32 2147483647, %v4155
        %v4158 = vcvt.s32.f32 %v4151
        %v4159 = vmul.f32 %v4158, %v4156
        %v4160 = vxor.u32 %v4159, 2147483648
        %v4161 = vsel %vm4040, %v4160, %v4159
        %v4162 = vsub.s32 4, %v4138
        %v4163 = vsel %vm4040, %v4162, %v4138
        %v4164 = vsel %vm4039, %v4036, %v4161
        %v4165 = vsel %vm4039, 0, %v4163
        %v4166 = vmul.f32 %v4164, %v4164
        %v4167 = vmul.f32 %v4166, -0.001358992
        %v4168 = vadd.f32 %v4167, 0.041655596
        %v4169 = vmul.f32 %v4166, %v4168
        %v4170 = vadd.f32 %v4169, -0.4999988
        %v4171 = vmul.f32 %v4166, %v4170
        %v4172 = vadd.f32 1.0, %v4171
        %v4173 = vmul.f32 %v4164, %v4164
        %v4174 = vmul.f32 %v4173, -0.00019511016
        %v4175 = vadd.f32 %v4174, 0.008332121
        %v4176 = vmul.f32 %v4173, %v4175
        %v4177 = vadd.f32 %v4176, -0.16666654
        %v4178 = vmul.f32 %v4173, %v4177
        %v4179 = vadd.f32 %v4178, 1.0
        %v4180 = vmul.f32 %v4179, %v4164
        %vm4181 = vweird.f32 %v4036
        %v4182 = vadd.s32 %v4165, 3
        %v4183 = vand.u32 %v4182, 3
        %vm4184 = vcmp.lt.s32.totalorder %v4183, 2
        %vm4185 = vcmp.eq.s32.totalorder %v4183, 0
        %v4186 = vxor.u32 %v4180, 2147483648
        %v4187 = vsel %vm4185, %v4172, %v4186
        %vm4188 = vcmp.eq.s32.totalorder %v4183, 2
        %v4189 = vxor.u32 %v4172, 2147483648
        %v4190 = vsel %vm4188, %v4189, %v4180
        %v4191 = vsel %vm4184, %v4187, %v4190
        %v4192 = vsel %vm4181, nan, %v4191
        %v4193 = vand.u32 2147483647, %v4037
        %vm4194 = vcmp.le.f32.partialorder %v4193, 0.7853982
        %vm4195 = vcmp.lt.s32.totalorder %v4037, 0
        %v4196 = vand.u32 %v4037, 2139095040
        %v4197 = vshrl.u32 %v4196, 23
        %v4198 = vsub.s32 %v4197, 127
        %v4199 = vand.u32 2147483647, %v4037
        %v4200 = vand.u32 %v4199, 8388607
        %v4201 = vor.u32 %v4200, 8388608
        %v4202 = vsub.s32 0, %v4201
        %v4203 = vadd.s32 %v4198, 1
        %vm4204 = vcmp.gt.s32.totalorder %v4203, 0
        %v4205 = vsel %vm4204, %v4203, 0
        %v4206 = vshrl.u32 %v4205, 5
        %v4207 = vand.u32 %v4205, 31
        %v4208 = vsub.s32 32, %v4207
        %v4209 = vshrl.u32 683565275, %v4208
        %v4210 = vshll.u32 683565275, %v4207
        %v4211 = vshrl.u32 2475754826, %v4208
        %v4212 = vor.u32 %v4210, %v4211
        %v4213 = vshll.u32 2475754826, %v4207
        %v4214 = vshrl.u32 2131351028, %v4208
        %v4215 = vor.u32 %v4213, %v4214
        %v4216 = vshll.u32 2131351028, %v4207
        %v4217 = vshrl.u32 2102212464, %v4208
        %v4218 = vor.u32 %v4216, %v4217
        %v4219 = vshll.u32 2102212464, %v4207
        %v4220 = vshrl.u32 920167782, %v4208
        %v4221 = vor.u32 %v4219, %v4220
        %v4222 = vshll.u32 920167782, %v4207
        %v4223 = vshrl.u32 1326507024, %v4208
        %v4224 = vor.u32 %v4222, %v4223
        %vm4225 = vcmp.lt.s32.totalorder %v4206, 1
        %vm4226 = vcmp.lt.s32.totalorder %v4206, 2
        %vm4227 = vcmp.lt.s32.totalorder %v4206, 3
        %vm4228 = vcmp.lt.s32.totalorder %v4206, 4
        %v4229 = vsel %vm4225, %v4209, %v4212
        %v4230 = vsel %vm4228, %v4218, 2102212464
        %v4231 = vsel %vm4227, %v4215, %v4230
        %v4232 = vsel %vm4226, %v4229, %v4231
        %v4233 = vsel %vm4225, %v4212, %v4215
        %v4234 = vsel %vm4228, %v4221, 920167782
        %v4235 = vsel %vm4227, %v4218, %v4234
        %v4236 = vsel %vm4226, %v4233, %v4235
        %v4237 = vsel %vm4225, %v4215, %v4218
        %v4238 = vsel %vm4228, %v4224, 1326507024
        %v4239 = vsel %vm4227, %v4221, %v4238
        %v4240 = vsel %vm4226, %v4237, %v4239
        %v4241 = vshll.u32 %v4201, 8
        %v4242 = vand.u32 %v4241, 65535
        %v4243 = vshrl.u32 %v4241, 16
        %v4244 = vand.u32 %v4240, 65535
        %v4245 = vshrl.u32 %v4240, 16
        %v4246 = vmul.u32 %v4242, %v4244
        %v4247 = vmul.u32 %v4242, %v4245
        %v4248 = vmul.u32 %v4243, %v4244
        %v4249 = vmul.u32 %v4243, %v4245
        %v4250 = vshll.u32 %v4247, 16
        %v4251 = vshrl.u32 %v4247, 16
        %v4252 = vshll.u32 %v4248, 16
        %v4253 = vshrl.u32 %v4248, 16
        %vm4254 = vc.u32 %v4246, %v4250
        %v4255 = vsel %vm4254, 1, 0
        %v4256 = vadd.s32 %v4246, %v4250
        %v4257 = vadd.s32 %v4249, %v4255
        %vm4258 = vc.u32 %v4256, %v4252
        %v4259 = vsel %vm4258, 1, 0
        %v4260 = vadd.s32 %v4256, %v4252
        %v4261 = vadd.s32 %v4257, %v4259
        %v4262 = vadd.s32 %v4261, %v4251
        %v4263 = vadd.s32 %v4262, %v4253
        %v4264 = vand.u32 %v4241, 65535
        %v4265 = vshrl.u32 %v4241, 16
        %v4266 = vand.u32 %v4236, 65535
        %v4267 = vshrl.u32 %v4236, 16
        %v4268 = vmul.u32 %v4264, %v4266
        %v4269 = vmul.u32 %v4264, %v4267
        %v4270 = vmul.u32 %v4265, %v4266
        %v4271 = vmul.u32 %v4265, %v4267
        %v4272 = vshll.u32 %v4269, 16
        %v4273 = vshrl.u32 %v4269, 16
        %v4274 = vshll.u32 %v4270, 16
        %v4275 = vshrl.u32 %v4270, 16
        %vm4276 = vc.u32 %v4268, %v4272
        %v4277 = vsel %vm4276, 1, 0
        %v4278 = vadd.s32 %v4268, %v4272
        %v4279 = vadd.s32 %v4271, %v4277
        %vm4280 = vc.u32 %v4278, %v4274
        %v4281 = vsel %vm4280, 1, 0
        %v4282 = vadd.s32 %v4278, %v4274
        %v4283 = vadd.s32 %v4279, %v4281
        %v4284 = vadd.s32 %v4283, %v4273
        %v4285 = vadd.s32 %v4284, %v4275
        %v4286 = vmul.u32 %v4241, %v4232
        %v4287 = vadd.s32 %v4263, %v4282
        %vm4288 = vc.u32 %v4263, %v4282
        %v4289 = vadd.s32 %v4285, 1
        %v4290 = vsel %vm4288, %v4289, %v4285
        %v4291 = vadd.s32 %v4286, %v4290
        %v4292 = vadd.s32 %v4291, 536870912
        %v4293 = vshrl.u32 %v4292, 30
        %v4294 = vshll.u32 %v4293, 30
        %v4295 = vsub.s32 %v4291, %v4294
        %vm4296 = vcmp.lt.s32.totalorder %v4295, 0
        %v4297 = vsub.s32 0, %v4295
        %v4298 = vsel %vm4296, %v4297, %v4295
        %v4299 = vclz %v4298
        %v4300 = vsub.s32 %v4299, 2
        %vm4301 = vcmp.gt.s32.totalorder 0, %v4300
        %v4302 = vsel %vm4301, 0, %v4300
        %v4303 = vsub.s32 32, %v4302
        %v4304 = vshll.u32 %v4295, %v4302
        %v4305 = vshrl.u32 %v4287, %v4303
        %v4306 = vor.u32 %v4304, %v4305
        %v4307 = vsub.s32 4294967266, %v4302
        %v4308 = vadd.s32 %v4307, 127
        %v4309 = vshll.u32 %v4308, 23
        %v4310 = vor.u32 4788187, %v4309
        %v4311 = vand.u32 2147483647, %v4310
        %v4313 = vcvt.s32.f32 %v4306
        %v4314 = vmul.f32 %v4313, %v4311
        %v4315 = vxor.u32 %v4314, 2147483648
        %v4316 = vsel %vm4195, %v4315, %v4314
        %v4317 = vsub.s32 4, %v4293
        %v4318 = vsel %vm4195, %v4317, %v4293
        %v4319 = vsel %vm4194, %v4037, %v4316
        %v4320 = vsel %vm4194, 0, %v4318
        %v4321 = vmul.f32 %v4319, %v4319
        %v4322 = vmul.f32 %v4321, -0.001358992
        %v4323 = vadd.f32 %v4322, 0.041655596
        %v4324 = vmul.f32 %v4321, %v4323
        %v4325 = vadd.f32 %v4324, -0.4999988
        %v4326 = vmul.f32 %v4321, %v4325
        %v4327 = vadd.f32 1.0, %v4326
        %v4328 = vmul.f32 %v4319, %v4319
        %v4329 = vmul.f32 %v4328, -0.00019511016
        %v4330 = vadd.f32 %v4329, 0.008332121
        %v4331 = vmul.f32 %v4328, %v4330
        %v4332 = vadd.f32 %v4331, -0.16666654
        %v4333 = vmul.f32 %v4328, %v4332
        %v4334 = vadd.f32 %v4333, 1.0
        %v4335 = vmul.f32 %v4334, %v4319
        %vm4336 = vweird.f32 %v4037
        %v4337 = vadd.s32 %v4320, 3
        %v4338 = vand.u32 %v4337, 3
        %vm4339 = vcmp.lt.s32.totalorder %v4338, 2
        %vm4340 = vcmp.eq.s32.totalorder %v4338, 0
        %v4341 = vxor.u32 %v4335, 2147483648
        %v4342 = vsel %vm4340, %v4327, %v4341
        %vm4343 = vcmp.eq.s32.totalorder %v4338, 2
        %v4344 = vxor.u32 %v4327, 2147483648
        %v4345 = vsel %vm4343, %v4344, %v4335
        %v4346 = vsel %vm4339, %v4342, %v4345
        %v4347 = vsel %vm4336, nan, %v4346
        %v4348 = vmul.f32 %v4192, %v4192
        %v4349 = vmul.f32 %v4347, %v4347
        %4351 = vset.pattern.permute.xlu0 0
        %4352 = vperm.xlu0 %4351, %v4022
        %v4353 = vpop.permute.xlu0 %4352
        %4356 = vset.pattern.permute.xlu0 0
        %4357 = vperm.xlu0 %4356, %v4023
        %v4358 = vpop.permute.xlu0 %4357
        %v4360 = vmul.f32 %v4353, %v4348
        %v4361 = vmul.f32 %v4358, %v4349
        %v4362 = vadd.f32 %v4017, %v4360
        %v4363 = vadd.f32 %v4020, %v4361
        %4364 = vst [vmem:[#allocation2] sm:$0xff] 0.0
        %4365 = vst [vmem:[#allocation2 + $0x8] sm:$0xff] 0.0
        %4368 = vrot.lane.b32.xlu0 %v4362, 3
        %v4369 = vpop.permute.xlu0 %4368
        %4370 = vrot.lane.b32.xlu0 %v4363, 3
        %v4371 = vpop.permute.xlu0 %4370
        %vm4374 = vcmask 285720
        %4375 = vst.msk [vmem:[#allocation2] sm:$0xff] %vm4374, %v4369
        %4376 = vst.msk [vmem:[#allocation2 + $0x8] sm:$0xff] %vm4374, %v4371
        %v4377 = vld [vmem:[#allocation2] sm:$0xff]
        %v4378 = vld [vmem:[#allocation2 + $0x8] sm:$0xff]
        %4381 = vrot.lane.b32.xlu0 %v4377, 127
        %v4382 = vpop.permute.xlu0 %4381
        %4383 = vrot.lane.b32.xlu0 %v4378, 127
        %v4384 = vpop.permute.xlu0 %4383
        %4387 = vrot.lane.b32.xlu0 %v4377, 126
        %v4388 = vpop.permute.xlu0 %4387
        %4389 = vrot.lane.b32.xlu0 %v4378, 126
        %v4390 = vpop.permute.xlu0 %4389
        %4393 = vrot.lane.b32.xlu0 %v4377, 125
        %v4394 = vpop.permute.xlu0 %4393
        %4395 = vrot.lane.b32.xlu0 %v4378, 125
        %v4396 = vpop.permute.xlu0 %4395
        %4399 = vrot.lane.b32.xlu0 %v4377, 124
        %v4400 = vpop.permute.xlu0 %4399
        %4401 = vrot.lane.b32.xlu0 %v4378, 124
        %v4402 = vpop.permute.xlu0 %4401
        %4405 = vrot.lane.b32.xlu0 %v4377, 123
        %v4406 = vpop.permute.xlu0 %4405
        %4407 = vrot.lane.b32.xlu0 %v4378, 123
        %v4408 = vpop.permute.xlu0 %4407
        %4411 = vrot.lane.b32.xlu0 %v4377, 122
        %v4412 = vpop.permute.xlu0 %4411
        %4413 = vrot.lane.b32.xlu0 %v4378, 122
        %v4414 = vpop.permute.xlu0 %4413
        %v4417 = vld [vmem:[#allocation16] sm:$0xf]
        %v4418 = vld [vmem:[#allocation16 + $0x4] sm:$0xf]
        %v4419 = vpack.c.bf16 %v4378, %v4377
        %v4420 = vpack.c.bf16 %v4384, %v4382
        %v4421 = vpack.c.bf16 %v4390, %v4388
        %v4422 = vpack.c.bf16 %v4396, %v4394
        %v4423 = vpack.c.bf16 %v4402, %v4400
        %v4424 = vpack.c.bf16 %v4408, %v4406
        %v4425 = vpack.c.bf16 %v4414, %v4412
        %v4426 = vld [vmem:[%s69] sm:$0xff]
        %v4427 = vld [vmem:[%s69 + $0x8] sm:$0xff]
        %4429 = vset.pattern.permute.xlu0 0
        %4430 = vperm.xlu0 %4429, %v4426
        %v4431 = vpop.permute.xlu0 %4430
        %4434 = vset.pattern.permute.xlu0 0
        %4435 = vperm.xlu0 %4434, %v4427
        %v4436 = vpop.permute.xlu0 %4435
        %v4440 = vunpack.c.l.b16 %v4417
        %v4441 = vunpack.c.l.b16 %v4418
        %v4442 = vpack.c.b16 %v4441, %v4440
        %vm4443 = vcmask 916480
        %v4445 = vsel %vm4443, %v4442, 0
        %4447 = vmatpush.bf16.msra.mxu0 0
        %4448 = vmatpush.bf16.msra.mxu0 %v4425
        %4449 = vmatpush.bf16.msra.mxu0 %v4424
        %4450 = vmatpush.bf16.msra.mxu0 %v4423
        %4451 = vmatpush.bf16.msra.mxu0 %v4422
        %4452 = vmatpush.bf16.msra.mxu0 %v4421
        %4453 = vmatpush.bf16.msra.mxu0 %v4420
        %4454 = vmatpush.bf16.msra.mxu0 %v4419
        %4455 = vmatmul.bf16.gmra.mxu0 %v4445
        %v4456 = vpop.f32.mrf.mxu0
        %v4457 = vadd.f32 %v4431, %v4456
        %v4458 = vpop.f32.mrf.mxu0
        %v4459 = vadd.f32 %v4436, %v4458
        %4460 = vdwg.mxu0
        %v4461 = vld [vmem:[%s73] sm:$0xff]
        %v4462 = vld [vmem:[%s73 + $0x8] sm:$0xff]
        %v4463 = vld [vmem:[%s71] sm:$0xff]
        %v4464 = vld [vmem:[%s71 + $0x8] sm:$0xff]
        %4466 = vset.pattern.permute.xlu0 0
        %4467 = vperm.xlu0 %4466, %v4463
        %v4468 = vpop.permute.xlu0 %4467
        %4471 = vset.pattern.permute.xlu0 0
        %4472 = vperm.xlu0 %4471, %v4464
        %v4473 = vpop.permute.xlu0 %4472
        %v4475 = vmul.f32 %v4468, %v4457
        %v4476 = vmul.f32 %v4473, %v4459
        %v4477 = vand.u32 2147483647, %v4475
        %vm4478 = vcmp.le.f32.partialorder %v4477, 0.7853982
        %vm4479 = vcmp.lt.s32.totalorder %v4475, 0
        %v4480 = vand.u32 %v4475, 2139095040
        %v4481 = vshrl.u32 %v4480, 23
        %v4482 = vsub.s32 %v4481, 127
        %v4483 = vand.u32 2147483647, %v4475
        %v4484 = vand.u32 %v4483, 8388607
        %v4485 = vor.u32 %v4484, 8388608
        %v4486 = vsub.s32 0, %v4485
        %v4487 = vadd.s32 %v4482, 1
        %vm4488 = vcmp.gt.s32.totalorder %v4487, 0
        %v4489 = vsel %vm4488, %v4487, 0
        %v4490 = vshrl.u32 %v4489, 5
        %v4491 = vand.u32 %v4489, 31
        %v4492 = vsub.s32 32, %v4491
        %v4493 = vshrl.u32 683565275, %v4492
        %v4494 = vshll.u32 683565275, %v4491
        %v4495 = vshrl.u32 2475754826, %v4492
        %v4496 = vor.u32 %v4494, %v4495
        %v4497 = vshll.u32 2475754826, %v4491
        %v4498 = vshrl.u32 2131351028, %v4492
        %v4499 = vor.u32 %v4497, %v4498
        %v4500 = vshll.u32 2131351028, %v4491
        %v4501 = vshrl.u32 2102212464, %v4492
        %v4502 = vor.u32 %v4500, %v4501
        %v4503 = vshll.u32 2102212464, %v4491
        %v4504 = vshrl.u32 920167782, %v4492
        %v4505 = vor.u32 %v4503, %v4504
        %v4506 = vshll.u32 920167782, %v4491
        %v4507 = vshrl.u32 1326507024, %v4492
        %v4508 = vor.u32 %v4506, %v4507
        %vm4509 = vcmp.lt.s32.totalorder %v4490, 1
        %vm4510 = vcmp.lt.s32.totalorder %v4490, 2
        %vm4511 = vcmp.lt.s32.totalorder %v4490, 3
        %vm4512 = vcmp.lt.s32.totalorder %v4490, 4
        %v4513 = vsel %vm4509, %v4493, %v4496
        %v4514 = vsel %vm4512, %v4502, 2102212464
        %v4515 = vsel %vm4511, %v4499, %v4514
        %v4516 = vsel %vm4510, %v4513, %v4515
        %v4517 = vsel %vm4509, %v4496, %v4499
        %v4518 = vsel %vm4512, %v4505, 920167782
        %v4519 = vsel %vm4511, %v4502, %v4518
        %v4520 = vsel %vm4510, %v4517, %v4519
        %v4521 = vsel %vm4509, %v4499, %v4502
        %v4522 = vsel %vm4512, %v4508, 1326507024
        %v4523 = vsel %vm4511, %v4505, %v4522
        %v4524 = vsel %vm4510, %v4521, %v4523
        %v4525 = vshll.u32 %v4485, 8
        %v4526 = vand.u32 %v4525, 65535
        %v4527 = vshrl.u32 %v4525, 16
        %v4528 = vand.u32 %v4524, 65535
        %v4529 = vshrl.u32 %v4524, 16
        %v4530 = vmul.u32 %v4526, %v4528
        %v4531 = vmul.u32 %v4526, %v4529
        %v4532 = vmul.u32 %v4527, %v4528
        %v4533 = vmul.u32 %v4527, %v4529
        %v4534 = vshll.u32 %v4531, 16
        %v4535 = vshrl.u32 %v4531, 16
        %v4536 = vshll.u32 %v4532, 16
        %v4537 = vshrl.u32 %v4532, 16
        %vm4538 = vc.u32 %v4530, %v4534
        %v4539 = vsel %vm4538, 1, 0
        %v4540 = vadd.s32 %v4530, %v4534
        %v4541 = vadd.s32 %v4533, %v4539
        %vm4542 = vc.u32 %v4540, %v4536
        %v4543 = vsel %vm4542, 1, 0
        %v4544 = vadd.s32 %v4540, %v4536
        %v4545 = vadd.s32 %v4541, %v4543
        %v4546 = vadd.s32 %v4545, %v4535
        %v4547 = vadd.s32 %v4546, %v4537
        %v4548 = vand.u32 %v4525, 65535
        %v4549 = vshrl.u32 %v4525, 16
        %v4550 = vand.u32 %v4520, 65535
        %v4551 = vshrl.u32 %v4520, 16
        %v4552 = vmul.u32 %v4548, %v4550
        %v4553 = vmul.u32 %v4548, %v4551
        %v4554 = vmul.u32 %v4549, %v4550
        %v4555 = vmul.u32 %v4549, %v4551
        %v4556 = vshll.u32 %v4553, 16
        %v4557 = vshrl.u32 %v4553, 16
        %v4558 = vshll.u32 %v4554, 16
        %v4559 = vshrl.u32 %v4554, 16
        %vm4560 = vc.u32 %v4552, %v4556
        %v4561 = vsel %vm4560, 1, 0
        %v4562 = vadd.s32 %v4552, %v4556
        %v4563 = vadd.s32 %v4555, %v4561
        %vm4564 = vc.u32 %v4562, %v4558
        %v4565 = vsel %vm4564, 1, 0
        %v4566 = vadd.s32 %v4562, %v4558
        %v4567 = vadd.s32 %v4563, %v4565
        %v4568 = vadd.s32 %v4567, %v4557
        %v4569 = vadd.s32 %v4568, %v4559
        %v4570 = vmul.u32 %v4525, %v4516
        %v4571 = vadd.s32 %v4547, %v4566
        %vm4572 = vc.u32 %v4547, %v4566
        %v4573 = vadd.s32 %v4569, 1
        %v4574 = vsel %vm4572, %v4573, %v4569
        %v4575 = vadd.s32 %v4570, %v4574
        %v4576 = vadd.s32 %v4575, 536870912
        %v4577 = vshrl.u32 %v4576, 30
        %v4578 = vshll.u32 %v4577, 30
        %v4579 = vsub.s32 %v4575, %v4578
        %vm4580 = vcmp.lt.s32.totalorder %v4579, 0
        %v4581 = vsub.s32 0, %v4579
        %v4582 = vsel %vm4580, %v4581, %v4579
        %v4583 = vclz %v4582
        %v4584 = vsub.s32 %v4583, 2
        %vm4585 = vcmp.gt.s32.totalorder 0, %v4584
        %v4586 = vsel %vm4585, 0, %v4584
        %v4587 = vsub.s32 32, %v4586
        %v4588 = vshll.u32 %v4579, %v4586
        %v4589 = vshrl.u32 %v4571, %v4587
        %v4590 = vor.u32 %v4588, %v4589
        %v4591 = vsub.s32 4294967266, %v4586
        %v4592 = vadd.s32 %v4591, 127
        %v4593 = vshll.u32 %v4592, 23
        %v4594 = vor.u32 4788187, %v4593
        %v4595 = vand.u32 2147483647, %v4594
        %v4597 = vcvt.s32.f32 %v4590
        %v4598 = vmul.f32 %v4597, %v4595
        %v4599 = vxor.u32 %v4598, 2147483648
        %v4600 = vsel %vm4479, %v4599, %v4598
        %v4601 = vsub.s32 4, %v4577
        %v4602 = vsel %vm4479, %v4601, %v4577
        %v4603 = vsel %vm4478, %v4475, %v4600
        %v4604 = vsel %vm4478, 0, %v4602
        %v4605 = vmul.f32 %v4603, %v4603
        %v4606 = vmul.f32 %v4605, -0.001358992
        %v4607 = vadd.f32 %v4606, 0.041655596
        %v4608 = vmul.f32 %v4605, %v4607
        %v4609 = vadd.f32 %v4608, -0.4999988
        %v4610 = vmul.f32 %v4605, %v4609
        %v4611 = vadd.f32 1.0, %v4610
        %v4612 = vmul.f32 %v4603, %v4603
        %v4613 = vmul.f32 %v4612, -0.00019511016
        %v4614 = vadd.f32 %v4613, 0.008332121
        %v4615 = vmul.f32 %v4612, %v4614
        %v4616 = vadd.f32 %v4615, -0.16666654
        %v4617 = vmul.f32 %v4612, %v4616
        %v4618 = vadd.f32 %v4617, 1.0
        %v4619 = vmul.f32 %v4618, %v4603
        %vm4620 = vweird.f32 %v4475
        %v4621 = vadd.s32 %v4604, 3
        %v4622 = vand.u32 %v4621, 3
        %vm4623 = vcmp.lt.s32.totalorder %v4622, 2
        %vm4624 = vcmp.eq.s32.totalorder %v4622, 0
        %v4625 = vxor.u32 %v4619, 2147483648
        %v4626 = vsel %vm4624, %v4611, %v4625
        %vm4627 = vcmp.eq.s32.totalorder %v4622, 2
        %v4628 = vxor.u32 %v4611, 2147483648
        %v4629 = vsel %vm4627, %v4628, %v4619
        %v4630 = vsel %vm4623, %v4626, %v4629
        %v4631 = vsel %vm4620, nan, %v4630
        %v4632 = vand.u32 2147483647, %v4476
        %vm4633 = vcmp.le.f32.partialorder %v4632, 0.7853982
        %vm4634 = vcmp.lt.s32.totalorder %v4476, 0
        %v4635 = vand.u32 %v4476, 2139095040
        %v4636 = vshrl.u32 %v4635, 23
        %v4637 = vsub.s32 %v4636, 127
        %v4638 = vand.u32 2147483647, %v4476
        %v4639 = vand.u32 %v4638, 8388607
        %v4640 = vor.u32 %v4639, 8388608
        %v4641 = vsub.s32 0, %v4640
        %v4642 = vadd.s32 %v4637, 1
        %vm4643 = vcmp.gt.s32.totalorder %v4642, 0
        %v4644 = vsel %vm4643, %v4642, 0
        %v4645 = vshrl.u32 %v4644, 5
        %v4646 = vand.u32 %v4644, 31
        %v4647 = vsub.s32 32, %v4646
        %v4648 = vshrl.u32 683565275, %v4647
        %v4649 = vshll.u32 683565275, %v4646
        %v4650 = vshrl.u32 2475754826, %v4647
        %v4651 = vor.u32 %v4649, %v4650
        %v4652 = vshll.u32 2475754826, %v4646
        %v4653 = vshrl.u32 2131351028, %v4647
        %v4654 = vor.u32 %v4652, %v4653
        %v4655 = vshll.u32 2131351028, %v4646
        %v4656 = vshrl.u32 2102212464, %v4647
        %v4657 = vor.u32 %v4655, %v4656
        %v4658 = vshll.u32 2102212464, %v4646
        %v4659 = vshrl.u32 920167782, %v4647
        %v4660 = vor.u32 %v4658, %v4659
        %v4661 = vshll.u32 920167782, %v4646
        %v4662 = vshrl.u32 1326507024, %v4647
        %v4663 = vor.u32 %v4661, %v4662
        %vm4664 = vcmp.lt.s32.totalorder %v4645, 1
        %vm4665 = vcmp.lt.s32.totalorder %v4645, 2
        %vm4666 = vcmp.lt.s32.totalorder %v4645, 3
        %vm4667 = vcmp.lt.s32.totalorder %v4645, 4
        %v4668 = vsel %vm4664, %v4648, %v4651
        %v4669 = vsel %vm4667, %v4657, 2102212464
        %v4670 = vsel %vm4666, %v4654, %v4669
        %v4671 = vsel %vm4665, %v4668, %v4670
        %v4672 = vsel %vm4664, %v4651, %v4654
        %v4673 = vsel %vm4667, %v4660, 920167782
        %v4674 = vsel %vm4666, %v4657, %v4673
        %v4675 = vsel %vm4665, %v4672, %v4674
        %v4676 = vsel %vm4664, %v4654, %v4657
        %v4677 = vsel %vm4667, %v4663, 1326507024
        %v4678 = vsel %vm4666, %v4660, %v4677
        %v4679 = vsel %vm4665, %v4676, %v4678
        %v4680 = vshll.u32 %v4640, 8
        %v4681 = vand.u32 %v4680, 65535
        %v4682 = vshrl.u32 %v4680, 16
        %v4683 = vand.u32 %v4679, 65535
        %v4684 = vshrl.u32 %v4679, 16
        %v4685 = vmul.u32 %v4681, %v4683
        %v4686 = vmul.u32 %v4681, %v4684
        %v4687 = vmul.u32 %v4682, %v4683
        %v4688 = vmul.u32 %v4682, %v4684
        %v4689 = vshll.u32 %v4686, 16
        %v4690 = vshrl.u32 %v4686, 16
        %v4691 = vshll.u32 %v4687, 16
        %v4692 = vshrl.u32 %v4687, 16
        %vm4693 = vc.u32 %v4685, %v4689
        %v4694 = vsel %vm4693, 1, 0
        %v4695 = vadd.s32 %v4685, %v4689
        %v4696 = vadd.s32 %v4688, %v4694
        %vm4697 = vc.u32 %v4695, %v4691
        %v4698 = vsel %vm4697, 1, 0
        %v4699 = vadd.s32 %v4695, %v4691
        %v4700 = vadd.s32 %v4696, %v4698
        %v4701 = vadd.s32 %v4700, %v4690
        %v4702 = vadd.s32 %v4701, %v4692
        %v4703 = vand.u32 %v4680, 65535
        %v4704 = vshrl.u32 %v4680, 16
        %v4705 = vand.u32 %v4675, 65535
        %v4706 = vshrl.u32 %v4675, 16
        %v4707 = vmul.u32 %v4703, %v4705
        %v4708 = vmul.u32 %v4703, %v4706
        %v4709 = vmul.u32 %v4704, %v4705
        %v4710 = vmul.u32 %v4704, %v4706
        %v4711 = vshll.u32 %v4708, 16
        %v4712 = vshrl.u32 %v4708, 16
        %v4713 = vshll.u32 %v4709, 16
        %v4714 = vshrl.u32 %v4709, 16
        %vm4715 = vc.u32 %v4707, %v4711
        %v4716 = vsel %vm4715, 1, 0
        %v4717 = vadd.s32 %v4707, %v4711
        %v4718 = vadd.s32 %v4710, %v4716
        %vm4719 = vc.u32 %v4717, %v4713
        %v4720 = vsel %vm4719, 1, 0
        %v4721 = vadd.s32 %v4717, %v4713
        %v4722 = vadd.s32 %v4718, %v4720
        %v4723 = vadd.s32 %v4722, %v4712
        %v4724 = vadd.s32 %v4723, %v4714
        %v4725 = vmul.u32 %v4680, %v4671
        %v4726 = vadd.s32 %v4702, %v4721
        %vm4727 = vc.u32 %v4702, %v4721
        %v4728 = vadd.s32 %v4724, 1
        %v4729 = vsel %vm4727, %v4728, %v4724
        %v4730 = vadd.s32 %v4725, %v4729
        %v4731 = vadd.s32 %v4730, 536870912
        %v4732 = vshrl.u32 %v4731, 30
        %v4733 = vshll.u32 %v4732, 30
        %v4734 = vsub.s32 %v4730, %v4733
        %vm4735 = vcmp.lt.s32.totalorder %v4734, 0
        %v4736 = vsub.s32 0, %v4734
        %v4737 = vsel %vm4735, %v4736, %v4734
        %v4738 = vclz %v4737
        %v4739 = vsub.s32 %v4738, 2
        %vm4740 = vcmp.gt.s32.totalorder 0, %v4739
        %v4741 = vsel %vm4740, 0, %v4739
        %v4742 = vsub.s32 32, %v4741
        %v4743 = vshll.u32 %v4734, %v4741
        %v4744 = vshrl.u32 %v4726, %v4742
        %v4745 = vor.u32 %v4743, %v4744
        %v4746 = vsub.s32 4294967266, %v4741
        %v4747 = vadd.s32 %v4746, 127
        %v4748 = vshll.u32 %v4747, 23
        %v4749 = vor.u32 4788187, %v4748
        %v4750 = vand.u32 2147483647, %v4749
        %v4752 = vcvt.s32.f32 %v4745
        %v4753 = vmul.f32 %v4752, %v4750
        %v4754 = vxor.u32 %v4753, 2147483648
        %v4755 = vsel %vm4634, %v4754, %v4753
        %v4756 = vsub.s32 4, %v4732
        %v4757 = vsel %vm4634, %v4756, %v4732
        %v4758 = vsel %vm4633, %v4476, %v4755
        %v4759 = vsel %vm4633, 0, %v4757
        %v4760 = vmul.f32 %v4758, %v4758
        %v4761 = vmul.f32 %v4760, -0.001358992
        %v4762 = vadd.f32 %v4761, 0.041655596
        %v4763 = vmul.f32 %v4760, %v4762
        %v4764 = vadd.f32 %v4763, -0.4999988
        %v4765 = vmul.f32 %v4760, %v4764
        %v4766 = vadd.f32 1.0, %v4765
        %v4767 = vmul.f32 %v4758, %v4758
        %v4768 = vmul.f32 %v4767, -0.00019511016
        %v4769 = vadd.f32 %v4768, 0.008332121
        %v4770 = vmul.f32 %v4767, %v4769
        %v4771 = vadd.f32 %v4770, -0.16666654
        %v4772 = vmul.f32 %v4767, %v4771
        %v4773 = vadd.f32 %v4772, 1.0
        %v4774 = vmul.f32 %v4773, %v4758
        %vm4775 = vweird.f32 %v4476
        %v4776 = vadd.s32 %v4759, 3
        %v4777 = vand.u32 %v4776, 3
        %vm4778 = vcmp.lt.s32.totalorder %v4777, 2
        %vm4779 = vcmp.eq.s32.totalorder %v4777, 0
        %v4780 = vxor.u32 %v4774, 2147483648
        %v4781 = vsel %vm4779, %v4766, %v4780
        %vm4782 = vcmp.eq.s32.totalorder %v4777, 2
        %v4783 = vxor.u32 %v4766, 2147483648
        %v4784 = vsel %vm4782, %v4783, %v4774
        %v4785 = vsel %vm4778, %v4781, %v4784
        %v4786 = vsel %vm4775, nan, %v4785
        %v4787 = vmul.f32 %v4631, %v4631
        %v4788 = vmul.f32 %v4786, %v4786
        %4790 = vset.pattern.permute.xlu0 0
        %4791 = vperm.xlu0 %4790, %v4461
        %v4792 = vpop.permute.xlu0 %4791
        %4795 = vset.pattern.permute.xlu0 0
        %4796 = vperm.xlu0 %4795, %v4462
        %v4797 = vpop.permute.xlu0 %4796
        %v4799 = vmul.f32 %v4792, %v4787
        %v4800 = vmul.f32 %v4797, %v4788
        %v4801 = vadd.f32 %v4457, %v4799
        %v4802 = vadd.f32 %v4459, %v4800
        %v4803 = vld [vmem:[#allocation17] sm:$0xf]
        %v4804 = vld [vmem:[#allocation17 + $0x4] sm:$0xf]
        %v4805 = vpack.c.bf16 %v4802, %v4801
        %v4806 = vld [vmem:[%s77] sm:$0xff]
        %v4807 = vld [vmem:[%s77 + $0x8] sm:$0xff]
        %4809 = vset.pattern.permute.xlu0 0
        %4810 = vperm.xlu0 %4809, %v4806
        %v4811 = vpop.permute.xlu0 %4810
        %4814 = vset.pattern.permute.xlu0 0
        %4815 = vperm.xlu0 %4814, %v4807
        %v4816 = vpop.permute.xlu0 %4815
        %v4820 = vunpack.c.l.b16 %v4803
        %v4821 = vunpack.c.l.b16 %v4804
        %v4822 = vpack.c.b16 %v4821, %v4820
        %vm4823 = vcmask 130048
        %v4825 = vsel %vm4823, %v4822, 0
        %4827 = vmatpush.bf16.msra.mxu0 0
        %4828 = vmatpush.bf16.msra.mxu0 0
        %4829 = vmatpush.bf16.msra.mxu0 0
        %4830 = vmatpush.bf16.msra.mxu0 0
        %4831 = vmatpush.bf16.msra.mxu0 0
        %4832 = vmatpush.bf16.msra.mxu0 0
        %4833 = vmatpush.bf16.msra.mxu0 0
        %4834 = vmatpush.bf16.msra.mxu0 %v4805
        %4835 = vmatmul.bf16.gmra.mxu0 %v4825
        %v4836 = vpop.f32.mrf.mxu0
        %v4837 = vadd.f32 %v4811, %v4836
        %v4838 = vpop.f32.mrf.mxu0
        %v4839 = vadd.f32 %v4816, %v4838
        %4840 = vdwg.mxu0
        %v4841 = vadd.f32 %v4837, %v4017
        %v4842 = vadd.f32 %v4839, %v4020
        %v4843 = vld [vmem:[%s81] sm:$0xff]
        %v4844 = vld [vmem:[%s81 + $0x8] sm:$0xff]
        %v4845 = vld [vmem:[%s79] sm:$0xff]
        %v4846 = vld [vmem:[%s79 + $0x8] sm:$0xff]
        %4848 = vset.pattern.permute.xlu0 0
        %4849 = vperm.xlu0 %4848, %v4845
        %v4850 = vpop.permute.xlu0 %4849
        %4853 = vset.pattern.permute.xlu0 0
        %4854 = vperm.xlu0 %4853, %v4846
        %v4855 = vpop.permute.xlu0 %4854
        %v4857 = vmul.f32 %v4850, %v4841
        %v4858 = vmul.f32 %v4855, %v4842
        %v4859 = vand.u32 2147483647, %v4857
        %vm4860 = vcmp.le.f32.partialorder %v4859, 0.7853982
        %vm4861 = vcmp.lt.s32.totalorder %v4857, 0
        %v4862 = vand.u32 %v4857, 2139095040
        %v4863 = vshrl.u32 %v4862, 23
        %v4864 = vsub.s32 %v4863, 127
        %v4865 = vand.u32 2147483647, %v4857
        %v4866 = vand.u32 %v4865, 8388607
        %v4867 = vor.u32 %v4866, 8388608
        %v4868 = vsub.s32 0, %v4867
        %v4869 = vadd.s32 %v4864, 1
        %vm4870 = vcmp.gt.s32.totalorder %v4869, 0
        %v4871 = vsel %vm4870, %v4869, 0
        %v4872 = vshrl.u32 %v4871, 5
        %v4873 = vand.u32 %v4871, 31
        %v4874 = vsub.s32 32, %v4873
        %v4875 = vshrl.u32 683565275, %v4874
        %v4876 = vshll.u32 683565275, %v4873
        %v4877 = vshrl.u32 2475754826, %v4874
        %v4878 = vor.u32 %v4876, %v4877
        %v4879 = vshll.u32 2475754826, %v4873
        %v4880 = vshrl.u32 2131351028, %v4874
        %v4881 = vor.u32 %v4879, %v4880
        %v4882 = vshll.u32 2131351028, %v4873
        %v4883 = vshrl.u32 2102212464, %v4874
        %v4884 = vor.u32 %v4882, %v4883
        %v4885 = vshll.u32 2102212464, %v4873
        %v4886 = vshrl.u32 920167782, %v4874
        %v4887 = vor.u32 %v4885, %v4886
        %v4888 = vshll.u32 920167782, %v4873
        %v4889 = vshrl.u32 1326507024, %v4874
        %v4890 = vor.u32 %v4888, %v4889
        %vm4891 = vcmp.lt.s32.totalorder %v4872, 1
        %vm4892 = vcmp.lt.s32.totalorder %v4872, 2
        %vm4893 = vcmp.lt.s32.totalorder %v4872, 3
        %vm4894 = vcmp.lt.s32.totalorder %v4872, 4
        %v4895 = vsel %vm4891, %v4875, %v4878
        %v4896 = vsel %vm4894, %v4884, 2102212464
        %v4897 = vsel %vm4893, %v4881, %v4896
        %v4898 = vsel %vm4892, %v4895, %v4897
        %v4899 = vsel %vm4891, %v4878, %v4881
        %v4900 = vsel %vm4894, %v4887, 920167782
        %v4901 = vsel %vm4893, %v4884, %v4900
        %v4902 = vsel %vm4892, %v4899, %v4901
        %v4903 = vsel %vm4891, %v4881, %v4884
        %v4904 = vsel %vm4894, %v4890, 1326507024
        %v4905 = vsel %vm4893, %v4887, %v4904
        %v4906 = vsel %vm4892, %v4903, %v4905
        %v4907 = vshll.u32 %v4867, 8
        %v4908 = vand.u32 %v4907, 65535
        %v4909 = vshrl.u32 %v4907, 16
        %v4910 = vand.u32 %v4906, 65535
        %v4911 = vshrl.u32 %v4906, 16
        %v4912 = vmul.u32 %v4908, %v4910
        %v4913 = vmul.u32 %v4908, %v4911
        %v4914 = vmul.u32 %v4909, %v4910
        %v4915 = vmul.u32 %v4909, %v4911
        %v4916 = vshll.u32 %v4913, 16
        %v4917 = vshrl.u32 %v4913, 16
        %v4918 = vshll.u32 %v4914, 16
        %v4919 = vshrl.u32 %v4914, 16
        %vm4920 = vc.u32 %v4912, %v4916
        %v4921 = vsel %vm4920, 1, 0
        %v4922 = vadd.s32 %v4912, %v4916
        %v4923 = vadd.s32 %v4915, %v4921
        %vm4924 = vc.u32 %v4922, %v4918
        %v4925 = vsel %vm4924, 1, 0
        %v4926 = vadd.s32 %v4922, %v4918
        %v4927 = vadd.s32 %v4923, %v4925
        %v4928 = vadd.s32 %v4927, %v4917
        %v4929 = vadd.s32 %v4928, %v4919
        %v4930 = vand.u32 %v4907, 65535
        %v4931 = vshrl.u32 %v4907, 16
        %v4932 = vand.u32 %v4902, 65535
        %v4933 = vshrl.u32 %v4902, 16
        %v4934 = vmul.u32 %v4930, %v4932
        %v4935 = vmul.u32 %v4930, %v4933
        %v4936 = vmul.u32 %v4931, %v4932
        %v4937 = vmul.u32 %v4931, %v4933
        %v4938 = vshll.u32 %v4935, 16
        %v4939 = vshrl.u32 %v4935, 16
        %v4940 = vshll.u32 %v4936, 16
        %v4941 = vshrl.u32 %v4936, 16
        %vm4942 = vc.u32 %v4934, %v4938
        %v4943 = vsel %vm4942, 1, 0
        %v4944 = vadd.s32 %v4934, %v4938
        %v4945 = vadd.s32 %v4937, %v4943
        %vm4946 = vc.u32 %v4944, %v4940
        %v4947 = vsel %vm4946, 1, 0
        %v4948 = vadd.s32 %v4944, %v4940
        %v4949 = vadd.s32 %v4945, %v4947
        %v4950 = vadd.s32 %v4949, %v4939
        %v4951 = vadd.s32 %v4950, %v4941
        %v4952 = vmul.u32 %v4907, %v4898
        %v4953 = vadd.s32 %v4929, %v4948
        %vm4954 = vc.u32 %v4929, %v4948
        %v4955 = vadd.s32 %v4951, 1
        %v4956 = vsel %vm4954, %v4955, %v4951
        %v4957 = vadd.s32 %v4952, %v4956
        %v4958 = vadd.s32 %v4957, 536870912
        %v4959 = vshrl.u32 %v4958, 30
        %v4960 = vshll.u32 %v4959, 30
        %v4961 = vsub.s32 %v4957, %v4960
        %vm4962 = vcmp.lt.s32.totalorder %v4961, 0
        %v4963 = vsub.s32 0, %v4961
        %v4964 = vsel %vm4962, %v4963, %v4961
        %v4965 = vclz %v4964
        %v4966 = vsub.s32 %v4965, 2
        %vm4967 = vcmp.gt.s32.totalorder 0, %v4966
        %v4968 = vsel %vm4967, 0, %v4966
        %v4969 = vsub.s32 32, %v4968
        %v4970 = vshll.u32 %v4961, %v4968
        %v4971 = vshrl.u32 %v4953, %v4969
        %v4972 = vor.u32 %v4970, %v4971
        %v4973 = vsub.s32 4294967266, %v4968
        %v4974 = vadd.s32 %v4973, 127
        %v4975 = vshll.u32 %v4974, 23
        %v4976 = vor.u32 4788187, %v4975
        %v4977 = vand.u32 2147483647, %v4976
        %v4979 = vcvt.s32.f32 %v4972
        %v4980 = vmul.f32 %v4979, %v4977
        %v4981 = vxor.u32 %v4980, 2147483648
        %v4982 = vsel %vm4861, %v4981, %v4980
        %v4983 = vsub.s32 4, %v4959
        %v4984 = vsel %vm4861, %v4983, %v4959
        %v4985 = vsel %vm4860, %v4857, %v4982
        %v4986 = vsel %vm4860, 0, %v4984
        %v4987 = vmul.f32 %v4985, %v4985
        %v4988 = vmul.f32 %v4987, -0.001358992
        %v4989 = vadd.f32 %v4988, 0.041655596
        %v4990 = vmul.f32 %v4987, %v4989
        %v4991 = vadd.f32 %v4990, -0.4999988
        %v4992 = vmul.f32 %v4987, %v4991
        %v4993 = vadd.f32 1.0, %v4992
        %v4994 = vmul.f32 %v4985, %v4985
        %v4995 = vmul.f32 %v4994, -0.00019511016
        %v4996 = vadd.f32 %v4995, 0.008332121
        %v4997 = vmul.f32 %v4994, %v4996
        %v4998 = vadd.f32 %v4997, -0.16666654
        %v4999 = vmul.f32 %v4994, %v4998
        %v5000 = vadd.f32 %v4999, 1.0
        %v5001 = vmul.f32 %v5000, %v4985
        %vm5002 = vweird.f32 %v4857
        %v5003 = vadd.s32 %v4986, 3
        %v5004 = vand.u32 %v5003, 3
        %vm5005 = vcmp.lt.s32.totalorder %v5004, 2
        %vm5006 = vcmp.eq.s32.totalorder %v5004, 0
        %v5007 = vxor.u32 %v5001, 2147483648
        %v5008 = vsel %vm5006, %v4993, %v5007
        %vm5009 = vcmp.eq.s32.totalorder %v5004, 2
        %v5010 = vxor.u32 %v4993, 2147483648
        %v5011 = vsel %vm5009, %v5010, %v5001
        %v5012 = vsel %vm5005, %v5008, %v5011
        %v5013 = vsel %vm5002, nan, %v5012
        %v5014 = vand.u32 2147483647, %v4858
        %vm5015 = vcmp.le.f32.partialorder %v5014, 0.7853982
        %vm5016 = vcmp.lt.s32.totalorder %v4858, 0
        %v5017 = vand.u32 %v4858, 2139095040
        %v5018 = vshrl.u32 %v5017, 23
        %v5019 = vsub.s32 %v5018, 127
        %v5020 = vand.u32 2147483647, %v4858
        %v5021 = vand.u32 %v5020, 8388607
        %v5022 = vor.u32 %v5021, 8388608
        %v5023 = vsub.s32 0, %v5022
        %v5024 = vadd.s32 %v5019, 1
        %vm5025 = vcmp.gt.s32.totalorder %v5024, 0
        %v5026 = vsel %vm5025, %v5024, 0
        %v5027 = vshrl.u32 %v5026, 5
        %v5028 = vand.u32 %v5026, 31
        %v5029 = vsub.s32 32, %v5028
        %v5030 = vshrl.u32 683565275, %v5029
        %v5031 = vshll.u32 683565275, %v5028
        %v5032 = vshrl.u32 2475754826, %v5029
        %v5033 = vor.u32 %v5031, %v5032
        %v5034 = vshll.u32 2475754826, %v5028
        %v5035 = vshrl.u32 2131351028, %v5029
        %v5036 = vor.u32 %v5034, %v5035
        %v5037 = vshll.u32 2131351028, %v5028
        %v5038 = vshrl.u32 2102212464, %v5029
        %v5039 = vor.u32 %v5037, %v5038
        %v5040 = vshll.u32 2102212464, %v5028
        %v5041 = vshrl.u32 920167782, %v5029
        %v5042 = vor.u32 %v5040, %v5041
        %v5043 = vshll.u32 920167782, %v5028
        %v5044 = vshrl.u32 1326507024, %v5029
        %v5045 = vor.u32 %v5043, %v5044
        %vm5046 = vcmp.lt.s32.totalorder %v5027, 1
        %vm5047 = vcmp.lt.s32.totalorder %v5027, 2
        %vm5048 = vcmp.lt.s32.totalorder %v5027, 3
        %vm5049 = vcmp.lt.s32.totalorder %v5027, 4
        %v5050 = vsel %vm5046, %v5030, %v5033
        %v5051 = vsel %vm5049, %v5039, 2102212464
        %v5052 = vsel %vm5048, %v5036, %v5051
        %v5053 = vsel %vm5047, %v5050, %v5052
        %v5054 = vsel %vm5046, %v5033, %v5036
        %v5055 = vsel %vm5049, %v5042, 920167782
        %v5056 = vsel %vm5048, %v5039, %v5055
        %v5057 = vsel %vm5047, %v5054, %v5056
        %v5058 = vsel %vm5046, %v5036, %v5039
        %v5059 = vsel %vm5049, %v5045, 1326507024
        %v5060 = vsel %vm5048, %v5042, %v5059
        %v5061 = vsel %vm5047, %v5058, %v5060
        %v5062 = vshll.u32 %v5022, 8
        %v5063 = vand.u32 %v5062, 65535
        %v5064 = vshrl.u32 %v5062, 16
        %v5065 = vand.u32 %v5061, 65535
        %v5066 = vshrl.u32 %v5061, 16
        %v5067 = vmul.u32 %v5063, %v5065
        %v5068 = vmul.u32 %v5063, %v5066
        %v5069 = vmul.u32 %v5064, %v5065
        %v5070 = vmul.u32 %v5064, %v5066
        %v5071 = vshll.u32 %v5068, 16
        %v5072 = vshrl.u32 %v5068, 16
        %v5073 = vshll.u32 %v5069, 16
        %v5074 = vshrl.u32 %v5069, 16
        %vm5075 = vc.u32 %v5067, %v5071
        %v5076 = vsel %vm5075, 1, 0
        %v5077 = vadd.s32 %v5067, %v5071
        %v5078 = vadd.s32 %v5070, %v5076
        %vm5079 = vc.u32 %v5077, %v5073
        %v5080 = vsel %vm5079, 1, 0
        %v5081 = vadd.s32 %v5077, %v5073
        %v5082 = vadd.s32 %v5078, %v5080
        %v5083 = vadd.s32 %v5082, %v5072
        %v5084 = vadd.s32 %v5083, %v5074
        %v5085 = vand.u32 %v5062, 65535
        %v5086 = vshrl.u32 %v5062, 16
        %v5087 = vand.u32 %v5057, 65535
        %v5088 = vshrl.u32 %v5057, 16
        %v5089 = vmul.u32 %v5085, %v5087
        %v5090 = vmul.u32 %v5085, %v5088
        %v5091 = vmul.u32 %v5086, %v5087
        %v5092 = vmul.u32 %v5086, %v5088
        %v5093 = vshll.u32 %v5090, 16
        %v5094 = vshrl.u32 %v5090, 16
        %v5095 = vshll.u32 %v5091, 16
        %v5096 = vshrl.u32 %v5091, 16
        %vm5097 = vc.u32 %v5089, %v5093
        %v5098 = vsel %vm5097, 1, 0
        %v5099 = vadd.s32 %v5089, %v5093
        %v5100 = vadd.s32 %v5092, %v5098
        %vm5101 = vc.u32 %v5099, %v5095
        %v5102 = vsel %vm5101, 1, 0
        %v5103 = vadd.s32 %v5099, %v5095
        %v5104 = vadd.s32 %v5100, %v5102
        %v5105 = vadd.s32 %v5104, %v5094
        %v5106 = vadd.s32 %v5105, %v5096
        %v5107 = vmul.u32 %v5062, %v5053
        %v5108 = vadd.s32 %v5084, %v5103
        %vm5109 = vc.u32 %v5084, %v5103
        %v5110 = vadd.s32 %v5106, 1
        %v5111 = vsel %vm5109, %v5110, %v5106
        %v5112 = vadd.s32 %v5107, %v5111
        %v5113 = vadd.s32 %v5112, 536870912
        %v5114 = vshrl.u32 %v5113, 30
        %v5115 = vshll.u32 %v5114, 30
        %v5116 = vsub.s32 %v5112, %v5115
        %vm5117 = vcmp.lt.s32.totalorder %v5116, 0
        %v5118 = vsub.s32 0, %v5116
        %v5119 = vsel %vm5117, %v5118, %v5116
        %v5120 = vclz %v5119
        %v5121 = vsub.s32 %v5120, 2
        %vm5122 = vcmp.gt.s32.totalorder 0, %v5121
        %v5123 = vsel %vm5122, 0, %v5121
        %v5124 = vsub.s32 32, %v5123
        %v5125 = vshll.u32 %v5116, %v5123
        %v5126 = vshrl.u32 %v5108, %v5124
        %v5127 = vor.u32 %v5125, %v5126
        %v5128 = vsub.s32 4294967266, %v5123
        %v5129 = vadd.s32 %v5128, 127
        %v5130 = vshll.u32 %v5129, 23
        %v5131 = vor.u32 4788187, %v5130
        %v5132 = vand.u32 2147483647, %v5131
        %v5134 = vcvt.s32.f32 %v5127
        %v5135 = vmul.f32 %v5134, %v5132
        %v5136 = vxor.u32 %v5135, 2147483648
        %v5137 = vsel %vm5016, %v5136, %v5135
        %v5138 = vsub.s32 4, %v5114
        %v5139 = vsel %vm5016, %v5138, %v5114
        %v5140 = vsel %vm5015, %v4858, %v5137
        %v5141 = vsel %vm5015, 0, %v5139
        %v5142 = vmul.f32 %v5140, %v5140
        %v5143 = vmul.f32 %v5142, -0.001358992
        %v5144 = vadd.f32 %v5143, 0.041655596
        %v5145 = vmul.f32 %v5142, %v5144
        %v5146 = vadd.f32 %v5145, -0.4999988
        %v5147 = vmul.f32 %v5142, %v5146
        %v5148 = vadd.f32 1.0, %v5147
        %v5149 = vmul.f32 %v5140, %v5140
        %v5150 = vmul.f32 %v5149, -0.00019511016
        %v5151 = vadd.f32 %v5150, 0.008332121
        %v5152 = vmul.f32 %v5149, %v5151
        %v5153 = vadd.f32 %v5152, -0.16666654
        %v5154 = vmul.f32 %v5149, %v5153
        %v5155 = vadd.f32 %v5154, 1.0
        %v5156 = vmul.f32 %v5155, %v5140
        %vm5157 = vweird.f32 %v4858
        %v5158 = vadd.s32 %v5141, 3
        %v5159 = vand.u32 %v5158, 3
        %vm5160 = vcmp.lt.s32.totalorder %v5159, 2
        %vm5161 = vcmp.eq.s32.totalorder %v5159, 0
        %v5162 = vxor.u32 %v5156, 2147483648
        %v5163 = vsel %vm5161, %v5148, %v5162
        %vm5164 = vcmp.eq.s32.totalorder %v5159, 2
        %v5165 = vxor.u32 %v5148, 2147483648
        %v5166 = vsel %vm5164, %v5165, %v5156
        %v5167 = vsel %vm5160, %v5163, %v5166
        %v5168 = vsel %vm5157, nan, %v5167
        %v5169 = vmul.f32 %v5013, %v5013
        %v5170 = vmul.f32 %v5168, %v5168
        %5172 = vset.pattern.permute.xlu0 0
        %5173 = vperm.xlu0 %5172, %v4843
        %v5174 = vpop.permute.xlu0 %5173
        %5177 = vset.pattern.permute.xlu0 0
        %5178 = vperm.xlu0 %5177, %v4844
        %v5179 = vpop.permute.xlu0 %5178
        %v5181 = vmul.f32 %v5174, %v5169
        %v5182 = vmul.f32 %v5179, %v5170
        %v5183 = vadd.f32 %v4841, %v5181
        %v5184 = vadd.f32 %v4842, %v5182
        %5185 = vst [vmem:[#allocation2] sm:$0xff] 0.0
        %5186 = vst [vmem:[#allocation2 + $0x8] sm:$0xff] 0.0
        %5189 = vrot.lane.b32.xlu0 %v5183, 9
        %v5190 = vpop.permute.xlu0 %5189
        %5191 = vrot.lane.b32.xlu0 %v5184, 9
        %v5192 = vpop.permute.xlu0 %5191
        %vm5195 = vcmask 334920
        %5196 = vst.msk [vmem:[#allocation2] sm:$0xff] %vm5195, %v5190
        %5197 = vst.msk [vmem:[#allocation2 + $0x8] sm:$0xff] %vm5195, %v5192
        %v5198 = vld [vmem:[#allocation2] sm:$0xff]
        %v5199 = vld [vmem:[#allocation2 + $0x8] sm:$0xff]
        %5202 = vrot.lane.b32.xlu0 %v5198, 125
        %v5203 = vpop.permute.xlu0 %5202
        %5204 = vrot.lane.b32.xlu0 %v5199, 125
        %v5205 = vpop.permute.xlu0 %5204
        %5208 = vrot.lane.b32.xlu0 %v5198, 122
        %v5209 = vpop.permute.xlu0 %5208
        %5210 = vrot.lane.b32.xlu0 %v5199, 122
        %v5211 = vpop.permute.xlu0 %5210
        %5214 = vrot.lane.b32.xlu0 %v5198, 119
        %v5215 = vpop.permute.xlu0 %5214
        %5216 = vrot.lane.b32.xlu0 %v5199, 119
        %v5217 = vpop.permute.xlu0 %5216
        %5220 = vrot.lane.b32.xlu0 %v5198, 116
        %v5221 = vpop.permute.xlu0 %5220
        %5222 = vrot.lane.b32.xlu0 %v5199, 116
        %v5223 = vpop.permute.xlu0 %5222
        %5226 = vrot.lane.b32.xlu0 %v5198, 113
        %v5227 = vpop.permute.xlu0 %5226
        %5228 = vrot.lane.b32.xlu0 %v5199, 113
        %v5229 = vpop.permute.xlu0 %5228
        %5232 = vrot.lane.b32.xlu0 %v5198, 110
        %v5233 = vpop.permute.xlu0 %5232
        %5234 = vrot.lane.b32.xlu0 %v5199, 110
        %v5235 = vpop.permute.xlu0 %5234
        %v5238 = vld [vmem:[#allocation19] sm:$0xf]
        %v5239 = vld [vmem:[#allocation19 + $0x4] sm:$0xf]
        %v5240 = vpack.c.bf16 %v5199, %v5198
        %v5241 = vpack.c.bf16 %v5205, %v5203
        %v5242 = vpack.c.bf16 %v5211, %v5209
        %v5243 = vpack.c.bf16 %v5217, %v5215
        %v5244 = vpack.c.bf16 %v5223, %v5221
        %v5245 = vpack.c.bf16 %v5229, %v5227
        %v5246 = vpack.c.bf16 %v5235, %v5233
        %v5247 = vld [vmem:[%s85] sm:$0xff]
        %v5248 = vld [vmem:[%s85 + $0x8] sm:$0xff]
        %5250 = vset.pattern.permute.xlu0 0
        %5251 = vperm.xlu0 %5250, %v5247
        %v5252 = vpop.permute.xlu0 %5251
        %5255 = vset.pattern.permute.xlu0 0
        %5256 = vperm.xlu0 %5255, %v5248
        %v5257 = vpop.permute.xlu0 %5256
        %v5261 = vunpack.c.l.b16 %v5238
        %v5262 = vunpack.c.l.b16 %v5239
        %v5263 = vpack.c.b16 %v5262, %v5261
        %v5265 = vsel %vm4443, %v5263, 0
        %5267 = vmatpush.bf16.msra.mxu0 0
        %5268 = vmatpush.bf16.msra.mxu0 %v5246
        %5269 = vmatpush.bf16.msra.mxu0 %v5245
        %5270 = vmatpush.bf16.msra.mxu0 %v5244
        %5271 = vmatpush.bf16.msra.mxu0 %v5243
        %5272 = vmatpush.bf16.msra.mxu0 %v5242
        %5273 = vmatpush.bf16.msra.mxu0 %v5241
        %5274 = vmatpush.bf16.msra.mxu0 %v5240
        %5275 = vmatmul.bf16.gmra.mxu0 %v5265
        %v5276 = vpop.f32.mrf.mxu0
        %v5277 = vadd.f32 %v5252, %v5276
        %v5278 = vpop.f32.mrf.mxu0
        %v5279 = vadd.f32 %v5257, %v5278
        %5280 = vdwg.mxu0
        %v5281 = vld [vmem:[%s89] sm:$0xff]
        %v5282 = vld [vmem:[%s89 + $0x8] sm:$0xff]
        %v5283 = vld [vmem:[%s87] sm:$0xff]
        %v5284 = vld [vmem:[%s87 + $0x8] sm:$0xff]
        %5286 = vset.pattern.permute.xlu0 0
        %5287 = vperm.xlu0 %5286, %v5283
        %v5288 = vpop.permute.xlu0 %5287
        %5291 = vset.pattern.permute.xlu0 0
        %5292 = vperm.xlu0 %5291, %v5284
        %v5293 = vpop.permute.xlu0 %5292
        %v5295 = vmul.f32 %v5288, %v5277
        %v5296 = vmul.f32 %v5293, %v5279
        %v5297 = vand.u32 2147483647, %v5295
        %vm5298 = vcmp.le.f32.partialorder %v5297, 0.7853982
        %vm5299 = vcmp.lt.s32.totalorder %v5295, 0
        %v5300 = vand.u32 %v5295, 2139095040
        %v5301 = vshrl.u32 %v5300, 23
        %v5302 = vsub.s32 %v5301, 127
        %v5303 = vand.u32 2147483647, %v5295
        %v5304 = vand.u32 %v5303, 8388607
        %v5305 = vor.u32 %v5304, 8388608
        %v5306 = vsub.s32 0, %v5305
        %v5307 = vadd.s32 %v5302, 1
        %vm5308 = vcmp.gt.s32.totalorder %v5307, 0
        %v5309 = vsel %vm5308, %v5307, 0
        %v5310 = vshrl.u32 %v5309, 5
        %v5311 = vand.u32 %v5309, 31
        %v5312 = vsub.s32 32, %v5311
        %v5313 = vshrl.u32 683565275, %v5312
        %v5314 = vshll.u32 683565275, %v5311
        %v5315 = vshrl.u32 2475754826, %v5312
        %v5316 = vor.u32 %v5314, %v5315
        %v5317 = vshll.u32 2475754826, %v5311
        %v5318 = vshrl.u32 2131351028, %v5312
        %v5319 = vor.u32 %v5317, %v5318
        %v5320 = vshll.u32 2131351028, %v5311
        %v5321 = vshrl.u32 2102212464, %v5312
        %v5322 = vor.u32 %v5320, %v5321
        %v5323 = vshll.u32 2102212464, %v5311
        %v5324 = vshrl.u32 920167782, %v5312
        %v5325 = vor.u32 %v5323, %v5324
        %v5326 = vshll.u32 920167782, %v5311
        %v5327 = vshrl.u32 1326507024, %v5312
        %v5328 = vor.u32 %v5326, %v5327
        %vm5329 = vcmp.lt.s32.totalorder %v5310, 1
        %vm5330 = vcmp.lt.s32.totalorder %v5310, 2
        %vm5331 = vcmp.lt.s32.totalorder %v5310, 3
        %vm5332 = vcmp.lt.s32.totalorder %v5310, 4
        %v5333 = vsel %vm5329, %v5313, %v5316
        %v5334 = vsel %vm5332, %v5322, 2102212464
        %v5335 = vsel %vm5331, %v5319, %v5334
        %v5336 = vsel %vm5330, %v5333, %v5335
        %v5337 = vsel %vm5329, %v5316, %v5319
        %v5338 = vsel %vm5332, %v5325, 920167782
        %v5339 = vsel %vm5331, %v5322, %v5338
        %v5340 = vsel %vm5330, %v5337, %v5339
        %v5341 = vsel %vm5329, %v5319, %v5322
        %v5342 = vsel %vm5332, %v5328, 1326507024
        %v5343 = vsel %vm5331, %v5325, %v5342
        %v5344 = vsel %vm5330, %v5341, %v5343
        %v5345 = vshll.u32 %v5305, 8
        %v5346 = vand.u32 %v5345, 65535
        %v5347 = vshrl.u32 %v5345, 16
        %v5348 = vand.u32 %v5344, 65535
        %v5349 = vshrl.u32 %v5344, 16
        %v5350 = vmul.u32 %v5346, %v5348
        %v5351 = vmul.u32 %v5346, %v5349
        %v5352 = vmul.u32 %v5347, %v5348
        %v5353 = vmul.u32 %v5347, %v5349
        %v5354 = vshll.u32 %v5351, 16
        %v5355 = vshrl.u32 %v5351, 16
        %v5356 = vshll.u32 %v5352, 16
        %v5357 = vshrl.u32 %v5352, 16
        %vm5358 = vc.u32 %v5350, %v5354
        %v5359 = vsel %vm5358, 1, 0
        %v5360 = vadd.s32 %v5350, %v5354
        %v5361 = vadd.s32 %v5353, %v5359
        %vm5362 = vc.u32 %v5360, %v5356
        %v5363 = vsel %vm5362, 1, 0
        %v5364 = vadd.s32 %v5360, %v5356
        %v5365 = vadd.s32 %v5361, %v5363
        %v5366 = vadd.s32 %v5365, %v5355
        %v5367 = vadd.s32 %v5366, %v5357
        %v5368 = vand.u32 %v5345, 65535
        %v5369 = vshrl.u32 %v5345, 16
        %v5370 = vand.u32 %v5340, 65535
        %v5371 = vshrl.u32 %v5340, 16
        %v5372 = vmul.u32 %v5368, %v5370
        %v5373 = vmul.u32 %v5368, %v5371
        %v5374 = vmul.u32 %v5369, %v5370
        %v5375 = vmul.u32 %v5369, %v5371
        %v5376 = vshll.u32 %v5373, 16
        %v5377 = vshrl.u32 %v5373, 16
        %v5378 = vshll.u32 %v5374, 16
        %v5379 = vshrl.u32 %v5374, 16
        %vm5380 = vc.u32 %v5372, %v5376
        %v5381 = vsel %vm5380, 1, 0
        %v5382 = vadd.s32 %v5372, %v5376
        %v5383 = vadd.s32 %v5375, %v5381
        %vm5384 = vc.u32 %v5382, %v5378
        %v5385 = vsel %vm5384, 1, 0
        %v5386 = vadd.s32 %v5382, %v5378
        %v5387 = vadd.s32 %v5383, %v5385
        %v5388 = vadd.s32 %v5387, %v5377
        %v5389 = vadd.s32 %v5388, %v5379
        %v5390 = vmul.u32 %v5345, %v5336
        %v5391 = vadd.s32 %v5367, %v5386
        %vm5392 = vc.u32 %v5367, %v5386
        %v5393 = vadd.s32 %v5389, 1
        %v5394 = vsel %vm5392, %v5393, %v5389
        %v5395 = vadd.s32 %v5390, %v5394
        %v5396 = vadd.s32 %v5395, 536870912
        %v5397 = vshrl.u32 %v5396, 30
        %v5398 = vshll.u32 %v5397, 30
        %v5399 = vsub.s32 %v5395, %v5398
        %vm5400 = vcmp.lt.s32.totalorder %v5399, 0
        %v5401 = vsub.s32 0, %v5399
        %v5402 = vsel %vm5400, %v5401, %v5399
        %v5403 = vclz %v5402
        %v5404 = vsub.s32 %v5403, 2
        %vm5405 = vcmp.gt.s32.totalorder 0, %v5404
        %v5406 = vsel %vm5405, 0, %v5404
        %v5407 = vsub.s32 32, %v5406
        %v5408 = vshll.u32 %v5399, %v5406
        %v5409 = vshrl.u32 %v5391, %v5407
        %v5410 = vor.u32 %v5408, %v5409
        %v5411 = vsub.s32 4294967266, %v5406
        %v5412 = vadd.s32 %v5411, 127
        %v5413 = vshll.u32 %v5412, 23
        %v5414 = vor.u32 4788187, %v5413
        %v5415 = vand.u32 2147483647, %v5414
        %v5417 = vcvt.s32.f32 %v5410
        %v5418 = vmul.f32 %v5417, %v5415
        %v5419 = vxor.u32 %v5418, 2147483648
        %v5420 = vsel %vm5299, %v5419, %v5418
        %v5421 = vsub.s32 4, %v5397
        %v5422 = vsel %vm5299, %v5421, %v5397
        %v5423 = vsel %vm5298, %v5295, %v5420
        %v5424 = vsel %vm5298, 0, %v5422
        %v5425 = vmul.f32 %v5423, %v5423
        %v5426 = vmul.f32 %v5425, -0.001358992
        %v5427 = vadd.f32 %v5426, 0.041655596
        %v5428 = vmul.f32 %v5425, %v5427
        %v5429 = vadd.f32 %v5428, -0.4999988
        %v5430 = vmul.f32 %v5425, %v5429
        %v5431 = vadd.f32 1.0, %v5430
        %v5432 = vmul.f32 %v5423, %v5423
        %v5433 = vmul.f32 %v5432, -0.00019511016
        %v5434 = vadd.f32 %v5433, 0.008332121
        %v5435 = vmul.f32 %v5432, %v5434
        %v5436 = vadd.f32 %v5435, -0.16666654
        %v5437 = vmul.f32 %v5432, %v5436
        %v5438 = vadd.f32 %v5437, 1.0
        %v5439 = vmul.f32 %v5438, %v5423
        %vm5440 = vweird.f32 %v5295
        %v5441 = vadd.s32 %v5424, 3
        %v5442 = vand.u32 %v5441, 3
        %vm5443 = vcmp.lt.s32.totalorder %v5442, 2
        %vm5444 = vcmp.eq.s32.totalorder %v5442, 0
        %v5445 = vxor.u32 %v5439, 2147483648
        %v5446 = vsel %vm5444, %v5431, %v5445
        %vm5447 = vcmp.eq.s32.totalorder %v5442, 2
        %v5448 = vxor.u32 %v5431, 2147483648
        %v5449 = vsel %vm5447, %v5448, %v5439
        %v5450 = vsel %vm5443, %v5446, %v5449
        %v5451 = vsel %vm5440, nan, %v5450
        %v5452 = vand.u32 2147483647, %v5296
        %vm5453 = vcmp.le.f32.partialorder %v5452, 0.7853982
        %vm5454 = vcmp.lt.s32.totalorder %v5296, 0
        %v5455 = vand.u32 %v5296, 2139095040
        %v5456 = vshrl.u32 %v5455, 23
        %v5457 = vsub.s32 %v5456, 127
        %v5458 = vand.u32 2147483647, %v5296
        %v5459 = vand.u32 %v5458, 8388607
        %v5460 = vor.u32 %v5459, 8388608
        %v5461 = vsub.s32 0, %v5460
        %v5462 = vadd.s32 %v5457, 1
        %vm5463 = vcmp.gt.s32.totalorder %v5462, 0
        %v5464 = vsel %vm5463, %v5462, 0
        %v5465 = vshrl.u32 %v5464, 5
        %v5466 = vand.u32 %v5464, 31
        %v5467 = vsub.s32 32, %v5466
        %v5468 = vshrl.u32 683565275, %v5467
        %v5469 = vshll.u32 683565275, %v5466
        %v5470 = vshrl.u32 2475754826, %v5467
        %v5471 = vor.u32 %v5469, %v5470
        %v5472 = vshll.u32 2475754826, %v5466
        %v5473 = vshrl.u32 2131351028, %v5467
        %v5474 = vor.u32 %v5472, %v5473
        %v5475 = vshll.u32 2131351028, %v5466
        %v5476 = vshrl.u32 2102212464, %v5467
        %v5477 = vor.u32 %v5475, %v5476
        %v5478 = vshll.u32 2102212464, %v5466
        %v5479 = vshrl.u32 920167782, %v5467
        %v5480 = vor.u32 %v5478, %v5479
        %v5481 = vshll.u32 920167782, %v5466
        %v5482 = vshrl.u32 1326507024, %v5467
        %v5483 = vor.u32 %v5481, %v5482
        %vm5484 = vcmp.lt.s32.totalorder %v5465, 1
        %vm5485 = vcmp.lt.s32.totalorder %v5465, 2
        %vm5486 = vcmp.lt.s32.totalorder %v5465, 3
        %vm5487 = vcmp.lt.s32.totalorder %v5465, 4
        %v5488 = vsel %vm5484, %v5468, %v5471
        %v5489 = vsel %vm5487, %v5477, 2102212464
        %v5490 = vsel %vm5486, %v5474, %v5489
        %v5491 = vsel %vm5485, %v5488, %v5490
        %v5492 = vsel %vm5484, %v5471, %v5474
        %v5493 = vsel %vm5487, %v5480, 920167782
        %v5494 = vsel %vm5486, %v5477, %v5493
        %v5495 = vsel %vm5485, %v5492, %v5494
        %v5496 = vsel %vm5484, %v5474, %v5477
        %v5497 = vsel %vm5487, %v5483, 1326507024
        %v5498 = vsel %vm5486, %v5480, %v5497
        %v5499 = vsel %vm5485, %v5496, %v5498
        %v5500 = vshll.u32 %v5460, 8
        %v5501 = vand.u32 %v5500, 65535
        %v5502 = vshrl.u32 %v5500, 16
        %v5503 = vand.u32 %v5499, 65535
        %v5504 = vshrl.u32 %v5499, 16
        %v5505 = vmul.u32 %v5501, %v5503
        %v5506 = vmul.u32 %v5501, %v5504
        %v5507 = vmul.u32 %v5502, %v5503
        %v5508 = vmul.u32 %v5502, %v5504
        %v5509 = vshll.u32 %v5506, 16
        %v5510 = vshrl.u32 %v5506, 16
        %v5511 = vshll.u32 %v5507, 16
        %v5512 = vshrl.u32 %v5507, 16
        %vm5513 = vc.u32 %v5505, %v5509
        %v5514 = vsel %vm5513, 1, 0
        %v5515 = vadd.s32 %v5505, %v5509
        %v5516 = vadd.s32 %v5508, %v5514
        %vm5517 = vc.u32 %v5515, %v5511
        %v5518 = vsel %vm5517, 1, 0
        %v5519 = vadd.s32 %v5515, %v5511
        %v5520 = vadd.s32 %v5516, %v5518
        %v5521 = vadd.s32 %v5520, %v5510
        %v5522 = vadd.s32 %v5521, %v5512
        %v5523 = vand.u32 %v5500, 65535
        %v5524 = vshrl.u32 %v5500, 16
        %v5525 = vand.u32 %v5495, 65535
        %v5526 = vshrl.u32 %v5495, 16
        %v5527 = vmul.u32 %v5523, %v5525
        %v5528 = vmul.u32 %v5523, %v5526
        %v5529 = vmul.u32 %v5524, %v5525
        %v5530 = vmul.u32 %v5524, %v5526
        %v5531 = vshll.u32 %v5528, 16
        %v5532 = vshrl.u32 %v5528, 16
        %v5533 = vshll.u32 %v5529, 16
        %v5534 = vshrl.u32 %v5529, 16
        %vm5535 = vc.u32 %v5527, %v5531
        %v5536 = vsel %vm5535, 1, 0
        %v5537 = vadd.s32 %v5527, %v5531
        %v5538 = vadd.s32 %v5530, %v5536
        %vm5539 = vc.u32 %v5537, %v5533
        %v5540 = vsel %vm5539, 1, 0
        %v5541 = vadd.s32 %v5537, %v5533
        %v5542 = vadd.s32 %v5538, %v5540
        %v5543 = vadd.s32 %v5542, %v5532
        %v5544 = vadd.s32 %v5543, %v5534
        %v5545 = vmul.u32 %v5500, %v5491
        %v5546 = vadd.s32 %v5522, %v5541
        %vm5547 = vc.u32 %v5522, %v5541
        %v5548 = vadd.s32 %v5544, 1
        %v5549 = vsel %vm5547, %v5548, %v5544
        %v5550 = vadd.s32 %v5545, %v5549
        %v5551 = vadd.s32 %v5550, 536870912
        %v5552 = vshrl.u32 %v5551, 30
        %v5553 = vshll.u32 %v5552, 30
        %v5554 = vsub.s32 %v5550, %v5553
        %vm5555 = vcmp.lt.s32.totalorder %v5554, 0
        %v5556 = vsub.s32 0, %v5554
        %v5557 = vsel %vm5555, %v5556, %v5554
        %v5558 = vclz %v5557
        %v5559 = vsub.s32 %v5558, 2
        %vm5560 = vcmp.gt.s32.totalorder 0, %v5559
        %v5561 = vsel %vm5560, 0, %v5559
        %v5562 = vsub.s32 32, %v5561
        %v5563 = vshll.u32 %v5554, %v5561
        %v5564 = vshrl.u32 %v5546, %v5562
        %v5565 = vor.u32 %v5563, %v5564
        %v5566 = vsub.s32 4294967266, %v5561
        %v5567 = vadd.s32 %v5566, 127
        %v5568 = vshll.u32 %v5567, 23
        %v5569 = vor.u32 4788187, %v5568
        %v5570 = vand.u32 2147483647, %v5569
        %v5572 = vcvt.s32.f32 %v5565
        %v5573 = vmul.f32 %v5572, %v5570
        %v5574 = vxor.u32 %v5573, 2147483648
        %v5575 = vsel %vm5454, %v5574, %v5573
        %v5576 = vsub.s32 4, %v5552
        %v5577 = vsel %vm5454, %v5576, %v5552
        %v5578 = vsel %vm5453, %v5296, %v5575
        %v5579 = vsel %vm5453, 0, %v5577
        %v5580 = vmul.f32 %v5578, %v5578
        %v5581 = vmul.f32 %v5580, -0.001358992
        %v5582 = vadd.f32 %v5581, 0.041655596
        %v5583 = vmul.f32 %v5580, %v5582
        %v5584 = vadd.f32 %v5583, -0.4999988
        %v5585 = vmul.f32 %v5580, %v5584
        %v5586 = vadd.f32 1.0, %v5585
        %v5587 = vmul.f32 %v5578, %v5578
        %v5588 = vmul.f32 %v5587, -0.00019511016
        %v5589 = vadd.f32 %v5588, 0.008332121
        %v5590 = vmul.f32 %v5587, %v5589
        %v5591 = vadd.f32 %v5590, -0.16666654
        %v5592 = vmul.f32 %v5587, %v5591
        %v5593 = vadd.f32 %v5592, 1.0
        %v5594 = vmul.f32 %v5593, %v5578
        %vm5595 = vweird.f32 %v5296
        %v5596 = vadd.s32 %v5579, 3
        %v5597 = vand.u32 %v5596, 3
        %vm5598 = vcmp.lt.s32.totalorder %v5597, 2
        %vm5599 = vcmp.eq.s32.totalorder %v5597, 0
        %v5600 = vxor.u32 %v5594, 2147483648
        %v5601 = vsel %vm5599, %v5586, %v5600
        %vm5602 = vcmp.eq.s32.totalorder %v5597, 2
        %v5603 = vxor.u32 %v5586, 2147483648
        %v5604 = vsel %vm5602, %v5603, %v5594
        %v5605 = vsel %vm5598, %v5601, %v5604
        %v5606 = vsel %vm5595, nan, %v5605
        %v5607 = vmul.f32 %v5451, %v5451
        %v5608 = vmul.f32 %v5606, %v5606
        %5610 = vset.pattern.permute.xlu0 0
        %5611 = vperm.xlu0 %5610, %v5281
        %v5612 = vpop.permute.xlu0 %5611
        %5615 = vset.pattern.permute.xlu0 0
        %5616 = vperm.xlu0 %5615, %v5282
        %v5617 = vpop.permute.xlu0 %5616
        %v5619 = vmul.f32 %v5612, %v5607
        %v5620 = vmul.f32 %v5617, %v5608
        %v5621 = vadd.f32 %v5277, %v5619
        %v5622 = vadd.f32 %v5279, %v5620
        %v5623 = vld [vmem:[#allocation20] sm:$0xf]
        %v5624 = vld [vmem:[#allocation20 + $0x4] sm:$0xf]
        %v5625 = vpack.c.bf16 %v5622, %v5621
        %v5626 = vld [vmem:[%s93] sm:$0xff]
        %v5627 = vld [vmem:[%s93 + $0x8] sm:$0xff]
        %5629 = vset.pattern.permute.xlu0 0
        %5630 = vperm.xlu0 %5629, %v5626
        %v5631 = vpop.permute.xlu0 %5630
        %5634 = vset.pattern.permute.xlu0 0
        %5635 = vperm.xlu0 %5634, %v5627
        %v5636 = vpop.permute.xlu0 %5635
        %v5640 = vunpack.c.l.b16 %v5623
        %v5641 = vunpack.c.l.b16 %v5624
        %v5642 = vpack.c.b16 %v5641, %v5640
        %v5644 = vsel %vm4823, %v5642, 0
        %5646 = vmatpush.bf16.msra.mxu0 0
        %5647 = vmatpush.bf16.msra.mxu0 0
        %5648 = vmatpush.bf16.msra.mxu0 0
        %5649 = vmatpush.bf16.msra.mxu0 0
        %5650 = vmatpush.bf16.msra.mxu0 0
        %5651 = vmatpush.bf16.msra.mxu0 0
        %5652 = vmatpush.bf16.msra.mxu0 0
        %5653 = vmatpush.bf16.msra.mxu0 %v5625
        %5654 = vmatmul.bf16.gmra.mxu0 %v5644
        %v5655 = vpop.f32.mrf.mxu0
        %v5656 = vadd.f32 %v5631, %v5655
        %v5657 = vpop.f32.mrf.mxu0
        %v5658 = vadd.f32 %v5636, %v5657
        %5659 = vdwg.mxu0
        %v5660 = vadd.f32 %v5656, %v4841
        %v5661 = vadd.f32 %v5658, %v4842
        %v5662 = vld [vmem:[%s97] sm:$0xff]
        %v5663 = vld [vmem:[%s97 + $0x8] sm:$0xff]
        %v5664 = vld [vmem:[%s95] sm:$0xff]
        %v5665 = vld [vmem:[%s95 + $0x8] sm:$0xff]
        %5667 = vset.pattern.permute.xlu0 0
        %5668 = vperm.xlu0 %5667, %v5664
        %v5669 = vpop.permute.xlu0 %5668
        %5672 = vset.pattern.permute.xlu0 0
        %5673 = vperm.xlu0 %5672, %v5665
        %v5674 = vpop.permute.xlu0 %5673
        %v5676 = vmul.f32 %v5669, %v5660
        %v5677 = vmul.f32 %v5674, %v5661
        %v5678 = vand.u32 2147483647, %v5676
        %vm5679 = vcmp.le.f32.partialorder %v5678, 0.7853982
        %vm5680 = vcmp.lt.s32.totalorder %v5676, 0
        %v5681 = vand.u32 %v5676, 2139095040
        %v5682 = vshrl.u32 %v5681, 23
        %v5683 = vsub.s32 %v5682, 127
        %v5684 = vand.u32 2147483647, %v5676
        %v5685 = vand.u32 %v5684, 8388607
        %v5686 = vor.u32 %v5685, 8388608
        %v5687 = vsub.s32 0, %v5686
        %v5688 = vadd.s32 %v5683, 1
        %vm5689 = vcmp.gt.s32.totalorder %v5688, 0
        %v5690 = vsel %vm5689, %v5688, 0
        %v5691 = vshrl.u32 %v5690, 5
        %v5692 = vand.u32 %v5690, 31
        %v5693 = vsub.s32 32, %v5692
        %v5694 = vshrl.u32 683565275, %v5693
        %v5695 = vshll.u32 683565275, %v5692
        %v5696 = vshrl.u32 2475754826, %v5693
        %v5697 = vor.u32 %v5695, %v5696
        %v5698 = vshll.u32 2475754826, %v5692
        %v5699 = vshrl.u32 2131351028, %v5693
        %v5700 = vor.u32 %v5698, %v5699
        %v5701 = vshll.u32 2131351028, %v5692
        %v5702 = vshrl.u32 2102212464, %v5693
        %v5703 = vor.u32 %v5701, %v5702
        %v5704 = vshll.u32 2102212464, %v5692
        %v5705 = vshrl.u32 920167782, %v5693
        %v5706 = vor.u32 %v5704, %v5705
        %v5707 = vshll.u32 920167782, %v5692
        %v5708 = vshrl.u32 1326507024, %v5693
        %v5709 = vor.u32 %v5707, %v5708
        %vm5710 = vcmp.lt.s32.totalorder %v5691, 1
        %vm5711 = vcmp.lt.s32.totalorder %v5691, 2
        %vm5712 = vcmp.lt.s32.totalorder %v5691, 3
        %vm5713 = vcmp.lt.s32.totalorder %v5691, 4
        %v5714 = vsel %vm5710, %v5694, %v5697
        %v5715 = vsel %vm5713, %v5703, 2102212464
        %v5716 = vsel %vm5712, %v5700, %v5715
        %v5717 = vsel %vm5711, %v5714, %v5716
        %v5718 = vsel %vm5710, %v5697, %v5700
        %v5719 = vsel %vm5713, %v5706, 920167782
        %v5720 = vsel %vm5712, %v5703, %v5719
        %v5721 = vsel %vm5711, %v5718, %v5720
        %v5722 = vsel %vm5710, %v5700, %v5703
        %v5723 = vsel %vm5713, %v5709, 1326507024
        %v5724 = vsel %vm5712, %v5706, %v5723
        %v5725 = vsel %vm5711, %v5722, %v5724
        %v5726 = vshll.u32 %v5686, 8
        %v5727 = vand.u32 %v5726, 65535
        %v5728 = vshrl.u32 %v5726, 16
        %v5729 = vand.u32 %v5725, 65535
        %v5730 = vshrl.u32 %v5725, 16
        %v5731 = vmul.u32 %v5727, %v5729
        %v5732 = vmul.u32 %v5727, %v5730
        %v5733 = vmul.u32 %v5728, %v5729
        %v5734 = vmul.u32 %v5728, %v5730
        %v5735 = vshll.u32 %v5732, 16
        %v5736 = vshrl.u32 %v5732, 16
        %v5737 = vshll.u32 %v5733, 16
        %v5738 = vshrl.u32 %v5733, 16
        %vm5739 = vc.u32 %v5731, %v5735
        %v5740 = vsel %vm5739, 1, 0
        %v5741 = vadd.s32 %v5731, %v5735
        %v5742 = vadd.s32 %v5734, %v5740
        %vm5743 = vc.u32 %v5741, %v5737
        %v5744 = vsel %vm5743, 1, 0
        %v5745 = vadd.s32 %v5741, %v5737
        %v5746 = vadd.s32 %v5742, %v5744
        %v5747 = vadd.s32 %v5746, %v5736
        %v5748 = vadd.s32 %v5747, %v5738
        %v5749 = vand.u32 %v5726, 65535
        %v5750 = vshrl.u32 %v5726, 16
        %v5751 = vand.u32 %v5721, 65535
        %v5752 = vshrl.u32 %v5721, 16
        %v5753 = vmul.u32 %v5749, %v5751
        %v5754 = vmul.u32 %v5749, %v5752
        %v5755 = vmul.u32 %v5750, %v5751
        %v5756 = vmul.u32 %v5750, %v5752
        %v5757 = vshll.u32 %v5754, 16
        %v5758 = vshrl.u32 %v5754, 16
        %v5759 = vshll.u32 %v5755, 16
        %v5760 = vshrl.u32 %v5755, 16
        %vm5761 = vc.u32 %v5753, %v5757
        %v5762 = vsel %vm5761, 1, 0
        %v5763 = vadd.s32 %v5753, %v5757
        %v5764 = vadd.s32 %v5756, %v5762
        %vm5765 = vc.u32 %v5763, %v5759
        %v5766 = vsel %vm5765, 1, 0
        %v5767 = vadd.s32 %v5763, %v5759
        %v5768 = vadd.s32 %v5764, %v5766
        %v5769 = vadd.s32 %v5768, %v5758
        %v5770 = vadd.s32 %v5769, %v5760
        %v5771 = vmul.u32 %v5726, %v5717
        %v5772 = vadd.s32 %v5748, %v5767
        %vm5773 = vc.u32 %v5748, %v5767
        %v5774 = vadd.s32 %v5770, 1
        %v5775 = vsel %vm5773, %v5774, %v5770
        %v5776 = vadd.s32 %v5771, %v5775
        %v5777 = vadd.s32 %v5776, 536870912
        %v5778 = vshrl.u32 %v5777, 30
        %v5779 = vshll.u32 %v5778, 30
        %v5780 = vsub.s32 %v5776, %v5779
        %vm5781 = vcmp.lt.s32.totalorder %v5780, 0
        %v5782 = vsub.s32 0, %v5780
        %v5783 = vsel %vm5781, %v5782, %v5780
        %v5784 = vclz %v5783
        %v5785 = vsub.s32 %v5784, 2
        %vm5786 = vcmp.gt.s32.totalorder 0, %v5785
        %v5787 = vsel %vm5786, 0, %v5785
        %v5788 = vsub.s32 32, %v5787
        %v5789 = vshll.u32 %v5780, %v5787
        %v5790 = vshrl.u32 %v5772, %v5788
        %v5791 = vor.u32 %v5789, %v5790
        %v5792 = vsub.s32 4294967266, %v5787
        %v5793 = vadd.s32 %v5792, 127
        %v5794 = vshll.u32 %v5793, 23
        %v5795 = vor.u32 4788187, %v5794
        %v5796 = vand.u32 2147483647, %v5795
        %v5798 = vcvt.s32.f32 %v5791
        %v5799 = vmul.f32 %v5798, %v5796
        %v5800 = vxor.u32 %v5799, 2147483648
        %v5801 = vsel %vm5680, %v5800, %v5799
        %v5802 = vsub.s32 4, %v5778
        %v5803 = vsel %vm5680, %v5802, %v5778
        %v5804 = vsel %vm5679, %v5676, %v5801
        %v5805 = vsel %vm5679, 0, %v5803
        %v5806 = vmul.f32 %v5804, %v5804
        %v5807 = vmul.f32 %v5806, -0.001358992
        %v5808 = vadd.f32 %v5807, 0.041655596
        %v5809 = vmul.f32 %v5806, %v5808
        %v5810 = vadd.f32 %v5809, -0.4999988
        %v5811 = vmul.f32 %v5806, %v5810
        %v5812 = vadd.f32 1.0, %v5811
        %v5813 = vmul.f32 %v5804, %v5804
        %v5814 = vmul.f32 %v5813, -0.00019511016
        %v5815 = vadd.f32 %v5814, 0.008332121
        %v5816 = vmul.f32 %v5813, %v5815
        %v5817 = vadd.f32 %v5816, -0.16666654
        %v5818 = vmul.f32 %v5813, %v5817
        %v5819 = vadd.f32 %v5818, 1.0
        %v5820 = vmul.f32 %v5819, %v5804
        %vm5821 = vweird.f32 %v5676
        %v5822 = vadd.s32 %v5805, 3
        %v5823 = vand.u32 %v5822, 3
        %vm5824 = vcmp.lt.s32.totalorder %v5823, 2
        %vm5825 = vcmp.eq.s32.totalorder %v5823, 0
        %v5826 = vxor.u32 %v5820, 2147483648
        %v5827 = vsel %vm5825, %v5812, %v5826
        %vm5828 = vcmp.eq.s32.totalorder %v5823, 2
        %v5829 = vxor.u32 %v5812, 2147483648
        %v5830 = vsel %vm5828, %v5829, %v5820
        %v5831 = vsel %vm5824, %v5827, %v5830
        %v5832 = vsel %vm5821, nan, %v5831
        %v5833 = vand.u32 2147483647, %v5677
        %vm5834 = vcmp.le.f32.partialorder %v5833, 0.7853982
        %vm5835 = vcmp.lt.s32.totalorder %v5677, 0
        %v5836 = vand.u32 %v5677, 2139095040
        %v5837 = vshrl.u32 %v5836, 23
        %v5838 = vsub.s32 %v5837, 127
        %v5839 = vand.u32 2147483647, %v5677
        %v5840 = vand.u32 %v5839, 8388607
        %v5841 = vor.u32 %v5840, 8388608
        %v5842 = vsub.s32 0, %v5841
        %v5843 = vadd.s32 %v5838, 1
        %vm5844 = vcmp.gt.s32.totalorder %v5843, 0
        %v5845 = vsel %vm5844, %v5843, 0
        %v5846 = vshrl.u32 %v5845, 5
        %v5847 = vand.u32 %v5845, 31
        %v5848 = vsub.s32 32, %v5847
        %v5849 = vshrl.u32 683565275, %v5848
        %v5850 = vshll.u32 683565275, %v5847
        %v5851 = vshrl.u32 2475754826, %v5848
        %v5852 = vor.u32 %v5850, %v5851
        %v5853 = vshll.u32 2475754826, %v5847
        %v5854 = vshrl.u32 2131351028, %v5848
        %v5855 = vor.u32 %v5853, %v5854
        %v5856 = vshll.u32 2131351028, %v5847
        %v5857 = vshrl.u32 2102212464, %v5848
        %v5858 = vor.u32 %v5856, %v5857
        %v5859 = vshll.u32 2102212464, %v5847
        %v5860 = vshrl.u32 920167782, %v5848
        %v5861 = vor.u32 %v5859, %v5860
        %v5862 = vshll.u32 920167782, %v5847
        %v5863 = vshrl.u32 1326507024, %v5848
        %v5864 = vor.u32 %v5862, %v5863
        %vm5865 = vcmp.lt.s32.totalorder %v5846, 1
        %vm5866 = vcmp.lt.s32.totalorder %v5846, 2
        %vm5867 = vcmp.lt.s32.totalorder %v5846, 3
        %vm5868 = vcmp.lt.s32.totalorder %v5846, 4
        %v5869 = vsel %vm5865, %v5849, %v5852
        %v5870 = vsel %vm5868, %v5858, 2102212464
        %v5871 = vsel %vm5867, %v5855, %v5870
        %v5872 = vsel %vm5866, %v5869, %v5871
        %v5873 = vsel %vm5865, %v5852, %v5855
        %v5874 = vsel %vm5868, %v5861, 920167782
        %v5875 = vsel %vm5867, %v5858, %v5874
        %v5876 = vsel %vm5866, %v5873, %v5875
        %v5877 = vsel %vm5865, %v5855, %v5858
        %v5878 = vsel %vm5868, %v5864, 1326507024
        %v5879 = vsel %vm5867, %v5861, %v5878
        %v5880 = vsel %vm5866, %v5877, %v5879
        %v5881 = vshll.u32 %v5841, 8
        %v5882 = vand.u32 %v5881, 65535
        %v5883 = vshrl.u32 %v5881, 16
        %v5884 = vand.u32 %v5880, 65535
        %v5885 = vshrl.u32 %v5880, 16
        %v5886 = vmul.u32 %v5882, %v5884
        %v5887 = vmul.u32 %v5882, %v5885
        %v5888 = vmul.u32 %v5883, %v5884
        %v5889 = vmul.u32 %v5883, %v5885
        %v5890 = vshll.u32 %v5887, 16
        %v5891 = vshrl.u32 %v5887, 16
        %v5892 = vshll.u32 %v5888, 16
        %v5893 = vshrl.u32 %v5888, 16
        %vm5894 = vc.u32 %v5886, %v5890
        %v5895 = vsel %vm5894, 1, 0
        %v5896 = vadd.s32 %v5886, %v5890
        %v5897 = vadd.s32 %v5889, %v5895
        %vm5898 = vc.u32 %v5896, %v5892
        %v5899 = vsel %vm5898, 1, 0
        %v5900 = vadd.s32 %v5896, %v5892
        %v5901 = vadd.s32 %v5897, %v5899
        %v5902 = vadd.s32 %v5901, %v5891
        %v5903 = vadd.s32 %v5902, %v5893
        %v5904 = vand.u32 %v5881, 65535
        %v5905 = vshrl.u32 %v5881, 16
        %v5906 = vand.u32 %v5876, 65535
        %v5907 = vshrl.u32 %v5876, 16
        %v5908 = vmul.u32 %v5904, %v5906
        %v5909 = vmul.u32 %v5904, %v5907
        %v5910 = vmul.u32 %v5905, %v5906
        %v5911 = vmul.u32 %v5905, %v5907
        %v5912 = vshll.u32 %v5909, 16
        %v5913 = vshrl.u32 %v5909, 16
        %v5914 = vshll.u32 %v5910, 16
        %v5915 = vshrl.u32 %v5910, 16
        %vm5916 = vc.u32 %v5908, %v5912
        %v5917 = vsel %vm5916, 1, 0
        %v5918 = vadd.s32 %v5908, %v5912
        %v5919 = vadd.s32 %v5911, %v5917
        %vm5920 = vc.u32 %v5918, %v5914
        %v5921 = vsel %vm5920, 1, 0
        %v5922 = vadd.s32 %v5918, %v5914
        %v5923 = vadd.s32 %v5919, %v5921
        %v5924 = vadd.s32 %v5923, %v5913
        %v5925 = vadd.s32 %v5924, %v5915
        %v5926 = vmul.u32 %v5881, %v5872
        %v5927 = vadd.s32 %v5903, %v5922
        %vm5928 = vc.u32 %v5903, %v5922
        %v5929 = vadd.s32 %v5925, 1
        %v5930 = vsel %vm5928, %v5929, %v5925
        %v5931 = vadd.s32 %v5926, %v5930
        %v5932 = vadd.s32 %v5931, 536870912
        %v5933 = vshrl.u32 %v5932, 30
        %v5934 = vshll.u32 %v5933, 30
        %v5935 = vsub.s32 %v5931, %v5934
        %vm5936 = vcmp.lt.s32.totalorder %v5935, 0
        %v5937 = vsub.s32 0, %v5935
        %v5938 = vsel %vm5936, %v5937, %v5935
        %v5939 = vclz %v5938
        %v5940 = vsub.s32 %v5939, 2
        %vm5941 = vcmp.gt.s32.totalorder 0, %v5940
        %v5942 = vsel %vm5941, 0, %v5940
        %v5943 = vsub.s32 32, %v5942
        %v5944 = vshll.u32 %v5935, %v5942
        %v5945 = vshrl.u32 %v5927, %v5943
        %v5946 = vor.u32 %v5944, %v5945
        %v5947 = vsub.s32 4294967266, %v5942
        %v5948 = vadd.s32 %v5947, 127
        %v5949 = vshll.u32 %v5948, 23
        %v5950 = vor.u32 4788187, %v5949
        %v5951 = vand.u32 2147483647, %v5950
        %v5953 = vcvt.s32.f32 %v5946
        %v5954 = vmul.f32 %v5953, %v5951
        %v5955 = vxor.u32 %v5954, 2147483648
        %v5956 = vsel %vm5835, %v5955, %v5954
        %v5957 = vsub.s32 4, %v5933
        %v5958 = vsel %vm5835, %v5957, %v5933
        %v5959 = vsel %vm5834, %v5677, %v5956
        %v5960 = vsel %vm5834, 0, %v5958
        %v5961 = vmul.f32 %v5959, %v5959
        %v5962 = vmul.f32 %v5961, -0.001358992
        %v5963 = vadd.f32 %v5962, 0.041655596
        %v5964 = vmul.f32 %v5961, %v5963
        %v5965 = vadd.f32 %v5964, -0.4999988
        %v5966 = vmul.f32 %v5961, %v5965
        %v5967 = vadd.f32 1.0, %v5966
        %v5968 = vmul.f32 %v5959, %v5959
        %v5969 = vmul.f32 %v5968, -0.00019511016
        %v5970 = vadd.f32 %v5969, 0.008332121
        %v5971 = vmul.f32 %v5968, %v5970
        %v5972 = vadd.f32 %v5971, -0.16666654
        %v5973 = vmul.f32 %v5968, %v5972
        %v5974 = vadd.f32 %v5973, 1.0
        %v5975 = vmul.f32 %v5974, %v5959
        %vm5976 = vweird.f32 %v5677
        %v5977 = vadd.s32 %v5960, 3
        %v5978 = vand.u32 %v5977, 3
        %vm5979 = vcmp.lt.s32.totalorder %v5978, 2
        %vm5980 = vcmp.eq.s32.totalorder %v5978, 0
        %v5981 = vxor.u32 %v5975, 2147483648
        %v5982 = vsel %vm5980, %v5967, %v5981
        %vm5983 = vcmp.eq.s32.totalorder %v5978, 2
        %v5984 = vxor.u32 %v5967, 2147483648
        %v5985 = vsel %vm5983, %v5984, %v5975
        %v5986 = vsel %vm5979, %v5982, %v5985
        %v5987 = vsel %vm5976, nan, %v5986
        %v5988 = vmul.f32 %v5832, %v5832
        %v5989 = vmul.f32 %v5987, %v5987
        %5991 = vset.pattern.permute.xlu0 0
        %5992 = vperm.xlu0 %5991, %v5662
        %v5993 = vpop.permute.xlu0 %5992
        %5996 = vset.pattern.permute.xlu0 0
        %5997 = vperm.xlu0 %5996, %v5663
        %v5998 = vpop.permute.xlu0 %5997
        %v6000 = vmul.f32 %v5993, %v5988
        %v6001 = vmul.f32 %v5998, %v5989
        %v6002 = vadd.f32 %v5660, %v6000
        %v6003 = vadd.f32 %v5661, %v6001
        %6004 = vst [vmem:[#allocation2] sm:$0xff] 0.0
        %6005 = vst [vmem:[#allocation2 + $0x8] sm:$0xff] 0.0
        %6008 = vrot.lane.b32.xlu0 %v6002, 27
        %v6009 = vpop.permute.xlu0 %6008
        %6010 = vrot.lane.b32.xlu0 %v6003, 27
        %v6011 = vpop.permute.xlu0 %6010
        %vm6014 = vcmask 482520
        %6015 = vst.msk [vmem:[#allocation2] sm:$0xff] %vm6014, %v6009
        %6016 = vst.msk [vmem:[#allocation2 + $0x8] sm:$0xff] %vm6014, %v6011
        %v6017 = vld [vmem:[#allocation2] sm:$0xff]
        %v6018 = vld [vmem:[#allocation2 + $0x8] sm:$0xff]
        %6021 = vrot.lane.b32.xlu0 %v6017, 119
        %v6022 = vpop.permute.xlu0 %6021
        %6023 = vrot.lane.b32.xlu0 %v6018, 119
        %v6024 = vpop.permute.xlu0 %6023
        %6027 = vrot.lane.b32.xlu0 %v6017, 110
        %v6028 = vpop.permute.xlu0 %6027
        %6029 = vrot.lane.b32.xlu0 %v6018, 110
        %v6030 = vpop.permute.xlu0 %6029
        %6033 = vrot.lane.b32.xlu0 %v6017, 101
        %v6034 = vpop.permute.xlu0 %6033
        %6035 = vrot.lane.b32.xlu0 %v6018, 101
        %v6036 = vpop.permute.xlu0 %6035
        %6039 = vrot.lane.b32.xlu0 %v6017, 92
        %v6040 = vpop.permute.xlu0 %6039
        %6041 = vrot.lane.b32.xlu0 %v6018, 92
        %v6042 = vpop.permute.xlu0 %6041
        %6045 = vrot.lane.b32.xlu0 %v6017, 83
        %v6046 = vpop.permute.xlu0 %6045
        %6047 = vrot.lane.b32.xlu0 %v6018, 83
        %v6048 = vpop.permute.xlu0 %6047
        %6051 = vrot.lane.b32.xlu0 %v6017, 74
        %v6052 = vpop.permute.xlu0 %6051
        %6053 = vrot.lane.b32.xlu0 %v6018, 74
        %v6054 = vpop.permute.xlu0 %6053
        %v6057 = vld [vmem:[#allocation22] sm:$0xf]
        %v6058 = vld [vmem:[#allocation22 + $0x4] sm:$0xf]
        %v6059 = vpack.c.bf16 %v6018, %v6017
        %v6060 = vpack.c.bf16 %v6024, %v6022
        %v6061 = vpack.c.bf16 %v6030, %v6028
        %v6062 = vpack.c.bf16 %v6036, %v6034
        %v6063 = vpack.c.bf16 %v6042, %v6040
        %v6064 = vpack.c.bf16 %v6048, %v6046
        %v6065 = vpack.c.bf16 %v6054, %v6052
        %v6066 = vld [vmem:[%s101] sm:$0xff]
        %v6067 = vld [vmem:[%s101 + $0x8] sm:$0xff]
        %6069 = vset.pattern.permute.xlu0 0
        %6070 = vperm.xlu0 %6069, %v6066
        %v6071 = vpop.permute.xlu0 %6070
        %6074 = vset.pattern.permute.xlu0 0
        %6075 = vperm.xlu0 %6074, %v6067
        %v6076 = vpop.permute.xlu0 %6075
        %v6080 = vunpack.c.l.b16 %v6057
        %v6081 = vunpack.c.l.b16 %v6058
        %v6082 = vpack.c.b16 %v6081, %v6080
        %v6084 = vsel %vm4443, %v6082, 0
        %6086 = vmatpush.bf16.msra.mxu0 0
        %6087 = vmatpush.bf16.msra.mxu0 %v6065
        %6088 = vmatpush.bf16.msra.mxu0 %v6064
        %6089 = vmatpush.bf16.msra.mxu0 %v6063
        %6090 = vmatpush.bf16.msra.mxu0 %v6062
        %6091 = vmatpush.bf16.msra.mxu0 %v6061
        %6092 = vmatpush.bf16.msra.mxu0 %v6060
        %6093 = vmatpush.bf16.msra.mxu0 %v6059
        %6094 = vmatmul.bf16.gmra.mxu0 %v6084
        %v6095 = vpop.f32.mrf.mxu0
        %v6096 = vadd.f32 %v6071, %v6095
        %v6097 = vpop.f32.mrf.mxu0
        %v6098 = vadd.f32 %v6076, %v6097
        %6099 = vdwg.mxu0
        %v6100 = vld [vmem:[%s105] sm:$0xff]
        %v6101 = vld [vmem:[%s105 + $0x8] sm:$0xff]
        %v6102 = vld [vmem:[%s103] sm:$0xff]
        %v6103 = vld [vmem:[%s103 + $0x8] sm:$0xff]
        %6105 = vset.pattern.permute.xlu0 0
        %6106 = vperm.xlu0 %6105, %v6102
        %v6107 = vpop.permute.xlu0 %6106
        %6110 = vset.pattern.permute.xlu0 0
        %6111 = vperm.xlu0 %6110, %v6103
        %v6112 = vpop.permute.xlu0 %6111
        %v6114 = vmul.f32 %v6107, %v6096
        %v6115 = vmul.f32 %v6112, %v6098
        %v6116 = vand.u32 2147483647, %v6114
        %vm6117 = vcmp.le.f32.partialorder %v6116, 0.7853982
        %vm6118 = vcmp.lt.s32.totalorder %v6114, 0
        %v6119 = vand.u32 %v6114, 2139095040
        %v6120 = vshrl.u32 %v6119, 23
        %v6121 = vsub.s32 %v6120, 127
        %v6122 = vand.u32 2147483647, %v6114
        %v6123 = vand.u32 %v6122, 8388607
        %v6124 = vor.u32 %v6123, 8388608
        %v6125 = vsub.s32 0, %v6124
        %v6126 = vadd.s32 %v6121, 1
        %vm6127 = vcmp.gt.s32.totalorder %v6126, 0
        %v6128 = vsel %vm6127, %v6126, 0
        %v6129 = vshrl.u32 %v6128, 5
        %v6130 = vand.u32 %v6128, 31
        %v6131 = vsub.s32 32, %v6130
        %v6132 = vshrl.u32 683565275, %v6131
        %v6133 = vshll.u32 683565275, %v6130
        %v6134 = vshrl.u32 2475754826, %v6131
        %v6135 = vor.u32 %v6133, %v6134
        %v6136 = vshll.u32 2475754826, %v6130
        %v6137 = vshrl.u32 2131351028, %v6131
        %v6138 = vor.u32 %v6136, %v6137
        %v6139 = vshll.u32 2131351028, %v6130
        %v6140 = vshrl.u32 2102212464, %v6131
        %v6141 = vor.u32 %v6139, %v6140
        %v6142 = vshll.u32 2102212464, %v6130
        %v6143 = vshrl.u32 920167782, %v6131
        %v6144 = vor.u32 %v6142, %v6143
        %v6145 = vshll.u32 920167782, %v6130
        %v6146 = vshrl.u32 1326507024, %v6131
        %v6147 = vor.u32 %v6145, %v6146
        %vm6148 = vcmp.lt.s32.totalorder %v6129, 1
        %vm6149 = vcmp.lt.s32.totalorder %v6129, 2
        %vm6150 = vcmp.lt.s32.totalorder %v6129, 3
        %vm6151 = vcmp.lt.s32.totalorder %v6129, 4
        %v6152 = vsel %vm6148, %v6132, %v6135
        %v6153 = vsel %vm6151, %v6141, 2102212464
        %v6154 = vsel %vm6150, %v6138, %v6153
        %v6155 = vsel %vm6149, %v6152, %v6154
        %v6156 = vsel %vm6148, %v6135, %v6138
        %v6157 = vsel %vm6151, %v6144, 920167782
        %v6158 = vsel %vm6150, %v6141, %v6157
        %v6159 = vsel %vm6149, %v6156, %v6158
        %v6160 = vsel %vm6148, %v6138, %v6141
        %v6161 = vsel %vm6151, %v6147, 1326507024
        %v6162 = vsel %vm6150, %v6144, %v6161
        %v6163 = vsel %vm6149, %v6160, %v6162
        %v6164 = vshll.u32 %v6124, 8
        %v6165 = vand.u32 %v6164, 65535
        %v6166 = vshrl.u32 %v6164, 16
        %v6167 = vand.u32 %v6163, 65535
        %v6168 = vshrl.u32 %v6163, 16
        %v6169 = vmul.u32 %v6165, %v6167
        %v6170 = vmul.u32 %v6165, %v6168
        %v6171 = vmul.u32 %v6166, %v6167
        %v6172 = vmul.u32 %v6166, %v6168
        %v6173 = vshll.u32 %v6170, 16
        %v6174 = vshrl.u32 %v6170, 16
        %v6175 = vshll.u32 %v6171, 16
        %v6176 = vshrl.u32 %v6171, 16
        %vm6177 = vc.u32 %v6169, %v6173
        %v6178 = vsel %vm6177, 1, 0
        %v6179 = vadd.s32 %v6169, %v6173
        %v6180 = vadd.s32 %v6172, %v6178
        %vm6181 = vc.u32 %v6179, %v6175
        %v6182 = vsel %vm6181, 1, 0
        %v6183 = vadd.s32 %v6179, %v6175
        %v6184 = vadd.s32 %v6180, %v6182
        %v6185 = vadd.s32 %v6184, %v6174
        %v6186 = vadd.s32 %v6185, %v6176
        %v6187 = vand.u32 %v6164, 65535
        %v6188 = vshrl.u32 %v6164, 16
        %v6189 = vand.u32 %v6159, 65535
        %v6190 = vshrl.u32 %v6159, 16
        %v6191 = vmul.u32 %v6187, %v6189
        %v6192 = vmul.u32 %v6187, %v6190
        %v6193 = vmul.u32 %v6188, %v6189
        %v6194 = vmul.u32 %v6188, %v6190
        %v6195 = vshll.u32 %v6192, 16
        %v6196 = vshrl.u32 %v6192, 16
        %v6197 = vshll.u32 %v6193, 16
        %v6198 = vshrl.u32 %v6193, 16
        %vm6199 = vc.u32 %v6191, %v6195
        %v6200 = vsel %vm6199, 1, 0
        %v6201 = vadd.s32 %v6191, %v6195
        %v6202 = vadd.s32 %v6194, %v6200
        %vm6203 = vc.u32 %v6201, %v6197
        %v6204 = vsel %vm6203, 1, 0
        %v6205 = vadd.s32 %v6201, %v6197
        %v6206 = vadd.s32 %v6202, %v6204
        %v6207 = vadd.s32 %v6206, %v6196
        %v6208 = vadd.s32 %v6207, %v6198
        %v6209 = vmul.u32 %v6164, %v6155
        %v6210 = vadd.s32 %v6186, %v6205
        %vm6211 = vc.u32 %v6186, %v6205
        %v6212 = vadd.s32 %v6208, 1
        %v6213 = vsel %vm6211, %v6212, %v6208
        %v6214 = vadd.s32 %v6209, %v6213
        %v6215 = vadd.s32 %v6214, 536870912
        %v6216 = vshrl.u32 %v6215, 30
        %v6217 = vshll.u32 %v6216, 30
        %v6218 = vsub.s32 %v6214, %v6217
        %vm6219 = vcmp.lt.s32.totalorder %v6218, 0
        %v6220 = vsub.s32 0, %v6218
        %v6221 = vsel %vm6219, %v6220, %v6218
        %v6222 = vclz %v6221
        %v6223 = vsub.s32 %v6222, 2
        %vm6224 = vcmp.gt.s32.totalorder 0, %v6223
        %v6225 = vsel %vm6224, 0, %v6223
        %v6226 = vsub.s32 32, %v6225
        %v6227 = vshll.u32 %v6218, %v6225
        %v6228 = vshrl.u32 %v6210, %v6226
        %v6229 = vor.u32 %v6227, %v6228
        %v6230 = vsub.s32 4294967266, %v6225
        %v6231 = vadd.s32 %v6230, 127
        %v6232 = vshll.u32 %v6231, 23
        %v6233 = vor.u32 4788187, %v6232
        %v6234 = vand.u32 2147483647, %v6233
        %v6236 = vcvt.s32.f32 %v6229
        %v6237 = vmul.f32 %v6236, %v6234
        %v6238 = vxor.u32 %v6237, 2147483648
        %v6239 = vsel %vm6118, %v6238, %v6237
        %v6240 = vsub.s32 4, %v6216
        %v6241 = vsel %vm6118, %v6240, %v6216
        %v6242 = vsel %vm6117, %v6114, %v6239
        %v6243 = vsel %vm6117, 0, %v6241
        %v6244 = vmul.f32 %v6242, %v6242
        %v6245 = vmul.f32 %v6244, -0.001358992
        %v6246 = vadd.f32 %v6245, 0.041655596
        %v6247 = vmul.f32 %v6244, %v6246
        %v6248 = vadd.f32 %v6247, -0.4999988
        %v6249 = vmul.f32 %v6244, %v6248
        %v6250 = vadd.f32 1.0, %v6249
        %v6251 = vmul.f32 %v6242, %v6242
        %v6252 = vmul.f32 %v6251, -0.00019511016
        %v6253 = vadd.f32 %v6252, 0.008332121
        %v6254 = vmul.f32 %v6251, %v6253
        %v6255 = vadd.f32 %v6254, -0.16666654
        %v6256 = vmul.f32 %v6251, %v6255
        %v6257 = vadd.f32 %v6256, 1.0
        %v6258 = vmul.f32 %v6257, %v6242
        %vm6259 = vweird.f32 %v6114
        %v6260 = vadd.s32 %v6243, 3
        %v6261 = vand.u32 %v6260, 3
        %vm6262 = vcmp.lt.s32.totalorder %v6261, 2
        %vm6263 = vcmp.eq.s32.totalorder %v6261, 0
        %v6264 = vxor.u32 %v6258, 2147483648
        %v6265 = vsel %vm6263, %v6250, %v6264
        %vm6266 = vcmp.eq.s32.totalorder %v6261, 2
        %v6267 = vxor.u32 %v6250, 2147483648
        %v6268 = vsel %vm6266, %v6267, %v6258
        %v6269 = vsel %vm6262, %v6265, %v6268
        %v6270 = vsel %vm6259, nan, %v6269
        %v6271 = vand.u32 2147483647, %v6115
        %vm6272 = vcmp.le.f32.partialorder %v6271, 0.7853982
        %vm6273 = vcmp.lt.s32.totalorder %v6115, 0
        %v6274 = vand.u32 %v6115, 2139095040
        %v6275 = vshrl.u32 %v6274, 23
        %v6276 = vsub.s32 %v6275, 127
        %v6277 = vand.u32 2147483647, %v6115
        %v6278 = vand.u32 %v6277, 8388607
        %v6279 = vor.u32 %v6278, 8388608
        %v6280 = vsub.s32 0, %v6279
        %v6281 = vadd.s32 %v6276, 1
        %vm6282 = vcmp.gt.s32.totalorder %v6281, 0
        %v6283 = vsel %vm6282, %v6281, 0
        %v6284 = vshrl.u32 %v6283, 5
        %v6285 = vand.u32 %v6283, 31
        %v6286 = vsub.s32 32, %v6285
        %v6287 = vshrl.u32 683565275, %v6286
        %v6288 = vshll.u32 683565275, %v6285
        %v6289 = vshrl.u32 2475754826, %v6286
        %v6290 = vor.u32 %v6288, %v6289
        %v6291 = vshll.u32 2475754826, %v6285
        %v6292 = vshrl.u32 2131351028, %v6286
        %v6293 = vor.u32 %v6291, %v6292
        %v6294 = vshll.u32 2131351028, %v6285
        %v6295 = vshrl.u32 2102212464, %v6286
        %v6296 = vor.u32 %v6294, %v6295
        %v6297 = vshll.u32 2102212464, %v6285
        %v6298 = vshrl.u32 920167782, %v6286
        %v6299 = vor.u32 %v6297, %v6298
        %v6300 = vshll.u32 920167782, %v6285
        %v6301 = vshrl.u32 1326507024, %v6286
        %v6302 = vor.u32 %v6300, %v6301
        %vm6303 = vcmp.lt.s32.totalorder %v6284, 1
        %vm6304 = vcmp.lt.s32.totalorder %v6284, 2
        %vm6305 = vcmp.lt.s32.totalorder %v6284, 3
        %vm6306 = vcmp.lt.s32.totalorder %v6284, 4
        %v6307 = vsel %vm6303, %v6287, %v6290
        %v6308 = vsel %vm6306, %v6296, 2102212464
        %v6309 = vsel %vm6305, %v6293, %v6308
        %v6310 = vsel %vm6304, %v6307, %v6309
        %v6311 = vsel %vm6303, %v6290, %v6293
        %v6312 = vsel %vm6306, %v6299, 920167782
        %v6313 = vsel %vm6305, %v6296, %v6312
        %v6314 = vsel %vm6304, %v6311, %v6313
        %v6315 = vsel %vm6303, %v6293, %v6296
        %v6316 = vsel %vm6306, %v6302, 1326507024
        %v6317 = vsel %vm6305, %v6299, %v6316
        %v6318 = vsel %vm6304, %v6315, %v6317
        %v6319 = vshll.u32 %v6279, 8
        %v6320 = vand.u32 %v6319, 65535
        %v6321 = vshrl.u32 %v6319, 16
        %v6322 = vand.u32 %v6318, 65535
        %v6323 = vshrl.u32 %v6318, 16
        %v6324 = vmul.u32 %v6320, %v6322
        %v6325 = vmul.u32 %v6320, %v6323
        %v6326 = vmul.u32 %v6321, %v6322
        %v6327 = vmul.u32 %v6321, %v6323
        %v6328 = vshll.u32 %v6325, 16
        %v6329 = vshrl.u32 %v6325, 16
        %v6330 = vshll.u32 %v6326, 16
        %v6331 = vshrl.u32 %v6326, 16
        %vm6332 = vc.u32 %v6324, %v6328
        %v6333 = vsel %vm6332, 1, 0
        %v6334 = vadd.s32 %v6324, %v6328
        %v6335 = vadd.s32 %v6327, %v6333
        %vm6336 = vc.u32 %v6334, %v6330
        %v6337 = vsel %vm6336, 1, 0
        %v6338 = vadd.s32 %v6334, %v6330
        %v6339 = vadd.s32 %v6335, %v6337
        %v6340 = vadd.s32 %v6339, %v6329
        %v6341 = vadd.s32 %v6340, %v6331
        %v6342 = vand.u32 %v6319, 65535
        %v6343 = vshrl.u32 %v6319, 16
        %v6344 = vand.u32 %v6314, 65535
        %v6345 = vshrl.u32 %v6314, 16
        %v6346 = vmul.u32 %v6342, %v6344
        %v6347 = vmul.u32 %v6342, %v6345
        %v6348 = vmul.u32 %v6343, %v6344
        %v6349 = vmul.u32 %v6343, %v6345
        %v6350 = vshll.u32 %v6347, 16
        %v6351 = vshrl.u32 %v6347, 16
        %v6352 = vshll.u32 %v6348, 16
        %v6353 = vshrl.u32 %v6348, 16
        %vm6354 = vc.u32 %v6346, %v6350
        %v6355 = vsel %vm6354, 1, 0
        %v6356 = vadd.s32 %v6346, %v6350
        %v6357 = vadd.s32 %v6349, %v6355
        %vm6358 = vc.u32 %v6356, %v6352
        %v6359 = vsel %vm6358, 1, 0
        %v6360 = vadd.s32 %v6356, %v6352
        %v6361 = vadd.s32 %v6357, %v6359
        %v6362 = vadd.s32 %v6361, %v6351
        %v6363 = vadd.s32 %v6362, %v6353
        %v6364 = vmul.u32 %v6319, %v6310
        %v6365 = vadd.s32 %v6341, %v6360
        %vm6366 = vc.u32 %v6341, %v6360
        %v6367 = vadd.s32 %v6363, 1
        %v6368 = vsel %vm6366, %v6367, %v6363
        %v6369 = vadd.s32 %v6364, %v6368
        %v6370 = vadd.s32 %v6369, 536870912
        %v6371 = vshrl.u32 %v6370, 30
        %v6372 = vshll.u32 %v6371, 30
        %v6373 = vsub.s32 %v6369, %v6372
        %vm6374 = vcmp.lt.s32.totalorder %v6373, 0
        %v6375 = vsub.s32 0, %v6373
        %v6376 = vsel %vm6374, %v6375, %v6373
        %v6377 = vclz %v6376
        %v6378 = vsub.s32 %v6377, 2
        %vm6379 = vcmp.gt.s32.totalorder 0, %v6378
        %v6380 = vsel %vm6379, 0, %v6378
        %v6381 = vsub.s32 32, %v6380
        %v6382 = vshll.u32 %v6373, %v6380
        %v6383 = vshrl.u32 %v6365, %v6381
        %v6384 = vor.u32 %v6382, %v6383
        %v6385 = vsub.s32 4294967266, %v6380
        %v6386 = vadd.s32 %v6385, 127
        %v6387 = vshll.u32 %v6386, 23
        %v6388 = vor.u32 4788187, %v6387
        %v6389 = vand.u32 2147483647, %v6388
        %v6391 = vcvt.s32.f32 %v6384
        %v6392 = vmul.f32 %v6391, %v6389
        %v6393 = vxor.u32 %v6392, 2147483648
        %v6394 = vsel %vm6273, %v6393, %v6392
        %v6395 = vsub.s32 4, %v6371
        %v6396 = vsel %vm6273, %v6395, %v6371
        %v6397 = vsel %vm6272, %v6115, %v6394
        %v6398 = vsel %vm6272, 0, %v6396
        %v6399 = vmul.f32 %v6397, %v6397
        %v6400 = vmul.f32 %v6399, -0.001358992
        %v6401 = vadd.f32 %v6400, 0.041655596
        %v6402 = vmul.f32 %v6399, %v6401
        %v6403 = vadd.f32 %v6402, -0.4999988
        %v6404 = vmul.f32 %v6399, %v6403
        %v6405 = vadd.f32 1.0, %v6404
        %v6406 = vmul.f32 %v6397, %v6397
        %v6407 = vmul.f32 %v6406, -0.00019511016
        %v6408 = vadd.f32 %v6407, 0.008332121
        %v6409 = vmul.f32 %v6406, %v6408
        %v6410 = vadd.f32 %v6409, -0.16666654
        %v6411 = vmul.f32 %v6406, %v6410
        %v6412 = vadd.f32 %v6411, 1.0
        %v6413 = vmul.f32 %v6412, %v6397
        %vm6414 = vweird.f32 %v6115
        %v6415 = vadd.s32 %v6398, 3
        %v6416 = vand.u32 %v6415, 3
        %vm6417 = vcmp.lt.s32.totalorder %v6416, 2
        %vm6418 = vcmp.eq.s32.totalorder %v6416, 0
        %v6419 = vxor.u32 %v6413, 2147483648
        %v6420 = vsel %vm6418, %v6405, %v6419
        %vm6421 = vcmp.eq.s32.totalorder %v6416, 2
        %v6422 = vxor.u32 %v6405, 2147483648
        %v6423 = vsel %vm6421, %v6422, %v6413
        %v6424 = vsel %vm6417, %v6420, %v6423
        %v6425 = vsel %vm6414, nan, %v6424
        %v6426 = vmul.f32 %v6270, %v6270
        %v6427 = vmul.f32 %v6425, %v6425
        %6429 = vset.pattern.permute.xlu0 0
        %6430 = vperm.xlu0 %6429, %v6100
        %v6431 = vpop.permute.xlu0 %6430
        %6434 = vset.pattern.permute.xlu0 0
        %6435 = vperm.xlu0 %6434, %v6101
        %v6436 = vpop.permute.xlu0 %6435
        %v6438 = vmul.f32 %v6431, %v6426
        %v6439 = vmul.f32 %v6436, %v6427
        %v6440 = vadd.f32 %v6096, %v6438
        %v6441 = vadd.f32 %v6098, %v6439
        %v6442 = vld [vmem:[#allocation23] sm:$0xf]
        %v6443 = vld [vmem:[#allocation23 + $0x4] sm:$0xf]
        %v6444 = vpack.c.bf16 %v6441, %v6440
        %v6445 = vld [vmem:[%s109] sm:$0xff]
        %v6446 = vld [vmem:[%s109 + $0x8] sm:$0xff]
        %6448 = vset.pattern.permute.xlu0 0
        %6449 = vperm.xlu0 %6448, %v6445
        %v6450 = vpop.permute.xlu0 %6449
        %6453 = vset.pattern.permute.xlu0 0
        %6454 = vperm.xlu0 %6453, %v6446
        %v6455 = vpop.permute.xlu0 %6454
        %v6459 = vunpack.c.l.b16 %v6442
        %v6460 = vunpack.c.l.b16 %v6443
        %v6461 = vpack.c.b16 %v6460, %v6459
        %v6463 = vsel %vm4823, %v6461, 0
        %6465 = vmatpush.bf16.msra.mxu0 0
        %6466 = vmatpush.bf16.msra.mxu0 0
        %6467 = vmatpush.bf16.msra.mxu0 0
        %6468 = vmatpush.bf16.msra.mxu0 0
        %6469 = vmatpush.bf16.msra.mxu0 0
        %6470 = vmatpush.bf16.msra.mxu0 0
        %6471 = vmatpush.bf16.msra.mxu0 0
        %6472 = vmatpush.bf16.msra.mxu0 %v6444
        %6473 = vmatmul.bf16.gmra.mxu0 %v6463
        %v6474 = vpop.f32.mrf.mxu0
        %v6475 = vadd.f32 %v6450, %v6474
        %v6476 = vpop.f32.mrf.mxu0
        %v6477 = vadd.f32 %v6455, %v6476
        %6478 = vdwg.mxu0
        %v6479 = vadd.f32 %v6475, %v5660
        %v6480 = vadd.f32 %v6477, %v5661
        %v6481 = vld [vmem:[%s113] sm:$0xff]
        %v6482 = vld [vmem:[%s113 + $0x8] sm:$0xff]
        %v6483 = vld [vmem:[%s111] sm:$0xff]
        %v6484 = vld [vmem:[%s111 + $0x8] sm:$0xff]
        %6486 = vset.pattern.permute.xlu0 0
        %6487 = vperm.xlu0 %6486, %v6483
        %v6488 = vpop.permute.xlu0 %6487
        %6491 = vset.pattern.permute.xlu0 0
        %6492 = vperm.xlu0 %6491, %v6484
        %v6493 = vpop.permute.xlu0 %6492
        %v6495 = vmul.f32 %v6488, %v6479
        %v6496 = vmul.f32 %v6493, %v6480
        %v6497 = vand.u32 2147483647, %v6495
        %vm6498 = vcmp.le.f32.partialorder %v6497, 0.7853982
        %vm6499 = vcmp.lt.s32.totalorder %v6495, 0
        %v6500 = vand.u32 %v6495, 2139095040
        %v6501 = vshrl.u32 %v6500, 23
        %v6502 = vsub.s32 %v6501, 127
        %v6503 = vand.u32 2147483647, %v6495
        %v6504 = vand.u32 %v6503, 8388607
        %v6505 = vor.u32 %v6504, 8388608
        %v6506 = vsub.s32 0, %v6505
        %v6507 = vadd.s32 %v6502, 1
        %vm6508 = vcmp.gt.s32.totalorder %v6507, 0
        %v6509 = vsel %vm6508, %v6507, 0
        %v6510 = vshrl.u32 %v6509, 5
        %v6511 = vand.u32 %v6509, 31
        %v6512 = vsub.s32 32, %v6511
        %v6513 = vshrl.u32 683565275, %v6512
        %v6514 = vshll.u32 683565275, %v6511
        %v6515 = vshrl.u32 2475754826, %v6512
        %v6516 = vor.u32 %v6514, %v6515
        %v6517 = vshll.u32 2475754826, %v6511
        %v6518 = vshrl.u32 2131351028, %v6512
        %v6519 = vor.u32 %v6517, %v6518
        %v6520 = vshll.u32 2131351028, %v6511
        %v6521 = vshrl.u32 2102212464, %v6512
        %v6522 = vor.u32 %v6520, %v6521
        %v6523 = vshll.u32 2102212464, %v6511
        %v6524 = vshrl.u32 920167782, %v6512
        %v6525 = vor.u32 %v6523, %v6524
        %v6526 = vshll.u32 920167782, %v6511
        %v6527 = vshrl.u32 1326507024, %v6512
        %v6528 = vor.u32 %v6526, %v6527
        %vm6529 = vcmp.lt.s32.totalorder %v6510, 1
        %vm6530 = vcmp.lt.s32.totalorder %v6510, 2
        %vm6531 = vcmp.lt.s32.totalorder %v6510, 3
        %vm6532 = vcmp.lt.s32.totalorder %v6510, 4
        %v6533 = vsel %vm6529, %v6513, %v6516
        %v6534 = vsel %vm6532, %v6522, 2102212464
        %v6535 = vsel %vm6531, %v6519, %v6534
        %v6536 = vsel %vm6530, %v6533, %v6535
        %v6537 = vsel %vm6529, %v6516, %v6519
        %v6538 = vsel %vm6532, %v6525, 920167782
        %v6539 = vsel %vm6531, %v6522, %v6538
        %v6540 = vsel %vm6530, %v6537, %v6539
        %v6541 = vsel %vm6529, %v6519, %v6522
        %v6542 = vsel %vm6532, %v6528, 1326507024
        %v6543 = vsel %vm6531, %v6525, %v6542
        %v6544 = vsel %vm6530, %v6541, %v6543
        %v6545 = vshll.u32 %v6505, 8
        %v6546 = vand.u32 %v6545, 65535
        %v6547 = vshrl.u32 %v6545, 16
        %v6548 = vand.u32 %v6544, 65535
        %v6549 = vshrl.u32 %v6544, 16
        %v6550 = vmul.u32 %v6546, %v6548
        %v6551 = vmul.u32 %v6546, %v6549
        %v6552 = vmul.u32 %v6547, %v6548
        %v6553 = vmul.u32 %v6547, %v6549
        %v6554 = vshll.u32 %v6551, 16
        %v6555 = vshrl.u32 %v6551, 16
        %v6556 = vshll.u32 %v6552, 16
        %v6557 = vshrl.u32 %v6552, 16
        %vm6558 = vc.u32 %v6550, %v6554
        %v6559 = vsel %vm6558, 1, 0
        %v6560 = vadd.s32 %v6550, %v6554
        %v6561 = vadd.s32 %v6553, %v6559
        %vm6562 = vc.u32 %v6560, %v6556
        %v6563 = vsel %vm6562, 1, 0
        %v6564 = vadd.s32 %v6560, %v6556
        %v6565 = vadd.s32 %v6561, %v6563
        %v6566 = vadd.s32 %v6565, %v6555
        %v6567 = vadd.s32 %v6566, %v6557
        %v6568 = vand.u32 %v6545, 65535
        %v6569 = vshrl.u32 %v6545, 16
        %v6570 = vand.u32 %v6540, 65535
        %v6571 = vshrl.u32 %v6540, 16
        %v6572 = vmul.u32 %v6568, %v6570
        %v6573 = vmul.u32 %v6568, %v6571
        %v6574 = vmul.u32 %v6569, %v6570
        %v6575 = vmul.u32 %v6569, %v6571
        %v6576 = vshll.u32 %v6573, 16
        %v6577 = vshrl.u32 %v6573, 16
        %v6578 = vshll.u32 %v6574, 16
        %v6579 = vshrl.u32 %v6574, 16
        %vm6580 = vc.u32 %v6572, %v6576
        %v6581 = vsel %vm6580, 1, 0
        %v6582 = vadd.s32 %v6572, %v6576
        %v6583 = vadd.s32 %v6575, %v6581
        %vm6584 = vc.u32 %v6582, %v6578
        %v6585 = vsel %vm6584, 1, 0
        %v6586 = vadd.s32 %v6582, %v6578
        %v6587 = vadd.s32 %v6583, %v6585
        %v6588 = vadd.s32 %v6587, %v6577
        %v6589 = vadd.s32 %v6588, %v6579
        %v6590 = vmul.u32 %v6545, %v6536
        %v6591 = vadd.s32 %v6567, %v6586
        %vm6592 = vc.u32 %v6567, %v6586
        %v6593 = vadd.s32 %v6589, 1
        %v6594 = vsel %vm6592, %v6593, %v6589
        %v6595 = vadd.s32 %v6590, %v6594
        %v6596 = vadd.s32 %v6595, 536870912
        %v6597 = vshrl.u32 %v6596, 30
        %v6598 = vshll.u32 %v6597, 30
        %v6599 = vsub.s32 %v6595, %v6598
        %vm6600 = vcmp.lt.s32.totalorder %v6599, 0
        %v6601 = vsub.s32 0, %v6599
        %v6602 = vsel %vm6600, %v6601, %v6599
        %v6603 = vclz %v6602
        %v6604 = vsub.s32 %v6603, 2
        %vm6605 = vcmp.gt.s32.totalorder 0, %v6604
        %v6606 = vsel %vm6605, 0, %v6604
        %v6607 = vsub.s32 32, %v6606
        %v6608 = vshll.u32 %v6599, %v6606
        %v6609 = vshrl.u32 %v6591, %v6607
        %v6610 = vor.u32 %v6608, %v6609
        %v6611 = vsub.s32 4294967266, %v6606
        %v6612 = vadd.s32 %v6611, 127
        %v6613 = vshll.u32 %v6612, 23
        %v6614 = vor.u32 4788187, %v6613
        %v6615 = vand.u32 2147483647, %v6614
        %v6617 = vcvt.s32.f32 %v6610
        %v6618 = vmul.f32 %v6617, %v6615
        %v6619 = vxor.u32 %v6618, 2147483648
        %v6620 = vsel %vm6499, %v6619, %v6618
        %v6621 = vsub.s32 4, %v6597
        %v6622 = vsel %vm6499, %v6621, %v6597
        %v6623 = vsel %vm6498, %v6495, %v6620
        %v6624 = vsel %vm6498, 0, %v6622
        %v6625 = vmul.f32 %v6623, %v6623
        %v6626 = vmul.f32 %v6625, -0.001358992
        %v6627 = vadd.f32 %v6626, 0.041655596
        %v6628 = vmul.f32 %v6625, %v6627
        %v6629 = vadd.f32 %v6628, -0.4999988
        %v6630 = vmul.f32 %v6625, %v6629
        %v6631 = vadd.f32 1.0, %v6630
        %v6632 = vmul.f32 %v6623, %v6623
        %v6633 = vmul.f32 %v6632, -0.00019511016
        %v6634 = vadd.f32 %v6633, 0.008332121
        %v6635 = vmul.f32 %v6632, %v6634
        %v6636 = vadd.f32 %v6635, -0.16666654
        %v6637 = vmul.f32 %v6632, %v6636
        %v6638 = vadd.f32 %v6637, 1.0
        %v6639 = vmul.f32 %v6638, %v6623
        %vm6640 = vweird.f32 %v6495
        %v6641 = vadd.s32 %v6624, 3
        %v6642 = vand.u32 %v6641, 3
        %vm6643 = vcmp.lt.s32.totalorder %v6642, 2
        %vm6644 = vcmp.eq.s32.totalorder %v6642, 0
        %v6645 = vxor.u32 %v6639, 2147483648
        %v6646 = vsel %vm6644, %v6631, %v6645
        %vm6647 = vcmp.eq.s32.totalorder %v6642, 2
        %v6648 = vxor.u32 %v6631, 2147483648
        %v6649 = vsel %vm6647, %v6648, %v6639
        %v6650 = vsel %vm6643, %v6646, %v6649
        %v6651 = vsel %vm6640, nan, %v6650
        %v6652 = vand.u32 2147483647, %v6496
        %vm6653 = vcmp.le.f32.partialorder %v6652, 0.7853982
        %vm6654 = vcmp.lt.s32.totalorder %v6496, 0
        %v6655 = vand.u32 %v6496, 2139095040
        %v6656 = vshrl.u32 %v6655, 23
        %v6657 = vsub.s32 %v6656, 127
        %v6658 = vand.u32 2147483647, %v6496
        %v6659 = vand.u32 %v6658, 8388607
        %v6660 = vor.u32 %v6659, 8388608
        %v6661 = vsub.s32 0, %v6660
        %v6662 = vadd.s32 %v6657, 1
        %vm6663 = vcmp.gt.s32.totalorder %v6662, 0
        %v6664 = vsel %vm6663, %v6662, 0
        %v6665 = vshrl.u32 %v6664, 5
        %v6666 = vand.u32 %v6664, 31
        %v6667 = vsub.s32 32, %v6666
        %v6668 = vshrl.u32 683565275, %v6667
        %v6669 = vshll.u32 683565275, %v6666
        %v6670 = vshrl.u32 2475754826, %v6667
        %v6671 = vor.u32 %v6669, %v6670
        %v6672 = vshll.u32 2475754826, %v6666
        %v6673 = vshrl.u32 2131351028, %v6667
        %v6674 = vor.u32 %v6672, %v6673
        %v6675 = vshll.u32 2131351028, %v6666
        %v6676 = vshrl.u32 2102212464, %v6667
        %v6677 = vor.u32 %v6675, %v6676
        %v6678 = vshll.u32 2102212464, %v6666
        %v6679 = vshrl.u32 920167782, %v6667
        %v6680 = vor.u32 %v6678, %v6679
        %v6681 = vshll.u32 920167782, %v6666
        %v6682 = vshrl.u32 1326507024, %v6667
        %v6683 = vor.u32 %v6681, %v6682
        %vm6684 = vcmp.lt.s32.totalorder %v6665, 1
        %vm6685 = vcmp.lt.s32.totalorder %v6665, 2
        %vm6686 = vcmp.lt.s32.totalorder %v6665, 3
        %vm6687 = vcmp.lt.s32.totalorder %v6665, 4
        %v6688 = vsel %vm6684, %v6668, %v6671
        %v6689 = vsel %vm6687, %v6677, 2102212464
        %v6690 = vsel %vm6686, %v6674, %v6689
        %v6691 = vsel %vm6685, %v6688, %v6690
        %v6692 = vsel %vm6684, %v6671, %v6674
        %v6693 = vsel %vm6687, %v6680, 920167782
        %v6694 = vsel %vm6686, %v6677, %v6693
        %v6695 = vsel %vm6685, %v6692, %v6694
        %v6696 = vsel %vm6684, %v6674, %v6677
        %v6697 = vsel %vm6687, %v6683, 1326507024
        %v6698 = vsel %vm6686, %v6680, %v6697
        %v6699 = vsel %vm6685, %v6696, %v6698
        %v6700 = vshll.u32 %v6660, 8
        %v6701 = vand.u32 %v6700, 65535
        %v6702 = vshrl.u32 %v6700, 16
        %v6703 = vand.u32 %v6699, 65535
        %v6704 = vshrl.u32 %v6699, 16
        %v6705 = vmul.u32 %v6701, %v6703
        %v6706 = vmul.u32 %v6701, %v6704
        %v6707 = vmul.u32 %v6702, %v6703
        %v6708 = vmul.u32 %v6702, %v6704
        %v6709 = vshll.u32 %v6706, 16
        %v6710 = vshrl.u32 %v6706, 16
        %v6711 = vshll.u32 %v6707, 16
        %v6712 = vshrl.u32 %v6707, 16
        %vm6713 = vc.u32 %v6705, %v6709
        %v6714 = vsel %vm6713, 1, 0
        %v6715 = vadd.s32 %v6705, %v6709
        %v6716 = vadd.s32 %v6708, %v6714
        %vm6717 = vc.u32 %v6715, %v6711
        %v6718 = vsel %vm6717, 1, 0
        %v6719 = vadd.s32 %v6715, %v6711
        %v6720 = vadd.s32 %v6716, %v6718
        %v6721 = vadd.s32 %v6720, %v6710
        %v6722 = vadd.s32 %v6721, %v6712
        %v6723 = vand.u32 %v6700, 65535
        %v6724 = vshrl.u32 %v6700, 16
        %v6725 = vand.u32 %v6695, 65535
        %v6726 = vshrl.u32 %v6695, 16
        %v6727 = vmul.u32 %v6723, %v6725
        %v6728 = vmul.u32 %v6723, %v6726
        %v6729 = vmul.u32 %v6724, %v6725
        %v6730 = vmul.u32 %v6724, %v6726
        %v6731 = vshll.u32 %v6728, 16
        %v6732 = vshrl.u32 %v6728, 16
        %v6733 = vshll.u32 %v6729, 16
        %v6734 = vshrl.u32 %v6729, 16
        %vm6735 = vc.u32 %v6727, %v6731
        %v6736 = vsel %vm6735, 1, 0
        %v6737 = vadd.s32 %v6727, %v6731
        %v6738 = vadd.s32 %v6730, %v6736
        %vm6739 = vc.u32 %v6737, %v6733
        %v6740 = vsel %vm6739, 1, 0
        %v6741 = vadd.s32 %v6737, %v6733
        %v6742 = vadd.s32 %v6738, %v6740
        %v6743 = vadd.s32 %v6742, %v6732
        %v6744 = vadd.s32 %v6743, %v6734
        %v6745 = vmul.u32 %v6700, %v6691
        %v6746 = vadd.s32 %v6722, %v6741
        %vm6747 = vc.u32 %v6722, %v6741
        %v6748 = vadd.s32 %v6744, 1
        %v6749 = vsel %vm6747, %v6748, %v6744
        %v6750 = vadd.s32 %v6745, %v6749
        %v6751 = vadd.s32 %v6750, 536870912
        %v6752 = vshrl.u32 %v6751, 30
        %v6753 = vshll.u32 %v6752, 30
        %v6754 = vsub.s32 %v6750, %v6753
        %vm6755 = vcmp.lt.s32.totalorder %v6754, 0
        %v6756 = vsub.s32 0, %v6754
        %v6757 = vsel %vm6755, %v6756, %v6754
        %v6758 = vclz %v6757
        %v6759 = vsub.s32 %v6758, 2
        %vm6760 = vcmp.gt.s32.totalorder 0, %v6759
        %v6761 = vsel %vm6760, 0, %v6759
        %v6762 = vsub.s32 32, %v6761
        %v6763 = vshll.u32 %v6754, %v6761
        %v6764 = vshrl.u32 %v6746, %v6762
        %v6765 = vor.u32 %v6763, %v6764
        %v6766 = vsub.s32 4294967266, %v6761
        %v6767 = vadd.s32 %v6766, 127
        %v6768 = vshll.u32 %v6767, 23
        %v6769 = vor.u32 4788187, %v6768
        %v6770 = vand.u32 2147483647, %v6769
        %v6772 = vcvt.s32.f32 %v6765
        %v6773 = vmul.f32 %v6772, %v6770
        %v6774 = vxor.u32 %v6773, 2147483648
        %v6775 = vsel %vm6654, %v6774, %v6773
        %v6776 = vsub.s32 4, %v6752
        %v6777 = vsel %vm6654, %v6776, %v6752
        %v6778 = vsel %vm6653, %v6496, %v6775
        %v6779 = vsel %vm6653, 0, %v6777
        %v6780 = vmul.f32 %v6778, %v6778
        %v6781 = vmul.f32 %v6780, -0.001358992
        %v6782 = vadd.f32 %v6781, 0.041655596
        %v6783 = vmul.f32 %v6780, %v6782
        %v6784 = vadd.f32 %v6783, -0.4999988
        %v6785 = vmul.f32 %v6780, %v6784
        %v6786 = vadd.f32 1.0, %v6785
        %v6787 = vmul.f32 %v6778, %v6778
        %v6788 = vmul.f32 %v6787, -0.00019511016
        %v6789 = vadd.f32 %v6788, 0.008332121
        %v6790 = vmul.f32 %v6787, %v6789
        %v6791 = vadd.f32 %v6790, -0.16666654
        %v6792 = vmul.f32 %v6787, %v6791
        %v6793 = vadd.f32 %v6792, 1.0
        %v6794 = vmul.f32 %v6793, %v6778
        %vm6795 = vweird.f32 %v6496
        %v6796 = vadd.s32 %v6779, 3
        %v6797 = vand.u32 %v6796, 3
        %vm6798 = vcmp.lt.s32.totalorder %v6797, 2
        %vm6799 = vcmp.eq.s32.totalorder %v6797, 0
        %v6800 = vxor.u32 %v6794, 2147483648
        %v6801 = vsel %vm6799, %v6786, %v6800
        %vm6802 = vcmp.eq.s32.totalorder %v6797, 2
        %v6803 = vxor.u32 %v6786, 2147483648
        %v6804 = vsel %vm6802, %v6803, %v6794
        %v6805 = vsel %vm6798, %v6801, %v6804
        %v6806 = vsel %vm6795, nan, %v6805
        %v6807 = vmul.f32 %v6651, %v6651
        %v6808 = vmul.f32 %v6806, %v6806
        %6810 = vset.pattern.permute.xlu0 0
        %6811 = vperm.xlu0 %6810, %v6481
        %v6812 = vpop.permute.xlu0 %6811
        %6815 = vset.pattern.permute.xlu0 0
        %6816 = vperm.xlu0 %6815, %v6482
        %v6817 = vpop.permute.xlu0 %6816
        %v6819 = vmul.f32 %v6812, %v6807
        %v6820 = vmul.f32 %v6817, %v6808
        %v6821 = vadd.f32 %v6479, %v6819
        %v6822 = vadd.f32 %v6480, %v6820
        %6823 = vst [vmem:[#allocation2] sm:$0xff] 0.0
        %6824 = vst [vmem:[#allocation2 + $0x8] sm:$0xff] 0.0
        %6827 = vrot.lane.b32.xlu0 %v6821, 2
        %v6828 = vpop.permute.xlu0 %6827
        %6829 = vrot.lane.b32.xlu0 %v6822, 2
        %v6830 = vpop.permute.xlu0 %6829
        %vm6833 = vcmask 277520
        %6834 = vst.msk [vmem:[#allocation2] sm:$0xff] %vm6833, %v6828
        %6835 = vst.msk [vmem:[#allocation2 + $0x8] sm:$0xff] %vm6833, %v6830
        %v6836 = vld [vmem:[#allocation2] sm:$0xff]
        %v6837 = vld [vmem:[#allocation2 + $0x8] sm:$0xff]
        %6840 = vrot.lane.b32.xlu0 %v6836, 127
        %v6841 = vpop.permute.xlu0 %6840
        %6842 = vrot.lane.b32.xlu0 %v6837, 127
        %v6843 = vpop.permute.xlu0 %6842
        %6846 = vrot.lane.b32.xlu0 %v6836, 126
        %v6847 = vpop.permute.xlu0 %6846
        %6848 = vrot.lane.b32.xlu0 %v6837, 126
        %v6849 = vpop.permute.xlu0 %6848
        %6852 = vrot.lane.b32.xlu0 %v6836, 125
        %v6853 = vpop.permute.xlu0 %6852
        %6854 = vrot.lane.b32.xlu0 %v6837, 125
        %v6855 = vpop.permute.xlu0 %6854
        %6858 = vrot.lane.b32.xlu0 %v6836, 124
        %v6859 = vpop.permute.xlu0 %6858
        %6860 = vrot.lane.b32.xlu0 %v6837, 124
        %v6861 = vpop.permute.xlu0 %6860
        %6864 = vrot.lane.b32.xlu0 %v6836, 123
        %v6865 = vpop.permute.xlu0 %6864
        %6866 = vrot.lane.b32.xlu0 %v6837, 123
        %v6867 = vpop.permute.xlu0 %6866
        %6870 = vrot.lane.b32.xlu0 %v6836, 122
        %v6871 = vpop.permute.xlu0 %6870
        %6872 = vrot.lane.b32.xlu0 %v6837, 122
        %v6873 = vpop.permute.xlu0 %6872
        %6876 = vrot.lane.b32.xlu0 %v6836, 121
        %v6877 = vpop.permute.xlu0 %6876
        %6878 = vrot.lane.b32.xlu0 %v6837, 121
        %v6879 = vpop.permute.xlu0 %6878
        %v6882 = vld [vmem:[#allocation25] sm:$0xf]
        %v6883 = vld [vmem:[#allocation25 + $0x4] sm:$0xf]
        %v6884 = vld [vmem:[#allocation25 + $0x8] sm:$0xf]
        %v6885 = vld [vmem:[#allocation25 + $0xc] sm:$0xf]
        %v6886 = vpack.c.bf16 %v6837, %v6836
        %v6887 = vpack.c.bf16 %v6843, %v6841
        %v6888 = vpack.c.bf16 %v6849, %v6847
        %v6889 = vpack.c.bf16 %v6855, %v6853
        %v6890 = vpack.c.bf16 %v6861, %v6859
        %v6891 = vpack.c.bf16 %v6867, %v6865
        %v6892 = vpack.c.bf16 %v6873, %v6871
        %v6893 = vpack.c.bf16 %v6879, %v6877
        %v6894 = vld [vmem:[%s117] sm:$0xff]
        %v6895 = vld [vmem:[%s117 + $0x8] sm:$0xff]
        %v6896 = vld [vmem:[%s117 + $0x10] sm:$0xff]
        %v6897 = vld [vmem:[%s117 + $0x18] sm:$0xff]
        %6899 = vset.pattern.permute.xlu0 0
        %6900 = vperm.xlu0 %6899, %v6894
        %v6901 = vpop.permute.xlu0 %6900
        %6904 = vset.pattern.permute.xlu0 0
        %6905 = vperm.xlu0 %6904, %v6895
        %v6906 = vpop.permute.xlu0 %6905
        %6909 = vset.pattern.permute.xlu0 0
        %6910 = vperm.xlu0 %6909, %v6896
        %v6911 = vpop.permute.xlu0 %6910
        %6914 = vset.pattern.permute.xlu0 0
        %6915 = vperm.xlu0 %6914, %v6897
        %v6916 = vpop.permute.xlu0 %6915
        %v6922 = vunpack.c.l.b16 %v6882
        %v6923 = vunpack.c.l.b16 %v6883
        %v6924 = vunpack.c.l.b16 %v6884
        %v6925 = vunpack.c.l.b16 %v6885
        %v6926 = vpack.c.b16 %v6923, %v6922
        %v6927 = vpack.c.b16 %v6925, %v6924
        %6930 = vmatpush.bf16.msra.mxu0 %v6893
        %6931 = vmatpush.bf16.msra.mxu0 %v6892
        %6932 = vmatpush.bf16.msra.mxu0 %v6891
        %6933 = vmatpush.bf16.msra.mxu0 %v6890
        %6934 = vmatpush.bf16.msra.mxu0 %v6889
        %6935 = vmatpush.bf16.msra.mxu0 %v6888
        %6936 = vmatpush.bf16.msra.mxu0 %v6887
        %6937 = vmatpush.bf16.msra.mxu0 %v6886
        %6938 = vmatmul.bf16.gmra.mxu0 %v6926
        %v6939 = vpop.f32.mrf.mxu0
        %v6940 = vadd.f32 %v6901, %v6939
        %v6941 = vpop.f32.mrf.mxu0
        %v6942 = vadd.f32 %v6906, %v6941
        %6943 = vmatmul.bf16.gmra.mxu0 %v6927
        %v6944 = vpop.f32.mrf.mxu0
        %v6945 = vadd.f32 %v6911, %v6944
        %v6946 = vpop.f32.mrf.mxu0
        %v6947 = vadd.f32 %v6916, %v6946
        %6948 = vdwg.mxu0
        %v6949 = vmul.u32 %v3962, 4
        %vm6950 = vcmp.eq.s32.totalorder %v3953, %v6949
        %vm6951 = vcmp.eq.s32.totalorder %v3954, %v6949
        %vm6952 = vcmp.eq.s32.totalorder %v3955, %v6949
        %vm6953 = vcmp.eq.s32.totalorder %v3956, %v6949
        %v6954 = vsel %vm6950, 1, 0
        %v6955 = vsel %vm6951, 1, 0
        %v6956 = vsel %vm6952, 1, 0
        %v6957 = vsel %vm6953, 1, 0
        %v6958 = vcvt.s32.f32 %v6954
        %v6959 = vcvt.s32.f32 %v6955
        %v6960 = vcvt.s32.f32 %v6956
        %v6961 = vcvt.s32.f32 %v6957
        %vm6962 = vcmask 236544
        %v6964 = vsel %vm6962, %v6940, 0
        %v6967 = vsel %vm6962, %v6942, 0
        %v6970 = vsel %vm6962, %v6945, 0
        %v6973 = vsel %vm6962, %v6947, 0
        %vm6975 = vcmask 1044480
        %v6977 = vsel %vm6975, %v6961, 0
        %6979 = vmatpush.msra.mxu0 0.0
        %6980 = vmatpush.msra.mxu0 0.0
        %6981 = vmatpush.msra.mxu0 0.0
        %6982 = vmatpush.msra.mxu0 0.0
        %6983 = vmatpush.msra.mxu0 0.0
        %6984 = vmatpush.msra.mxu0 0.0
        %6985 = vmatpush.msra.mxu0 0.0
        %6986 = vmatpush.msra.mxu0 0.0
        %6987 = vmatpush.msra.mxu0 0.0
        %6988 = vmatpush.msra.mxu0 0.0
        %6989 = vmatpush.msra.mxu0 0.0
        %6990 = vmatpush.msra.mxu0 0.0
        %6991 = vmatpush.msra.mxu0 %v6977
        %6992 = vmatpush.msra.mxu0 %v6960
        %6993 = vmatpush.msra.mxu0 %v6959
        %6994 = vmatpush.msra.mxu0 %v6958
        %6995 = vmatmul.f32.gmra.mxu0 %v6964
        %v6996 = vpop.f32.mrf.mxu0
        %v6997 = vadd.f32 0.0, %v6996
        %6998 = vmatmul.f32.gmra.mxu0 %v6967
        %v6999 = vpop.f32.mrf.mxu0
        %v7000 = vadd.f32 0.0, %v6999
        %7001 = vmatmul.f32.gmra.mxu0 %v6970
        %v7002 = vpop.f32.mrf.mxu0
        %v7003 = vadd.f32 0.0, %v7002
        %7004 = vmatmul.f32.gmra.mxu0 %v6973
        %v7005 = vpop.f32.mrf.mxu0
        %v7006 = vadd.f32 0.0, %v7005
        %7007 = vdwg.mxu0
        %v7008 = vld [vmem:[%s121] sm:$0xff]
        %v7009 = vld [vmem:[%s121 + $0x8] sm:$0xff]
        %v7010 = vld [vmem:[%s121 + $0x10] sm:$0xff]
        %v7011 = vld [vmem:[%s121 + $0x18] sm:$0xff]
        %v7012 = vld [vmem:[%s119] sm:$0xff]
        %v7013 = vld [vmem:[%s119 + $0x8] sm:$0xff]
        %v7014 = vld [vmem:[%s119 + $0x10] sm:$0xff]
        %v7015 = vld [vmem:[%s119 + $0x18] sm:$0xff]
        %7017 = vset.pattern.permute.xlu0 0
        %7018 = vperm.xlu0 %7017, %v7012
        %v7019 = vpop.permute.xlu0 %7018
        %7022 = vset.pattern.permute.xlu0 0
        %7023 = vperm.xlu0 %7022, %v7013
        %v7024 = vpop.permute.xlu0 %7023
        %7027 = vset.pattern.permute.xlu0 0
        %7028 = vperm.xlu0 %7027, %v7014
        %v7029 = vpop.permute.xlu0 %7028
        %7032 = vset.pattern.permute.xlu0 0
        %7033 = vperm.xlu0 %7032, %v7015
        %v7034 = vpop.permute.xlu0 %7033
        %v7036 = vmul.f32 %v7019, %v6997
        %v7037 = vmul.f32 %v7024, %v7000
        %v7038 = vmul.f32 %v7029, %v7003
        %v7039 = vmul.f32 %v7034, %v7006
        %v7040 = vand.u32 2147483647, %v7036
        %vm7041 = vcmp.le.f32.partialorder %v7040, 0.7853982
        %vm7042 = vcmp.lt.s32.totalorder %v7036, 0
        %v7043 = vand.u32 %v7036, 2139095040
        %v7044 = vshrl.u32 %v7043, 23
        %v7045 = vsub.s32 %v7044, 127
        %v7046 = vand.u32 2147483647, %v7036
        %v7047 = vand.u32 %v7046, 8388607
        %v7048 = vor.u32 %v7047, 8388608
        %v7049 = vsub.s32 0, %v7048
        %v7050 = vadd.s32 %v7045, 1
        %vm7051 = vcmp.gt.s32.totalorder %v7050, 0
        %v7052 = vsel %vm7051, %v7050, 0
        %v7053 = vshrl.u32 %v7052, 5
        %v7054 = vand.u32 %v7052, 31
        %v7055 = vsub.s32 32, %v7054
        %v7056 = vshrl.u32 683565275, %v7055
        %v7057 = vshll.u32 683565275, %v7054
        %v7058 = vshrl.u32 2475754826, %v7055
        %v7059 = vor.u32 %v7057, %v7058
        %v7060 = vshll.u32 2475754826, %v7054
        %v7061 = vshrl.u32 2131351028, %v7055
        %v7062 = vor.u32 %v7060, %v7061
        %v7063 = vshll.u32 2131351028, %v7054
        %v7064 = vshrl.u32 2102212464, %v7055
        %v7065 = vor.u32 %v7063, %v7064
        %v7066 = vshll.u32 2102212464, %v7054
        %v7067 = vshrl.u32 920167782, %v7055
        %v7068 = vor.u32 %v7066, %v7067
        %v7069 = vshll.u32 920167782, %v7054
        %v7070 = vshrl.u32 1326507024, %v7055
        %v7071 = vor.u32 %v7069, %v7070
        %vm7072 = vcmp.lt.s32.totalorder %v7053, 1
        %vm7073 = vcmp.lt.s32.totalorder %v7053, 2
        %vm7074 = vcmp.lt.s32.totalorder %v7053, 3
        %vm7075 = vcmp.lt.s32.totalorder %v7053, 4
        %v7076 = vsel %vm7072, %v7056, %v7059
        %v7077 = vsel %vm7075, %v7065, 2102212464
        %v7078 = vsel %vm7074, %v7062, %v7077
        %v7079 = vsel %vm7073, %v7076, %v7078
        %v7080 = vsel %vm7072, %v7059, %v7062
        %v7081 = vsel %vm7075, %v7068, 920167782
        %v7082 = vsel %vm7074, %v7065, %v7081
        %v7083 = vsel %vm7073, %v7080, %v7082
        %v7084 = vsel %vm7072, %v7062, %v7065
        %v7085 = vsel %vm7075, %v7071, 1326507024
        %v7086 = vsel %vm7074, %v7068, %v7085
        %v7087 = vsel %vm7073, %v7084, %v7086
        %v7088 = vshll.u32 %v7048, 8
        %v7089 = vand.u32 %v7088, 65535
        %v7090 = vshrl.u32 %v7088, 16
        %v7091 = vand.u32 %v7087, 65535
        %v7092 = vshrl.u32 %v7087, 16
        %v7093 = vmul.u32 %v7089, %v7091
        %v7094 = vmul.u32 %v7089, %v7092
        %v7095 = vmul.u32 %v7090, %v7091
        %v7096 = vmul.u32 %v7090, %v7092
        %v7097 = vshll.u32 %v7094, 16
        %v7098 = vshrl.u32 %v7094, 16
        %v7099 = vshll.u32 %v7095, 16
        %v7100 = vshrl.u32 %v7095, 16
        %vm7101 = vc.u32 %v7093, %v7097
        %v7102 = vsel %vm7101, 1, 0
        %v7103 = vadd.s32 %v7093, %v7097
        %v7104 = vadd.s32 %v7096, %v7102
        %vm7105 = vc.u32 %v7103, %v7099
        %v7106 = vsel %vm7105, 1, 0
        %v7107 = vadd.s32 %v7103, %v7099
        %v7108 = vadd.s32 %v7104, %v7106
        %v7109 = vadd.s32 %v7108, %v7098
        %v7110 = vadd.s32 %v7109, %v7100
        %v7111 = vand.u32 %v7088, 65535
        %v7112 = vshrl.u32 %v7088, 16
        %v7113 = vand.u32 %v7083, 65535
        %v7114 = vshrl.u32 %v7083, 16
        %v7115 = vmul.u32 %v7111, %v7113
        %v7116 = vmul.u32 %v7111, %v7114
        %v7117 = vmul.u32 %v7112, %v7113
        %v7118 = vmul.u32 %v7112, %v7114
        %v7119 = vshll.u32 %v7116, 16
        %v7120 = vshrl.u32 %v7116, 16
        %v7121 = vshll.u32 %v7117, 16
        %v7122 = vshrl.u32 %v7117, 16
        %vm7123 = vc.u32 %v7115, %v7119
        %v7124 = vsel %vm7123, 1, 0
        %v7125 = vadd.s32 %v7115, %v7119
        %v7126 = vadd.s32 %v7118, %v7124
        %vm7127 = vc.u32 %v7125, %v7121
        %v7128 = vsel %vm7127, 1, 0
        %v7129 = vadd.s32 %v7125, %v7121
        %v7130 = vadd.s32 %v7126, %v7128
        %v7131 = vadd.s32 %v7130, %v7120
        %v7132 = vadd.s32 %v7131, %v7122
        %v7133 = vmul.u32 %v7088, %v7079
        %v7134 = vadd.s32 %v7110, %v7129
        %vm7135 = vc.u32 %v7110, %v7129
        %v7136 = vadd.s32 %v7132, 1
        %v7137 = vsel %vm7135, %v7136, %v7132
        %v7138 = vadd.s32 %v7133, %v7137
        %v7139 = vadd.s32 %v7138, 536870912
        %v7140 = vshrl.u32 %v7139, 30
        %v7141 = vshll.u32 %v7140, 30
        %v7142 = vsub.s32 %v7138, %v7141
        %vm7143 = vcmp.lt.s32.totalorder %v7142, 0
        %v7144 = vsub.s32 0, %v7142
        %v7145 = vsel %vm7143, %v7144, %v7142
        %v7146 = vclz %v7145
        %v7147 = vsub.s32 %v7146, 2
        %vm7148 = vcmp.gt.s32.totalorder 0, %v7147
        %v7149 = vsel %vm7148, 0, %v7147
        %v7150 = vsub.s32 32, %v7149
        %v7151 = vshll.u32 %v7142, %v7149
        %v7152 = vshrl.u32 %v7134, %v7150
        %v7153 = vor.u32 %v7151, %v7152
        %v7154 = vsub.s32 4294967266, %v7149
        %v7155 = vadd.s32 %v7154, 127
        %v7156 = vshll.u32 %v7155, 23
        %v7157 = vor.u32 4788187, %v7156
        %v7158 = vand.u32 2147483647, %v7157
        %v7160 = vcvt.s32.f32 %v7153
        %v7161 = vmul.f32 %v7160, %v7158
        %v7162 = vxor.u32 %v7161, 2147483648
        %v7163 = vsel %vm7042, %v7162, %v7161
        %v7164 = vsub.s32 4, %v7140
        %v7165 = vsel %vm7042, %v7164, %v7140
        %v7166 = vsel %vm7041, %v7036, %v7163
        %v7167 = vsel %vm7041, 0, %v7165
        %v7168 = vmul.f32 %v7166, %v7166
        %v7169 = vmul.f32 %v7168, -0.001358992
        %v7170 = vadd.f32 %v7169, 0.041655596
        %v7171 = vmul.f32 %v7168, %v7170
        %v7172 = vadd.f32 %v7171, -0.4999988
        %v7173 = vmul.f32 %v7168, %v7172
        %v7174 = vadd.f32 1.0, %v7173
        %v7175 = vmul.f32 %v7166, %v7166
        %v7176 = vmul.f32 %v7175, -0.00019511016
        %v7177 = vadd.f32 %v7176, 0.008332121
        %v7178 = vmul.f32 %v7175, %v7177
        %v7179 = vadd.f32 %v7178, -0.16666654
        %v7180 = vmul.f32 %v7175, %v7179
        %v7181 = vadd.f32 %v7180, 1.0
        %v7182 = vmul.f32 %v7181, %v7166
        %vm7183 = vweird.f32 %v7036
        %v7184 = vadd.s32 %v7167, 3
        %v7185 = vand.u32 %v7184, 3
        %vm7186 = vcmp.lt.s32.totalorder %v7185, 2
        %vm7187 = vcmp.eq.s32.totalorder %v7185, 0
        %v7188 = vxor.u32 %v7182, 2147483648
        %v7189 = vsel %vm7187, %v7174, %v7188
        %vm7190 = vcmp.eq.s32.totalorder %v7185, 2
        %v7191 = vxor.u32 %v7174, 2147483648
        %v7192 = vsel %vm7190, %v7191, %v7182
        %v7193 = vsel %vm7186, %v7189, %v7192
        %v7194 = vsel %vm7183, nan, %v7193
        %v7195 = vand.u32 2147483647, %v7037
        %vm7196 = vcmp.le.f32.partialorder %v7195, 0.7853982
        %vm7197 = vcmp.lt.s32.totalorder %v7037, 0
        %v7198 = vand.u32 %v7037, 2139095040
        %v7199 = vshrl.u32 %v7198, 23
        %v7200 = vsub.s32 %v7199, 127
        %v7201 = vand.u32 2147483647, %v7037
        %v7202 = vand.u32 %v7201, 8388607
        %v7203 = vor.u32 %v7202, 8388608
        %v7204 = vsub.s32 0, %v7203
        %v7205 = vadd.s32 %v7200, 1
        %vm7206 = vcmp.gt.s32.totalorder %v7205, 0
        %v7207 = vsel %vm7206, %v7205, 0
        %v7208 = vshrl.u32 %v7207, 5
        %v7209 = vand.u32 %v7207, 31
        %v7210 = vsub.s32 32, %v7209
        %v7211 = vshrl.u32 683565275, %v7210
        %v7212 = vshll.u32 683565275, %v7209
        %v7213 = vshrl.u32 2475754826, %v7210
        %v7214 = vor.u32 %v7212, %v7213
        %v7215 = vshll.u32 2475754826, %v7209
        %v7216 = vshrl.u32 2131351028, %v7210
        %v7217 = vor.u32 %v7215, %v7216
        %v7218 = vshll.u32 2131351028, %v7209
        %v7219 = vshrl.u32 2102212464, %v7210
        %v7220 = vor.u32 %v7218, %v7219
        %v7221 = vshll.u32 2102212464, %v7209
        %v7222 = vshrl.u32 920167782, %v7210
        %v7223 = vor.u32 %v7221, %v7222
        %v7224 = vshll.u32 920167782, %v7209
        %v7225 = vshrl.u32 1326507024, %v7210
        %v7226 = vor.u32 %v7224, %v7225
        %vm7227 = vcmp.lt.s32.totalorder %v7208, 1
        %vm7228 = vcmp.lt.s32.totalorder %v7208, 2
        %vm7229 = vcmp.lt.s32.totalorder %v7208, 3
        %vm7230 = vcmp.lt.s32.totalorder %v7208, 4
        %v7231 = vsel %vm7227, %v7211, %v7214
        %v7232 = vsel %vm7230, %v7220, 2102212464
        %v7233 = vsel %vm7229, %v7217, %v7232
        %v7234 = vsel %vm7228, %v7231, %v7233
        %v7235 = vsel %vm7227, %v7214, %v7217
        %v7236 = vsel %vm7230, %v7223, 920167782
        %v7237 = vsel %vm7229, %v7220, %v7236
        %v7238 = vsel %vm7228, %v7235, %v7237
        %v7239 = vsel %vm7227, %v7217, %v7220
        %v7240 = vsel %vm7230, %v7226, 1326507024
        %v7241 = vsel %vm7229, %v7223, %v7240
        %v7242 = vsel %vm7228, %v7239, %v7241
        %v7243 = vshll.u32 %v7203, 8
        %v7244 = vand.u32 %v7243, 65535
        %v7245 = vshrl.u32 %v7243, 16
        %v7246 = vand.u32 %v7242, 65535
        %v7247 = vshrl.u32 %v7242, 16
        %v7248 = vmul.u32 %v7244, %v7246
        %v7249 = vmul.u32 %v7244, %v7247
        %v7250 = vmul.u32 %v7245, %v7246
        %v7251 = vmul.u32 %v7245, %v7247
        %v7252 = vshll.u32 %v7249, 16
        %v7253 = vshrl.u32 %v7249, 16
        %v7254 = vshll.u32 %v7250, 16
        %v7255 = vshrl.u32 %v7250, 16
        %vm7256 = vc.u32 %v7248, %v7252
        %v7257 = vsel %vm7256, 1, 0
        %v7258 = vadd.s32 %v7248, %v7252
        %v7259 = vadd.s32 %v7251, %v7257
        %vm7260 = vc.u32 %v7258, %v7254
        %v7261 = vsel %vm7260, 1, 0
        %v7262 = vadd.s32 %v7258, %v7254
        %v7263 = vadd.s32 %v7259, %v7261
        %v7264 = vadd.s32 %v7263, %v7253
        %v7265 = vadd.s32 %v7264, %v7255
        %v7266 = vand.u32 %v7243, 65535
        %v7267 = vshrl.u32 %v7243, 16
        %v7268 = vand.u32 %v7238, 65535
        %v7269 = vshrl.u32 %v7238, 16
        %v7270 = vmul.u32 %v7266, %v7268
        %v7271 = vmul.u32 %v7266, %v7269
        %v7272 = vmul.u32 %v7267, %v7268
        %v7273 = vmul.u32 %v7267, %v7269
        %v7274 = vshll.u32 %v7271, 16
        %v7275 = vshrl.u32 %v7271, 16
        %v7276 = vshll.u32 %v7272, 16
        %v7277 = vshrl.u32 %v7272, 16
        %vm7278 = vc.u32 %v7270, %v7274
        %v7279 = vsel %vm7278, 1, 0
        %v7280 = vadd.s32 %v7270, %v7274
        %v7281 = vadd.s32 %v7273, %v7279
        %vm7282 = vc.u32 %v7280, %v7276
        %v7283 = vsel %vm7282, 1, 0
        %v7284 = vadd.s32 %v7280, %v7276
        %v7285 = vadd.s32 %v7281, %v7283
        %v7286 = vadd.s32 %v7285, %v7275
        %v7287 = vadd.s32 %v7286, %v7277
        %v7288 = vmul.u32 %v7243, %v7234
        %v7289 = vadd.s32 %v7265, %v7284
        %vm7290 = vc.u32 %v7265, %v7284
        %v7291 = vadd.s32 %v7287, 1
        %v7292 = vsel %vm7290, %v7291, %v7287
        %v7293 = vadd.s32 %v7288, %v7292
        %v7294 = vadd.s32 %v7293, 536870912
        %v7295 = vshrl.u32 %v7294, 30
        %v7296 = vshll.u32 %v7295, 30
        %v7297 = vsub.s32 %v7293, %v7296
        %vm7298 = vcmp.lt.s32.totalorder %v7297, 0
        %v7299 = vsub.s32 0, %v7297
        %v7300 = vsel %vm7298, %v7299, %v7297
        %v7301 = vclz %v7300
        %v7302 = vsub.s32 %v7301, 2
        %vm7303 = vcmp.gt.s32.totalorder 0, %v7302
        %v7304 = vsel %vm7303, 0, %v7302
        %v7305 = vsub.s32 32, %v7304
        %v7306 = vshll.u32 %v7297, %v7304
        %v7307 = vshrl.u32 %v7289, %v7305
        %v7308 = vor.u32 %v7306, %v7307
        %v7309 = vsub.s32 4294967266, %v7304
        %v7310 = vadd.s32 %v7309, 127
        %v7311 = vshll.u32 %v7310, 23
        %v7312 = vor.u32 4788187, %v7311
        %v7313 = vand.u32 2147483647, %v7312
        %v7315 = vcvt.s32.f32 %v7308
        %v7316 = vmul.f32 %v7315, %v7313
        %v7317 = vxor.u32 %v7316, 2147483648
        %v7318 = vsel %vm7197, %v7317, %v7316
        %v7319 = vsub.s32 4, %v7295
        %v7320 = vsel %vm7197, %v7319, %v7295
        %v7321 = vsel %vm7196, %v7037, %v7318
        %v7322 = vsel %vm7196, 0, %v7320
        %v7323 = vmul.f32 %v7321, %v7321
        %v7324 = vmul.f32 %v7323, -0.001358992
        %v7325 = vadd.f32 %v7324, 0.041655596
        %v7326 = vmul.f32 %v7323, %v7325
        %v7327 = vadd.f32 %v7326, -0.4999988
        %v7328 = vmul.f32 %v7323, %v7327
        %v7329 = vadd.f32 1.0, %v7328
        %v7330 = vmul.f32 %v7321, %v7321
        %v7331 = vmul.f32 %v7330, -0.00019511016
        %v7332 = vadd.f32 %v7331, 0.008332121
        %v7333 = vmul.f32 %v7330, %v7332
        %v7334 = vadd.f32 %v7333, -0.16666654
        %v7335 = vmul.f32 %v7330, %v7334
        %v7336 = vadd.f32 %v7335, 1.0
        %v7337 = vmul.f32 %v7336, %v7321
        %vm7338 = vweird.f32 %v7037
        %v7339 = vadd.s32 %v7322, 3
        %v7340 = vand.u32 %v7339, 3
        %vm7341 = vcmp.lt.s32.totalorder %v7340, 2
        %vm7342 = vcmp.eq.s32.totalorder %v7340, 0
        %v7343 = vxor.u32 %v7337, 2147483648
        %v7344 = vsel %vm7342, %v7329, %v7343
        %vm7345 = vcmp.eq.s32.totalorder %v7340, 2
        %v7346 = vxor.u32 %v7329, 2147483648
        %v7347 = vsel %vm7345, %v7346, %v7337
        %v7348 = vsel %vm7341, %v7344, %v7347
        %v7349 = vsel %vm7338, nan, %v7348
        %v7350 = vand.u32 2147483647, %v7038
        %vm7351 = vcmp.le.f32.partialorder %v7350, 0.7853982
        %vm7352 = vcmp.lt.s32.totalorder %v7038, 0
        %v7353 = vand.u32 %v7038, 2139095040
        %v7354 = vshrl.u32 %v7353, 23
        %v7355 = vsub.s32 %v7354, 127
        %v7356 = vand.u32 2147483647, %v7038
        %v7357 = vand.u32 %v7356, 8388607
        %v7358 = vor.u32 %v7357, 8388608
        %v7359 = vsub.s32 0, %v7358
        %v7360 = vadd.s32 %v7355, 1
        %vm7361 = vcmp.gt.s32.totalorder %v7360, 0
        %v7362 = vsel %vm7361, %v7360, 0
        %v7363 = vshrl.u32 %v7362, 5
        %v7364 = vand.u32 %v7362, 31
        %v7365 = vsub.s32 32, %v7364
        %v7366 = vshrl.u32 683565275, %v7365
        %v7367 = vshll.u32 683565275, %v7364
        %v7368 = vshrl.u32 2475754826, %v7365
        %v7369 = vor.u32 %v7367, %v7368
        %v7370 = vshll.u32 2475754826, %v7364
        %v7371 = vshrl.u32 2131351028, %v7365
        %v7372 = vor.u32 %v7370, %v7371
        %v7373 = vshll.u32 2131351028, %v7364
        %v7374 = vshrl.u32 2102212464, %v7365
        %v7375 = vor.u32 %v7373, %v7374
        %v7376 = vshll.u32 2102212464, %v7364
        %v7377 = vshrl.u32 920167782, %v7365
        %v7378 = vor.u32 %v7376, %v7377
        %v7379 = vshll.u32 920167782, %v7364
        %v7380 = vshrl.u32 1326507024, %v7365
        %v7381 = vor.u32 %v7379, %v7380
        %vm7382 = vcmp.lt.s32.totalorder %v7363, 1
        %vm7383 = vcmp.lt.s32.totalorder %v7363, 2
        %vm7384 = vcmp.lt.s32.totalorder %v7363, 3
        %vm7385 = vcmp.lt.s32.totalorder %v7363, 4
        %v7386 = vsel %vm7382, %v7366, %v7369
        %v7387 = vsel %vm7385, %v7375, 2102212464
        %v7388 = vsel %vm7384, %v7372, %v7387
        %v7389 = vsel %vm7383, %v7386, %v7388
        %v7390 = vsel %vm7382, %v7369, %v7372
        %v7391 = vsel %vm7385, %v7378, 920167782
        %v7392 = vsel %vm7384, %v7375, %v7391
        %v7393 = vsel %vm7383, %v7390, %v7392
        %v7394 = vsel %vm7382, %v7372, %v7375
        %v7395 = vsel %vm7385, %v7381, 1326507024
        %v7396 = vsel %vm7384, %v7378, %v7395
        %v7397 = vsel %vm7383, %v7394, %v7396
        %v7398 = vshll.u32 %v7358, 8
        %v7399 = vand.u32 %v7398, 65535
        %v7400 = vshrl.u32 %v7398, 16
        %v7401 = vand.u32 %v7397, 65535
        %v7402 = vshrl.u32 %v7397, 16
        %v7403 = vmul.u32 %v7399, %v7401
        %v7404 = vmul.u32 %v7399, %v7402
        %v7405 = vmul.u32 %v7400, %v7401
        %v7406 = vmul.u32 %v7400, %v7402
        %v7407 = vshll.u32 %v7404, 16
        %v7408 = vshrl.u32 %v7404, 16
        %v7409 = vshll.u32 %v7405, 16
        %v7410 = vshrl.u32 %v7405, 16
        %vm7411 = vc.u32 %v7403, %v7407
        %v7412 = vsel %vm7411, 1, 0
        %v7413 = vadd.s32 %v7403, %v7407
        %v7414 = vadd.s32 %v7406, %v7412
        %vm7415 = vc.u32 %v7413, %v7409
        %v7416 = vsel %vm7415, 1, 0
        %v7417 = vadd.s32 %v7413, %v7409
        %v7418 = vadd.s32 %v7414, %v7416
        %v7419 = vadd.s32 %v7418, %v7408
        %v7420 = vadd.s32 %v7419, %v7410
        %v7421 = vand.u32 %v7398, 65535
        %v7422 = vshrl.u32 %v7398, 16
        %v7423 = vand.u32 %v7393, 65535
        %v7424 = vshrl.u32 %v7393, 16
        %v7425 = vmul.u32 %v7421, %v7423
        %v7426 = vmul.u32 %v7421, %v7424
        %v7427 = vmul.u32 %v7422, %v7423
        %v7428 = vmul.u32 %v7422, %v7424
        %v7429 = vshll.u32 %v7426, 16
        %v7430 = vshrl.u32 %v7426, 16
        %v7431 = vshll.u32 %v7427, 16
        %v7432 = vshrl.u32 %v7427, 16
        %vm7433 = vc.u32 %v7425, %v7429
        %v7434 = vsel %vm7433, 1, 0
        %v7435 = vadd.s32 %v7425, %v7429
        %v7436 = vadd.s32 %v7428, %v7434
        %vm7437 = vc.u32 %v7435, %v7431
        %v7438 = vsel %vm7437, 1, 0
        %v7439 = vadd.s32 %v7435, %v7431
        %v7440 = vadd.s32 %v7436, %v7438
        %v7441 = vadd.s32 %v7440, %v7430
        %v7442 = vadd.s32 %v7441, %v7432
        %v7443 = vmul.u32 %v7398, %v7389
        %v7444 = vadd.s32 %v7420, %v7439
        %vm7445 = vc.u32 %v7420, %v7439
        %v7446 = vadd.s32 %v7442, 1
        %v7447 = vsel %vm7445, %v7446, %v7442
        %v7448 = vadd.s32 %v7443, %v7447
        %v7449 = vadd.s32 %v7448, 536870912
        %v7450 = vshrl.u32 %v7449, 30
        %v7451 = vshll.u32 %v7450, 30
        %v7452 = vsub.s32 %v7448, %v7451
        %vm7453 = vcmp.lt.s32.totalorder %v7452, 0
        %v7454 = vsub.s32 0, %v7452
        %v7455 = vsel %vm7453, %v7454, %v7452
        %v7456 = vclz %v7455
        %v7457 = vsub.s32 %v7456, 2
        %vm7458 = vcmp.gt.s32.totalorder 0, %v7457
        %v7459 = vsel %vm7458, 0, %v7457
        %v7460 = vsub.s32 32, %v7459
        %v7461 = vshll.u32 %v7452, %v7459
        %v7462 = vshrl.u32 %v7444, %v7460
        %v7463 = vor.u32 %v7461, %v7462
        %v7464 = vsub.s32 4294967266, %v7459
        %v7465 = vadd.s32 %v7464, 127
        %v7466 = vshll.u32 %v7465, 23
        %v7467 = vor.u32 4788187, %v7466
        %v7468 = vand.u32 2147483647, %v7467
        %v7470 = vcvt.s32.f32 %v7463
        %v7471 = vmul.f32 %v7470, %v7468
        %v7472 = vxor.u32 %v7471, 2147483648
        %v7473 = vsel %vm7352, %v7472, %v7471
        %v7474 = vsub.s32 4, %v7450
        %v7475 = vsel %vm7352, %v7474, %v7450
        %v7476 = vsel %vm7351, %v7038, %v7473
        %v7477 = vsel %vm7351, 0, %v7475
        %v7478 = vmul.f32 %v7476, %v7476
        %v7479 = vmul.f32 %v7478, -0.001358992
        %v7480 = vadd.f32 %v7479, 0.041655596
        %v7481 = vmul.f32 %v7478, %v7480
        %v7482 = vadd.f32 %v7481, -0.4999988
        %v7483 = vmul.f32 %v7478, %v7482
        %v7484 = vadd.f32 1.0, %v7483
        %v7485 = vmul.f32 %v7476, %v7476
        %v7486 = vmul.f32 %v7485, -0.00019511016
        %v7487 = vadd.f32 %v7486, 0.008332121
        %v7488 = vmul.f32 %v7485, %v7487
        %v7489 = vadd.f32 %v7488, -0.16666654
        %v7490 = vmul.f32 %v7485, %v7489
        %v7491 = vadd.f32 %v7490, 1.0
        %v7492 = vmul.f32 %v7491, %v7476
        %vm7493 = vweird.f32 %v7038
        %v7494 = vadd.s32 %v7477, 3
        %v7495 = vand.u32 %v7494, 3
        %vm7496 = vcmp.lt.s32.totalorder %v7495, 2
        %vm7497 = vcmp.eq.s32.totalorder %v7495, 0
        %v7498 = vxor.u32 %v7492, 2147483648
        %v7499 = vsel %vm7497, %v7484, %v7498
        %vm7500 = vcmp.eq.s32.totalorder %v7495, 2
        %v7501 = vxor.u32 %v7484, 2147483648
        %v7502 = vsel %vm7500, %v7501, %v7492
        %v7503 = vsel %vm7496, %v7499, %v7502
        %v7504 = vsel %vm7493, nan, %v7503
        %v7505 = vand.u32 2147483647, %v7039
        %vm7506 = vcmp.le.f32.partialorder %v7505, 0.7853982
        %vm7507 = vcmp.lt.s32.totalorder %v7039, 0
        %v7508 = vand.u32 %v7039, 2139095040
        %v7509 = vshrl.u32 %v7508, 23
        %v7510 = vsub.s32 %v7509, 127
        %v7511 = vand.u32 2147483647, %v7039
        %v7512 = vand.u32 %v7511, 8388607
        %v7513 = vor.u32 %v7512, 8388608
        %v7514 = vsub.s32 0, %v7513
        %v7515 = vadd.s32 %v7510, 1
        %vm7516 = vcmp.gt.s32.totalorder %v7515, 0
        %v7517 = vsel %vm7516, %v7515, 0
        %v7518 = vshrl.u32 %v7517, 5
        %v7519 = vand.u32 %v7517, 31
        %v7520 = vsub.s32 32, %v7519
        %v7521 = vshrl.u32 683565275, %v7520
        %v7522 = vshll.u32 683565275, %v7519
        %v7523 = vshrl.u32 2475754826, %v7520
        %v7524 = vor.u32 %v7522, %v7523
        %v7525 = vshll.u32 2475754826, %v7519
        %v7526 = vshrl.u32 2131351028, %v7520
        %v7527 = vor.u32 %v7525, %v7526
        %v7528 = vshll.u32 2131351028, %v7519
        %v7529 = vshrl.u32 2102212464, %v7520
        %v7530 = vor.u32 %v7528, %v7529
        %v7531 = vshll.u32 2102212464, %v7519
        %v7532 = vshrl.u32 920167782, %v7520
        %v7533 = vor.u32 %v7531, %v7532
        %v7534 = vshll.u32 920167782, %v7519
        %v7535 = vshrl.u32 1326507024, %v7520
        %v7536 = vor.u32 %v7534, %v7535
        %vm7537 = vcmp.lt.s32.totalorder %v7518, 1
        %vm7538 = vcmp.lt.s32.totalorder %v7518, 2
        %vm7539 = vcmp.lt.s32.totalorder %v7518, 3
        %vm7540 = vcmp.lt.s32.totalorder %v7518, 4
        %v7541 = vsel %vm7537, %v7521, %v7524
        %v7542 = vsel %vm7540, %v7530, 2102212464
        %v7543 = vsel %vm7539, %v7527, %v7542
        %v7544 = vsel %vm7538, %v7541, %v7543
        %v7545 = vsel %vm7537, %v7524, %v7527
        %v7546 = vsel %vm7540, %v7533, 920167782
        %v7547 = vsel %vm7539, %v7530, %v7546
        %v7548 = vsel %vm7538, %v7545, %v7547
        %v7549 = vsel %vm7537, %v7527, %v7530
        %v7550 = vsel %vm7540, %v7536, 1326507024
        %v7551 = vsel %vm7539, %v7533, %v7550
        %v7552 = vsel %vm7538, %v7549, %v7551
        %v7553 = vshll.u32 %v7513, 8
        %v7554 = vand.u32 %v7553, 65535
        %v7555 = vshrl.u32 %v7553, 16
        %v7556 = vand.u32 %v7552, 65535
        %v7557 = vshrl.u32 %v7552, 16
        %v7558 = vmul.u32 %v7554, %v7556
        %v7559 = vmul.u32 %v7554, %v7557
        %v7560 = vmul.u32 %v7555, %v7556
        %v7561 = vmul.u32 %v7555, %v7557
        %v7562 = vshll.u32 %v7559, 16
        %v7563 = vshrl.u32 %v7559, 16
        %v7564 = vshll.u32 %v7560, 16
        %v7565 = vshrl.u32 %v7560, 16
        %vm7566 = vc.u32 %v7558, %v7562
        %v7567 = vsel %vm7566, 1, 0
        %v7568 = vadd.s32 %v7558, %v7562
        %v7569 = vadd.s32 %v7561, %v7567
        %vm7570 = vc.u32 %v7568, %v7564
        %v7571 = vsel %vm7570, 1, 0
        %v7572 = vadd.s32 %v7568, %v7564
        %v7573 = vadd.s32 %v7569, %v7571
        %v7574 = vadd.s32 %v7573, %v7563
        %v7575 = vadd.s32 %v7574, %v7565
        %v7576 = vand.u32 %v7553, 65535
        %v7577 = vshrl.u32 %v7553, 16
        %v7578 = vand.u32 %v7548, 65535
        %v7579 = vshrl.u32 %v7548, 16
        %v7580 = vmul.u32 %v7576, %v7578
        %v7581 = vmul.u32 %v7576, %v7579
        %v7582 = vmul.u32 %v7577, %v7578
        %v7583 = vmul.u32 %v7577, %v7579
        %v7584 = vshll.u32 %v7581, 16
        %v7585 = vshrl.u32 %v7581, 16
        %v7586 = vshll.u32 %v7582, 16
        %v7587 = vshrl.u32 %v7582, 16
        %vm7588 = vc.u32 %v7580, %v7584
        %v7589 = vsel %vm7588, 1, 0
        %v7590 = vadd.s32 %v7580, %v7584
        %v7591 = vadd.s32 %v7583, %v7589
        %vm7592 = vc.u32 %v7590, %v7586
        %v7593 = vsel %vm7592, 1, 0
        %v7594 = vadd.s32 %v7590, %v7586
        %v7595 = vadd.s32 %v7591, %v7593
        %v7596 = vadd.s32 %v7595, %v7585
        %v7597 = vadd.s32 %v7596, %v7587
        %v7598 = vmul.u32 %v7553, %v7544
        %v7599 = vadd.s32 %v7575, %v7594
        %vm7600 = vc.u32 %v7575, %v7594
        %v7601 = vadd.s32 %v7597, 1
        %v7602 = vsel %vm7600, %v7601, %v7597
        %v7603 = vadd.s32 %v7598, %v7602
        %v7604 = vadd.s32 %v7603, 536870912
        %v7605 = vshrl.u32 %v7604, 30
        %v7606 = vshll.u32 %v7605, 30
        %v7607 = vsub.s32 %v7603, %v7606
        %vm7608 = vcmp.lt.s32.totalorder %v7607, 0
        %v7609 = vsub.s32 0, %v7607
        %v7610 = vsel %vm7608, %v7609, %v7607
        %v7611 = vclz %v7610
        %v7612 = vsub.s32 %v7611, 2
        %vm7613 = vcmp.gt.s32.totalorder 0, %v7612
        %v7614 = vsel %vm7613, 0, %v7612
        %v7615 = vsub.s32 32, %v7614
        %v7616 = vshll.u32 %v7607, %v7614
        %v7617 = vshrl.u32 %v7599, %v7615
        %v7618 = vor.u32 %v7616, %v7617
        %v7619 = vsub.s32 4294967266, %v7614
        %v7620 = vadd.s32 %v7619, 127
        %v7621 = vshll.u32 %v7620, 23
        %v7622 = vor.u32 4788187, %v7621
        %v7623 = vand.u32 2147483647, %v7622
        %v7625 = vcvt.s32.f32 %v7618
        %v7626 = vmul.f32 %v7625, %v7623
        %v7627 = vxor.u32 %v7626, 2147483648
        %v7628 = vsel %vm7507, %v7627, %v7626
        %v7629 = vsub.s32 4, %v7605
        %v7630 = vsel %vm7507, %v7629, %v7605
        %v7631 = vsel %vm7506, %v7039, %v7628
        %v7632 = vsel %vm7506, 0, %v7630
        %v7633 = vmul.f32 %v7631, %v7631
        %v7634 = vmul.f32 %v7633, -0.001358992
        %v7635 = vadd.f32 %v7634, 0.041655596
        %v7636 = vmul.f32 %v7633, %v7635
        %v7637 = vadd.f32 %v7636, -0.4999988
        %v7638 = vmul.f32 %v7633, %v7637
        %v7639 = vadd.f32 1.0, %v7638
        %v7640 = vmul.f32 %v7631, %v7631
        %v7641 = vmul.f32 %v7640, -0.00019511016
        %v7642 = vadd.f32 %v7641, 0.008332121
        %v7643 = vmul.f32 %v7640, %v7642
        %v7644 = vadd.f32 %v7643, -0.16666654
        %v7645 = vmul.f32 %v7640, %v7644
        %v7646 = vadd.f32 %v7645, 1.0
        %v7647 = vmul.f32 %v7646, %v7631
        %vm7648 = vweird.f32 %v7039
        %v7649 = vadd.s32 %v7632, 3
        %v7650 = vand.u32 %v7649, 3
        %vm7651 = vcmp.lt.s32.totalorder %v7650, 2
        %vm7652 = vcmp.eq.s32.totalorder %v7650, 0
        %v7653 = vxor.u32 %v7647, 2147483648
        %v7654 = vsel %vm7652, %v7639, %v7653
        %vm7655 = vcmp.eq.s32.totalorder %v7650, 2
        %v7656 = vxor.u32 %v7639, 2147483648
        %v7657 = vsel %vm7655, %v7656, %v7647
        %v7658 = vsel %vm7651, %v7654, %v7657
        %v7659 = vsel %vm7648, nan, %v7658
        %v7660 = vmul.f32 %v7194, %v7194
        %v7661 = vmul.f32 %v7349, %v7349
        %v7662 = vmul.f32 %v7504, %v7504
        %v7663 = vmul.f32 %v7659, %v7659
        %7665 = vset.pattern.permute.xlu0 0
        %7666 = vperm.xlu0 %7665, %v7008
        %v7667 = vpop.permute.xlu0 %7666
        %7670 = vset.pattern.permute.xlu0 0
        %7671 = vperm.xlu0 %7670, %v7009
        %v7672 = vpop.permute.xlu0 %7671
        %7675 = vset.pattern.permute.xlu0 0
        %7676 = vperm.xlu0 %7675, %v7010
        %v7677 = vpop.permute.xlu0 %7676
        %7680 = vset.pattern.permute.xlu0 0
        %7681 = vperm.xlu0 %7680, %v7011
        %v7682 = vpop.permute.xlu0 %7681
        %v7684 = vmul.f32 %v7667, %v7660
        %v7685 = vmul.f32 %v7672, %v7661
        %v7686 = vmul.f32 %v7677, %v7662
        %v7687 = vmul.f32 %v7682, %v7663
        %v7688 = vadd.f32 %v6997, %v7684
        %v7689 = vadd.f32 %v7000, %v7685
        %v7690 = vadd.f32 %v7003, %v7686
        %v7691 = vadd.f32 %v7006, %v7687
        %7692 = vst [vmem:[#allocation2] sm:$0xff] 0.0
        %7693 = vst [vmem:[#allocation2 + $0x8] sm:$0xff] 0.0
        %7694 = vst [vmem:[#allocation2 + $0x10] sm:$0xff] 0.0
        %7695 = vst [vmem:[#allocation2 + $0x18] sm:$0xff] 0.0
        %7700 = vrot.lane.b32.xlu0 %v7688, 1
        %v7701 = vpop.permute.xlu0 %7700
        %7702 = vrot.lane.b32.xlu0 %v7689, 1
        %v7703 = vpop.permute.xlu0 %7702
        %7704 = vrot.lane.b32.xlu0 %v7690, 1
        %v7705 = vpop.permute.xlu0 %7704
        %7706 = vrot.lane.b32.xlu0 %v7691, 1
        %v7707 = vpop.permute.xlu0 %7706
        %vm7712 = vcmask 72712
        %7713 = vst.msk [vmem:[#allocation2] sm:$0xff] %vm7712, %v7701
        %7714 = vst.msk [vmem:[#allocation2 + $0x8] sm:$0xff] %vm7712, %v7703
        %7715 = vst.msk [vmem:[#allocation2 + $0x10] sm:$0xff] %vm7712, %v7705
        %7716 = vst.msk [vmem:[#allocation2 + $0x18] sm:$0xff] %vm7712, %v7707
        %v7717 = vld [vmem:[#allocation2] sm:$0xff]
        %v7718 = vld [vmem:[#allocation2 + $0x8] sm:$0xff]
        %v7719 = vld [vmem:[#allocation2 + $0x10] sm:$0xff]
        %v7720 = vld [vmem:[#allocation2 + $0x18] sm:$0xff]
        %7725 = vrot.lane.b32.xlu0 %v7717, 127
        %v7726 = vpop.permute.xlu0 %7725
        %7727 = vrot.lane.b32.xlu0 %v7718, 127
        %v7728 = vpop.permute.xlu0 %7727
        %7729 = vrot.lane.b32.xlu0 %v7719, 127
        %v7730 = vpop.permute.xlu0 %7729
        %7731 = vrot.lane.b32.xlu0 %v7720, 127
        %v7732 = vpop.permute.xlu0 %7731
        %7737 = vrot.lane.b32.xlu0 %v7717, 126
        %v7738 = vpop.permute.xlu0 %7737
        %7739 = vrot.lane.b32.xlu0 %v7718, 126
        %v7740 = vpop.permute.xlu0 %7739
        %7741 = vrot.lane.b32.xlu0 %v7719, 126
        %v7742 = vpop.permute.xlu0 %7741
        %7743 = vrot.lane.b32.xlu0 %v7720, 126
        %v7744 = vpop.permute.xlu0 %7743
        %v7749 = vld [vmem:[%s123] sm:$0xf]
        %v7750 = vld [vmem:[%s123 + $0x4] sm:$0xf]
        %v7751 = vld [vmem:[%s123 + $0x8] sm:$0xf]
        %v7752 = vld [vmem:[%s123 + $0xc] sm:$0xf]
        %v7753 = vpack.c.bf16 %v7718, %v7717
        %v7754 = vpack.c.bf16 %v7720, %v7719
        %v7755 = vpack.c.bf16 %v7728, %v7726
        %v7756 = vpack.c.bf16 %v7732, %v7730
        %v7757 = vpack.c.bf16 %v7740, %v7738
        %v7758 = vpack.c.bf16 %v7744, %v7742
        %v7759 = vld [vmem:[%s125] sm:$0xff]
        %v7760 = vld [vmem:[%s125 + $0x8] sm:$0xff]
        %v7761 = vld [vmem:[%s125 + $0x10] sm:$0xff]
        %v7762 = vld [vmem:[%s125 + $0x18] sm:$0xff]
        %7764 = vset.pattern.permute.xlu0 0
        %7765 = vperm.xlu0 %7764, %v7759
        %v7766 = vpop.permute.xlu0 %7765
        %7769 = vset.pattern.permute.xlu0 0
        %7770 = vperm.xlu0 %7769, %v7760
        %v7771 = vpop.permute.xlu0 %7770
        %7774 = vset.pattern.permute.xlu0 0
        %7775 = vperm.xlu0 %7774, %v7761
        %v7776 = vpop.permute.xlu0 %7775
        %7779 = vset.pattern.permute.xlu0 0
        %7780 = vperm.xlu0 %7779, %v7762
        %v7781 = vpop.permute.xlu0 %7780
        %v7787 = vunpack.c.l.b16 %v7749
        %v7788 = vunpack.c.l.b16 %v7750
        %v7789 = vunpack.c.l.b16 %v7751
        %v7790 = vunpack.c.l.b16 %v7752
        %v7791 = vpack.c.b16 %v7788, %v7787
        %v7792 = vpack.c.b16 %v7790, %v7789
        %vm7793 = vcmask 785408
        %v7795 = vsel %vm7793, %v7791, 0
        %v7798 = vsel %vm7793, %v7792, 0
        %7800 = vmatpush.bf16.msra.mxu0 0
        %7801 = vmatpush.bf16.msra.mxu0 0
        %7802 = vmatpush.bf16.msra.mxu0 %v7758
        %7803 = vmatpush.bf16.msra.mxu0 %v7757
        %7804 = vmatpush.bf16.msra.mxu0 %v7756
        %7805 = vmatpush.bf16.msra.mxu0 %v7755
        %7806 = vmatpush.bf16.msra.mxu0 %v7754
        %7807 = vmatpush.bf16.msra.mxu0 %v7753
        %7808 = vmatmul.bf16.gmra.mxu0 %v7795
        %v7809 = vpop.f32.mrf.mxu0
        %v7810 = vadd.f32 %v7766, %v7809
        %v7811 = vpop.f32.mrf.mxu0
        %v7812 = vadd.f32 %v7771, %v7811
        %7813 = vmatmul.bf16.gmra.mxu0 %v7798
        %v7814 = vpop.f32.mrf.mxu0
        %v7815 = vadd.f32 %v7776, %v7814
        %v7816 = vpop.f32.mrf.mxu0
        %v7817 = vadd.f32 %v7781, %v7816
        %7818 = vdwg.mxu0
        %v7819 = vld [vmem:[%s127] sm:$0xff]
        %v7820 = vld [vmem:[%s129] sm:$0xff]
        %7822 = vset.pattern.permute.xlu0 0
        %7823 = vperm.xlu0 %7822, %v7820
        %v7824 = vpop.permute.xlu0 %7823
        %v7827 = vsel %vm3934, %v7819, 0
        %7829 = vmatpush.msra.mxu0 0.0
        %7830 = vmatpush.msra.mxu0 0.0
        %7831 = vmatpush.msra.mxu0 0.0
        %7832 = vmatpush.msra.mxu0 0.0
        %7833 = vmatpush.msra.mxu0 0.0
        %7834 = vmatpush.msra.mxu0 0.0
        %7835 = vmatpush.msra.mxu0 0.0
        %7836 = vmatpush.msra.mxu0 0.0
        %7837 = vmatpush.msra.mxu0 0.0
        %7838 = vmatpush.msra.mxu0 0.0
        %7839 = vmatpush.msra.mxu0 0.0
        %7840 = vmatpush.msra.mxu0 0.0
        %7841 = vmatpush.msra.mxu0 %v7817
        %7842 = vmatpush.msra.mxu0 %v7815
        %7843 = vmatpush.msra.mxu0 %v7812
        %7844 = vmatpush.msra.mxu0 %v7810
        %7845 = vmatmul.f32.gmra.mxu0 %v7827
        %v7846 = vpop.f32.mrf.mxu0
        %v7847 = vadd.f32 %v7824, %v7846
        %7848 = vdwg.mxu0
        %7849 = vst.msk [vmem:[%s2352] sm:$0xff] %vm2849, %v7847
        %v7850 = vmul.f32 %v7847, %v7847
        %v7851 = vsel %vm2849, %v7850, 0.0
        %v7852 = vrot.slane %v7851, 4
        %v7853 = vadd.f32 %v7851, %v7852
        %v7854 = vrot.slane %v7853, 2
        %v7855 = vadd.f32 %v7853, %v7854
        %v7856 = vrot.slane %v7855, 1
        %v7857 = vadd.f32 %v7855, %v7856
        %v7858 = vrsqrt.pop %v7857
        %v7859 = vmul.f32 %v7858, %v7857
        %v7860 = vmul.f32 %v7859, %v7858
        %v7861 = vmul.f32 0.5, %v7860
        %v7862 = vsub.f32 1.5, %v7861
        %v7863 = vmul.f32 %v7858, %v7862
        %v7864 = vmul.f32 %v7857, %v7863
        %vm7865 = vcmp.eq.f32.partialorder %v7857, inf
        %v7866 = vsel %vm7865, %v7857, %v7864
        %vm7867 = vcmp.eq.f32.partialorder %v7857, 0.0
        %v7868 = vand.u32 %v7857, 2147483648
        %v7869 = vsel %vm7867, %v7868, %v7866
        %v7870 = vmax.f32 %v7869, 1e-12
        %v7871 = vrcp.pop %v7870
        %v7872 = vmul.f32 %v7870, %v7871
        %v7873 = vsub.f32 1.0, %v7872
        %v7874 = vmul.f32 %v7871, %v7873
        %v7875 = vadd.f32 %v7871, %v7874
        %vm7876 = vweird.f32 %v7870
        %vm7877 = vweird.f32 %v7871
        %vm7878 = vmor %vm7876, %vm7877
        %v7879 = vsel %vm7878, %v7871, %v7875
        %v7880 = vand.u32 2147483647, %v7870
        %vm7881 = vcmp.eq.f32.partialorder %v7880, 8.507059e+37
        %v7882 = vand.u32 %v7870, 2147483648
        %v7883 = vor.u32 1.1754944e-38, %v7882
        %v7884 = vsel %vm7881, %v7883, %v7879
        %v7885 = vmul.f32 %v7847, %v7884
        %v7886 = vld [vmem:[%s131] sm:$0xff]
        %v7887 = vld [vmem:[%s131 + $0x8] sm:$0xff]
        %v7888 = vld [vmem:[%s131 + $0x10] sm:$0xff]
        %v7889 = vld [vmem:[%s131 + $0x18] sm:$0xff]
        %v7890 = vld [vmem:[%s131 + $0x20] sm:$0xff]
        %v7891 = vld [vmem:[%s131 + $0x28] sm:$0xff]
        %v7892 = vld [vmem:[%s131 + $0x30] sm:$0xff]
        %v7893 = vld [vmem:[%s131 + $0x38] sm:$0xff]
        %v7895 = vsel %vm2849, %v7886, 0
        %v7898 = vsel %vm2849, %v7887, 0
        %v7901 = vsel %vm2849, %v7888, 0
        %v7904 = vsel %vm2849, %v7889, 0
        %v7907 = vsel %vm2849, %v7890, 0
        %v7910 = vsel %vm2849, %v7891, 0
        %v7913 = vsel %vm2849, %v7892, 0
        %v7916 = vsel %vm2849, %v7893, 0
        %7918 = vmatpush.msra.mxu0 0.0
        %7919 = vmatpush.msra.mxu0 0.0
        %7920 = vmatpush.msra.mxu0 0.0
        %7921 = vmatpush.msra.mxu0 0.0
        %7922 = vmatpush.msra.mxu0 0.0
        %7923 = vmatpush.msra.mxu0 0.0
        %7924 = vmatpush.msra.mxu0 0.0
        %7925 = vmatpush.msra.mxu0 0.0
        %7926 = vmatpush.msra.mxu0 0.0
        %7927 = vmatpush.msra.mxu0 0.0
        %7928 = vmatpush.msra.mxu0 0.0
        %7929 = vmatpush.msra.mxu0 0.0
        %7930 = vmatpush.msra.mxu0 0.0
        %7931 = vmatpush.msra.mxu0 0.0
        %7932 = vmatpush.msra.mxu0 0.0
        %7933 = vmatpush.msra.mxu0 %v7885
        %7934 = vmatmul.f32.gmra.mxu0 %v7895
        %v7935 = vpop.f32.mrf.mxu0
        %v7936 = vadd.f32 0.0, %v7935
        %7937 = vmatmul.f32.gmra.mxu0 %v7898
        %v7938 = vpop.f32.mrf.mxu0
        %v7939 = vadd.f32 0.0, %v7938
        %7940 = vmatmul.f32.gmra.mxu0 %v7901
        %v7941 = vpop.f32.mrf.mxu0
        %v7942 = vadd.f32 0.0, %v7941
        %7943 = vmatmul.f32.gmra.mxu0 %v7904
        %v7944 = vpop.f32.mrf.mxu0
        %v7945 = vadd.f32 0.0, %v7944
        %7946 = vmatmul.f32.gmra.mxu0 %v7907
        %v7947 = vpop.f32.mrf.mxu0
        %v7948 = vadd.f32 0.0, %v7947
        %7949 = vmatmul.f32.gmra.mxu0 %v7910
        %v7950 = vpop.f32.mrf.mxu0
        %v7951 = vadd.f32 0.0, %v7950
        %7952 = vmatmul.f32.gmra.mxu0 %v7913
        %v7953 = vpop.f32.mrf.mxu0
        %v7954 = vadd.f32 0.0, %v7953
        %7955 = vmatmul.f32.gmra.mxu0 %v7916
        %v7956 = vpop.f32.mrf.mxu0
        %v7957 = vadd.f32 0.0, %v7956
        %7958 = vdwg.mxu0
        %v7959 = vsel %vm2849, %v7936, -inf
        %v7960 = vsel %vm2849, %v7939, -inf
        %v7961 = vsel %vm2849, %v7942, -inf
        %v7962 = vsel %vm2849, %v7945, -inf
        %v7963 = vsel %vm2849, %v7948, -inf
        %v7964 = vmax.f32 %v7959, %v7963
        %v7965 = vsel %vm2849, %v7951, -inf
        %v7966 = vmax.f32 %v7960, %v7965
        %v7967 = vsel %vm2849, %v7954, -inf
        %v7968 = vmax.f32 %v7961, %v7967
        %v7969 = vsel %vm2849, %v7957, -inf
        %v7970 = vmax.f32 %v7962, %v7969
        %v7971 = vmax.f32 %v7964, %v7966
        %v7972 = vmax.f32 %v7968, %v7970
        %v7973 = vmax.f32 %v7971, %v7972
        %v7974 = vrot.slane %v7973, 4
        %v7975 = vmax.f32 %v7973, %v7974
        %v7976 = vrot.slane %v7975, 2
        %v7977 = vmax.f32 %v7975, %v7976
        %v7978 = vrot.slane %v7977, 1
        %v7979 = vmax.f32 %v7977, %v7978
        %vm7980 = vcmp.ge.f32.partialorder %v7936, %v7979
        %vm7981 = vcmp.ge.f32.partialorder %v7939, %v7979
        %vm7982 = vcmp.ge.f32.partialorder %v7942, %v7979
        %vm7983 = vcmp.ge.f32.partialorder %v7945, %v7979
        %vm7984 = vcmp.ge.f32.partialorder %v7948, %v7979
        %vm7985 = vcmp.ge.f32.partialorder %v7951, %v7979
        %vm7986 = vcmp.ge.f32.partialorder %v7954, %v7979
        %vm7987 = vcmp.ge.f32.partialorder %v7957, %v7979
        %v7988 = vsel %vm7980, %v3953, 64
        %v7989 = vsel %vm7981, %v3954, 64
        %v7990 = vsel %vm7982, %v3955, 64
        %v7991 = vsel %vm7983, %v3956, 64
        %v7992 = vsel %vm7984, %v3957, 64
        %v7993 = vsel %vm7985, %v3958, 64
        %v7994 = vsel %vm7986, %v3959, 64
        %v7995 = vsel %vm7987, %v3960, 64
        %v7996 = vsel %vm2849, %v7988, 2147483647
        %v7997 = vsel %vm2849, %v7989, 2147483647
        %v7998 = vsel %vm2849, %v7990, 2147483647
        %v7999 = vsel %vm2849, %v7991, 2147483647
        %v8000 = vsel %vm2849, %v7992, 2147483647
        %vm8001 = vcmp.lt.s32.totalorder %v7996, %v8000
        %v8002 = vsel %vm8001, %v7996, %v8000
        %v8003 = vsel %vm2849, %v7993, 2147483647
        %vm8004 = vcmp.lt.s32.totalorder %v7997, %v8003
        %v8005 = vsel %vm8004, %v7997, %v8003
        %v8006 = vsel %vm2849, %v7994, 2147483647
        %vm8007 = vcmp.lt.s32.totalorder %v7998, %v8006
        %v8008 = vsel %vm8007, %v7998, %v8006
        %v8009 = vsel %vm2849, %v7995, 2147483647
        %vm8010 = vcmp.lt.s32.totalorder %v7999, %v8009
        %v8011 = vsel %vm8010, %v7999, %v8009
        %vm8012 = vcmp.lt.s32.totalorder %v8002, %v8005
        %v8013 = vsel %vm8012, %v8002, %v8005
        %vm8014 = vcmp.lt.s32.totalorder %v8008, %v8011
        %v8015 = vsel %vm8014, %v8008, %v8011
        %vm8016 = vcmp.lt.s32.totalorder %v8013, %v8015
        %v8017 = vsel %vm8016, %v8013, %v8015
        %v8018 = vrot.slane %v8017, 4
        %vm8019 = vcmp.lt.s32.totalorder %v8017, %v8018
        %v8020 = vsel %vm8019, %v8017, %v8018
        %v8021 = vrot.slane %v8020, 2
        %vm8022 = vcmp.lt.s32.totalorder %v8020, %v8021
        %v8023 = vsel %vm8022, %v8020, %v8021
        %v8024 = vrot.slane %v8023, 1
        %vm8025 = vcmp.lt.s32.totalorder %v8023, %v8024
        %v8026 = vsel %vm8025, %v8023, %v8024
        %vm8027 = vcmask 57344
        %8028 = vst.msk [vmem:[%s2347] sm:$0x1] %vm8027, %v8026
        %vm8029 = vcmp.eq.s32.totalorder %v3953, %v8026
        %vm8030 = vcmp.eq.s32.totalorder %v3954, %v8026
        %vm8031 = vcmp.eq.s32.totalorder %v3955, %v8026
        %vm8032 = vcmp.eq.s32.totalorder %v3956, %v8026
        %vm8033 = vcmp.eq.s32.totalorder %v3957, %v8026
        %vm8034 = vcmp.eq.s32.totalorder %v3958, %v8026
        %vm8035 = vcmp.eq.s32.totalorder %v3959, %v8026
        %vm8036 = vcmp.eq.s32.totalorder %v3960, %v8026
        %v8037 = vsel %vm8029, 1, 0
        %v8038 = vsel %vm8030, 1, 0
        %v8039 = vsel %vm8031, 1, 0
        %v8040 = vsel %vm8032, 1, 0
        %v8041 = vsel %vm8033, 1, 0
        %v8042 = vsel %vm8034, 1, 0
        %v8043 = vsel %vm8035, 1, 0
        %v8044 = vsel %vm8036, 1, 0
        %v8045 = vcvt.s32.f32 %v8037
        %v8046 = vcvt.s32.f32 %v8038
        %v8047 = vcvt.s32.f32 %v8039
        %v8048 = vcvt.s32.f32 %v8040
        %v8049 = vcvt.s32.f32 %v8041
        %v8050 = vcvt.s32.f32 %v8042
        %v8051 = vcvt.s32.f32 %v8043
        %v8052 = vcvt.s32.f32 %v8044
        %v8053 = vld [vmem:[%s133] sm:$0xff]
        %vm8054 = vcmask 523264
        %v8056 = vsel %vm8054, %v8053, 0
        %8058 = vmatpush.msra.mxu0 0.0
        %8059 = vmatpush.msra.mxu0 0.0
        %8060 = vmatpush.msra.mxu0 0.0
        %8061 = vmatpush.msra.mxu0 0.0
        %8062 = vmatpush.msra.mxu0 0.0
        %8063 = vmatpush.msra.mxu0 0.0
        %8064 = vmatpush.msra.mxu0 0.0
        %8065 = vmatpush.msra.mxu0 0.0
        %8066 = vmatpush.msra.mxu0 %v8052
        %8067 = vmatpush.msra.mxu0 %v8051
        %8068 = vmatpush.msra.mxu0 %v8050
        %8069 = vmatpush.msra.mxu0 %v8049
        %8070 = vmatpush.msra.mxu0 %v8048
        %8071 = vmatpush.msra.mxu0 %v8047
        %8072 = vmatpush.msra.mxu0 %v8046
        %8073 = vmatpush.msra.mxu0 %v8045
        %8074 = vmatmul.f32.gmra.mxu0 %v8056
        %v8075 = vpop.f32.mrf.mxu0
        %v8076 = vadd.f32 0.0, %v8075
        %8077 = vdwg.mxu0
        %v8078 = vld [vmem:[#allocation26] sm:$0xff]
        %v8079 = vld [vmem:[#allocation26 + $0x8] sm:$0xff]
        %v8080 = vld [vmem:[#allocation26 + $0x10] sm:$0xff]
        %v8081 = vld [vmem:[#allocation26 + $0x18] sm:$0xff]
        %v8082 = vld [vmem:[%s137] sm:$0xff]
        %v8083 = vld [vmem:[%s137 + $0x8] sm:$0xff]
        %v8084 = vld [vmem:[%s137 + $0x10] sm:$0xff]
        %v8085 = vld [vmem:[%s137 + $0x18] sm:$0xff]
        %8087 = vset.pattern.permute.xlu0 0
        %8088 = vperm.xlu0 %8087, %v8082
        %v8089 = vpop.permute.xlu0 %8088
        %8092 = vset.pattern.permute.xlu0 0
        %8093 = vperm.xlu0 %8092, %v8083
        %v8094 = vpop.permute.xlu0 %8093
        %8097 = vset.pattern.permute.xlu0 0
        %8098 = vperm.xlu0 %8097, %v8084
        %v8099 = vpop.permute.xlu0 %8098
        %8102 = vset.pattern.permute.xlu0 0
        %8103 = vperm.xlu0 %8102, %v8085
        %v8104 = vpop.permute.xlu0 %8103
        %v8107 = vsel %vm2849, %v8078, 0
        %v8110 = vsel %vm2849, %v8079, 0
        %v8113 = vsel %vm2849, %v8080, 0
        %v8116 = vsel %vm2849, %v8081, 0
        %8118 = vmatpush.msra.mxu0 0.0
        %8119 = vmatpush.msra.mxu0 0.0
        %8120 = vmatpush.msra.mxu0 0.0
        %8121 = vmatpush.msra.mxu0 0.0
        %8122 = vmatpush.msra.mxu0 0.0
        %8123 = vmatpush.msra.mxu0 0.0
        %8124 = vmatpush.msra.mxu0 0.0
        %8125 = vmatpush.msra.mxu0 0.0
        %8126 = vmatpush.msra.mxu0 0.0
        %8127 = vmatpush.msra.mxu0 0.0
        %8128 = vmatpush.msra.mxu0 0.0
        %8129 = vmatpush.msra.mxu0 0.0
        %8130 = vmatpush.msra.mxu0 0.0
        %8131 = vmatpush.msra.mxu0 0.0
        %8132 = vmatpush.msra.mxu0 0.0
        %8133 = vmatpush.msra.mxu0 %v8076
        %8134 = vmatmul.f32.gmra.mxu0 %v8107
        %v8135 = vpop.f32.mrf.mxu0
        %v8136 = vadd.f32 %v8089, %v8135
        %8137 = vmatmul.f32.gmra.mxu0 %v8110
        %v8138 = vpop.f32.mrf.mxu0
        %v8139 = vadd.f32 %v8094, %v8138
        %8140 = vmatmul.f32.gmra.mxu0 %v8113
        %v8141 = vpop.f32.mrf.mxu0
        %v8142 = vadd.f32 %v8099, %v8141
        %8143 = vmatmul.f32.gmra.mxu0 %v8116
        %v8144 = vpop.f32.mrf.mxu0
        %v8145 = vadd.f32 %v8104, %v8144
        %8146 = vdwg.mxu0
        %v8147 = vadd.f32 %v8136, 0.0
        %v8148 = vadd.f32 %v8139, 0.0
        %v8149 = vadd.f32 %v8142, 0.0
        %v8150 = vadd.f32 %v8145, 0.0
        %v8151 = vsub.f32 %v7810, %v8136
        %v8152 = vsub.f32 %v7812, %v8139
        %v8153 = vsub.f32 %v7815, %v8142
        %v8154 = vsub.f32 %v7817, %v8145
        %s8155 = scalar_lea.vmem %s127, 8
        %v8156 = vld [vmem:[%s8155] sm:$0xff]
        %s8157 = scalar_lea.vmem %s129, 8
        %v8158 = vld [vmem:[%s8157] sm:$0xff]
        %8160 = vset.pattern.permute.xlu0 0
        %8161 = vperm.xlu0 %8160, %v8158
        %v8162 = vpop.permute.xlu0 %8161
        %v8165 = vsel %vm3934, %v8156, 0
        %8167 = vmatpush.msra.mxu0 0.0
        %8168 = vmatpush.msra.mxu0 0.0
        %8169 = vmatpush.msra.mxu0 0.0
        %8170 = vmatpush.msra.mxu0 0.0
        %8171 = vmatpush.msra.mxu0 0.0
        %8172 = vmatpush.msra.mxu0 0.0
        %8173 = vmatpush.msra.mxu0 0.0
        %8174 = vmatpush.msra.mxu0 0.0
        %8175 = vmatpush.msra.mxu0 0.0
        %8176 = vmatpush.msra.mxu0 0.0
        %8177 = vmatpush.msra.mxu0 0.0
        %8178 = vmatpush.msra.mxu0 0.0
        %8179 = vmatpush.msra.mxu0 %v8154
        %8180 = vmatpush.msra.mxu0 %v8153
        %8181 = vmatpush.msra.mxu0 %v8152
        %8182 = vmatpush.msra.mxu0 %v8151
        %8183 = vmatmul.f32.gmra.mxu0 %v8165
        %v8184 = vpop.f32.mrf.mxu0
        %v8185 = vadd.f32 %v8162, %v8184
        %8186 = vdwg.mxu0
        %8187 = vst.msk [vmem:[%s2352 + $0x8] sm:$0xff] %vm2849, %v8185
        %v8188 = vmul.f32 %v8185, %v8185
        %v8189 = vsel %vm2849, %v8188, 0.0
        %v8190 = vrot.slane %v8189, 4
        %v8191 = vadd.f32 %v8189, %v8190
        %v8192 = vrot.slane %v8191, 2
        %v8193 = vadd.f32 %v8191, %v8192
        %v8194 = vrot.slane %v8193, 1
        %v8195 = vadd.f32 %v8193, %v8194
        %v8196 = vrsqrt.pop %v8195
        %v8197 = vmul.f32 %v8196, %v8195
        %v8198 = vmul.f32 %v8197, %v8196
        %v8199 = vmul.f32 0.5, %v8198
        %v8200 = vsub.f32 1.5, %v8199
        %v8201 = vmul.f32 %v8196, %v8200
        %v8202 = vmul.f32 %v8195, %v8201
        %vm8203 = vcmp.eq.f32.partialorder %v8195, inf
        %v8204 = vsel %vm8203, %v8195, %v8202
        %vm8205 = vcmp.eq.f32.partialorder %v8195, 0.0
        %v8206 = vand.u32 %v8195, 2147483648
        %v8207 = vsel %vm8205, %v8206, %v8204
        %v8208 = vmax.f32 %v8207, 1e-12
        %v8209 = vrcp.pop %v8208
        %v8210 = vmul.f32 %v8208, %v8209
        %v8211 = vsub.f32 1.0, %v8210
        %v8212 = vmul.f32 %v8209, %v8211
        %v8213 = vadd.f32 %v8209, %v8212
        %vm8214 = vweird.f32 %v8208
        %vm8215 = vweird.f32 %v8209
        %vm8216 = vmor %vm8214, %vm8215
        %v8217 = vsel %vm8216, %v8209, %v8213
        %v8218 = vand.u32 2147483647, %v8208
        %vm8219 = vcmp.eq.f32.partialorder %v8218, 8.507059e+37
        %v8220 = vand.u32 %v8208, 2147483648
        %v8221 = vor.u32 1.1754944e-38, %v8220
        %v8222 = vsel %vm8219, %v8221, %v8217
        %v8223 = vmul.f32 %v8185, %v8222
        %s8224 = scalar_lea.vmem %s131, 64
        %v8225 = vld [vmem:[%s8224] sm:$0xff]
        %v8226 = vld [vmem:[%s8224 + $0x8] sm:$0xff]
        %v8227 = vld [vmem:[%s8224 + $0x10] sm:$0xff]
        %v8228 = vld [vmem:[%s8224 + $0x18] sm:$0xff]
        %v8229 = vld [vmem:[%s8224 + $0x20] sm:$0xff]
        %v8230 = vld [vmem:[%s8224 + $0x28] sm:$0xff]
        %v8231 = vld [vmem:[%s8224 + $0x30] sm:$0xff]
        %v8232 = vld [vmem:[%s8224 + $0x38] sm:$0xff]
        %v8234 = vsel %vm2849, %v8225, 0
        %v8237 = vsel %vm2849, %v8226, 0
        %v8240 = vsel %vm2849, %v8227, 0
        %v8243 = vsel %vm2849, %v8228, 0
        %v8246 = vsel %vm2849, %v8229, 0
        %v8249 = vsel %vm2849, %v8230, 0
        %v8252 = vsel %vm2849, %v8231, 0
        %v8255 = vsel %vm2849, %v8232, 0
        %8257 = vmatpush.msra.mxu0 0.0
        %8258 = vmatpush.msra.mxu0 0.0
        %8259 = vmatpush.msra.mxu0 0.0
        %8260 = vmatpush.msra.mxu0 0.0
        %8261 = vmatpush.msra.mxu0 0.0
        %8262 = vmatpush.msra.mxu0 0.0
        %8263 = vmatpush.msra.mxu0 0.0
        %8264 = vmatpush.msra.mxu0 0.0
        %8265 = vmatpush.msra.mxu0 0.0
        %8266 = vmatpush.msra.mxu0 0.0
        %8267 = vmatpush.msra.mxu0 0.0
        %8268 = vmatpush.msra.mxu0 0.0
        %8269 = vmatpush.msra.mxu0 0.0
        %8270 = vmatpush.msra.mxu0 0.0
        %8271 = vmatpush.msra.mxu0 0.0
        %8272 = vmatpush.msra.mxu0 %v8223
        %8273 = vmatmul.f32.gmra.mxu0 %v8234
        %v8274 = vpop.f32.mrf.mxu0
        %v8275 = vadd.f32 0.0, %v8274
        %8276 = vmatmul.f32.gmra.mxu0 %v8237
        %v8277 = vpop.f32.mrf.mxu0
        %v8278 = vadd.f32 0.0, %v8277
        %8279 = vmatmul.f32.gmra.mxu0 %v8240
        %v8280 = vpop.f32.mrf.mxu0
        %v8281 = vadd.f32 0.0, %v8280
        %8282 = vmatmul.f32.gmra.mxu0 %v8243
        %v8283 = vpop.f32.mrf.mxu0
        %v8284 = vadd.f32 0.0, %v8283
        %8285 = vmatmul.f32.gmra.mxu0 %v8246
        %v8286 = vpop.f32.mrf.mxu0
        %v8287 = vadd.f32 0.0, %v8286
        %8288 = vmatmul.f32.gmra.mxu0 %v8249
        %v8289 = vpop.f32.mrf.mxu0
        %v8290 = vadd.f32 0.0, %v8289
        %8291 = vmatmul.f32.gmra.mxu0 %v8252
        %v8292 = vpop.f32.mrf.mxu0
        %v8293 = vadd.f32 0.0, %v8292
        %8294 = vmatmul.f32.gmra.mxu0 %v8255
        %v8295 = vpop.f32.mrf.mxu0
        %v8296 = vadd.f32 0.0, %v8295
        %8297 = vdwg.mxu0
        %v8298 = vsel %vm2849, %v8275, -inf
        %v8299 = vsel %vm2849, %v8278, -inf
        %v8300 = vsel %vm2849, %v8281, -inf
        %v8301 = vsel %vm2849, %v8284, -inf
        %v8302 = vsel %vm2849, %v8287, -inf
        %v8303 = vmax.f32 %v8298, %v8302
        %v8304 = vsel %vm2849, %v8290, -inf
        %v8305 = vmax.f32 %v8299, %v8304
        %v8306 = vsel %vm2849, %v8293, -inf
        %v8307 = vmax.f32 %v8300, %v8306
        %v8308 = vsel %vm2849, %v8296, -inf
        %v8309 = vmax.f32 %v8301, %v8308
        %v8310 = vmax.f32 %v8303, %v8305
        %v8311 = vmax.f32 %v8307, %v8309
        %v8312 = vmax.f32 %v8310, %v8311
        %v8313 = vrot.slane %v8312, 4
        %v8314 = vmax.f32 %v8312, %v8313
        %v8315 = vrot.slane %v8314, 2
        %v8316 = vmax.f32 %v8314, %v8315
        %v8317 = vrot.slane %v8316, 1
        %v8318 = vmax.f32 %v8316, %v8317
        %vm8319 = vcmp.ge.f32.partialorder %v8275, %v8318
        %vm8320 = vcmp.ge.f32.partialorder %v8278, %v8318
        %vm8321 = vcmp.ge.f32.partialorder %v8281, %v8318
        %vm8322 = vcmp.ge.f32.partialorder %v8284, %v8318
        %vm8323 = vcmp.ge.f32.partialorder %v8287, %v8318
        %vm8324 = vcmp.ge.f32.partialorder %v8290, %v8318
        %vm8325 = vcmp.ge.f32.partialorder %v8293, %v8318
        %vm8326 = vcmp.ge.f32.partialorder %v8296, %v8318
        %v8327 = vsel %vm8319, %v3953, 64
        %v8328 = vsel %vm8320, %v3954, 64
        %v8329 = vsel %vm8321, %v3955, 64
        %v8330 = vsel %vm8322, %v3956, 64
        %v8331 = vsel %vm8323, %v3957, 64
        %v8332 = vsel %vm8324, %v3958, 64
        %v8333 = vsel %vm8325, %v3959, 64
        %v8334 = vsel %vm8326, %v3960, 64
        %v8335 = vsel %vm2849, %v8327, 2147483647
        %v8336 = vsel %vm2849, %v8328, 2147483647
        %v8337 = vsel %vm2849, %v8329, 2147483647
        %v8338 = vsel %vm2849, %v8330, 2147483647
        %v8339 = vsel %vm2849, %v8331, 2147483647
        %vm8340 = vcmp.lt.s32.totalorder %v8335, %v8339
        %v8341 = vsel %vm8340, %v8335, %v8339
        %v8342 = vsel %vm2849, %v8332, 2147483647
        %vm8343 = vcmp.lt.s32.totalorder %v8336, %v8342
        %v8344 = vsel %vm8343, %v8336, %v8342
        %v8345 = vsel %vm2849, %v8333, 2147483647
        %vm8346 = vcmp.lt.s32.totalorder %v8337, %v8345
        %v8347 = vsel %vm8346, %v8337, %v8345
        %v8348 = vsel %vm2849, %v8334, 2147483647
        %vm8349 = vcmp.lt.s32.totalorder %v8338, %v8348
        %v8350 = vsel %vm8349, %v8338, %v8348
        %vm8351 = vcmp.lt.s32.totalorder %v8341, %v8344
        %v8352 = vsel %vm8351, %v8341, %v8344
        %vm8353 = vcmp.lt.s32.totalorder %v8347, %v8350
        %v8354 = vsel %vm8353, %v8347, %v8350
        %vm8355 = vcmp.lt.s32.totalorder %v8352, %v8354
        %v8356 = vsel %vm8355, %v8352, %v8354
        %v8357 = vrot.slane %v8356, 4
        %vm8358 = vcmp.lt.s32.totalorder %v8356, %v8357
        %v8359 = vsel %vm8358, %v8356, %v8357
        %v8360 = vrot.slane %v8359, 2
        %vm8361 = vcmp.lt.s32.totalorder %v8359, %v8360
        %v8362 = vsel %vm8361, %v8359, %v8360
        %v8363 = vrot.slane %v8362, 1
        %vm8364 = vcmp.lt.s32.totalorder %v8362, %v8363
        %v8365 = vsel %vm8364, %v8362, %v8363
        %8366 = vst.msk [vmem:[%s2347 + $0x1] sm:$0x1] %vm8027, %v8365
        %vm8367 = vcmp.eq.s32.totalorder %v3953, %v8365
        %vm8368 = vcmp.eq.s32.totalorder %v3954, %v8365
        %vm8369 = vcmp.eq.s32.totalorder %v3955, %v8365
        %vm8370 = vcmp.eq.s32.totalorder %v3956, %v8365
        %vm8371 = vcmp.eq.s32.totalorder %v3957, %v8365
        %vm8372 = vcmp.eq.s32.totalorder %v3958, %v8365
        %vm8373 = vcmp.eq.s32.totalorder %v3959, %v8365
        %vm8374 = vcmp.eq.s32.totalorder %v3960, %v8365
        %v8375 = vsel %vm8367, 1, 0
        %v8376 = vsel %vm8368, 1, 0
        %v8377 = vsel %vm8369, 1, 0
        %v8378 = vsel %vm8370, 1, 0
        %v8379 = vsel %vm8371, 1, 0
        %v8380 = vsel %vm8372, 1, 0
        %v8381 = vsel %vm8373, 1, 0
        %v8382 = vsel %vm8374, 1, 0
        %v8383 = vcvt.s32.f32 %v8375
        %v8384 = vcvt.s32.f32 %v8376
        %v8385 = vcvt.s32.f32 %v8377
        %v8386 = vcvt.s32.f32 %v8378
        %v8387 = vcvt.s32.f32 %v8379
        %v8388 = vcvt.s32.f32 %v8380
        %v8389 = vcvt.s32.f32 %v8381
        %v8390 = vcvt.s32.f32 %v8382
        %s8391 = scalar_lea.vmem %s133, 8
        %v8392 = vld [vmem:[%s8391] sm:$0xff]
        %v8394 = vsel %vm8054, %v8392, 0
        %8396 = vmatpush.msra.mxu0 0.0
        %8397 = vmatpush.msra.mxu0 0.0
        %8398 = vmatpush.msra.mxu0 0.0
        %8399 = vmatpush.msra.mxu0 0.0
        %8400 = vmatpush.msra.mxu0 0.0
        %8401 = vmatpush.msra.mxu0 0.0
        %8402 = vmatpush.msra.mxu0 0.0
        %8403 = vmatpush.msra.mxu0 0.0
        %8404 = vmatpush.msra.mxu0 %v8390
        %8405 = vmatpush.msra.mxu0 %v8389
        %8406 = vmatpush.msra.mxu0 %v8388
        %8407 = vmatpush.msra.mxu0 %v8387
        %8408 = vmatpush.msra.mxu0 %v8386
        %8409 = vmatpush.msra.mxu0 %v8385
        %8410 = vmatpush.msra.mxu0 %v8384
        %8411 = vmatpush.msra.mxu0 %v8383
        %8412 = vmatmul.f32.gmra.mxu0 %v8394
        %v8413 = vpop.f32.mrf.mxu0
        %v8414 = vadd.f32 0.0, %v8413
        %8415 = vdwg.mxu0
        %s8416 = scalar_lea.vmem [#allocation26], 32
        %v8417 = vld [vmem:[%s8416] sm:$0xff]
        %v8418 = vld [vmem:[%s8416 + $0x8] sm:$0xff]
        %v8419 = vld [vmem:[%s8416 + $0x10] sm:$0xff]
        %v8420 = vld [vmem:[%s8416 + $0x18] sm:$0xff]
        %s8421 = scalar_lea.vmem %s137, 32
        %v8422 = vld [vmem:[%s8421] sm:$0xff]
        %v8423 = vld [vmem:[%s8421 + $0x8] sm:$0xff]
        %v8424 = vld [vmem:[%s8421 + $0x10] sm:$0xff]
        %v8425 = vld [vmem:[%s8421 + $0x18] sm:$0xff]
        %8427 = vset.pattern.permute.xlu0 0
        %8428 = vperm.xlu0 %8427, %v8422
        %v8429 = vpop.permute.xlu0 %8428
        %8432 = vset.pattern.permute.xlu0 0
        %8433 = vperm.xlu0 %8432, %v8423
        %v8434 = vpop.permute.xlu0 %8433
        %8437 = vset.pattern.permute.xlu0 0
        %8438 = vperm.xlu0 %8437, %v8424
        %v8439 = vpop.permute.xlu0 %8438
        %8442 = vset.pattern.permute.xlu0 0
        %8443 = vperm.xlu0 %8442, %v8425
        %v8444 = vpop.permute.xlu0 %8443
        %v8447 = vsel %vm2849, %v8417, 0
        %v8450 = vsel %vm2849, %v8418, 0
        %v8453 = vsel %vm2849, %v8419, 0
        %v8456 = vsel %vm2849, %v8420, 0
        %8458 = vmatpush.msra.mxu0 0.0
        %8459 = vmatpush.msra.mxu0 0.0
        %8460 = vmatpush.msra.mxu0 0.0
        %8461 = vmatpush.msra.mxu0 0.0
        %8462 = vmatpush.msra.mxu0 0.0
        %8463 = vmatpush.msra.mxu0 0.0
        %8464 = vmatpush.msra.mxu0 0.0
        %8465 = vmatpush.msra.mxu0 0.0
        %8466 = vmatpush.msra.mxu0 0.0
        %8467 = vmatpush.msra.mxu0 0.0
        %8468 = vmatpush.msra.mxu0 0.0
        %8469 = vmatpush.msra.mxu0 0.0
        %8470 = vmatpush.msra.mxu0 0.0
        %8471 = vmatpush.msra.mxu0 0.0
        %8472 = vmatpush.msra.mxu0 0.0
        %8473 = vmatpush.msra.mxu0 %v8414
        %8474 = vmatmul.f32.gmra.mxu0 %v8447
        %v8475 = vpop.f32.mrf.mxu0
        %v8476 = vadd.f32 %v8429, %v8475
        %8477 = vmatmul.f32.gmra.mxu0 %v8450
        %v8478 = vpop.f32.mrf.mxu0
        %v8479 = vadd.f32 %v8434, %v8478
        %8480 = vmatmul.f32.gmra.mxu0 %v8453
        %v8481 = vpop.f32.mrf.mxu0
        %v8482 = vadd.f32 %v8439, %v8481
        %8483 = vmatmul.f32.gmra.mxu0 %v8456
        %v8484 = vpop.f32.mrf.mxu0
        %v8485 = vadd.f32 %v8444, %v8484
        %8486 = vdwg.mxu0
        %v8487 = vadd.f32 %v8147, %v8476
        %v8488 = vadd.f32 %v8148, %v8479
        %v8489 = vadd.f32 %v8149, %v8482
        %v8490 = vadd.f32 %v8150, %v8485
        %v8491 = vsub.f32 %v8151, %v8476
        %v8492 = vsub.f32 %v8152, %v8479
        %v8493 = vsub.f32 %v8153, %v8482
        %v8494 = vsub.f32 %v8154, %v8485
        %s8495 = scalar_lea.vmem %s127, 16
        %v8496 = vld [vmem:[%s8495] sm:$0xff]
        %s8497 = scalar_lea.vmem %s129, 16
        %v8498 = vld [vmem:[%s8497] sm:$0xff]
        %8500 = vset.pattern.permute.xlu0 0
        %8501 = vperm.xlu0 %8500, %v8498
        %v8502 = vpop.permute.xlu0 %8501
        %v8505 = vsel %vm3934, %v8496, 0
        %8507 = vmatpush.msra.mxu0 0.0
        %8508 = vmatpush.msra.mxu0 0.0
        %8509 = vmatpush.msra.mxu0 0.0
        %8510 = vmatpush.msra.mxu0 0.0
        %8511 = vmatpush.msra.mxu0 0.0
        %8512 = vmatpush.msra.mxu0 0.0
        %8513 = vmatpush.msra.mxu0 0.0
        %8514 = vmatpush.msra.mxu0 0.0
        %8515 = vmatpush.msra.mxu0 0.0
        %8516 = vmatpush.msra.mxu0 0.0
        %8517 = vmatpush.msra.mxu0 0.0
        %8518 = vmatpush.msra.mxu0 0.0
        %8519 = vmatpush.msra.mxu0 %v8494
        %8520 = vmatpush.msra.mxu0 %v8493
        %8521 = vmatpush.msra.mxu0 %v8492
        %8522 = vmatpush.msra.mxu0 %v8491
        %8523 = vmatmul.f32.gmra.mxu0 %v8505
        %v8524 = vpop.f32.mrf.mxu0
        %v8525 = vadd.f32 %v8502, %v8524
        %8526 = vdwg.mxu0
        %8527 = vst.msk [vmem:[%s2352 + $0x10] sm:$0xff] %vm2849, %v8525
        %v8528 = vmul.f32 %v8525, %v8525
        %v8529 = vsel %vm2849, %v8528, 0.0
        %v8530 = vrot.slane %v8529, 4
        %v8531 = vadd.f32 %v8529, %v8530
        %v8532 = vrot.slane %v8531, 2
        %v8533 = vadd.f32 %v8531, %v8532
        %v8534 = vrot.slane %v8533, 1
        %v8535 = vadd.f32 %v8533, %v8534
        %v8536 = vrsqrt.pop %v8535
        %v8537 = vmul.f32 %v8536, %v8535
        %v8538 = vmul.f32 %v8537, %v8536
        %v8539 = vmul.f32 0.5, %v8538
        %v8540 = vsub.f32 1.5, %v8539
        %v8541 = vmul.f32 %v8536, %v8540
        %v8542 = vmul.f32 %v8535, %v8541
        %vm8543 = vcmp.eq.f32.partialorder %v8535, inf
        %v8544 = vsel %vm8543, %v8535, %v8542
        %vm8545 = vcmp.eq.f32.partialorder %v8535, 0.0
        %v8546 = vand.u32 %v8535, 2147483648
        %v8547 = vsel %vm8545, %v8546, %v8544
        %v8548 = vmax.f32 %v8547, 1e-12
        %v8549 = vrcp.pop %v8548
        %v8550 = vmul.f32 %v8548, %v8549
        %v8551 = vsub.f32 1.0, %v8550
        %v8552 = vmul.f32 %v8549, %v8551
        %v8553 = vadd.f32 %v8549, %v8552
        %vm8554 = vweird.f32 %v8548
        %vm8555 = vweird.f32 %v8549
        %vm8556 = vmor %vm8554, %vm8555
        %v8557 = vsel %vm8556, %v8549, %v8553
        %v8558 = vand.u32 2147483647, %v8548
        %vm8559 = vcmp.eq.f32.partialorder %v8558, 8.507059e+37
        %v8560 = vand.u32 %v8548, 2147483648
        %v8561 = vor.u32 1.1754944e-38, %v8560
        %v8562 = vsel %vm8559, %v8561, %v8557
        %v8563 = vmul.f32 %v8525, %v8562
        %s8564 = scalar_lea.vmem %s131, 128
        %v8565 = vld [vmem:[%s8564] sm:$0xff]
        %v8566 = vld [vmem:[%s8564 + $0x8] sm:$0xff]
        %v8567 = vld [vmem:[%s8564 + $0x10] sm:$0xff]
        %v8568 = vld [vmem:[%s8564 + $0x18] sm:$0xff]
        %v8569 = vld [vmem:[%s8564 + $0x20] sm:$0xff]
        %v8570 = vld [vmem:[%s8564 + $0x28] sm:$0xff]
        %v8571 = vld [vmem:[%s8564 + $0x30] sm:$0xff]
        %v8572 = vld [vmem:[%s8564 + $0x38] sm:$0xff]
        %v8574 = vsel %vm2849, %v8565, 0
        %v8577 = vsel %vm2849, %v8566, 0
        %v8580 = vsel %vm2849, %v8567, 0
        %v8583 = vsel %vm2849, %v8568, 0
        %v8586 = vsel %vm2849, %v8569, 0
        %v8589 = vsel %vm2849, %v8570, 0
        %v8592 = vsel %vm2849, %v8571, 0
        %v8595 = vsel %vm2849, %v8572, 0
        %8597 = vmatpush.msra.mxu0 0.0
        %8598 = vmatpush.msra.mxu0 0.0
        %8599 = vmatpush.msra.mxu0 0.0
        %8600 = vmatpush.msra.mxu0 0.0
        %8601 = vmatpush.msra.mxu0 0.0
        %8602 = vmatpush.msra.mxu0 0.0
        %8603 = vmatpush.msra.mxu0 0.0
        %8604 = vmatpush.msra.mxu0 0.0
        %8605 = vmatpush.msra.mxu0 0.0
        %8606 = vmatpush.msra.mxu0 0.0
        %8607 = vmatpush.msra.mxu0 0.0
        %8608 = vmatpush.msra.mxu0 0.0
        %8609 = vmatpush.msra.mxu0 0.0
        %8610 = vmatpush.msra.mxu0 0.0
        %8611 = vmatpush.msra.mxu0 0.0
        %8612 = vmatpush.msra.mxu0 %v8563
        %8613 = vmatmul.f32.gmra.mxu0 %v8574
        %v8614 = vpop.f32.mrf.mxu0
        %v8615 = vadd.f32 0.0, %v8614
        %8616 = vmatmul.f32.gmra.mxu0 %v8577
        %v8617 = vpop.f32.mrf.mxu0
        %v8618 = vadd.f32 0.0, %v8617
        %8619 = vmatmul.f32.gmra.mxu0 %v8580
        %v8620 = vpop.f32.mrf.mxu0
        %v8621 = vadd.f32 0.0, %v8620
        %8622 = vmatmul.f32.gmra.mxu0 %v8583
        %v8623 = vpop.f32.mrf.mxu0
        %v8624 = vadd.f32 0.0, %v8623
        %8625 = vmatmul.f32.gmra.mxu0 %v8586
        %v8626 = vpop.f32.mrf.mxu0
        %v8627 = vadd.f32 0.0, %v8626
        %8628 = vmatmul.f32.gmra.mxu0 %v8589
        %v8629 = vpop.f32.mrf.mxu0
        %v8630 = vadd.f32 0.0, %v8629
        %8631 = vmatmul.f32.gmra.mxu0 %v8592
        %v8632 = vpop.f32.mrf.mxu0
        %v8633 = vadd.f32 0.0, %v8632
        %8634 = vmatmul.f32.gmra.mxu0 %v8595
        %v8635 = vpop.f32.mrf.mxu0
        %v8636 = vadd.f32 0.0, %v8635
        %8637 = vdwg.mxu0
        %v8638 = vsel %vm2849, %v8615, -inf
        %v8639 = vsel %vm2849, %v8618, -inf
        %v8640 = vsel %vm2849, %v8621, -inf
        %v8641 = vsel %vm2849, %v8624, -inf
        %v8642 = vsel %vm2849, %v8627, -inf
        %v8643 = vmax.f32 %v8638, %v8642
        %v8644 = vsel %vm2849, %v8630, -inf
        %v8645 = vmax.f32 %v8639, %v8644
        %v8646 = vsel %vm2849, %v8633, -inf
        %v8647 = vmax.f32 %v8640, %v8646
        %v8648 = vsel %vm2849, %v8636, -inf
        %v8649 = vmax.f32 %v8641, %v8648
        %v8650 = vmax.f32 %v8643, %v8645
        %v8651 = vmax.f32 %v8647, %v8649
        %v8652 = vmax.f32 %v8650, %v8651
        %v8653 = vrot.slane %v8652, 4
        %v8654 = vmax.f32 %v8652, %v8653
        %v8655 = vrot.slane %v8654, 2
        %v8656 = vmax.f32 %v8654, %v8655
        %v8657 = vrot.slane %v8656, 1
        %v8658 = vmax.f32 %v8656, %v8657
        %vm8659 = vcmp.ge.f32.partialorder %v8615, %v8658
        %vm8660 = vcmp.ge.f32.partialorder %v8618, %v8658
        %vm8661 = vcmp.ge.f32.partialorder %v8621, %v8658
        %vm8662 = vcmp.ge.f32.partialorder %v8624, %v8658
        %vm8663 = vcmp.ge.f32.partialorder %v8627, %v8658
        %vm8664 = vcmp.ge.f32.partialorder %v8630, %v8658
        %vm8665 = vcmp.ge.f32.partialorder %v8633, %v8658
        %vm8666 = vcmp.ge.f32.partialorder %v8636, %v8658
        %v8667 = vsel %vm8659, %v3953, 64
        %v8668 = vsel %vm8660, %v3954, 64
        %v8669 = vsel %vm8661, %v3955, 64
        %v8670 = vsel %vm8662, %v3956, 64
        %v8671 = vsel %vm8663, %v3957, 64
        %v8672 = vsel %vm8664, %v3958, 64
        %v8673 = vsel %vm8665, %v3959, 64
        %v8674 = vsel %vm8666, %v3960, 64
        %v8675 = vsel %vm2849, %v8667, 2147483647
        %v8676 = vsel %vm2849, %v8668, 2147483647
        %v8677 = vsel %vm2849, %v8669, 2147483647
        %v8678 = vsel %vm2849, %v8670, 2147483647
        %v8679 = vsel %vm2849, %v8671, 2147483647
        %vm8680 = vcmp.lt.s32.totalorder %v8675, %v8679
        %v8681 = vsel %vm8680, %v8675, %v8679
        %v8682 = vsel %vm2849, %v8672, 2147483647
        %vm8683 = vcmp.lt.s32.totalorder %v8676, %v8682
        %v8684 = vsel %vm8683, %v8676, %v8682
        %v8685 = vsel %vm2849, %v8673, 2147483647
        %vm8686 = vcmp.lt.s32.totalorder %v8677, %v8685
        %v8687 = vsel %vm8686, %v8677, %v8685
        %v8688 = vsel %vm2849, %v8674, 2147483647
        %vm8689 = vcmp.lt.s32.totalorder %v8678, %v8688
        %v8690 = vsel %vm8689, %v8678, %v8688
        %vm8691 = vcmp.lt.s32.totalorder %v8681, %v8684
        %v8692 = vsel %vm8691, %v8681, %v8684
        %vm8693 = vcmp.lt.s32.totalorder %v8687, %v8690
        %v8694 = vsel %vm8693, %v8687, %v8690
        %vm8695 = vcmp.lt.s32.totalorder %v8692, %v8694
        %v8696 = vsel %vm8695, %v8692, %v8694
        %v8697 = vrot.slane %v8696, 4
        %vm8698 = vcmp.lt.s32.totalorder %v8696, %v8697
        %v8699 = vsel %vm8698, %v8696, %v8697
        %v8700 = vrot.slane %v8699, 2
        %vm8701 = vcmp.lt.s32.totalorder %v8699, %v8700
        %v8702 = vsel %vm8701, %v8699, %v8700
        %v8703 = vrot.slane %v8702, 1
        %vm8704 = vcmp.lt.s32.totalorder %v8702, %v8703
        %v8705 = vsel %vm8704, %v8702, %v8703
        %8706 = vst.msk [vmem:[%s2347 + $0x2] sm:$0x1] %vm8027, %v8705
        %vm8707 = vcmp.eq.s32.totalorder %v3953, %v8705
        %vm8708 = vcmp.eq.s32.totalorder %v3954, %v8705
        %vm8709 = vcmp.eq.s32.totalorder %v3955, %v8705
        %vm8710 = vcmp.eq.s32.totalorder %v3956, %v8705
        %vm8711 = vcmp.eq.s32.totalorder %v3957, %v8705
        %vm8712 = vcmp.eq.s32.totalorder %v3958, %v8705
        %vm8713 = vcmp.eq.s32.totalorder %v3959, %v8705
        %vm8714 = vcmp.eq.s32.totalorder %v3960, %v8705
        %v8715 = vsel %vm8707, 1, 0
        %v8716 = vsel %vm8708, 1, 0
        %v8717 = vsel %vm8709, 1, 0
        %v8718 = vsel %vm8710, 1, 0
        %v8719 = vsel %vm8711, 1, 0
        %v8720 = vsel %vm8712, 1, 0
        %v8721 = vsel %vm8713, 1, 0
        %v8722 = vsel %vm8714, 1, 0
        %v8723 = vcvt.s32.f32 %v8715
        %v8724 = vcvt.s32.f32 %v8716
        %v8725 = vcvt.s32.f32 %v8717
        %v8726 = vcvt.s32.f32 %v8718
        %v8727 = vcvt.s32.f32 %v8719
        %v8728 = vcvt.s32.f32 %v8720
        %v8729 = vcvt.s32.f32 %v8721
        %v8730 = vcvt.s32.f32 %v8722
        %s8731 = scalar_lea.vmem %s133, 16
        %v8732 = vld [vmem:[%s8731] sm:$0xff]
        %v8734 = vsel %vm8054, %v8732, 0
        %8736 = vmatpush.msra.mxu0 0.0
        %8737 = vmatpush.msra.mxu0 0.0
        %8738 = vmatpush.msra.mxu0 0.0
        %8739 = vmatpush.msra.mxu0 0.0
        %8740 = vmatpush.msra.mxu0 0.0
        %8741 = vmatpush.msra.mxu0 0.0
        %8742 = vmatpush.msra.mxu0 0.0
        %8743 = vmatpush.msra.mxu0 0.0
        %8744 = vmatpush.msra.mxu0 %v8730
        %8745 = vmatpush.msra.mxu0 %v8729
        %8746 = vmatpush.msra.mxu0 %v8728
        %8747 = vmatpush.msra.mxu0 %v8727
        %8748 = vmatpush.msra.mxu0 %v8726
        %8749 = vmatpush.msra.mxu0 %v8725
        %8750 = vmatpush.msra.mxu0 %v8724
        %8751 = vmatpush.msra.mxu0 %v8723
        %8752 = vmatmul.f32.gmra.mxu0 %v8734
        %v8753 = vpop.f32.mrf.mxu0
        %v8754 = vadd.f32 0.0, %v8753
        %8755 = vdwg.mxu0
        %s8756 = scalar_lea.vmem [#allocation26], 64
        %v8757 = vld [vmem:[%s8756] sm:$0xff]
        %v8758 = vld [vmem:[%s8756 + $0x8] sm:$0xff]
        %v8759 = vld [vmem:[%s8756 + $0x10] sm:$0xff]
        %v8760 = vld [vmem:[%s8756 + $0x18] sm:$0xff]
        %s8761 = scalar_lea.vmem %s137, 64
        %v8762 = vld [vmem:[%s8761] sm:$0xff]
        %v8763 = vld [vmem:[%s8761 + $0x8] sm:$0xff]
        %v8764 = vld [vmem:[%s8761 + $0x10] sm:$0xff]
        %v8765 = vld [vmem:[%s8761 + $0x18] sm:$0xff]
        %8767 = vset.pattern.permute.xlu0 0
        %8768 = vperm.xlu0 %8767, %v8762
        %v8769 = vpop.permute.xlu0 %8768
        %8772 = vset.pattern.permute.xlu0 0
        %8773 = vperm.xlu0 %8772, %v8763
        %v8774 = vpop.permute.xlu0 %8773
        %8777 = vset.pattern.permute.xlu0 0
        %8778 = vperm.xlu0 %8777, %v8764
        %v8779 = vpop.permute.xlu0 %8778
        %8782 = vset.pattern.permute.xlu0 0
        %8783 = vperm.xlu0 %8782, %v8765
        %v8784 = vpop.permute.xlu0 %8783
        %v8787 = vsel %vm2849, %v8757, 0
        %v8790 = vsel %vm2849, %v8758, 0
        %v8793 = vsel %vm2849, %v8759, 0
        %v8796 = vsel %vm2849, %v8760, 0
        %8798 = vmatpush.msra.mxu0 0.0
        %8799 = vmatpush.msra.mxu0 0.0
        %8800 = vmatpush.msra.mxu0 0.0
        %8801 = vmatpush.msra.mxu0 0.0
        %8802 = vmatpush.msra.mxu0 0.0
        %8803 = vmatpush.msra.mxu0 0.0
        %8804 = vmatpush.msra.mxu0 0.0
        %8805 = vmatpush.msra.mxu0 0.0
        %8806 = vmatpush.msra.mxu0 0.0
        %8807 = vmatpush.msra.mxu0 0.0
        %8808 = vmatpush.msra.mxu0 0.0
        %8809 = vmatpush.msra.mxu0 0.0
        %8810 = vmatpush.msra.mxu0 0.0
        %8811 = vmatpush.msra.mxu0 0.0
        %8812 = vmatpush.msra.mxu0 0.0
        %8813 = vmatpush.msra.mxu0 %v8754
        %8814 = vmatmul.f32.gmra.mxu0 %v8787
        %v8815 = vpop.f32.mrf.mxu0
        %v8816 = vadd.f32 %v8769, %v8815
        %8817 = vmatmul.f32.gmra.mxu0 %v8790
        %v8818 = vpop.f32.mrf.mxu0
        %v8819 = vadd.f32 %v8774, %v8818
        %8820 = vmatmul.f32.gmra.mxu0 %v8793
        %v8821 = vpop.f32.mrf.mxu0
        %v8822 = vadd.f32 %v8779, %v8821
        %8823 = vmatmul.f32.gmra.mxu0 %v8796
        %v8824 = vpop.f32.mrf.mxu0
        %v8825 = vadd.f32 %v8784, %v8824
        %8826 = vdwg.mxu0
        %v8827 = vadd.f32 %v8487, %v8816
        %v8828 = vadd.f32 %v8488, %v8819
        %v8829 = vadd.f32 %v8489, %v8822
        %v8830 = vadd.f32 %v8490, %v8825
        %8831 = vst.msk [vmem:[%s2343] sm:$0xff] %vm2849, %v8827
        %8832 = vst.msk [vmem:[%s2343 + $0x8] sm:$0xff] %vm2849, %v8828
        %8833 = vst.msk [vmem:[%s2343 + $0x10] sm:$0xff] %vm2849, %v8829
        %8834 = vst.msk [vmem:[%s2343 + $0x18] sm:$0xff] %vm2849, %v8830
        %p8835 = scmp.lt.s32.totalorder %s166, 1
        %s8836 = scalar_select %p8835, %s166, 1
        %s8837 = smul.addr %s8836, 4
        %s8838 = smul.addr %s8837, 8
        %s8839 = scalar_lea.vmem %s139, %s8838
        %p8840 = scmp.lt.s32.totalorder %s166, 1
        %s8841 = scalar_select %p8840, %s166, 1
        %s8842 = smul.addr %s8841, 4
        %s8843 = scalar_lea.vmem %s141, %s8842
        %p8844 = scmp.lt.s32.totalorder %s166, 1
        %s8845 = scalar_select %p8844, %s166, 1
        %s8846 = smul.addr %s8845, 3
        %s8847 = smul.addr %s8846, 8
        %s8848 = scalar_lea.vmem %s143, %s8847
        // Predicated region
        $region361: #{_encode_impl.1} parent=295 // pred_check
          %p8849 = pneg %p1638
        $region362: #{_encode_impl.1} parent=295 // pred_check_branch
          %8851 = sbr.rel (%p8849) target = $region364
        $region363: #{_encode_impl.1} parent=295 // pred_region
          _
        $region364: #{_encode_impl.1} parent=295 // pred_fallthru
          _
        // Predicated region
        $region365: #{_encode_impl.1} parent=295 // pred_check
          %p8852 = pneg %p1664
        $region366: #{_encode_impl.1} parent=295 // pred_check_branch
          %8854 = sbr.rel (%p8852) target = $region368
        $region367: #{_encode_impl.1} parent=295 // pred_region
          _
        $region368: #{_encode_impl.1} parent=295 // pred_fallthru
          _
        // Predicated region
        $region369: #{_encode_impl.1} parent=295 // pred_check
          %p8855 = pneg %p1690
        $region370: #{_encode_impl.1} parent=295 // pred_check_branch
          %8857 = sbr.rel (%p8855) target = $region372
        $region371: #{_encode_impl.1} parent=295 // pred_region
          _
        $region372: #{_encode_impl.1} parent=295 // pred_fallthru
          _
      $region296: #{_encode_impl.1} parent=5 // pred_fallthru
        _
      %p8858 = scmp.le.s32.totalorder 2, %s161
      // Predicated region
      $region373: #{_encode_impl.1} parent=5 // pred_check
        %p8859 = pneg %p8858
      $region374: #{_encode_impl.1} parent=5 // pred_check_branch
        %8861 = sbr.rel (%p8859) target = $region376
      $region375: #{_encode_impl.1} parent=5 // pred_region
        %s8862 = ssub.s32 %s161, 2
        // Predicated region
        $region377: #{_encode_impl.1} parent=375 // pred_check
          %p8863 = pneg %p1644
        $region378: #{_encode_impl.1} parent=375 // pred_check_branch
          %8865 = sbr.rel (%p8863) target = $region380
        $region379: #{_encode_impl.1} parent=375 // pred_region
          %p8866 = scmp.lt.s32.totalorder %s167, 1
          %s8867 = scalar_select %p8866, %s167, 1
          %s8868 = smul.addr %s8867, 4
          %s8869 = smul.addr %s8868, 8
          %s8870 = scalar_lea.vmem %s139, %s8869
        $region380: #{_encode_impl.1} parent=375 // pred_fallthru
          _
        // Predicated region
        $region381: #{_encode_impl.1} parent=375 // pred_check
          %p8871 = pneg %p1670
        $region382: #{_encode_impl.1} parent=375 // pred_check_branch
          %8873 = sbr.rel (%p8871) target = $region384
        $region383: #{_encode_impl.1} parent=375 // pred_region
          %p8874 = scmp.lt.s32.totalorder %s167, 1
          %s8875 = scalar_select %p8874, %s167, 1
          %s8876 = smul.addr %s8875, 4
          %s8877 = scalar_lea.vmem %s141, %s8876
        $region384: #{_encode_impl.1} parent=375 // pred_fallthru
          _
        // Predicated region
        $region385: #{_encode_impl.1} parent=375 // pred_check
          %p8878 = pneg %p1696
        $region386: #{_encode_impl.1} parent=375 // pred_check_branch
          %8880 = sbr.rel (%p8878) target = $region388
        $region387: #{_encode_impl.1} parent=375 // pred_region
          %p8881 = scmp.lt.s32.totalorder %s167, 1
          %s8882 = scalar_select %p8881, %s167, 1
          %s8883 = smul.addr %s8882, 3
          %s8884 = smul.addr %s8883, 8
          %s8885 = scalar_lea.vmem %s143, %s8884
        $region388: #{_encode_impl.1} parent=375 // pred_fallthru
          _
      $region376: #{_encode_impl.1} parent=5 // pred_fallthru
        _
    $region6: #{_encode_impl.1} parent=1 // loop_footer
      %s165 = sadd.s32 1, %s161
    $region7: #{_encode_impl.1} parent=1 // loop_footer_branch
      %160 = sbr.rel target = $region3
    $region8: #{_encode_impl.1} parent=1 // loop_exit
      _
    %8886 = vsyncpa [#allocation4], 1
    %s8887 = scalar_lea.sflag [#allocation4], 1
    %8888 = vsyncpa %s8887, 1
    %8889 = vsyncpa [#allocation6], 1
    %8890 = vsyncpa [#allocation9], 1
    %8891 = vsyncpa [#allocation12], 1
    %8892 = vsyncpa [#allocation15], 1
    %8893 = vsyncpa [#allocation18], 1
    %8894 = vsyncpa [#allocation21], 1
    %8895 = vsyncpa [#allocation24], 1
    %8896 = vsyncpa [#allocation27], 1

</llo_original>
